<compile_context>
chip_gen: v7x
topology: tpu7x:2x2x1
jax: 0.10.0
libtpu: 0.0.40
codegen_flags: <defaults>
</compile_context>

<pallas_src>
import functools

import numpy as np
import jax
import jax.numpy as jnp
from jax import lax
from jax.experimental import pallas as pl
from jax.experimental.pallas import tpu as pltpu

_K = 4                       # kernel size (stride 2, padding 1 everywhere)
_MM_DTYPE = jnp.bfloat16     # MXU input dtype (accumulation stays f32)

# Conv2d weights: (O, I, kh, kw); ConvTranspose2d weights: (I, O, kh, kw)
_ENC_SHAPES = [(16, 3, 4, 4), (32, 16, 4, 4), (64, 32, 4, 4), (128, 64, 4, 4)]
_DEC_SHAPES = [(128, 64, 4, 4), (64, 32, 4, 4), (32, 16, 4, 4), (16, 3, 4, 4)]


# ---------------------------------------------------------------------------
# Constant geometry matrices (numpy, baked at trace time)
# ---------------------------------------------------------------------------
def _row_select(kh, h_out, h_in, is_transpose):
    """0/1 matrix (h_out, h_in) selecting the input row feeding each output row
    for kernel-row offset kh (zero padding handled by out-of-range drop)."""
    ho = np.arange(h_out)[:, None]
    hi = np.arange(h_in)[None, :]
    if is_transpose:   # ConvTranspose2d: ho = 2*h - 1 + kh
        hit = (ho == 2 * hi + kh - 1)
    else:              # Conv2d:          h  = 2*ho - 1 + kh
        hit = (hi == 2 * ho + kh - 1)
    return hit.astype(np.float32)


def _col_structure(w_in, w_out, is_transpose):
    """(K, w_in, w_out) 0/1 structure: which input column feeds which output
    column for each kernel-column offset kw."""
    kw = np.arange(_K)[:, None, None]
    wi = np.arange(w_in)[None, :, None]
    wo = np.arange(w_out)[None, None, :]
    if is_transpose:
        hit = (wo == 2 * wi + kw - 1)
    else:
        hit = (wi == 2 * wo + kw - 1)
    return hit.astype(np.float32)


def _layer_operands(wt, bias, is_transpose, n, h_in, w_in):
    """Build per-layer operands: L (4, n*Ho, n*Hin), R (4, Win*Cin, Wo*Co),
    bias row (1, Wo*Co)."""
    if is_transpose:
        c_in, c_out = wt.shape[0], wt.shape[1]
        h_out, w_out = 2 * h_in, 2 * w_in
        s = jnp.asarray(_col_structure(w_in, w_out, True), dtype=wt.dtype)
        r = jnp.einsum("qwv,iohq->hwivo", s, wt)      # (kh, w, ci, wo, co)
    else:
        c_out, c_in = wt.shape[0], wt.shape[1]
        h_out, w_out = h_in // 2, w_in // 2
        s = jnp.asarray(_col_structure(w_in, w_out, False), dtype=wt.dtype)
        r = jnp.einsum("qwv,oihq->hwivo", s, wt)      # (kh, w, ci, wo, co)
    r = r.reshape(_K, w_in * c_in, w_out * c_out).astype(_MM_DTYPE)

    l_np = np.stack([
        np.kron(np.eye(n, dtype=np.float32),
                _row_select(kh, h_out, h_in, is_transpose))
        for kh in range(_K)
    ])                                                # (4, n*Ho, n*Hin), 0/1
    l_m = jnp.asarray(l_np, dtype=_MM_DTYPE)

    b_row = jnp.tile(bias, w_out).reshape(1, w_out * c_out).astype(jnp.float32)
    return l_m, r, b_row, h_out, w_out, c_out


# ---------------------------------------------------------------------------
# The single fused Pallas kernel: 8 layers of (L@x)@R + bias + activation
# ---------------------------------------------------------------------------
def _autoencoder_kernel(num_layers, acts, x_ref, *refs):
    out_ref = refs[-1]
    x = x_ref[...].astype(_MM_DTYPE)                  # (N*H, W*C)
    for li in range(num_layers):
        l_ref = refs[3 * li + 0]                      # (4, N*Ho, N*Hin)
        r_ref = refs[3 * li + 1]                      # (4, Win*Cin, Wo*Co)
        b_ref = refs[3 * li + 2]                      # (1, Wo*Co)
        acc = None
        for kh in range(_K):
            # Row selection (exact 0/1 matmul), then banded-weight matmul.
            rows = jnp.dot(l_ref[kh], x, preferred_element_type=jnp.float32)
            rows = rows.astype(_MM_DTYPE)             # lossless: pure selection
            part = jnp.dot(rows, r_ref[kh],
                           preferred_element_type=jnp.float32)
            acc = part if acc is None else acc + part
        acc = acc + b_ref[...]
        if acts[li] == "relu":
            y = jnp.maximum(acc, 0.0)
        else:
            y = jax.nn.sigmoid(acc)
        if li == num_layers - 1:
            out_ref[...] = y.astype(out_ref.dtype)
        else:
            x = y.astype(_MM_DTYPE)


def autoencoder_forward(params, x_nchw):
    """Matches SimpleAutoencoder.forward (NCHW in / NCHW out)."""
    n, c, h, w = x_nchw.shape
    x2d = jnp.transpose(x_nchw, (0, 2, 3, 1)).reshape(n * h, w * c)

    cfgs = ([(wb, False) for wb in params["enc"]] +
            [(wb, True) for wb in params["dec"]])

    operands = [x2d]
    acts = []
    cur_h, cur_w, cur_c = h, w, c
    for i, ((wt, bias), is_t) in enumerate(cfgs):
        l_m, r_m, b_row, cur_h, cur_w, cur_c = _layer_operands(
            wt, bias, is_t, n, cur_h, cur_w)
        operands += [l_m, r_m, b_row]
        acts.append("sigmoid" if i == len(cfgs) - 1 else "relu")

    out_shape = (n * cur_h, cur_w * cur_c)

    def full_spec(shape):
        nd = len(shape)
        return pl.BlockSpec(shape, lambda i, nd=nd: (0,) * nd)

    kernel = functools.partial(_autoencoder_kernel, len(cfgs), tuple(acts))
    out2d = pl.pallas_call(
        kernel,
        out_shape=jax.ShapeDtypeStruct(out_shape, jnp.float32),
        grid_spec=pltpu.PrefetchScalarGridSpec(
            num_scalar_prefetch=0,
            grid=(1,),
            in_specs=[full_spec(op.shape) for op in operands],
            out_specs=full_spec(out_shape),
        ),
        compiler_params=pltpu.CompilerParams(
            dimension_semantics=("arbitrary",),
            vmem_limit_bytes=48 * 1024 * 1024,
        ),
    )(*operands)

    out_nhwc = out2d.reshape(n, cur_h, cur_w, cur_c)
    return jnp.transpose(out_nhwc, (0, 3, 1, 2))      # NHWC -> NCHW


# ---------------------------------------------------------------------------
# Parameters (PyTorch-style init) and a pure-JAX reference for validation
# ---------------------------------------------------------------------------
def init_params(key):
    params = {"enc": [], "dec": []}
    for shp in _ENC_SHAPES:                           # Conv2d: (out, in, kh, kw)
        key, kw_, kb = jax.random.split(key, 3)
        scale = 1.0 / jnp.sqrt(shp[1] * shp[2] * shp[3])
        params["enc"].append(
            (jax.random.uniform(kw_, shp, jnp.float32, -scale, scale),
             jax.random.uniform(kb, (shp[0],), jnp.float32, -scale, scale)))
    for shp in _DEC_SHAPES:                           # ConvTranspose2d: (in, out, kh, kw)
        key, kw_, kb = jax.random.split(key, 3)
        scale = 1.0 / jnp.sqrt(shp[0] * shp[2] * shp[3])
        params["dec"].append(
            (jax.random.uniform(kw_, shp, jnp.float32, -scale, scale),
             jax.random.uniform(kb, (shp[1],), jnp.float32, -scale, scale)))
    return params


def reference_forward(params, x_nchw):
    dn = ("NCHW", "OIHW", "NCHW")
    x = x_nchw
    for w, b in params["enc"]:
        x = lax.conv_general_dilated(x, w, (2, 2), [(1, 1), (1, 1)],
                                     dimension_numbers=dn)
        x = jnp.maximum(x + b[None, :, None, None], 0.0)
    last = len(params["dec"]) - 1
    for i, (w, b) in enumerate(params["dec"]):
        w_conv = jnp.transpose(w[:, :, ::-1, ::-1], (1, 0, 2, 3))
        x = lax.conv_general_dilated(x, w_conv, (1, 1), [(2, 2), (2, 2)],
                                     lhs_dilation=(2, 2), dimension_numbers=dn)
        x = x + b[None, :, None, None]
        x = jax.nn.sigmoid(x) if i == last else jnp.maximum(x, 0.0)
    return x


if __name__ == "__main__":
    key = jax.random.PRNGKey(0)
    key, pkey, xkey = jax.random.split(key, 3)
    params = init_params(pkey)
    x = jax.random.uniform(xkey, (2, 3, 32, 32), jnp.float32)  # NCHW, CIFAR-like

    fwd = jax.jit(autoencoder_forward)
    out = jax.block_until_ready(fwd(params, x))
    assert out.shape == (2, 3, 32, 32), out.shape

    ref = jax.block_until_ready(jax.jit(reference_forward)(params, x))
    err = float(jnp.max(jnp.abs(out - ref)))
    # bf16 MXU inputs with f32 accumulation -> loosened tolerance vs f32 ref.
    assert err < 3e-2, err

    print("KERNEL_OK")
</pallas_src>

<mosaic_0001>
module attributes {stable_mosaic.version = 11 : i64} {
  func.func @_autoencoder_kernel(%arg0: i32, %arg1: memref<64x96xf32, #tpu.memory_space<vmem>>, %arg2: memref<4x32x64xbf16, #tpu.memory_space<vmem>>, %arg3: memref<4x96x256xbf16, #tpu.memory_space<vmem>>, %arg4: memref<1x256xf32, #tpu.memory_space<vmem>>, %arg5: memref<4x16x32xbf16, #tpu.memory_space<vmem>>, %arg6: memref<4x256x256xbf16, #tpu.memory_space<vmem>>, %arg7: memref<1x256xf32, #tpu.memory_space<vmem>>, %arg8: memref<4x8x16xbf16, #tpu.memory_space<vmem>>, %arg9: memref<4x256x256xbf16, #tpu.memory_space<vmem>>, %arg10: memref<1x256xf32, #tpu.memory_space<vmem>>, %arg11: memref<4x4x8xbf16, #tpu.memory_space<vmem>>, %arg12: memref<4x256x256xbf16, #tpu.memory_space<vmem>>, %arg13: memref<1x256xf32, #tpu.memory_space<vmem>>, %arg14: memref<4x8x4xbf16, #tpu.memory_space<vmem>>, %arg15: memref<4x256x256xbf16, #tpu.memory_space<vmem>>, %arg16: memref<1x256xf32, #tpu.memory_space<vmem>>, %arg17: memref<4x16x8xbf16, #tpu.memory_space<vmem>>, %arg18: memref<4x256x256xbf16, #tpu.memory_space<vmem>>, %arg19: memref<1x256xf32, #tpu.memory_space<vmem>>, %arg20: memref<4x32x16xbf16, #tpu.memory_space<vmem>>, %arg21: memref<4x256x256xbf16, #tpu.memory_space<vmem>>, %arg22: memref<1x256xf32, #tpu.memory_space<vmem>>, %arg23: memref<4x64x32xbf16, #tpu.memory_space<vmem>>, %arg24: memref<4x256x96xbf16, #tpu.memory_space<vmem>>, %arg25: memref<1x96xf32, #tpu.memory_space<vmem>>, %arg26: memref<64x96xf32, #tpu.memory_space<vmem>>) attributes {dimension_semantics = [#tpu.dimension_semantics<arbitrary>], iteration_bounds = array<i64: 1>, scalar_prefetch = 0 : i64, scratch_operands = 0 : i64, tpu.core_type = #tpu.core_type<tc>, window_params = [{pipeline_mode = #tpu.pipeline_mode<synchronous>, transform_indices = @transform_0, window_bounds = array<i64: 64, 96>}, {pipeline_mode = #tpu.pipeline_mode<synchronous>, transform_indices = @transform_1, window_bounds = array<i64: 4, 32, 64>}, {pipeline_mode = #tpu.pipeline_mode<synchronous>, transform_indices = @transform_2, window_bounds = array<i64: 4, 96, 256>}, {pipeline_mode = #tpu.pipeline_mode<synchronous>, transform_indices = @transform_3, window_bounds = array<i64: 1, 256>}, {pipeline_mode = #tpu.pipeline_mode<synchronous>, transform_indices = @transform_4, window_bounds = array<i64: 4, 16, 32>}, {pipeline_mode = #tpu.pipeline_mode<synchronous>, transform_indices = @transform_5, window_bounds = array<i64: 4, 256, 256>}, {pipeline_mode = #tpu.pipeline_mode<synchronous>, transform_indices = @transform_6, window_bounds = array<i64: 1, 256>}, {pipeline_mode = #tpu.pipeline_mode<synchronous>, transform_indices = @transform_7, window_bounds = array<i64: 4, 8, 16>}, {pipeline_mode = #tpu.pipeline_mode<synchronous>, transform_indices = @transform_8, window_bounds = array<i64: 4, 256, 256>}, {pipeline_mode = #tpu.pipeline_mode<synchronous>, transform_indices = @transform_9, window_bounds = array<i64: 1, 256>}, {pipeline_mode = #tpu.pipeline_mode<synchronous>, transform_indices = @transform_10, window_bounds = array<i64: 4, 4, 8>}, {pipeline_mode = #tpu.pipeline_mode<synchronous>, transform_indices = @transform_11, window_bounds = array<i64: 4, 256, 256>}, {pipeline_mode = #tpu.pipeline_mode<synchronous>, transform_indices = @transform_12, window_bounds = array<i64: 1, 256>}, {pipeline_mode = #tpu.pipeline_mode<synchronous>, transform_indices = @transform_13, window_bounds = array<i64: 4, 8, 4>}, {pipeline_mode = #tpu.pipeline_mode<synchronous>, transform_indices = @transform_14, window_bounds = array<i64: 4, 256, 256>}, {pipeline_mode = #tpu.pipeline_mode<synchronous>, transform_indices = @transform_15, window_bounds = array<i64: 1, 256>}, {pipeline_mode = #tpu.pipeline_mode<synchronous>, transform_indices = @transform_16, window_bounds = array<i64: 4, 16, 8>}, {pipeline_mode = #tpu.pipeline_mode<synchronous>, transform_indices = @transform_17, window_bounds = array<i64: 4, 256, 256>}, {pipeline_mode = #tpu.pipeline_mode<synchronous>, transform_indices = @transform_18, window_bounds = array<i64: 1, 256>}, {pipeline_mode = #tpu.pipeline_mode<synchronous>, transform_indices = @transform_19, window_bounds = array<i64: 4, 32, 16>}, {pipeline_mode = #tpu.pipeline_mode<synchronous>, transform_indices = @transform_20, window_bounds = array<i64: 4, 256, 256>}, {pipeline_mode = #tpu.pipeline_mode<synchronous>, transform_indices = @transform_21, window_bounds = array<i64: 1, 256>}, {pipeline_mode = #tpu.pipeline_mode<synchronous>, transform_indices = @transform_22, window_bounds = array<i64: 4, 64, 32>}, {pipeline_mode = #tpu.pipeline_mode<synchronous>, transform_indices = @transform_23, window_bounds = array<i64: 4, 256, 96>}, {pipeline_mode = #tpu.pipeline_mode<synchronous>, transform_indices = @transform_24, window_bounds = array<i64: 1, 96>}, {pipeline_mode = #tpu.pipeline_mode<synchronous>, transform_indices = @transform_25, window_bounds = array<i64: 64, 96>}]} {
    %c0 = arith.constant 0 : index
    %c0_0 = arith.constant 0 : index
    %0 = vector.load %arg1[%c0, %c0_0] : memref<64x96xf32, #tpu.memory_space<vmem>>, vector<64x96xf32>
    %1 = arith.truncf %0 : vector<64x96xf32> to vector<64x96xbf16>
    %c0_1 = arith.constant 0 : index
    %c0_2 = arith.constant 0 : index
    %c0_3 = arith.constant 0 : index
    %2 = vector.load %arg2[%c0_1, %c0_2, %c0_3] : memref<4x32x64xbf16, #tpu.memory_space<vmem>>, vector<1x32x64xbf16>
    %3 = vector.shape_cast %2 : vector<1x32x64xbf16> to vector<32x64xbf16>
    %cst = arith.constant dense<0.000000e+00> : vector<32x96xf32>
    %4 = tpu.matmul %3, %1, %cst {dimension_numbers = #tpu.dot_dimension_numbers<[1], [0], [0], [1], [0, 0, 1, 1], [], []>} : vector<32x64xbf16>, vector<64x96xbf16>, vector<32x96xf32> -> vector<32x96xf32>
    %5 = arith.truncf %4 : vector<32x96xf32> to vector<32x96xbf16>
    %c0_4 = arith.constant 0 : index
    %c0_5 = arith.constant 0 : index
    %c0_6 = arith.constant 0 : index
    %6 = vector.load %arg3[%c0_4, %c0_5, %c0_6] : memref<4x96x256xbf16, #tpu.memory_space<vmem>>, vector<1x96x256xbf16>
    %7 = vector.shape_cast %6 : vector<1x96x256xbf16> to vector<96x256xbf16>
    %cst_7 = arith.constant dense<0.000000e+00> : vector<32x256xf32>
    %8 = tpu.matmul %5, %7, %cst_7 {dimension_numbers = #tpu.dot_dimension_numbers<[1], [0], [0], [1], [0, 0, 1, 1], [], []>} : vector<32x96xbf16>, vector<96x256xbf16>, vector<32x256xf32> -> vector<32x256xf32>
    %c1 = arith.constant 1 : index
    %c0_8 = arith.constant 0 : index
    %c0_9 = arith.constant 0 : index
    %9 = vector.load %arg2[%c1, %c0_8, %c0_9] : memref<4x32x64xbf16, #tpu.memory_space<vmem>>, vector<1x32x64xbf16>
    %10 = vector.shape_cast %9 : vector<1x32x64xbf16> to vector<32x64xbf16>
    %cst_10 = arith.constant dense<0.000000e+00> : vector<32x96xf32>
    %11 = tpu.matmul %10, %1, %cst_10 {dimension_numbers = #tpu.dot_dimension_numbers<[1], [0], [0], [1], [0, 0, 1, 1], [], []>} : vector<32x64xbf16>, vector<64x96xbf16>, vector<32x96xf32> -> vector<32x96xf32>
    %12 = arith.truncf %11 : vector<32x96xf32> to vector<32x96xbf16>
    %c1_11 = arith.constant 1 : index
    %c0_12 = arith.constant 0 : index
    %c0_13 = arith.constant 0 : index
    %13 = vector.load %arg3[%c1_11, %c0_12, %c0_13] : memref<4x96x256xbf16, #tpu.memory_space<vmem>>, vector<1x96x256xbf16>
    %14 = vector.shape_cast %13 : vector<1x96x256xbf16> to vector<96x256xbf16>
    %cst_14 = arith.constant dense<0.000000e+00> : vector<32x256xf32>
    %15 = tpu.matmul %12, %14, %cst_14 {dimension_numbers = #tpu.dot_dimension_numbers<[1], [0], [0], [1], [0, 0, 1, 1], [], []>} : vector<32x96xbf16>, vector<96x256xbf16>, vector<32x256xf32> -> vector<32x256xf32>
    %16 = arith.addf %8, %15 : vector<32x256xf32>
    %c2 = arith.constant 2 : index
    %c0_15 = arith.constant 0 : index
    %c0_16 = arith.constant 0 : index
    %17 = vector.load %arg2[%c2, %c0_15, %c0_16] : memref<4x32x64xbf16, #tpu.memory_space<vmem>>, vector<1x32x64xbf16>
    %18 = vector.shape_cast %17 : vector<1x32x64xbf16> to vector<32x64xbf16>
    %cst_17 = arith.constant dense<0.000000e+00> : vector<32x96xf32>
    %19 = tpu.matmul %18, %1, %cst_17 {dimension_numbers = #tpu.dot_dimension_numbers<[1], [0], [0], [1], [0, 0, 1, 1], [], []>} : vector<32x64xbf16>, vector<64x96xbf16>, vector<32x96xf32> -> vector<32x96xf32>
    %20 = arith.truncf %19 : vector<32x96xf32> to vector<32x96xbf16>
    %c2_18 = arith.constant 2 : index
    %c0_19 = arith.constant 0 : index
    %c0_20 = arith.constant 0 : index
    %21 = vector.load %arg3[%c2_18, %c0_19, %c0_20] : memref<4x96x256xbf16, #tpu.memory_space<vmem>>, vector<1x96x256xbf16>
    %22 = vector.shape_cast %21 : vector<1x96x256xbf16> to vector<96x256xbf16>
    %cst_21 = arith.constant dense<0.000000e+00> : vector<32x256xf32>
    %23 = tpu.matmul %20, %22, %cst_21 {dimension_numbers = #tpu.dot_dimension_numbers<[1], [0], [0], [1], [0, 0, 1, 1], [], []>} : vector<32x96xbf16>, vector<96x256xbf16>, vector<32x256xf32> -> vector<32x256xf32>
    %24 = arith.addf %16, %23 : vector<32x256xf32>
    %c3 = arith.constant 3 : index
    %c0_22 = arith.constant 0 : index
    %c0_23 = arith.constant 0 : index
    %25 = vector.load %arg2[%c3, %c0_22, %c0_23] : memref<4x32x64xbf16, #tpu.memory_space<vmem>>, vector<1x32x64xbf16>
    %26 = vector.shape_cast %25 : vector<1x32x64xbf16> to vector<32x64xbf16>
    %cst_24 = arith.constant dense<0.000000e+00> : vector<32x96xf32>
    %27 = tpu.matmul %26, %1, %cst_24 {dimension_numbers = #tpu.dot_dimension_numbers<[1], [0], [0], [1], [0, 0, 1, 1], [], []>} : vector<32x64xbf16>, vector<64x96xbf16>, vector<32x96xf32> -> vector<32x96xf32>
    %28 = arith.truncf %27 : vector<32x96xf32> to vector<32x96xbf16>
    %c3_25 = arith.constant 3 : index
    %c0_26 = arith.constant 0 : index
    %c0_27 = arith.constant 0 : index
    %29 = vector.load %arg3[%c3_25, %c0_26, %c0_27] : memref<4x96x256xbf16, #tpu.memory_space<vmem>>, vector<1x96x256xbf16>
    %30 = vector.shape_cast %29 : vector<1x96x256xbf16> to vector<96x256xbf16>
    %cst_28 = arith.constant dense<0.000000e+00> : vector<32x256xf32>
    %31 = tpu.matmul %28, %30, %cst_28 {dimension_numbers = #tpu.dot_dimension_numbers<[1], [0], [0], [1], [0, 0, 1, 1], [], []>} : vector<32x96xbf16>, vector<96x256xbf16>, vector<32x256xf32> -> vector<32x256xf32>
    %32 = arith.addf %24, %31 : vector<32x256xf32>
    %c0_29 = arith.constant 0 : index
    %c0_30 = arith.constant 0 : index
    %33 = vector.load %arg4[%c0_29, %c0_30] : memref<1x256xf32, #tpu.memory_space<vmem>>, vector<1x256xf32>
    %34 = vector.broadcast %33 : vector<1x256xf32> to vector<32x256xf32>
    %35 = arith.addf %32, %34 : vector<32x256xf32>
    %cst_31 = arith.constant 0.000000e+00 : f32
    %36 = vector.broadcast %cst_31 : f32 to vector<32x256xf32>
    %37 = arith.maximumf %35, %36 : vector<32x256xf32>
    %38 = arith.truncf %37 : vector<32x256xf32> to vector<32x256xbf16>
    %c0_32 = arith.constant 0 : index
    %c0_33 = arith.constant 0 : index
    %c0_34 = arith.constant 0 : index
    %39 = vector.load %arg5[%c0_32, %c0_33, %c0_34] : memref<4x16x32xbf16, #tpu.memory_space<vmem>>, vector<1x16x32xbf16>
    %40 = vector.shape_cast %39 : vector<1x16x32xbf16> to vector<16x32xbf16>
    %cst_35 = arith.constant dense<0.000000e+00> : vector<16x256xf32>
    %41 = tpu.matmul %40, %38, %cst_35 {dimension_numbers = #tpu.dot_dimension_numbers<[1], [0], [0], [1], [0, 0, 1, 1], [], []>} : vector<16x32xbf16>, vector<32x256xbf16>, vector<16x256xf32> -> vector<16x256xf32>
    %42 = arith.truncf %41 : vector<16x256xf32> to vector<16x256xbf16>
    %c0_36 = arith.constant 0 : index
    %c0_37 = arith.constant 0 : index
    %c0_38 = arith.constant 0 : index
    %43 = vector.load %arg6[%c0_36, %c0_37, %c0_38] : memref<4x256x256xbf16, #tpu.memory_space<vmem>>, vector<1x256x256xbf16>
    %44 = vector.shape_cast %43 : vector<1x256x256xbf16> to vector<256x256xbf16>
    %cst_39 = arith.constant dense<0.000000e+00> : vector<16x256xf32>
    %45 = tpu.matmul %42, %44, %cst_39 {dimension_numbers = #tpu.dot_dimension_numbers<[1], [0], [0], [1], [0, 0, 1, 1], [], []>} : vector<16x256xbf16>, vector<256x256xbf16>, vector<16x256xf32> -> vector<16x256xf32>
    %c1_40 = arith.constant 1 : index
    %c0_41 = arith.constant 0 : index
    %c0_42 = arith.constant 0 : index
    %46 = vector.load %arg5[%c1_40, %c0_41, %c0_42] : memref<4x16x32xbf16, #tpu.memory_space<vmem>>, vector<1x16x32xbf16>
    %47 = vector.shape_cast %46 : vector<1x16x32xbf16> to vector<16x32xbf16>
    %cst_43 = arith.constant dense<0.000000e+00> : vector<16x256xf32>
    %48 = tpu.matmul %47, %38, %cst_43 {dimension_numbers = #tpu.dot_dimension_numbers<[1], [0], [0], [1], [0, 0, 1, 1], [], []>} : vector<16x32xbf16>, vector<32x256xbf16>, vector<16x256xf32> -> vector<16x256xf32>
    %49 = arith.truncf %48 : vector<16x256xf32> to vector<16x256xbf16>
    %c1_44 = arith.constant 1 : index
    %c0_45 = arith.constant 0 : index
    %c0_46 = arith.constant 0 : index
    %50 = vector.load %arg6[%c1_44, %c0_45, %c0_46] : memref<4x256x256xbf16, #tpu.memory_space<vmem>>, vector<1x256x256xbf16>
    %51 = vector.shape_cast %50 : vector<1x256x256xbf16> to vector<256x256xbf16>
    %cst_47 = arith.constant dense<0.000000e+00> : vector<16x256xf32>
    %52 = tpu.matmul %49, %51, %cst_47 {dimension_numbers = #tpu.dot_dimension_numbers<[1], [0], [0], [1], [0, 0, 1, 1], [], []>} : vector<16x256xbf16>, vector<256x256xbf16>, vector<16x256xf32> -> vector<16x256xf32>
    %53 = arith.addf %45, %52 : vector<16x256xf32>
    %c2_48 = arith.constant 2 : index
    %c0_49 = arith.constant 0 : index
    %c0_50 = arith.constant 0 : index
    %54 = vector.load %arg5[%c2_48, %c0_49, %c0_50] : memref<4x16x32xbf16, #tpu.memory_space<vmem>>, vector<1x16x32xbf16>
    %55 = vector.shape_cast %54 : vector<1x16x32xbf16> to vector<16x32xbf16>
    %cst_51 = arith.constant dense<0.000000e+00> : vector<16x256xf32>
    %56 = tpu.matmul %55, %38, %cst_51 {dimension_numbers = #tpu.dot_dimension_numbers<[1], [0], [0], [1], [0, 0, 1, 1], [], []>} : vector<16x32xbf16>, vector<32x256xbf16>, vector<16x256xf32> -> vector<16x256xf32>
    %57 = arith.truncf %56 : vector<16x256xf32> to vector<16x256xbf16>
    %c2_52 = arith.constant 2 : index
    %c0_53 = arith.constant 0 : index
    %c0_54 = arith.constant 0 : index
    %58 = vector.load %arg6[%c2_52, %c0_53, %c0_54] : memref<4x256x256xbf16, #tpu.memory_space<vmem>>, vector<1x256x256xbf16>
    %59 = vector.shape_cast %58 : vector<1x256x256xbf16> to vector<256x256xbf16>
    %cst_55 = arith.constant dense<0.000000e+00> : vector<16x256xf32>
    %60 = tpu.matmul %57, %59, %cst_55 {dimension_numbers = #tpu.dot_dimension_numbers<[1], [0], [0], [1], [0, 0, 1, 1], [], []>} : vector<16x256xbf16>, vector<256x256xbf16>, vector<16x256xf32> -> vector<16x256xf32>
    %61 = arith.addf %53, %60 : vector<16x256xf32>
    %c3_56 = arith.constant 3 : index
    %c0_57 = arith.constant 0 : index
    %c0_58 = arith.constant 0 : index
    %62 = vector.load %arg5[%c3_56, %c0_57, %c0_58] : memref<4x16x32xbf16, #tpu.memory_space<vmem>>, vector<1x16x32xbf16>
    %63 = vector.shape_cast %62 : vector<1x16x32xbf16> to vector<16x32xbf16>
    %cst_59 = arith.constant dense<0.000000e+00> : vector<16x256xf32>
    %64 = tpu.matmul %63, %38, %cst_59 {dimension_numbers = #tpu.dot_dimension_numbers<[1], [0], [0], [1], [0, 0, 1, 1], [], []>} : vector<16x32xbf16>, vector<32x256xbf16>, vector<16x256xf32> -> vector<16x256xf32>
    %65 = arith.truncf %64 : vector<16x256xf32> to vector<16x256xbf16>
    %c3_60 = arith.constant 3 : index
    %c0_61 = arith.constant 0 : index
    %c0_62 = arith.constant 0 : index
    %66 = vector.load %arg6[%c3_60, %c0_61, %c0_62] : memref<4x256x256xbf16, #tpu.memory_space<vmem>>, vector<1x256x256xbf16>
    %67 = vector.shape_cast %66 : vector<1x256x256xbf16> to vector<256x256xbf16>
    %cst_63 = arith.constant dense<0.000000e+00> : vector<16x256xf32>
    %68 = tpu.matmul %65, %67, %cst_63 {dimension_numbers = #tpu.dot_dimension_numbers<[1], [0], [0], [1], [0, 0, 1, 1], [], []>} : vector<16x256xbf16>, vector<256x256xbf16>, vector<16x256xf32> -> vector<16x256xf32>
    %69 = arith.addf %61, %68 : vector<16x256xf32>
    %c0_64 = arith.constant 0 : index
    %c0_65 = arith.constant 0 : index
    %70 = vector.load %arg7[%c0_64, %c0_65] : memref<1x256xf32, #tpu.memory_space<vmem>>, vector<1x256xf32>
    %71 = vector.broadcast %70 : vector<1x256xf32> to vector<16x256xf32>
    %72 = arith.addf %69, %71 : vector<16x256xf32>
    %cst_66 = arith.constant 0.000000e+00 : f32
    %73 = vector.broadcast %cst_66 : f32 to vector<16x256xf32>
    %74 = arith.maximumf %72, %73 : vector<16x256xf32>
    %75 = arith.truncf %74 : vector<16x256xf32> to vector<16x256xbf16>
    %c0_67 = arith.constant 0 : index
    %c0_68 = arith.constant 0 : index
    %c0_69 = arith.constant 0 : index
    %76 = vector.load %arg8[%c0_67, %c0_68, %c0_69] : memref<4x8x16xbf16, #tpu.memory_space<vmem>>, vector<1x8x16xbf16>
    %77 = vector.shape_cast %76 : vector<1x8x16xbf16> to vector<8x16xbf16>
    %cst_70 = arith.constant dense<0.000000e+00> : vector<8x256xf32>
    %78 = tpu.matmul %77, %75, %cst_70 {dimension_numbers = #tpu.dot_dimension_numbers<[1], [0], [0], [1], [0, 0, 1, 1], [], []>} : vector<8x16xbf16>, vector<16x256xbf16>, vector<8x256xf32> -> vector<8x256xf32>
    %79 = arith.truncf %78 : vector<8x256xf32> to vector<8x256xbf16>
    %c0_71 = arith.constant 0 : index
    %c0_72 = arith.constant 0 : index
    %c0_73 = arith.constant 0 : index
    %80 = vector.load %arg9[%c0_71, %c0_72, %c0_73] : memref<4x256x256xbf16, #tpu.memory_space<vmem>>, vector<1x256x256xbf16>
    %81 = vector.shape_cast %80 : vector<1x256x256xbf16> to vector<256x256xbf16>
    %cst_74 = arith.constant dense<0.000000e+00> : vector<8x256xf32>
    %82 = tpu.matmul %79, %81, %cst_74 {dimension_numbers = #tpu.dot_dimension_numbers<[1], [0], [0], [1], [0, 0, 1, 1], [], []>} : vector<8x256xbf16>, vector<256x256xbf16>, vector<8x256xf32> -> vector<8x256xf32>
    %c1_75 = arith.constant 1 : index
    %c0_76 = arith.constant 0 : index
    %c0_77 = arith.constant 0 : index
    %83 = vector.load %arg8[%c1_75, %c0_76, %c0_77] : memref<4x8x16xbf16, #tpu.memory_space<vmem>>, vector<1x8x16xbf16>
    %84 = vector.shape_cast %83 : vector<1x8x16xbf16> to vector<8x16xbf16>
    %cst_78 = arith.constant dense<0.000000e+00> : vector<8x256xf32>
    %85 = tpu.matmul %84, %75, %cst_78 {dimension_numbers = #tpu.dot_dimension_numbers<[1], [0], [0], [1], [0, 0, 1, 1], [], []>} : vector<8x16xbf16>, vector<16x256xbf16>, vector<8x256xf32> -> vector<8x256xf32>
    %86 = arith.truncf %85 : vector<8x256xf32> to vector<8x256xbf16>
    %c1_79 = arith.constant 1 : index
    %c0_80 = arith.constant 0 : index
    %c0_81 = arith.constant 0 : index
    %87 = vector.load %arg9[%c1_79, %c0_80, %c0_81] : memref<4x256x256xbf16, #tpu.memory_space<vmem>>, vector<1x256x256xbf16>
    %88 = vector.shape_cast %87 : vector<1x256x256xbf16> to vector<256x256xbf16>
    %cst_82 = arith.constant dense<0.000000e+00> : vector<8x256xf32>
    %89 = tpu.matmul %86, %88, %cst_82 {dimension_numbers = #tpu.dot_dimension_numbers<[1], [0], [0], [1], [0, 0, 1, 1], [], []>} : vector<8x256xbf16>, vector<256x256xbf16>, vector<8x256xf32> -> vector<8x256xf32>
    %90 = arith.addf %82, %89 : vector<8x256xf32>
    %c2_83 = arith.constant 2 : index
    %c0_84 = arith.constant 0 : index
    %c0_85 = arith.constant 0 : index
    %91 = vector.load %arg8[%c2_83, %c0_84, %c0_85] : memref<4x8x16xbf16, #tpu.memory_space<vmem>>, vector<1x8x16xbf16>
    %92 = vector.shape_cast %91 : vector<1x8x16xbf16> to vector<8x16xbf16>
    %cst_86 = arith.constant dense<0.000000e+00> : vector<8x256xf32>
    %93 = tpu.matmul %92, %75, %cst_86 {dimension_numbers = #tpu.dot_dimension_numbers<[1], [0], [0], [1], [0, 0, 1, 1], [], []>} : vector<8x16xbf16>, vector<16x256xbf16>, vector<8x256xf32> -> vector<8x256xf32>
    %94 = arith.truncf %93 : vector<8x256xf32> to vector<8x256xbf16>
    %c2_87 = arith.constant 2 : index
    %c0_88 = arith.constant 0 : index
    %c0_89 = arith.constant 0 : index
    %95 = vector.load %arg9[%c2_87, %c0_88, %c0_89] : memref<4x256x256xbf16, #tpu.memory_space<vmem>>, vector<1x256x256xbf16>
    %96 = vector.shape_cast %95 : vector<1x256x256xbf16> to vector<256x256xbf16>
    %cst_90 = arith.constant dense<0.000000e+00> : vector<8x256xf32>
    %97 = tpu.matmul %94, %96, %cst_90 {dimension_numbers = #tpu.dot_dimension_numbers<[1], [0], [0], [1], [0, 0, 1, 1], [], []>} : vector<8x256xbf16>, vector<256x256xbf16>, vector<8x256xf32> -> vector<8x256xf32>
    %98 = arith.addf %90, %97 : vector<8x256xf32>
    %c3_91 = arith.constant 3 : index
    %c0_92 = arith.constant 0 : index
    %c0_93 = arith.constant 0 : index
    %99 = vector.load %arg8[%c3_91, %c0_92, %c0_93] : memref<4x8x16xbf16, #tpu.memory_space<vmem>>, vector<1x8x16xbf16>
    %100 = vector.shape_cast %99 : vector<1x8x16xbf16> to vector<8x16xbf16>
    %cst_94 = arith.constant dense<0.000000e+00> : vector<8x256xf32>
    %101 = tpu.matmul %100, %75, %cst_94 {dimension_numbers = #tpu.dot_dimension_numbers<[1], [0], [0], [1], [0, 0, 1, 1], [], []>} : vector<8x16xbf16>, vector<16x256xbf16>, vector<8x256xf32> -> vector<8x256xf32>
    %102 = arith.truncf %101 : vector<8x256xf32> to vector<8x256xbf16>
    %c3_95 = arith.constant 3 : index
    %c0_96 = arith.constant 0 : index
    %c0_97 = arith.constant 0 : index
    %103 = vector.load %arg9[%c3_95, %c0_96, %c0_97] : memref<4x256x256xbf16, #tpu.memory_space<vmem>>, vector<1x256x256xbf16>
    %104 = vector.shape_cast %103 : vector<1x256x256xbf16> to vector<256x256xbf16>
    %cst_98 = arith.constant dense<0.000000e+00> : vector<8x256xf32>
    %105 = tpu.matmul %102, %104, %cst_98 {dimension_numbers = #tpu.dot_dimension_numbers<[1], [0], [0], [1], [0, 0, 1, 1], [], []>} : vector<8x256xbf16>, vector<256x256xbf16>, vector<8x256xf32> -> vector<8x256xf32>
    %106 = arith.addf %98, %105 : vector<8x256xf32>
    %c0_99 = arith.constant 0 : index
    %c0_100 = arith.constant 0 : index
    %107 = vector.load %arg10[%c0_99, %c0_100] : memref<1x256xf32, #tpu.memory_space<vmem>>, vector<1x256xf32>
    %108 = vector.broadcast %107 : vector<1x256xf32> to vector<8x256xf32>
    %109 = arith.addf %106, %108 : vector<8x256xf32>
    %cst_101 = arith.constant 0.000000e+00 : f32
    %110 = vector.broadcast %cst_101 : f32 to vector<8x256xf32>
    %111 = arith.maximumf %109, %110 : vector<8x256xf32>
    %112 = arith.truncf %111 : vector<8x256xf32> to vector<8x256xbf16>
    %c0_102 = arith.constant 0 : index
    %c0_103 = arith.constant 0 : index
    %c0_104 = arith.constant 0 : index
    %113 = vector.load %arg11[%c0_102, %c0_103, %c0_104] : memref<4x4x8xbf16, #tpu.memory_space<vmem>>, vector<1x4x8xbf16>
    %114 = vector.shape_cast %113 : vector<1x4x8xbf16> to vector<4x8xbf16>
    %cst_105 = arith.constant dense<0.000000e+00> : vector<4x256xf32>
    %115 = tpu.matmul %114, %112, %cst_105 {dimension_numbers = #tpu.dot_dimension_numbers<[1], [0], [0], [1], [0, 0, 1, 1], [], []>} : vector<4x8xbf16>, vector<8x256xbf16>, vector<4x256xf32> -> vector<4x256xf32>
    %116 = arith.truncf %115 : vector<4x256xf32> to vector<4x256xbf16>
    %c0_106 = arith.constant 0 : index
    %c0_107 = arith.constant 0 : index
    %c0_108 = arith.constant 0 : index
    %117 = vector.load %arg12[%c0_106, %c0_107, %c0_108] : memref<4x256x256xbf16, #tpu.memory_space<vmem>>, vector<1x256x256xbf16>
    %118 = vector.shape_cast %117 : vector<1x256x256xbf16> to vector<256x256xbf16>
    %cst_109 = arith.constant dense<0.000000e+00> : vector<4x256xf32>
    %119 = tpu.matmul %116, %118, %cst_109 {dimension_numbers = #tpu.dot_dimension_numbers<[1], [0], [0], [1], [0, 0, 1, 1], [], []>} : vector<4x256xbf16>, vector<256x256xbf16>, vector<4x256xf32> -> vector<4x256xf32>
    %c1_110 = arith.constant 1 : index
    %c0_111 = arith.constant 0 : index
    %c0_112 = arith.constant 0 : index
    %120 = vector.load %arg11[%c1_110, %c0_111, %c0_112] : memref<4x4x8xbf16, #tpu.memory_space<vmem>>, vector<1x4x8xbf16>
    %121 = vector.shape_cast %120 : vector<1x4x8xbf16> to vector<4x8xbf16>
    %cst_113 = arith.constant dense<0.000000e+00> : vector<4x256xf32>
    %122 = tpu.matmul %121, %112, %cst_113 {dimension_numbers = #tpu.dot_dimension_numbers<[1], [0], [0], [1], [0, 0, 1, 1], [], []>} : vector<4x8xbf16>, vector<8x256xbf16>, vector<4x256xf32> -> vector<4x256xf32>
    %123 = arith.truncf %122 : vector<4x256xf32> to vector<4x256xbf16>
    %c1_114 = arith.constant 1 : index
    %c0_115 = arith.constant 0 : index
    %c0_116 = arith.constant 0 : index
    %124 = vector.load %arg12[%c1_114, %c0_115, %c0_116] : memref<4x256x256xbf16, #tpu.memory_space<vmem>>, vector<1x256x256xbf16>
    %125 = vector.shape_cast %124 : vector<1x256x256xbf16> to vector<256x256xbf16>
    %cst_117 = arith.constant dense<0.000000e+00> : vector<4x256xf32>
    %126 = tpu.matmul %123, %125, %cst_117 {dimension_numbers = #tpu.dot_dimension_numbers<[1], [0], [0], [1], [0, 0, 1, 1], [], []>} : vector<4x256xbf16>, vector<256x256xbf16>, vector<4x256xf32> -> vector<4x256xf32>
    %127 = arith.addf %119, %126 : vector<4x256xf32>
    %c2_118 = arith.constant 2 : index
    %c0_119 = arith.constant 0 : index
    %c0_120 = arith.constant 0 : index
    %128 = vector.load %arg11[%c2_118, %c0_119, %c0_120] : memref<4x4x8xbf16, #tpu.memory_space<vmem>>, vector<1x4x8xbf16>
    %129 = vector.shape_cast %128 : vector<1x4x8xbf16> to vector<4x8xbf16>
    %cst_121 = arith.constant dense<0.000000e+00> : vector<4x256xf32>
    %130 = tpu.matmul %129, %112, %cst_121 {dimension_numbers = #tpu.dot_dimension_numbers<[1], [0], [0], [1], [0, 0, 1, 1], [], []>} : vector<4x8xbf16>, vector<8x256xbf16>, vector<4x256xf32> -> vector<4x256xf32>
    %131 = arith.truncf %130 : vector<4x256xf32> to vector<4x256xbf16>
    %c2_122 = arith.constant 2 : index
    %c0_123 = arith.constant 0 : index
    %c0_124 = arith.constant 0 : index
    %132 = vector.load %arg12[%c2_122, %c0_123, %c0_124] : memref<4x256x256xbf16, #tpu.memory_space<vmem>>, vector<1x256x256xbf16>
    %133 = vector.shape_cast %132 : vector<1x256x256xbf16> to vector<256x256xbf16>
    %cst_125 = arith.constant dense<0.000000e+00> : vector<4x256xf32>
    %134 = tpu.matmul %131, %133, %cst_125 {dimension_numbers = #tpu.dot_dimension_numbers<[1], [0], [0], [1], [0, 0, 1, 1], [], []>} : vector<4x256xbf16>, vector<256x256xbf16>, vector<4x256xf32> -> vector<4x256xf32>
    %135 = arith.addf %127, %134 : vector<4x256xf32>
    %c3_126 = arith.constant 3 : index
    %c0_127 = arith.constant 0 : index
    %c0_128 = arith.constant 0 : index
    %136 = vector.load %arg11[%c3_126, %c0_127, %c0_128] : memref<4x4x8xbf16, #tpu.memory_space<vmem>>, vector<1x4x8xbf16>
    %137 = vector.shape_cast %136 : vector<1x4x8xbf16> to vector<4x8xbf16>
    %cst_129 = arith.constant dense<0.000000e+00> : vector<4x256xf32>
    %138 = tpu.matmul %137, %112, %cst_129 {dimension_numbers = #tpu.dot_dimension_numbers<[1], [0], [0], [1], [0, 0, 1, 1], [], []>} : vector<4x8xbf16>, vector<8x256xbf16>, vector<4x256xf32> -> vector<4x256xf32>
    %139 = arith.truncf %138 : vector<4x256xf32> to vector<4x256xbf16>
    %c3_130 = arith.constant 3 : index
    %c0_131 = arith.constant 0 : index
    %c0_132 = arith.constant 0 : index
    %140 = vector.load %arg12[%c3_130, %c0_131, %c0_132] : memref<4x256x256xbf16, #tpu.memory_space<vmem>>, vector<1x256x256xbf16>
    %141 = vector.shape_cast %140 : vector<1x256x256xbf16> to vector<256x256xbf16>
    %cst_133 = arith.constant dense<0.000000e+00> : vector<4x256xf32>
    %142 = tpu.matmul %139, %141, %cst_133 {dimension_numbers = #tpu.dot_dimension_numbers<[1], [0], [0], [1], [0, 0, 1, 1], [], []>} : vector<4x256xbf16>, vector<256x256xbf16>, vector<4x256xf32> -> vector<4x256xf32>
    %143 = arith.addf %135, %142 : vector<4x256xf32>
    %c0_134 = arith.constant 0 : index
    %c0_135 = arith.constant 0 : index
    %144 = vector.load %arg13[%c0_134, %c0_135] : memref<1x256xf32, #tpu.memory_space<vmem>>, vector<1x256xf32>
    %145 = vector.broadcast %144 : vector<1x256xf32> to vector<4x256xf32>
    %146 = arith.addf %143, %145 : vector<4x256xf32>
    %cst_136 = arith.constant 0.000000e+00 : f32
    %147 = vector.broadcast %cst_136 : f32 to vector<4x256xf32>
    %148 = arith.maximumf %146, %147 : vector<4x256xf32>
    %149 = arith.truncf %148 : vector<4x256xf32> to vector<4x256xbf16>
    %c0_137 = arith.constant 0 : index
    %c0_138 = arith.constant 0 : index
    %c0_139 = arith.constant 0 : index
    %150 = vector.load %arg14[%c0_137, %c0_138, %c0_139] : memref<4x8x4xbf16, #tpu.memory_space<vmem>>, vector<1x8x4xbf16>
    %151 = vector.shape_cast %150 : vector<1x8x4xbf16> to vector<8x4xbf16>
    %cst_140 = arith.constant dense<0.000000e+00> : vector<8x256xf32>
    %152 = tpu.matmul %151, %149, %cst_140 {dimension_numbers = #tpu.dot_dimension_numbers<[1], [0], [0], [1], [0, 0, 1, 1], [], []>} : vector<8x4xbf16>, vector<4x256xbf16>, vector<8x256xf32> -> vector<8x256xf32>
    %153 = arith.truncf %152 : vector<8x256xf32> to vector<8x256xbf16>
    %c0_141 = arith.constant 0 : index
    %c0_142 = arith.constant 0 : index
    %c0_143 = arith.constant 0 : index
    %154 = vector.load %arg15[%c0_141, %c0_142, %c0_143] : memref<4x256x256xbf16, #tpu.memory_space<vmem>>, vector<1x256x256xbf16>
    %155 = vector.shape_cast %154 : vector<1x256x256xbf16> to vector<256x256xbf16>
    %cst_144 = arith.constant dense<0.000000e+00> : vector<8x256xf32>
    %156 = tpu.matmul %153, %155, %cst_144 {dimension_numbers = #tpu.dot_dimension_numbers<[1], [0], [0], [1], [0, 0, 1, 1], [], []>} : vector<8x256xbf16>, vector<256x256xbf16>, vector<8x256xf32> -> vector<8x256xf32>
    %c1_145 = arith.constant 1 : index
    %c0_146 = arith.constant 0 : index
    %c0_147 = arith.constant 0 : index
    %157 = vector.load %arg14[%c1_145, %c0_146, %c0_147] : memref<4x8x4xbf16, #tpu.memory_space<vmem>>, vector<1x8x4xbf16>
    %158 = vector.shape_cast %157 : vector<1x8x4xbf16> to vector<8x4xbf16>
    %cst_148 = arith.constant dense<0.000000e+00> : vector<8x256xf32>
    %159 = tpu.matmul %158, %149, %cst_148 {dimension_numbers = #tpu.dot_dimension_numbers<[1], [0], [0], [1], [0, 0, 1, 1], [], []>} : vector<8x4xbf16>, vector<4x256xbf16>, vector<8x256xf32> -> vector<8x256xf32>
    %160 = arith.truncf %159 : vector<8x256xf32> to vector<8x256xbf16>
    %c1_149 = arith.constant 1 : index
    %c0_150 = arith.constant 0 : index
    %c0_151 = arith.constant 0 : index
    %161 = vector.load %arg15[%c1_149, %c0_150, %c0_151] : memref<4x256x256xbf16, #tpu.memory_space<vmem>>, vector<1x256x256xbf16>
    %162 = vector.shape_cast %161 : vector<1x256x256xbf16> to vector<256x256xbf16>
    %cst_152 = arith.constant dense<0.000000e+00> : vector<8x256xf32>
    %163 = tpu.matmul %160, %162, %cst_152 {dimension_numbers = #tpu.dot_dimension_numbers<[1], [0], [0], [1], [0, 0, 1, 1], [], []>} : vector<8x256xbf16>, vector<256x256xbf16>, vector<8x256xf32> -> vector<8x256xf32>
    %164 = arith.addf %156, %163 : vector<8x256xf32>
    %c2_153 = arith.constant 2 : index
    %c0_154 = arith.constant 0 : index
    %c0_155 = arith.constant 0 : index
    %165 = vector.load %arg14[%c2_153, %c0_154, %c0_155] : memref<4x8x4xbf16, #tpu.memory_space<vmem>>, vector<1x8x4xbf16>
    %166 = vector.shape_cast %165 : vector<1x8x4xbf16> to vector<8x4xbf16>
    %cst_156 = arith.constant dense<0.000000e+00> : vector<8x256xf32>
    %167 = tpu.matmul %166, %149, %cst_156 {dimension_numbers = #tpu.dot_dimension_numbers<[1], [0], [0], [1], [0, 0, 1, 1], [], []>} : vector<8x4xbf16>, vector<4x256xbf16>, vector<8x256xf32> -> vector<8x256xf32>
    %168 = arith.truncf %167 : vector<8x256xf32> to vector<8x256xbf16>
    %c2_157 = arith.constant 2 : index
    %c0_158 = arith.constant 0 : index
    %c0_159 = arith.constant 0 : index
    %169 = vector.load %arg15[%c2_157, %c0_158, %c0_159] : memref<4x256x256xbf16, #tpu.memory_space<vmem>>, vector<1x256x256xbf16>
    %170 = vector.shape_cast %169 : vector<1x256x256xbf16> to vector<256x256xbf16>
    %cst_160 = arith.constant dense<0.000000e+00> : vector<8x256xf32>
    %171 = tpu.matmul %168, %170, %cst_160 {dimension_numbers = #tpu.dot_dimension_numbers<[1], [0], [0], [1], [0, 0, 1, 1], [], []>} : vector<8x256xbf16>, vector<256x256xbf16>, vector<8x256xf32> -> vector<8x256xf32>
    %172 = arith.addf %164, %171 : vector<8x256xf32>
    %c3_161 = arith.constant 3 : index
    %c0_162 = arith.constant 0 : index
    %c0_163 = arith.constant 0 : index
    %173 = vector.load %arg14[%c3_161, %c0_162, %c0_163] : memref<4x8x4xbf16, #tpu.memory_space<vmem>>, vector<1x8x4xbf16>
    %174 = vector.shape_cast %173 : vector<1x8x4xbf16> to vector<8x4xbf16>
    %cst_164 = arith.constant dense<0.000000e+00> : vector<8x256xf32>
    %175 = tpu.matmul %174, %149, %cst_164 {dimension_numbers = #tpu.dot_dimension_numbers<[1], [0], [0], [1], [0, 0, 1, 1], [], []>} : vector<8x4xbf16>, vector<4x256xbf16>, vector<8x256xf32> -> vector<8x256xf32>
    %176 = arith.truncf %175 : vector<8x256xf32> to vector<8x256xbf16>
    %c3_165 = arith.constant 3 : index
    %c0_166 = arith.constant 0 : index
    %c0_167 = arith.constant 0 : index
    %177 = vector.load %arg15[%c3_165, %c0_166, %c0_167] : memref<4x256x256xbf16, #tpu.memory_space<vmem>>, vector<1x256x256xbf16>
    %178 = vector.shape_cast %177 : vector<1x256x256xbf16> to vector<256x256xbf16>
    %cst_168 = arith.constant dense<0.000000e+00> : vector<8x256xf32>
    %179 = tpu.matmul %176, %178, %cst_168 {dimension_numbers = #tpu.dot_dimension_numbers<[1], [0], [0], [1], [0, 0, 1, 1], [], []>} : vector<8x256xbf16>, vector<256x256xbf16>, vector<8x256xf32> -> vector<8x256xf32>
    %180 = arith.addf %172, %179 : vector<8x256xf32>
    %c0_169 = arith.constant 0 : index
    %c0_170 = arith.constant 0 : index
    %181 = vector.load %arg16[%c0_169, %c0_170] : memref<1x256xf32, #tpu.memory_space<vmem>>, vector<1x256xf32>
    %182 = vector.broadcast %181 : vector<1x256xf32> to vector<8x256xf32>
    %183 = arith.addf %180, %182 : vector<8x256xf32>
    %cst_171 = arith.constant 0.000000e+00 : f32
    %184 = vector.broadcast %cst_171 : f32 to vector<8x256xf32>
    %185 = arith.maximumf %183, %184 : vector<8x256xf32>
    %186 = arith.truncf %185 : vector<8x256xf32> to vector<8x256xbf16>
    %c0_172 = arith.constant 0 : index
    %c0_173 = arith.constant 0 : index
    %c0_174 = arith.constant 0 : index
    %187 = vector.load %arg17[%c0_172, %c0_173, %c0_174] : memref<4x16x8xbf16, #tpu.memory_space<vmem>>, vector<1x16x8xbf16>
    %188 = vector.shape_cast %187 : vector<1x16x8xbf16> to vector<16x8xbf16>
    %cst_175 = arith.constant dense<0.000000e+00> : vector<16x256xf32>
    %189 = tpu.matmul %188, %186, %cst_175 {dimension_numbers = #tpu.dot_dimension_numbers<[1], [0], [0], [1], [0, 0, 1, 1], [], []>} : vector<16x8xbf16>, vector<8x256xbf16>, vector<16x256xf32> -> vector<16x256xf32>
    %190 = arith.truncf %189 : vector<16x256xf32> to vector<16x256xbf16>
    %c0_176 = arith.constant 0 : index
    %c0_177 = arith.constant 0 : index
    %c0_178 = arith.constant 0 : index
    %191 = vector.load %arg18[%c0_176, %c0_177, %c0_178] : memref<4x256x256xbf16, #tpu.memory_space<vmem>>, vector<1x256x256xbf16>
    %192 = vector.shape_cast %191 : vector<1x256x256xbf16> to vector<256x256xbf16>
    %cst_179 = arith.constant dense<0.000000e+00> : vector<16x256xf32>
    %193 = tpu.matmul %190, %192, %cst_179 {dimension_numbers = #tpu.dot_dimension_numbers<[1], [0], [0], [1], [0, 0, 1, 1], [], []>} : vector<16x256xbf16>, vector<256x256xbf16>, vector<16x256xf32> -> vector<16x256xf32>
    %c1_180 = arith.constant 1 : index
    %c0_181 = arith.constant 0 : index
    %c0_182 = arith.constant 0 : index
    %194 = vector.load %arg17[%c1_180, %c0_181, %c0_182] : memref<4x16x8xbf16, #tpu.memory_space<vmem>>, vector<1x16x8xbf16>
    %195 = vector.shape_cast %194 : vector<1x16x8xbf16> to vector<16x8xbf16>
    %cst_183 = arith.constant dense<0.000000e+00> : vector<16x256xf32>
    %196 = tpu.matmul %195, %186, %cst_183 {dimension_numbers = #tpu.dot_dimension_numbers<[1], [0], [0], [1], [0, 0, 1, 1], [], []>} : vector<16x8xbf16>, vector<8x256xbf16>, vector<16x256xf32> -> vector<16x256xf32>
    %197 = arith.truncf %196 : vector<16x256xf32> to vector<16x256xbf16>
    %c1_184 = arith.constant 1 : index
    %c0_185 = arith.constant 0 : index
    %c0_186 = arith.constant 0 : index
    %198 = vector.load %arg18[%c1_184, %c0_185, %c0_186] : memref<4x256x256xbf16, #tpu.memory_space<vmem>>, vector<1x256x256xbf16>
    %199 = vector.shape_cast %198 : vector<1x256x256xbf16> to vector<256x256xbf16>
    %cst_187 = arith.constant dense<0.000000e+00> : vector<16x256xf32>
    %200 = tpu.matmul %197, %199, %cst_187 {dimension_numbers = #tpu.dot_dimension_numbers<[1], [0], [0], [1], [0, 0, 1, 1], [], []>} : vector<16x256xbf16>, vector<256x256xbf16>, vector<16x256xf32> -> vector<16x256xf32>
    %201 = arith.addf %193, %200 : vector<16x256xf32>
    %c2_188 = arith.constant 2 : index
    %c0_189 = arith.constant 0 : index
    %c0_190 = arith.constant 0 : index
    %202 = vector.load %arg17[%c2_188, %c0_189, %c0_190] : memref<4x16x8xbf16, #tpu.memory_space<vmem>>, vector<1x16x8xbf16>
    %203 = vector.shape_cast %202 : vector<1x16x8xbf16> to vector<16x8xbf16>
    %cst_191 = arith.constant dense<0.000000e+00> : vector<16x256xf32>
    %204 = tpu.matmul %203, %186, %cst_191 {dimension_numbers = #tpu.dot_dimension_numbers<[1], [0], [0], [1], [0, 0, 1, 1], [], []>} : vector<16x8xbf16>, vector<8x256xbf16>, vector<16x256xf32> -> vector<16x256xf32>
    %205 = arith.truncf %204 : vector<16x256xf32> to vector<16x256xbf16>
    %c2_192 = arith.constant 2 : index
    %c0_193 = arith.constant 0 : index
    %c0_194 = arith.constant 0 : index
    %206 = vector.load %arg18[%c2_192, %c0_193, %c0_194] : memref<4x256x256xbf16, #tpu.memory_space<vmem>>, vector<1x256x256xbf16>
    %207 = vector.shape_cast %206 : vector<1x256x256xbf16> to vector<256x256xbf16>
    %cst_195 = arith.constant dense<0.000000e+00> : vector<16x256xf32>
    %208 = tpu.matmul %205, %207, %cst_195 {dimension_numbers = #tpu.dot_dimension_numbers<[1], [0], [0], [1], [0, 0, 1, 1], [], []>} : vector<16x256xbf16>, vector<256x256xbf16>, vector<16x256xf32> -> vector<16x256xf32>
    %209 = arith.addf %201, %208 : vector<16x256xf32>
    %c3_196 = arith.constant 3 : index
    %c0_197 = arith.constant 0 : index
    %c0_198 = arith.constant 0 : index
    %210 = vector.load %arg17[%c3_196, %c0_197, %c0_198] : memref<4x16x8xbf16, #tpu.memory_space<vmem>>, vector<1x16x8xbf16>
    %211 = vector.shape_cast %210 : vector<1x16x8xbf16> to vector<16x8xbf16>
    %cst_199 = arith.constant dense<0.000000e+00> : vector<16x256xf32>
    %212 = tpu.matmul %211, %186, %cst_199 {dimension_numbers = #tpu.dot_dimension_numbers<[1], [0], [0], [1], [0, 0, 1, 1], [], []>} : vector<16x8xbf16>, vector<8x256xbf16>, vector<16x256xf32> -> vector<16x256xf32>
    %213 = arith.truncf %212 : vector<16x256xf32> to vector<16x256xbf16>
    %c3_200 = arith.constant 3 : index
    %c0_201 = arith.constant 0 : index
    %c0_202 = arith.constant 0 : index
    %214 = vector.load %arg18[%c3_200, %c0_201, %c0_202] : memref<4x256x256xbf16, #tpu.memory_space<vmem>>, vector<1x256x256xbf16>
    %215 = vector.shape_cast %214 : vector<1x256x256xbf16> to vector<256x256xbf16>
    %cst_203 = arith.constant dense<0.000000e+00> : vector<16x256xf32>
    %216 = tpu.matmul %213, %215, %cst_203 {dimension_numbers = #tpu.dot_dimension_numbers<[1], [0], [0], [1], [0, 0, 1, 1], [], []>} : vector<16x256xbf16>, vector<256x256xbf16>, vector<16x256xf32> -> vector<16x256xf32>
    %217 = arith.addf %209, %216 : vector<16x256xf32>
    %c0_204 = arith.constant 0 : index
    %c0_205 = arith.constant 0 : index
    %218 = vector.load %arg19[%c0_204, %c0_205] : memref<1x256xf32, #tpu.memory_space<vmem>>, vector<1x256xf32>
    %219 = vector.broadcast %218 : vector<1x256xf32> to vector<16x256xf32>
    %220 = arith.addf %217, %219 : vector<16x256xf32>
    %cst_206 = arith.constant 0.000000e+00 : f32
    %221 = vector.broadcast %cst_206 : f32 to vector<16x256xf32>
    %222 = arith.maximumf %220, %221 : vector<16x256xf32>
    %223 = arith.truncf %222 : vector<16x256xf32> to vector<16x256xbf16>
    %c0_207 = arith.constant 0 : index
    %c0_208 = arith.constant 0 : index
    %c0_209 = arith.constant 0 : index
    %224 = vector.load %arg20[%c0_207, %c0_208, %c0_209] : memref<4x32x16xbf16, #tpu.memory_space<vmem>>, vector<1x32x16xbf16>
    %225 = vector.shape_cast %224 : vector<1x32x16xbf16> to vector<32x16xbf16>
    %cst_210 = arith.constant dense<0.000000e+00> : vector<32x256xf32>
    %226 = tpu.matmul %225, %223, %cst_210 {dimension_numbers = #tpu.dot_dimension_numbers<[1], [0], [0], [1], [0, 0, 1, 1], [], []>} : vector<32x16xbf16>, vector<16x256xbf16>, vector<32x256xf32> -> vector<32x256xf32>
    %227 = arith.truncf %226 : vector<32x256xf32> to vector<32x256xbf16>
    %c0_211 = arith.constant 0 : index
    %c0_212 = arith.constant 0 : index
    %c0_213 = arith.constant 0 : index
    %228 = vector.load %arg21[%c0_211, %c0_212, %c0_213] : memref<4x256x256xbf16, #tpu.memory_space<vmem>>, vector<1x256x256xbf16>
    %229 = vector.shape_cast %228 : vector<1x256x256xbf16> to vector<256x256xbf16>
    %cst_214 = arith.constant dense<0.000000e+00> : vector<32x256xf32>
    %230 = tpu.matmul %227, %229, %cst_214 {dimension_numbers = #tpu.dot_dimension_numbers<[1], [0], [0], [1], [0, 0, 1, 1], [], []>} : vector<32x256xbf16>, vector<256x256xbf16>, vector<32x256xf32> -> vector<32x256xf32>
    %c1_215 = arith.constant 1 : index
    %c0_216 = arith.constant 0 : index
    %c0_217 = arith.constant 0 : index
    %231 = vector.load %arg20[%c1_215, %c0_216, %c0_217] : memref<4x32x16xbf16, #tpu.memory_space<vmem>>, vector<1x32x16xbf16>
    %232 = vector.shape_cast %231 : vector<1x32x16xbf16> to vector<32x16xbf16>
    %cst_218 = arith.constant dense<0.000000e+00> : vector<32x256xf32>
    %233 = tpu.matmul %232, %223, %cst_218 {dimension_numbers = #tpu.dot_dimension_numbers<[1], [0], [0], [1], [0, 0, 1, 1], [], []>} : vector<32x16xbf16>, vector<16x256xbf16>, vector<32x256xf32> -> vector<32x256xf32>
    %234 = arith.truncf %233 : vector<32x256xf32> to vector<32x256xbf16>
    %c1_219 = arith.constant 1 : index
    %c0_220 = arith.constant 0 : index
    %c0_221 = arith.constant 0 : index
    %235 = vector.load %arg21[%c1_219, %c0_220, %c0_221] : memref<4x256x256xbf16, #tpu.memory_space<vmem>>, vector<1x256x256xbf16>
    %236 = vector.shape_cast %235 : vector<1x256x256xbf16> to vector<256x256xbf16>
    %cst_222 = arith.constant dense<0.000000e+00> : vector<32x256xf32>
    %237 = tpu.matmul %234, %236, %cst_222 {dimension_numbers = #tpu.dot_dimension_numbers<[1], [0], [0], [1], [0, 0, 1, 1], [], []>} : vector<32x256xbf16>, vector<256x256xbf16>, vector<32x256xf32> -> vector<32x256xf32>
    %238 = arith.addf %230, %237 : vector<32x256xf32>
    %c2_223 = arith.constant 2 : index
    %c0_224 = arith.constant 0 : index
    %c0_225 = arith.constant 0 : index
    %239 = vector.load %arg20[%c2_223, %c0_224, %c0_225] : memref<4x32x16xbf16, #tpu.memory_space<vmem>>, vector<1x32x16xbf16>
    %240 = vector.shape_cast %239 : vector<1x32x16xbf16> to vector<32x16xbf16>
    %cst_226 = arith.constant dense<0.000000e+00> : vector<32x256xf32>
    %241 = tpu.matmul %240, %223, %cst_226 {dimension_numbers = #tpu.dot_dimension_numbers<[1], [0], [0], [1], [0, 0, 1, 1], [], []>} : vector<32x16xbf16>, vector<16x256xbf16>, vector<32x256xf32> -> vector<32x256xf32>
    %242 = arith.truncf %241 : vector<32x256xf32> to vector<32x256xbf16>
    %c2_227 = arith.constant 2 : index
    %c0_228 = arith.constant 0 : index
    %c0_229 = arith.constant 0 : index
    %243 = vector.load %arg21[%c2_227, %c0_228, %c0_229] : memref<4x256x256xbf16, #tpu.memory_space<vmem>>, vector<1x256x256xbf16>
    %244 = vector.shape_cast %243 : vector<1x256x256xbf16> to vector<256x256xbf16>
    %cst_230 = arith.constant dense<0.000000e+00> : vector<32x256xf32>
    %245 = tpu.matmul %242, %244, %cst_230 {dimension_numbers = #tpu.dot_dimension_numbers<[1], [0], [0], [1], [0, 0, 1, 1], [], []>} : vector<32x256xbf16>, vector<256x256xbf16>, vector<32x256xf32> -> vector<32x256xf32>
    %246 = arith.addf %238, %245 : vector<32x256xf32>
    %c3_231 = arith.constant 3 : index
    %c0_232 = arith.constant 0 : index
    %c0_233 = arith.constant 0 : index
    %247 = vector.load %arg20[%c3_231, %c0_232, %c0_233] : memref<4x32x16xbf16, #tpu.memory_space<vmem>>, vector<1x32x16xbf16>
    %248 = vector.shape_cast %247 : vector<1x32x16xbf16> to vector<32x16xbf16>
    %cst_234 = arith.constant dense<0.000000e+00> : vector<32x256xf32>
    %249 = tpu.matmul %248, %223, %cst_234 {dimension_numbers = #tpu.dot_dimension_numbers<[1], [0], [0], [1], [0, 0, 1, 1], [], []>} : vector<32x16xbf16>, vector<16x256xbf16>, vector<32x256xf32> -> vector<32x256xf32>
    %250 = arith.truncf %249 : vector<32x256xf32> to vector<32x256xbf16>
    %c3_235 = arith.constant 3 : index
    %c0_236 = arith.constant 0 : index
    %c0_237 = arith.constant 0 : index
    %251 = vector.load %arg21[%c3_235, %c0_236, %c0_237] : memref<4x256x256xbf16, #tpu.memory_space<vmem>>, vector<1x256x256xbf16>
    %252 = vector.shape_cast %251 : vector<1x256x256xbf16> to vector<256x256xbf16>
    %cst_238 = arith.constant dense<0.000000e+00> : vector<32x256xf32>
    %253 = tpu.matmul %250, %252, %cst_238 {dimension_numbers = #tpu.dot_dimension_numbers<[1], [0], [0], [1], [0, 0, 1, 1], [], []>} : vector<32x256xbf16>, vector<256x256xbf16>, vector<32x256xf32> -> vector<32x256xf32>
    %254 = arith.addf %246, %253 : vector<32x256xf32>
    %c0_239 = arith.constant 0 : index
    %c0_240 = arith.constant 0 : index
    %255 = vector.load %arg22[%c0_239, %c0_240] : memref<1x256xf32, #tpu.memory_space<vmem>>, vector<1x256xf32>
    %256 = vector.broadcast %255 : vector<1x256xf32> to vector<32x256xf32>
    %257 = arith.addf %254, %256 : vector<32x256xf32>
    %cst_241 = arith.constant 0.000000e+00 : f32
    %258 = vector.broadcast %cst_241 : f32 to vector<32x256xf32>
    %259 = arith.maximumf %257, %258 : vector<32x256xf32>
    %260 = arith.truncf %259 : vector<32x256xf32> to vector<32x256xbf16>
    %c0_242 = arith.constant 0 : index
    %c0_243 = arith.constant 0 : index
    %c0_244 = arith.constant 0 : index
    %261 = vector.load %arg23[%c0_242, %c0_243, %c0_244] : memref<4x64x32xbf16, #tpu.memory_space<vmem>>, vector<1x64x32xbf16>
    %262 = vector.shape_cast %261 : vector<1x64x32xbf16> to vector<64x32xbf16>
    %cst_245 = arith.constant dense<0.000000e+00> : vector<64x256xf32>
    %263 = tpu.matmul %262, %260, %cst_245 {dimension_numbers = #tpu.dot_dimension_numbers<[1], [0], [0], [1], [0, 0, 1, 1], [], []>} : vector<64x32xbf16>, vector<32x256xbf16>, vector<64x256xf32> -> vector<64x256xf32>
    %264 = arith.truncf %263 : vector<64x256xf32> to vector<64x256xbf16>
    %c0_246 = arith.constant 0 : index
    %c0_247 = arith.constant 0 : index
    %c0_248 = arith.constant 0 : index
    %265 = vector.load %arg24[%c0_246, %c0_247, %c0_248] : memref<4x256x96xbf16, #tpu.memory_space<vmem>>, vector<1x256x96xbf16>
    %266 = vector.shape_cast %265 : vector<1x256x96xbf16> to vector<256x96xbf16>
    %cst_249 = arith.constant dense<0.000000e+00> : vector<64x96xf32>
    %267 = tpu.matmul %264, %266, %cst_249 {dimension_numbers = #tpu.dot_dimension_numbers<[1], [0], [0], [1], [0, 0, 1, 1], [], []>} : vector<64x256xbf16>, vector<256x96xbf16>, vector<64x96xf32> -> vector<64x96xf32>
    %c1_250 = arith.constant 1 : index
    %c0_251 = arith.constant 0 : index
    %c0_252 = arith.constant 0 : index
    %268 = vector.load %arg23[%c1_250, %c0_251, %c0_252] : memref<4x64x32xbf16, #tpu.memory_space<vmem>>, vector<1x64x32xbf16>
    %269 = vector.shape_cast %268 : vector<1x64x32xbf16> to vector<64x32xbf16>
    %cst_253 = arith.constant dense<0.000000e+00> : vector<64x256xf32>
    %270 = tpu.matmul %269, %260, %cst_253 {dimension_numbers = #tpu.dot_dimension_numbers<[1], [0], [0], [1], [0, 0, 1, 1], [], []>} : vector<64x32xbf16>, vector<32x256xbf16>, vector<64x256xf32> -> vector<64x256xf32>
    %271 = arith.truncf %270 : vector<64x256xf32> to vector<64x256xbf16>
    %c1_254 = arith.constant 1 : index
    %c0_255 = arith.constant 0 : index
    %c0_256 = arith.constant 0 : index
    %272 = vector.load %arg24[%c1_254, %c0_255, %c0_256] : memref<4x256x96xbf16, #tpu.memory_space<vmem>>, vector<1x256x96xbf16>
    %273 = vector.shape_cast %272 : vector<1x256x96xbf16> to vector<256x96xbf16>
    %cst_257 = arith.constant dense<0.000000e+00> : vector<64x96xf32>
    %274 = tpu.matmul %271, %273, %cst_257 {dimension_numbers = #tpu.dot_dimension_numbers<[1], [0], [0], [1], [0, 0, 1, 1], [], []>} : vector<64x256xbf16>, vector<256x96xbf16>, vector<64x96xf32> -> vector<64x96xf32>
    %275 = arith.addf %267, %274 : vector<64x96xf32>
    %c2_258 = arith.constant 2 : index
    %c0_259 = arith.constant 0 : index
    %c0_260 = arith.constant 0 : index
    %276 = vector.load %arg23[%c2_258, %c0_259, %c0_260] : memref<4x64x32xbf16, #tpu.memory_space<vmem>>, vector<1x64x32xbf16>
    %277 = vector.shape_cast %276 : vector<1x64x32xbf16> to vector<64x32xbf16>
    %cst_261 = arith.constant dense<0.000000e+00> : vector<64x256xf32>
    %278 = tpu.matmul %277, %260, %cst_261 {dimension_numbers = #tpu.dot_dimension_numbers<[1], [0], [0], [1], [0, 0, 1, 1], [], []>} : vector<64x32xbf16>, vector<32x256xbf16>, vector<64x256xf32> -> vector<64x256xf32>
    %279 = arith.truncf %278 : vector<64x256xf32> to vector<64x256xbf16>
    %c2_262 = arith.constant 2 : index
    %c0_263 = arith.constant 0 : index
    %c0_264 = arith.constant 0 : index
    %280 = vector.load %arg24[%c2_262, %c0_263, %c0_264] : memref<4x256x96xbf16, #tpu.memory_space<vmem>>, vector<1x256x96xbf16>
    %281 = vector.shape_cast %280 : vector<1x256x96xbf16> to vector<256x96xbf16>
    %cst_265 = arith.constant dense<0.000000e+00> : vector<64x96xf32>
    %282 = tpu.matmul %279, %281, %cst_265 {dimension_numbers = #tpu.dot_dimension_numbers<[1], [0], [0], [1], [0, 0, 1, 1], [], []>} : vector<64x256xbf16>, vector<256x96xbf16>, vector<64x96xf32> -> vector<64x96xf32>
    %283 = arith.addf %275, %282 : vector<64x96xf32>
    %c3_266 = arith.constant 3 : index
    %c0_267 = arith.constant 0 : index
    %c0_268 = arith.constant 0 : index
    %284 = vector.load %arg23[%c3_266, %c0_267, %c0_268] : memref<4x64x32xbf16, #tpu.memory_space<vmem>>, vector<1x64x32xbf16>
    %285 = vector.shape_cast %284 : vector<1x64x32xbf16> to vector<64x32xbf16>
    %cst_269 = arith.constant dense<0.000000e+00> : vector<64x256xf32>
    %286 = tpu.matmul %285, %260, %cst_269 {dimension_numbers = #tpu.dot_dimension_numbers<[1], [0], [0], [1], [0, 0, 1, 1], [], []>} : vector<64x32xbf16>, vector<32x256xbf16>, vector<64x256xf32> -> vector<64x256xf32>
    %287 = arith.truncf %286 : vector<64x256xf32> to vector<64x256xbf16>
    %c3_270 = arith.constant 3 : index
    %c0_271 = arith.constant 0 : index
    %c0_272 = arith.constant 0 : index
    %288 = vector.load %arg24[%c3_270, %c0_271, %c0_272] : memref<4x256x96xbf16, #tpu.memory_space<vmem>>, vector<1x256x96xbf16>
    %289 = vector.shape_cast %288 : vector<1x256x96xbf16> to vector<256x96xbf16>
    %cst_273 = arith.constant dense<0.000000e+00> : vector<64x96xf32>
    %290 = tpu.matmul %287, %289, %cst_273 {dimension_numbers = #tpu.dot_dimension_numbers<[1], [0], [0], [1], [0, 0, 1, 1], [], []>} : vector<64x256xbf16>, vector<256x96xbf16>, vector<64x96xf32> -> vector<64x96xf32>
    %291 = arith.addf %283, %290 : vector<64x96xf32>
    %c0_274 = arith.constant 0 : index
    %c0_275 = arith.constant 0 : index
    %292 = vector.load %arg25[%c0_274, %c0_275] : memref<1x96xf32, #tpu.memory_space<vmem>>, vector<1x96xf32>
    %293 = vector.broadcast %292 : vector<1x96xf32> to vector<64x96xf32>
    %294 = arith.addf %291, %293 : vector<64x96xf32>
    %295 = arith.negf %294 : vector<64x96xf32>
    %296 = math.exp %295 : vector<64x96xf32>
    %cst_276 = arith.constant 1.000000e+00 : f32
    %297 = vector.broadcast %cst_276 : f32 to vector<64x96xf32>
    %298 = arith.addf %297, %296 : vector<64x96xf32>
    %299 = arith.divf %297, %298 : vector<64x96xf32>
    %c0_277 = arith.constant 0 : index
    %c0_278 = arith.constant 0 : index
    %300 = vector.load %arg26[%c0_277, %c0_278] : memref<64x96xf32, #tpu.memory_space<vmem>>, vector<64x96xf32>
    tpu.vector_store %arg26[%c0_277, %c0_278], %299 {strides = array<i32>} : memref<64x96xf32, #tpu.memory_space<vmem>>, vector<64x96xf32>,
    return
  }
  func.func @transform_0(%arg0: i32) -> (i32, i32) {
    %c0_i32 = arith.constant 0 : i32
    %c0_i32_0 = arith.constant 0 : i32
    %c0_i32_1 = arith.constant 0 : i32
    return %c0_i32, %c0_i32_0 : i32, i32
  }
  func.func @transform_1(%arg0: i32) -> (i32, i32, i32) {
    %c0_i32 = arith.constant 0 : i32
    %c0_i32_0 = arith.constant 0 : i32
    %c0_i32_1 = arith.constant 0 : i32
    %c0_i32_2 = arith.constant 0 : i32
    return %c0_i32, %c0_i32_0, %c0_i32_1 : i32, i32, i32
  }
  func.func @transform_2(%arg0: i32) -> (i32, i32, i32) {
    %c0_i32 = arith.constant 0 : i32
    %c0_i32_0 = arith.constant 0 : i32
    %c0_i32_1 = arith.constant 0 : i32
    %c0_i32_2 = arith.constant 0 : i32
    return %c0_i32, %c0_i32_0, %c0_i32_1 : i32, i32, i32
  }
  func.func @transform_3(%arg0: i32) -> (i32, i32) {
    %c0_i32 = arith.constant 0 : i32
    %c0_i32_0 = arith.constant 0 : i32
    %c0_i32_1 = arith.constant 0 : i32
    return %c0_i32, %c0_i32_0 : i32, i32
  }
  func.func @transform_4(%arg0: i32) -> (i32, i32, i32) {
    %c0_i32 = arith.constant 0 : i32
    %c0_i32_0 = arith.constant 0 : i32
    %c0_i32_1 = arith.constant 0 : i32
    %c0_i32_2 = arith.constant 0 : i32
    return %c0_i32, %c0_i32_0, %c0_i32_1 : i32, i32, i32
  }
  func.func @transform_5(%arg0: i32) -> (i32, i32, i32) {
    %c0_i32 = arith.constant 0 : i32
    %c0_i32_0 = arith.constant 0 : i32
    %c0_i32_1 = arith.constant 0 : i32
    %c0_i32_2 = arith.constant 0 : i32
    return %c0_i32, %c0_i32_0, %c0_i32_1 : i32, i32, i32
  }
  func.func @transform_6(%arg0: i32) -> (i32, i32) {
    %c0_i32 = arith.constant 0 : i32
    %c0_i32_0 = arith.constant 0 : i32
    %c0_i32_1 = arith.constant 0 : i32
    return %c0_i32, %c0_i32_0 : i32, i32
  }
  func.func @transform_7(%arg0: i32) -> (i32, i32, i32) {
    %c0_i32 = arith.constant 0 : i32
    %c0_i32_0 = arith.constant 0 : i32
    %c0_i32_1 = arith.constant 0 : i32
    %c0_i32_2 = arith.constant 0 : i32
    return %c0_i32, %c0_i32_0, %c0_i32_1 : i32, i32, i32
  }
  func.func @transform_8(%arg0: i32) -> (i32, i32, i32) {
    %c0_i32 = arith.constant 0 : i32
    %c0_i32_0 = arith.constant 0 : i32
    %c0_i32_1 = arith.constant 0 : i32
    %c0_i32_2 = arith.constant 0 : i32
    return %c0_i32, %c0_i32_0, %c0_i32_1 : i32, i32, i32
  }
  func.func @transform_9(%arg0: i32) -> (i32, i32) {
    %c0_i32 = arith.constant 0 : i32
    %c0_i32_0 = arith.constant 0 : i32
    %c0_i32_1 = arith.constant 0 : i32
    return %c0_i32, %c0_i32_0 : i32, i32
  }
  func.func @transform_10(%arg0: i32) -> (i32, i32, i32) {
    %c0_i32 = arith.constant 0 : i32
    %c0_i32_0 = arith.constant 0 : i32
    %c0_i32_1 = arith.constant 0 : i32
    %c0_i32_2 = arith.constant 0 : i32
    return %c0_i32, %c0_i32_0, %c0_i32_1 : i32, i32, i32
  }
  func.func @transform_11(%arg0: i32) -> (i32, i32, i32) {
    %c0_i32 = arith.constant 0 : i32
    %c0_i32_0 = arith.constant 0 : i32
    %c0_i32_1 = arith.constant 0 : i32
    %c0_i32_2 = arith.constant 0 : i32
    return %c0_i32, %c0_i32_0, %c0_i32_1 : i32, i32, i32
  }
  func.func @transform_12(%arg0: i32) -> (i32, i32) {
    %c0_i32 = arith.constant 0 : i32
    %c0_i32_0 = arith.constant 0 : i32
    %c0_i32_1 = arith.constant 0 : i32
    return %c0_i32, %c0_i32_0 : i32, i32
  }
  func.func @transform_13(%arg0: i32) -> (i32, i32, i32) {
    %c0_i32 = arith.constant 0 : i32
    %c0_i32_0 = arith.constant 0 : i32
    %c0_i32_1 = arith.constant 0 : i32
    %c0_i32_2 = arith.constant 0 : i32
    return %c0_i32, %c0_i32_0, %c0_i32_1 : i32, i32, i32
  }
  func.func @transform_14(%arg0: i32) -> (i32, i32, i32) {
    %c0_i32 = arith.constant 0 : i32
    %c0_i32_0 = arith.constant 0 : i32
    %c0_i32_1 = arith.constant 0 : i32
    %c0_i32_2 = arith.constant 0 : i32
    return %c0_i32, %c0_i32_0, %c0_i32_1 : i32, i32, i32
  }
  func.func @transform_15(%arg0: i32) -> (i32, i32) {
    %c0_i32 = arith.constant 0 : i32
    %c0_i32_0 = arith.constant 0 : i32
    %c0_i32_1 = arith.constant 0 : i32
    return %c0_i32, %c0_i32_0 : i32, i32
  }
  func.func @transform_16(%arg0: i32) -> (i32, i32, i32) {
    %c0_i32 = arith.constant 0 : i32
    %c0_i32_0 = arith.constant 0 : i32
    %c0_i32_1 = arith.constant 0 : i32
    %c0_i32_2 = arith.constant 0 : i32
    return %c0_i32, %c0_i32_0, %c0_i32_1 : i32, i32, i32
  }
  func.func @transform_17(%arg0: i32) -> (i32, i32, i32) {
    %c0_i32 = arith.constant 0 : i32
    %c0_i32_0 = arith.constant 0 : i32
    %c0_i32_1 = arith.constant 0 : i32
    %c0_i32_2 = arith.constant 0 : i32
    return %c0_i32, %c0_i32_0, %c0_i32_1 : i32, i32, i32
  }
  func.func @transform_18(%arg0: i32) -> (i32, i32) {
    %c0_i32 = arith.constant 0 : i32
    %c0_i32_0 = arith.constant 0 : i32
    %c0_i32_1 = arith.constant 0 : i32
    return %c0_i32, %c0_i32_0 : i32, i32
  }
  func.func @transform_19(%arg0: i32) -> (i32, i32, i32) {
    %c0_i32 = arith.constant 0 : i32
    %c0_i32_0 = arith.constant 0 : i32
    %c0_i32_1 = arith.constant 0 : i32
    %c0_i32_2 = arith.constant 0 : i32
    return %c0_i32, %c0_i32_0, %c0_i32_1 : i32, i32, i32
  }
  func.func @transform_20(%arg0: i32) -> (i32, i32, i32) {
    %c0_i32 = arith.constant 0 : i32
    %c0_i32_0 = arith.constant 0 : i32
    %c0_i32_1 = arith.constant 0 : i32
    %c0_i32_2 = arith.constant 0 : i32
    return %c0_i32, %c0_i32_0, %c0_i32_1 : i32, i32, i32
  }
  func.func @transform_21(%arg0: i32) -> (i32, i32) {
    %c0_i32 = arith.constant 0 : i32
    %c0_i32_0 = arith.constant 0 : i32
    %c0_i32_1 = arith.constant 0 : i32
    return %c0_i32, %c0_i32_0 : i32, i32
  }
  func.func @transform_22(%arg0: i32) -> (i32, i32, i32) {
    %c0_i32 = arith.constant 0 : i32
    %c0_i32_0 = arith.constant 0 : i32
    %c0_i32_1 = arith.constant 0 : i32
    %c0_i32_2 = arith.constant 0 : i32
    return %c0_i32, %c0_i32_0, %c0_i32_1 : i32, i32, i32
  }
  func.func @transform_23(%arg0: i32) -> (i32, i32, i32) {
    %c0_i32 = arith.constant 0 : i32
    %c0_i32_0 = arith.constant 0 : i32
    %c0_i32_1 = arith.constant 0 : i32
    %c0_i32_2 = arith.constant 0 : i32
    return %c0_i32, %c0_i32_0, %c0_i32_1 : i32, i32, i32
  }
  func.func @transform_24(%arg0: i32) -> (i32, i32) {
    %c0_i32 = arith.constant 0 : i32
    %c0_i32_0 = arith.constant 0 : i32
    %c0_i32_1 = arith.constant 0 : i32
    return %c0_i32, %c0_i32_0 : i32, i32
  }
  func.func @transform_25(%arg0: i32) -> (i32, i32) {
    %c0_i32 = arith.constant 0 : i32
    %c0_i32_0 = arith.constant 0 : i32
    %c0_i32_1 = arith.constant 0 : i32
    return %c0_i32, %c0_i32_0 : i32, i32
  }
}

</mosaic_0001>

<llo_original>
// kernel: tile.78
$region0: #{tile.78}
  #allocation0 [shape = 's32[1]{0}', space=sflag, size = 0x4, scoped, tag = 'scoped memory for tile.78']
  %s0 = inlined_call_operand.vmem [shape: f32[3], index: 0, kind: input, shape index: {}]
  %s1 = inlined_call_operand.vmem [shape: f32[32,3], index: 1, kind: output, shape index: {}]
  // Predicated region
  $region2: #{tile.78} parent=0 // pred_check
    _
  $region3: #{tile.78} parent=0 // pred_check_branch
    %3 = sbr.rel (0) target = $region5
  $region4: #{tile.78} parent=0 // pred_region
    _
  $region5: #{tile.78} parent=0 // pred_fallthru
    _
  %v4 = vld [vmem:[%s0] ss:$0 sm:$0xff]
  %5 = vst [vmem:[%s1] sm:$0xff] %v4
  %s6 = scalar_lea.vmem %s1, 8
  %7 = vst [vmem:[%s6] sm:$0xff] %v4
  %s8 = scalar_lea.vmem %s1, 16
  %9 = vst [vmem:[%s8] sm:$0xff] %v4
  %s10 = scalar_lea.vmem %s1, 24
  %11 = vst [vmem:[%s10] sm:$0xff] %v4

// kernel: tile.79
$region0: #{tile.79}
  %s0 = inlined_call_operand.vmem [shape: f32[32,3], index: 0, kind: input, shape index: {}]
  %s1 = inlined_call_operand.vmem [shape: f32[1,96], index: 1, kind: output, shape index: {}]
  $region1: #{tile.79} parent=0
    #allocation0 [shape = 'u8[4096]{0}', space=vmem, size = 0x1000, scoped, tag = 'scoped mem for output reshape']
    %v2 = vld [vmem:[%s0] sm:$0x1]
    %vm3 = vcmask 23552
    %4 = vst.msk [vmem:[#allocation0] sm:$0x1] %vm3, %v2
    %s5 = scalar_lea.vmem %s0, 31
    %v6 = vld [vmem:[%s5] sm:$0x1]
    %7 = vrot.lane.b32.xlu0 %v6, 93
    %v8 = vpop.permute.xlu0 %7
    %vm9 = vcmask 786152
    %10 = vst.msk [vmem:[#allocation0] sm:$0x1] %vm9, %v8
    %s11 = scalar_lea.vmem %s0, 30
    %v12 = vld [vmem:[%s11] sm:$0x1]
    %13 = vrot.lane.b32.xlu0 %v12, 90
    %v14 = vpop.permute.xlu0 %13
    %vm15 = vcmask 761552
    %16 = vst.msk [vmem:[#allocation0] sm:$0x1] %vm15, %v14
    %s17 = scalar_lea.vmem %s0, 29
    %v18 = vld [vmem:[%s17] sm:$0x1]
    %19 = vrot.lane.b32.xlu0 %v18, 87
    %v20 = vpop.permute.xlu0 %19
    %vm21 = vcmask 736952
    %22 = vst.msk [vmem:[#allocation0] sm:$0x1] %vm21, %v20
    %s23 = scalar_lea.vmem %s0, 28
    %v24 = vld [vmem:[%s23] sm:$0x1]
    %25 = vrot.lane.b32.xlu0 %v24, 84
    %v26 = vpop.permute.xlu0 %25
    %vm27 = vcmask 712352
    %28 = vst.msk [vmem:[#allocation0] sm:$0x1] %vm27, %v26
    %s29 = scalar_lea.vmem %s0, 27
    %v30 = vld [vmem:[%s29] sm:$0x1]
    %31 = vrot.lane.b32.xlu0 %v30, 81
    %v32 = vpop.permute.xlu0 %31
    %vm33 = vcmask 687752
    %34 = vst.msk [vmem:[#allocation0] sm:$0x1] %vm33, %v32
    %s35 = scalar_lea.vmem %s0, 26
    %v36 = vld [vmem:[%s35] sm:$0x1]
    %37 = vrot.lane.b32.xlu0 %v36, 78
    %v38 = vpop.permute.xlu0 %37
    %vm39 = vcmask 663152
    %40 = vst.msk [vmem:[#allocation0] sm:$0x1] %vm39, %v38
    %s41 = scalar_lea.vmem %s0, 25
    %v42 = vld [vmem:[%s41] sm:$0x1]
    %43 = vrot.lane.b32.xlu0 %v42, 75
    %v44 = vpop.permute.xlu0 %43
    %vm45 = vcmask 638552
    %46 = vst.msk [vmem:[#allocation0] sm:$0x1] %vm45, %v44
    %s47 = scalar_lea.vmem %s0, 24
    %v48 = vld [vmem:[%s47] sm:$0x1]
    %49 = vrot.lane.b32.xlu0 %v48, 72
    %v50 = vpop.permute.xlu0 %49
    %vm51 = vcmask 613952
    %52 = vst.msk [vmem:[#allocation0] sm:$0x1] %vm51, %v50
    %s53 = scalar_lea.vmem %s0, 23
    %v54 = vld [vmem:[%s53] sm:$0x1]
    %55 = vrot.lane.b32.xlu0 %v54, 69
    %v56 = vpop.permute.xlu0 %55
    %vm57 = vcmask 589352
    %58 = vst.msk [vmem:[#allocation0] sm:$0x1] %vm57, %v56
    %s59 = scalar_lea.vmem %s0, 22
    %v60 = vld [vmem:[%s59] sm:$0x1]
    %61 = vrot.lane.b32.xlu0 %v60, 66
    %v62 = vpop.permute.xlu0 %61
    %vm63 = vcmask 564752
    %64 = vst.msk [vmem:[#allocation0] sm:$0x1] %vm63, %v62
    %s65 = scalar_lea.vmem %s0, 21
    %v66 = vld [vmem:[%s65] sm:$0x1]
    %67 = vrot.lane.b32.xlu0 %v66, 63
    %v68 = vpop.permute.xlu0 %67
    %vm69 = vcmask 540152
    %70 = vst.msk [vmem:[#allocation0] sm:$0x1] %vm69, %v68
    %s71 = scalar_lea.vmem %s0, 20
    %v72 = vld [vmem:[%s71] sm:$0x1]
    %73 = vrot.lane.b32.xlu0 %v72, 60
    %v74 = vpop.permute.xlu0 %73
    %vm75 = vcmask 515552
    %76 = vst.msk [vmem:[#allocation0] sm:$0x1] %vm75, %v74
    %s77 = scalar_lea.vmem %s0, 19
    %v78 = vld [vmem:[%s77] sm:$0x1]
    %79 = vrot.lane.b32.xlu0 %v78, 57
    %v80 = vpop.permute.xlu0 %79
    %vm81 = vcmask 490952
    %82 = vst.msk [vmem:[#allocation0] sm:$0x1] %vm81, %v80
    %s83 = scalar_lea.vmem %s0, 18
    %v84 = vld [vmem:[%s83] sm:$0x1]
    %85 = vrot.lane.b32.xlu0 %v84, 54
    %v86 = vpop.permute.xlu0 %85
    %vm87 = vcmask 466352
    %88 = vst.msk [vmem:[#allocation0] sm:$0x1] %vm87, %v86
    %s89 = scalar_lea.vmem %s0, 17
    %v90 = vld [vmem:[%s89] sm:$0x1]
    %91 = vrot.lane.b32.xlu0 %v90, 51
    %v92 = vpop.permute.xlu0 %91
    %vm93 = vcmask 441752
    %94 = vst.msk [vmem:[#allocation0] sm:$0x1] %vm93, %v92
    %s95 = scalar_lea.vmem %s0, 16
    %v96 = vld [vmem:[%s95] sm:$0x1]
    %97 = vrot.lane.b32.xlu0 %v96, 48
    %v98 = vpop.permute.xlu0 %97
    %vm99 = vcmask 417152
    %100 = vst.msk [vmem:[#allocation0] sm:$0x1] %vm99, %v98
    %s101 = scalar_lea.vmem %s0, 15
    %v102 = vld [vmem:[%s101] sm:$0x1]
    %103 = vrot.lane.b32.xlu0 %v102, 45
    %v104 = vpop.permute.xlu0 %103
    %vm105 = vcmask 392552
    %106 = vst.msk [vmem:[#allocation0] sm:$0x1] %vm105, %v104
    %s107 = scalar_lea.vmem %s0, 14
    %v108 = vld [vmem:[%s107] sm:$0x1]
    %109 = vrot.lane.b32.xlu0 %v108, 42
    %v110 = vpop.permute.xlu0 %109
    %vm111 = vcmask 367952
    %112 = vst.msk [vmem:[#allocation0] sm:$0x1] %vm111, %v110
    %s113 = scalar_lea.vmem %s0, 13
    %v114 = vld [vmem:[%s113] sm:$0x1]
    %115 = vrot.lane.b32.xlu0 %v114, 39
    %v116 = vpop.permute.xlu0 %115
    %vm117 = vcmask 343352
    %118 = vst.msk [vmem:[#allocation0] sm:$0x1] %vm117, %v116
    %s119 = scalar_lea.vmem %s0, 12
    %v120 = vld [vmem:[%s119] sm:$0x1]
    %121 = vrot.lane.b32.xlu0 %v120, 36
    %v122 = vpop.permute.xlu0 %121
    %vm123 = vcmask 318752
    %124 = vst.msk [vmem:[#allocation0] sm:$0x1] %vm123, %v122
    %s125 = scalar_lea.vmem %s0, 11
    %v126 = vld [vmem:[%s125] sm:$0x1]
    %127 = vrot.lane.b32.xlu0 %v126, 33
    %v128 = vpop.permute.xlu0 %127
    %vm129 = vcmask 294152
    %130 = vst.msk [vmem:[#allocation0] sm:$0x1] %vm129, %v128
    %s131 = scalar_lea.vmem %s0, 10
    %v132 = vld [vmem:[%s131] sm:$0x1]
    %133 = vrot.lane.b32.xlu0 %v132, 30
    %v134 = vpop.permute.xlu0 %133
    %vm135 = vcmask 269552
    %136 = vst.msk [vmem:[#allocation0] sm:$0x1] %vm135, %v134
    %s137 = scalar_lea.vmem %s0, 9
    %v138 = vld [vmem:[%s137] sm:$0x1]
    %139 = vrot.lane.b32.xlu0 %v138, 27
    %v140 = vpop.permute.xlu0 %139
    %vm141 = vcmask 244952
    %142 = vst.msk [vmem:[#allocation0] sm:$0x1] %vm141, %v140
    %s143 = scalar_lea.vmem %s0, 8
    %v144 = vld [vmem:[%s143] sm:$0x1]
    %145 = vrot.lane.b32.xlu0 %v144, 24
    %v146 = vpop.permute.xlu0 %145
    %vm147 = vcmask 220352
    %148 = vst.msk [vmem:[#allocation0] sm:$0x1] %vm147, %v146
    %s149 = scalar_lea.vmem %s0, 7
    %v150 = vld [vmem:[%s149] sm:$0x1]
    %151 = vrot.lane.b32.xlu0 %v150, 21
    %v152 = vpop.permute.xlu0 %151
    %vm153 = vcmask 195752
    %154 = vst.msk [vmem:[#allocation0] sm:$0x1] %vm153, %v152
    %s155 = scalar_lea.vmem %s0, 6
    %v156 = vld [vmem:[%s155] sm:$0x1]
    %157 = vrot.lane.b32.xlu0 %v156, 18
    %v158 = vpop.permute.xlu0 %157
    %vm159 = vcmask 171152
    %160 = vst.msk [vmem:[#allocation0] sm:$0x1] %vm159, %v158
    %s161 = scalar_lea.vmem %s0, 5
    %v162 = vld [vmem:[%s161] sm:$0x1]
    %163 = vrot.lane.b32.xlu0 %v162, 15
    %v164 = vpop.permute.xlu0 %163
    %vm165 = vcmask 146552
    %166 = vst.msk [vmem:[#allocation0] sm:$0x1] %vm165, %v164
    %s167 = scalar_lea.vmem %s0, 4
    %v168 = vld [vmem:[%s167] sm:$0x1]
    %169 = vrot.lane.b32.xlu0 %v168, 12
    %v170 = vpop.permute.xlu0 %169
    %vm171 = vcmask 121952
    %172 = vst.msk [vmem:[#allocation0] sm:$0x1] %vm171, %v170
    %s173 = scalar_lea.vmem %s0, 3
    %v174 = vld [vmem:[%s173] sm:$0x1]
    %175 = vrot.lane.b32.xlu0 %v174, 9
    %v176 = vpop.permute.xlu0 %175
    %vm177 = vcmask 97352
    %178 = vst.msk [vmem:[#allocation0] sm:$0x1] %vm177, %v176
    %s179 = scalar_lea.vmem %s0, 2
    %v180 = vld [vmem:[%s179] sm:$0x1]
    %181 = vrot.lane.b32.xlu0 %v180, 6
    %v182 = vpop.permute.xlu0 %181
    %vm183 = vcmask 72752
    %184 = vst.msk [vmem:[#allocation0] sm:$0x1] %vm183, %v182
    %s185 = scalar_lea.vmem %s0, 1
    %v186 = vld [vmem:[%s185] sm:$0x1]
    %187 = vrot.lane.b32.xlu0 %v186, 3
    %v188 = vpop.permute.xlu0 %187
    %vm189 = vcmask 48152
    %190 = vst.msk [vmem:[#allocation0] sm:$0x1] %vm189, %v188
    %s192 = sshllo.u32 0, 1
    %v194 = vld [vmem:[#allocation0] sm:%s192]
    %s195 = sshllo.u32 0, 1
    %196 = vst [vmem:[%s1] sm:%s195] %v194

// kernel: tile.43
$region0: #{tile.43}
  #allocation0 [shape = 's32[1]{0}', space=sflag, size = 0x4, scoped, tag = 'scoped memory for tile.43']
  %s0 = inlined_call_operand.vmem [shape: f32[16], index: 0, kind: input, shape index: {}]
  %s1 = inlined_call_operand.vmem [shape: f32[16,16], index: 1, kind: output, shape index: {}]
  // Predicated region
  $region2: #{tile.43} parent=0 // pred_check
    _
  $region3: #{tile.43} parent=0 // pred_check_branch
    %3 = sbr.rel (0) target = $region5
  $region4: #{tile.43} parent=0 // pred_region
    _
  $region5: #{tile.43} parent=0 // pred_fallthru
    _
  %v4 = vld [vmem:[%s0] ss:$0 sm:$0xff]
  %5 = vst [vmem:[%s1] sm:$0xff] %v4
  %s6 = scalar_lea.vmem %s1, 8
  %7 = vst [vmem:[%s6] sm:$0xff] %v4

// kernel: tile.44
$region0: #{tile.44}
  %s0 = inlined_call_operand.vmem [shape: f32[16,16], index: 0, kind: input, shape index: {}]
  %s1 = inlined_call_operand.vmem [shape: f32[1,256], index: 1, kind: output, shape index: {}]
  $region1: #{tile.44} parent=0
    #allocation0 [shape = 'u8[8192]{0}', space=vmem, size = 0x2000, scoped, tag = 'scoped mem for output reshape']
    %s2 = smov 3
    %v3 = vld [vmem:[%s0] ss:$8 sm:%s2]
    %vm4 = vcmask 130048
    %5 = vst.msk [vmem:[#allocation0] ss:$8 sm:$0x3] %vm4, %v3
    %s6 = scalar_lea.vmem %s0, 7
    %s7 = smov 3
    %v8 = vld [vmem:[%s6] ss:$8 sm:%s7]
    %9 = vrot.lane.b32.xlu0 %v8, 112
    %v10 = vpop.permute.xlu0 %9
    %vm11 = vcmask 1048448
    %12 = vst.msk [vmem:[#allocation0] ss:$8 sm:$0x3] %vm11, %v10
    %s13 = scalar_lea.vmem %s0, 6
    %s14 = smov 3
    %v15 = vld [vmem:[%s13] ss:$8 sm:%s14]
    %16 = vrot.lane.b32.xlu0 %v15, 96
    %v17 = vpop.permute.xlu0 %16
    %vm18 = vcmask 917248
    %19 = vst.msk [vmem:[#allocation0] ss:$8 sm:$0x3] %vm18, %v17
    %s20 = scalar_lea.vmem %s0, 5
    %s21 = smov 3
    %v22 = vld [vmem:[%s20] ss:$8 sm:%s21]
    %23 = vrot.lane.b32.xlu0 %v22, 80
    %v24 = vpop.permute.xlu0 %23
    %vm25 = vcmask 786048
    %26 = vst.msk [vmem:[#allocation0] ss:$8 sm:$0x3] %vm25, %v24
    %s27 = scalar_lea.vmem %s0, 4
    %s28 = smov 3
    %v29 = vld [vmem:[%s27] ss:$8 sm:%s28]
    %30 = vrot.lane.b32.xlu0 %v29, 64
    %v31 = vpop.permute.xlu0 %30
    %vm32 = vcmask 654848
    %33 = vst.msk [vmem:[#allocation0] ss:$8 sm:$0x3] %vm32, %v31
    %s34 = scalar_lea.vmem %s0, 3
    %s35 = smov 3
    %v36 = vld [vmem:[%s34] ss:$8 sm:%s35]
    %37 = vrot.lane.b32.xlu0 %v36, 48
    %v38 = vpop.permute.xlu0 %37
    %vm39 = vcmask 523648
    %40 = vst.msk [vmem:[#allocation0] ss:$8 sm:$0x3] %vm39, %v38
    %s41 = scalar_lea.vmem %s0, 2
    %s42 = smov 3
    %v43 = vld [vmem:[%s41] ss:$8 sm:%s42]
    %44 = vrot.lane.b32.xlu0 %v43, 32
    %v45 = vpop.permute.xlu0 %44
    %vm46 = vcmask 392448
    %47 = vst.msk [vmem:[#allocation0] ss:$8 sm:$0x3] %vm46, %v45
    %s48 = scalar_lea.vmem %s0, 1
    %s49 = smov 3
    %v50 = vld [vmem:[%s48] ss:$8 sm:%s49]
    %51 = vrot.lane.b32.xlu0 %v50, 16
    %v52 = vpop.permute.xlu0 %51
    %vm53 = vcmask 261248
    %54 = vst.msk [vmem:[#allocation0] ss:$8 sm:$0x3] %vm53, %v52
    %s56 = sshllo.u32 0, 1
    %v58 = vld [vmem:[#allocation0] sm:%s56]
    %s59 = sshllo.u32 0, 1
    %60 = vst [vmem:[%s1] sm:%s59] %v58
    %s61 = scalar_lea.vmem [#allocation0], 8
    %v62 = vld [vmem:[%s61] sm:%s56]
    %s63 = sshllo.u32 0, 1
    %s64 = scalar_lea.vmem %s1, 1
    %65 = vst [vmem:[%s64] sm:%s63] %v62

// kernel: tile.48
$region0: #{tile.48}
  #allocation0 [shape = 's32[1]{0}', space=sflag, size = 0x4, scoped, tag = 'scoped memory for tile.48']
  %s0 = inlined_call_operand.vmem [shape: f32[32], index: 0, kind: input, shape index: {}]
  %s1 = inlined_call_operand.vmem [shape: f32[8,32], index: 1, kind: output, shape index: {}]
  // Predicated region
  $region2: #{tile.48} parent=0 // pred_check
    _
  $region3: #{tile.48} parent=0 // pred_check_branch
    %3 = sbr.rel (0) target = $region5
  $region4: #{tile.48} parent=0 // pred_region
    _
  $region5: #{tile.48} parent=0 // pred_fallthru
    _
  %v4 = vld [vmem:[%s0] ss:$0 sm:$0xff]
  %5 = vst [vmem:[%s1] sm:$0xff] %v4

// kernel: tile.49
$region0: #{tile.49}
  %s0 = inlined_call_operand.vmem [shape: f32[8,32], index: 0, kind: input, shape index: {}]
  %s1 = inlined_call_operand.vmem [shape: f32[1,256], index: 1, kind: output, shape index: {}]
  $region1: #{tile.49} parent=0
    #allocation0 [shape = 'u8[8192]{0}', space=vmem, size = 0x2000, scoped, tag = 'scoped mem for output reshape']
    %s2 = smov 3
    %v3 = vld [vmem:[%s0] ss:$4 sm:%s2]
    %vm4 = vcmask 261120
    %5 = vst.msk [vmem:[#allocation0] ss:$8 sm:$0x3] %vm4, %v3
    %s6 = scalar_lea.vmem %s0, 3
    %s7 = smov 3
    %v8 = vld [vmem:[%s6] ss:$4 sm:%s7]
    %9 = vrot.lane.b32.xlu0 %v8, 96
    %v10 = vpop.permute.xlu0 %9
    %vm11 = vcmask 1048320
    %12 = vst.msk [vmem:[#allocation0] ss:$8 sm:$0x3] %vm11, %v10
    %s13 = scalar_lea.vmem %s0, 2
    %s14 = smov 3
    %v15 = vld [vmem:[%s13] ss:$4 sm:%s14]
    %16 = vrot.lane.b32.xlu0 %v15, 64
    %v17 = vpop.permute.xlu0 %16
    %vm18 = vcmask 785920
    %19 = vst.msk [vmem:[#allocation0] ss:$8 sm:$0x3] %vm18, %v17
    %s20 = scalar_lea.vmem %s0, 1
    %s21 = smov 3
    %v22 = vld [vmem:[%s20] ss:$4 sm:%s21]
    %23 = vrot.lane.b32.xlu0 %v22, 32
    %v24 = vpop.permute.xlu0 %23
    %vm25 = vcmask 523520
    %26 = vst.msk [vmem:[#allocation0] ss:$8 sm:$0x3] %vm25, %v24
    %s28 = sshllo.u32 0, 1
    %v30 = vld [vmem:[#allocation0] sm:%s28]
    %s31 = sshllo.u32 0, 1
    %32 = vst [vmem:[%s1] sm:%s31] %v30
    %s33 = scalar_lea.vmem [#allocation0], 8
    %v34 = vld [vmem:[%s33] sm:%s28]
    %s35 = sshllo.u32 0, 1
    %s36 = scalar_lea.vmem %s1, 1
    %37 = vst [vmem:[%s36] sm:%s35] %v34

// kernel: tile.53
$region0: #{tile.53}
  #allocation0 [shape = 's32[1]{0}', space=sflag, size = 0x4, scoped, tag = 'scoped memory for tile.53']
  %s0 = inlined_call_operand.vmem [shape: f32[64], index: 0, kind: input, shape index: {}]
  %s1 = inlined_call_operand.vmem [shape: f32[4,64], index: 1, kind: output, shape index: {}]
  // Predicated region
  $region2: #{tile.53} parent=0 // pred_check
    _
  $region3: #{tile.53} parent=0 // pred_check_branch
    %3 = sbr.rel (0) target = $region5
  $region4: #{tile.53} parent=0 // pred_region
    _
  $region5: #{tile.53} parent=0 // pred_fallthru
    _
  %v4 = vld [vmem:[%s0] ss:$0 sm:$0xff]
  %5 = vst [vmem:[%s1] sm:$0xf] %v4

// kernel: tile.54
$region0: #{tile.54}
  %s0 = inlined_call_operand.vmem [shape: f32[4,64], index: 0, kind: input, shape index: {}]
  %s1 = inlined_call_operand.vmem [shape: f32[1,256], index: 1, kind: output, shape index: {}]
  $region1: #{tile.54} parent=0
    #allocation0 [shape = 'u8[8192]{0}', space=vmem, size = 0x2000, scoped, tag = 'scoped mem for output reshape']
    #allocation1 [shape = 'u8[4096]{0}', space=vmem, size = 0x1000, scoped, tag = 'scoped mem for input reshape']
    %s3 = sshllo.u32 0, 4
    %v4 = vld [vmem:[%s0] sm:%s3]
    %5 = vst [vmem:[#allocation1] sm:%s3] %v4
    %s6 = smov 3
    %v7 = vld [vmem:[#allocation1] ss:$2 sm:%s6]
    %vm8 = vcmask 523264
    %9 = vst.msk [vmem:[#allocation0] ss:$8 sm:$0x3] %vm8, %v7
    %s10 = scalar_lea.vmem [#allocation1], 1
    %s11 = smov 3
    %v12 = vld [vmem:[%s10] ss:$2 sm:%s11]
    %13 = vrot.lane.b32.xlu0 %v12, 64
    %v14 = vpop.permute.xlu0 %13
    %vm15 = vcmask 1048064
    %16 = vst.msk [vmem:[#allocation0] ss:$8 sm:$0x3] %vm15, %v14
    %s18 = sshllo.u32 0, 1
    %v20 = vld [vmem:[#allocation0] sm:%s18]
    %s21 = sshllo.u32 0, 1
    %22 = vst [vmem:[%s1] sm:%s21] %v20
    %s23 = scalar_lea.vmem [#allocation0], 8
    %v24 = vld [vmem:[%s23] sm:%s18]
    %s25 = sshllo.u32 0, 1
    %s26 = scalar_lea.vmem %s1, 1
    %27 = vst [vmem:[%s26] sm:%s25] %v24

// kernel: tile.58
$region0: #{tile.58}
  #allocation0 [shape = 's32[1]{0}', space=sflag, size = 0x4, scoped, tag = 'scoped memory for tile.58']
  %s0 = inlined_call_operand.vmem [shape: f32[128], index: 0, kind: input, shape index: {}]
  %s1 = inlined_call_operand.vmem [shape: f32[2,128], index: 1, kind: output, shape index: {}]
  // Predicated region
  $region2: #{tile.58} parent=0 // pred_check
    _
  $region3: #{tile.58} parent=0 // pred_check_branch
    %3 = sbr.rel (0) target = $region5
  $region4: #{tile.58} parent=0 // pred_region
    _
  $region5: #{tile.58} parent=0 // pred_fallthru
    _
  %v4 = vld [vmem:[%s0] ss:$0 sm:$0xff]
  %5 = vst [vmem:[%s1] sm:$0x3] %v4

// kernel: autoencoder_forward.1
$region0: #{autoencoder_forward.1}
  #allocation0 [shape = 'u32[]', space=smem, size = 0x4, offset = 0x4, fixed_abs, tag = 'smem constant byte address 0x4 - core index']
  #allocation1 [shape = 'u32[144,128]{1,0:T(1,128)}', space=vmem, size = 0x12000, scoped, tag = 'internal scratch']
  %s0 = inlined_call_operand.vmem [shape: f32[64,96], index: 0, kind: input, shape index: {}]
  %s1 = inlined_call_operand.vmem [shape: bf16[4,32,64], index: 1, kind: input, shape index: {}]
  %s2 = inlined_call_operand.vmem [shape: bf16[4,96,256], index: 2, kind: input, shape index: {}]
  %s3 = inlined_call_operand.vmem [shape: f32[1,256], index: 3, kind: input, shape index: {}]
  %s4 = inlined_call_operand.vmem [shape: bf16[4,16,32], index: 4, kind: input, shape index: {}]
  %s5 = inlined_call_operand.vmem [shape: bf16[4,256,256], index: 5, kind: input, shape index: {}]
  %s6 = inlined_call_operand.vmem [shape: f32[1,256], index: 6, kind: input, shape index: {}]
  %s7 = inlined_call_operand.vmem [shape: bf16[4,8,16], index: 7, kind: input, shape index: {}]
  %s8 = inlined_call_operand.vmem [shape: bf16[4,256,256], index: 8, kind: input, shape index: {}]
  %s9 = inlined_call_operand.vmem [shape: f32[1,256], index: 9, kind: input, shape index: {}]
  %s10 = inlined_call_operand.vmem [shape: bf16[4,4,8], index: 10, kind: input, shape index: {}]
  %s11 = inlined_call_operand.vmem [shape: bf16[4,256,256], index: 11, kind: input, shape index: {}]
  %s12 = inlined_call_operand.vmem [shape: f32[1,256], index: 12, kind: input, shape index: {}]
  %s13 = inlined_call_operand.vmem [shape: bf16[4,8,4], index: 13, kind: input, shape index: {}]
  %s14 = inlined_call_operand.vmem [shape: bf16[4,256,256], index: 14, kind: input, shape index: {}]
  %s15 = inlined_call_operand.vmem [shape: f32[1,256], index: 15, kind: input, shape index: {}]
  %s16 = inlined_call_operand.vmem [shape: bf16[4,16,8], index: 16, kind: input, shape index: {}]
  %s17 = inlined_call_operand.vmem [shape: bf16[4,256,256], index: 17, kind: input, shape index: {}]
  %s18 = inlined_call_operand.vmem [shape: f32[1,256], index: 18, kind: input, shape index: {}]
  %s19 = inlined_call_operand.vmem [shape: bf16[4,32,16], index: 19, kind: input, shape index: {}]
  %s20 = inlined_call_operand.vmem [shape: bf16[4,256,256], index: 20, kind: input, shape index: {}]
  %s21 = inlined_call_operand.vmem [shape: f32[1,256], index: 21, kind: input, shape index: {}]
  %s22 = inlined_call_operand.vmem [shape: bf16[4,64,32], index: 22, kind: input, shape index: {}]
  %s23 = inlined_call_operand.vmem [shape: bf16[4,256,96], index: 23, kind: input, shape index: {}]
  %s24 = inlined_call_operand.vmem [shape: f32[1,96], index: 24, kind: input, shape index: {}]
  %s25 = inlined_call_operand.vmem [shape: f32[64,96], index: 25, kind: output, shape index: {}]
  %s26 = sld [smem:[#allocation0]]
  $region110: #{autoencoder_forward.1} parent=0
    _
  %s28 = ssub.s32 1, %s26
  %s29 = scalar_select 0, %s28, %s26
  // Predicated region
  $region2: #{autoencoder_forward.1} parent=0 // pred_check
    _
  $region3: #{autoencoder_forward.1} parent=0 // pred_check_branch
    %31 = sbr.rel (0) target = $region5
  $region4: #{autoencoder_forward.1} parent=0 // pred_region
    _
  $region5: #{autoencoder_forward.1} parent=0 // pred_fallthru
    _
  // Predicated region
  $region6: #{autoencoder_forward.1} parent=0 // pred_check
    _
  $region7: #{autoencoder_forward.1} parent=0 // pred_check_branch
    %33 = sbr.rel (0) target = $region9
  $region8: #{autoencoder_forward.1} parent=0 // pred_region
    _
  $region9: #{autoencoder_forward.1} parent=0 // pred_fallthru
    _
  // Predicated region
  $region10: #{autoencoder_forward.1} parent=0 // pred_check
    _
  $region11: #{autoencoder_forward.1} parent=0 // pred_check_branch
    %35 = sbr.rel (0) target = $region13
  $region12: #{autoencoder_forward.1} parent=0 // pred_region
    _
  $region13: #{autoencoder_forward.1} parent=0 // pred_fallthru
    _
  // Predicated region
  $region14: #{autoencoder_forward.1} parent=0 // pred_check
    _
  $region15: #{autoencoder_forward.1} parent=0 // pred_check_branch
    %37 = sbr.rel (0) target = $region17
  $region16: #{autoencoder_forward.1} parent=0 // pred_region
    _
  $region17: #{autoencoder_forward.1} parent=0 // pred_fallthru
    _
  // Predicated region
  $region18: #{autoencoder_forward.1} parent=0 // pred_check
    _
  $region19: #{autoencoder_forward.1} parent=0 // pred_check_branch
    %39 = sbr.rel (0) target = $region21
  $region20: #{autoencoder_forward.1} parent=0 // pred_region
    _
  $region21: #{autoencoder_forward.1} parent=0 // pred_fallthru
    _
  // Predicated region
  $region22: #{autoencoder_forward.1} parent=0 // pred_check
    _
  $region23: #{autoencoder_forward.1} parent=0 // pred_check_branch
    %41 = sbr.rel (0) target = $region25
  $region24: #{autoencoder_forward.1} parent=0 // pred_region
    _
  $region25: #{autoencoder_forward.1} parent=0 // pred_fallthru
    _
  // Predicated region
  $region26: #{autoencoder_forward.1} parent=0 // pred_check
    _
  $region27: #{autoencoder_forward.1} parent=0 // pred_check_branch
    %43 = sbr.rel (0) target = $region29
  $region28: #{autoencoder_forward.1} parent=0 // pred_region
    _
  $region29: #{autoencoder_forward.1} parent=0 // pred_fallthru
    _
  // Predicated region
  $region30: #{autoencoder_forward.1} parent=0 // pred_check
    _
  $region31: #{autoencoder_forward.1} parent=0 // pred_check_branch
    %45 = sbr.rel (0) target = $region33
  $region32: #{autoencoder_forward.1} parent=0 // pred_region
    _
  $region33: #{autoencoder_forward.1} parent=0 // pred_fallthru
    _
  // Predicated region
  $region34: #{autoencoder_forward.1} parent=0 // pred_check
    _
  $region35: #{autoencoder_forward.1} parent=0 // pred_check_branch
    %47 = sbr.rel (0) target = $region37
  $region36: #{autoencoder_forward.1} parent=0 // pred_region
    _
  $region37: #{autoencoder_forward.1} parent=0 // pred_fallthru
    _
  // Predicated region
  $region38: #{autoencoder_forward.1} parent=0 // pred_check
    _
  $region39: #{autoencoder_forward.1} parent=0 // pred_check_branch
    %49 = sbr.rel (0) target = $region41
  $region40: #{autoencoder_forward.1} parent=0 // pred_region
    _
  $region41: #{autoencoder_forward.1} parent=0 // pred_fallthru
    _
  // Predicated region
  $region42: #{autoencoder_forward.1} parent=0 // pred_check
    _
  $region43: #{autoencoder_forward.1} parent=0 // pred_check_branch
    %51 = sbr.rel (0) target = $region45
  $region44: #{autoencoder_forward.1} parent=0 // pred_region
    _
  $region45: #{autoencoder_forward.1} parent=0 // pred_fallthru
    _
  // Predicated region
  $region46: #{autoencoder_forward.1} parent=0 // pred_check
    _
  $region47: #{autoencoder_forward.1} parent=0 // pred_check_branch
    %53 = sbr.rel (0) target = $region49
  $region48: #{autoencoder_forward.1} parent=0 // pred_region
    _
  $region49: #{autoencoder_forward.1} parent=0 // pred_fallthru
    _
  // Predicated region
  $region50: #{autoencoder_forward.1} parent=0 // pred_check
    _
  $region51: #{autoencoder_forward.1} parent=0 // pred_check_branch
    %55 = sbr.rel (0) target = $region53
  $region52: #{autoencoder_forward.1} parent=0 // pred_region
    _
  $region53: #{autoencoder_forward.1} parent=0 // pred_fallthru
    _
  // Predicated region
  $region54: #{autoencoder_forward.1} parent=0 // pred_check
    _
  $region55: #{autoencoder_forward.1} parent=0 // pred_check_branch
    %57 = sbr.rel (0) target = $region57
  $region56: #{autoencoder_forward.1} parent=0 // pred_region
    _
  $region57: #{autoencoder_forward.1} parent=0 // pred_fallthru
    _
  // Predicated region
  $region58: #{autoencoder_forward.1} parent=0 // pred_check
    _
  $region59: #{autoencoder_forward.1} parent=0 // pred_check_branch
    %59 = sbr.rel (0) target = $region61
  $region60: #{autoencoder_forward.1} parent=0 // pred_region
    _
  $region61: #{autoencoder_forward.1} parent=0 // pred_fallthru
    _
  // Predicated region
  $region62: #{autoencoder_forward.1} parent=0 // pred_check
    _
  $region63: #{autoencoder_forward.1} parent=0 // pred_check_branch
    %61 = sbr.rel (0) target = $region65
  $region64: #{autoencoder_forward.1} parent=0 // pred_region
    _
  $region65: #{autoencoder_forward.1} parent=0 // pred_fallthru
    _
  // Predicated region
  $region66: #{autoencoder_forward.1} parent=0 // pred_check
    _
  $region67: #{autoencoder_forward.1} parent=0 // pred_check_branch
    %63 = sbr.rel (0) target = $region69
  $region68: #{autoencoder_forward.1} parent=0 // pred_region
    _
  $region69: #{autoencoder_forward.1} parent=0 // pred_fallthru
    _
  // Predicated region
  $region70: #{autoencoder_forward.1} parent=0 // pred_check
    _
  $region71: #{autoencoder_forward.1} parent=0 // pred_check_branch
    %65 = sbr.rel (0) target = $region73
  $region72: #{autoencoder_forward.1} parent=0 // pred_region
    _
  $region73: #{autoencoder_forward.1} parent=0 // pred_fallthru
    _
  // Predicated region
  $region74: #{autoencoder_forward.1} parent=0 // pred_check
    _
  $region75: #{autoencoder_forward.1} parent=0 // pred_check_branch
    %67 = sbr.rel (0) target = $region77
  $region76: #{autoencoder_forward.1} parent=0 // pred_region
    _
  $region77: #{autoencoder_forward.1} parent=0 // pred_fallthru
    _
  // Predicated region
  $region78: #{autoencoder_forward.1} parent=0 // pred_check
    _
  $region79: #{autoencoder_forward.1} parent=0 // pred_check_branch
    %69 = sbr.rel (0) target = $region81
  $region80: #{autoencoder_forward.1} parent=0 // pred_region
    _
  $region81: #{autoencoder_forward.1} parent=0 // pred_fallthru
    _
  // Predicated region
  $region82: #{autoencoder_forward.1} parent=0 // pred_check
    _
  $region83: #{autoencoder_forward.1} parent=0 // pred_check_branch
    %71 = sbr.rel (0) target = $region85
  $region84: #{autoencoder_forward.1} parent=0 // pred_region
    _
  $region85: #{autoencoder_forward.1} parent=0 // pred_fallthru
    _
  // Predicated region
  $region86: #{autoencoder_forward.1} parent=0 // pred_check
    _
  $region87: #{autoencoder_forward.1} parent=0 // pred_check_branch
    %73 = sbr.rel (0) target = $region89
  $region88: #{autoencoder_forward.1} parent=0 // pred_region
    _
  $region89: #{autoencoder_forward.1} parent=0 // pred_fallthru
    _
  // Predicated region
  $region90: #{autoencoder_forward.1} parent=0 // pred_check
    _
  $region91: #{autoencoder_forward.1} parent=0 // pred_check_branch
    %75 = sbr.rel (0) target = $region93
  $region92: #{autoencoder_forward.1} parent=0 // pred_region
    _
  $region93: #{autoencoder_forward.1} parent=0 // pred_fallthru
    _
  // Predicated region
  $region94: #{autoencoder_forward.1} parent=0 // pred_check
    _
  $region95: #{autoencoder_forward.1} parent=0 // pred_check_branch
    %77 = sbr.rel (0) target = $region97
  $region96: #{autoencoder_forward.1} parent=0 // pred_region
    _
  $region97: #{autoencoder_forward.1} parent=0 // pred_fallthru
    _
  // Predicated region
  $region98: #{autoencoder_forward.1} parent=0 // pred_check
    _
  $region99: #{autoencoder_forward.1} parent=0 // pred_check_branch
    %79 = sbr.rel (0) target = $region101
  $region100: #{autoencoder_forward.1} parent=0 // pred_region
    _
  $region101: #{autoencoder_forward.1} parent=0 // pred_fallthru
    _
  %v81 = vld [vmem:[%s0] sm:$0xff]
  %v82 = vld [vmem:[%s0 + $0x8] sm:$0xff]
  %v83 = vld [vmem:[%s0 + $0x10] sm:$0xff]
  %v84 = vld [vmem:[%s0 + $0x18] sm:$0xff]
  %v85 = vld [vmem:[%s0 + $0x20] sm:$0xff]
  %v86 = vld [vmem:[%s0 + $0x28] sm:$0xff]
  %v87 = vld [vmem:[%s0 + $0x30] sm:$0xff]
  %v88 = vld [vmem:[%s0 + $0x38] sm:$0xff]
  %v89 = vpack.c.bf16 %v82, %v81
  %v90 = vpack.c.bf16 %v84, %v83
  %v91 = vpack.c.bf16 %v86, %v85
  %v92 = vpack.c.bf16 %v88, %v87
  %v93 = vld [vmem:[%s1] sm:$0xf]
  %v94 = vld [vmem:[%s1 + $0x4] sm:$0xf]
  %v95 = vld [vmem:[%s1 + $0x8] sm:$0xf]
  %v96 = vld [vmem:[%s1 + $0xc] sm:$0xf]
  %v101 = vunpack.c.l.b16 %v93
  %v102 = vunpack.c.l.b16 %v94
  %v103 = vunpack.c.l.b16 %v95
  %v104 = vunpack.c.l.b16 %v96
  %v105 = vpack.c.b16 %v102, %v101
  %v106 = vpack.c.b16 %v104, %v103
  %vm107 = vcmask 523264
  %v109 = vsel %vm107, %v105, 0
  %v112 = vsel %vm107, %v106, 0
  %114 = vmatprep.subr.bf16.mxu0 0
  %115 = vmatpush1.bf16.msra.mxu0 %v89
  %116 = vmatprep.subr.bf16.mxu0 0
  %117 = vmatpush1.bf16.msra.mxu0 %v90
  %118 = vmatprep.subr.bf16.mxu0 0
  %119 = vmatpush1.bf16.msra.mxu0 %v91
  %120 = vmatprep.subr.bf16.mxu0 0
  %121 = vmatpush1.bf16.msra.mxu0 %v92
  %122 = vmatprep.subr.bf16.mxu0 0
  %123 = vmatpush1.bf16.msra.mxu0 0
  %124 = vmatprep.subr.bf16.mxu0 0
  %125 = vmatpush1.bf16.msra.mxu0 0
  %126 = vmatprep.subr.bf16.mxu0 0
  %127 = vmatpush1.bf16.msra.mxu0 0
  %128 = vmatprep.subr.bf16.mxu0 0
  %129 = vmatpush1.bf16.msra.mxu0 0
  %130 = vmatprep.subr.bf16.mxu0 0
  %131 = vmatpush1.bf16.msra.mxu0 0
  %132 = vmatprep.subr.bf16.mxu0 0
  %133 = vmatpush1.bf16.msra.mxu0 0
  %134 = vmatprep.subr.bf16.mxu0 0
  %135 = vmatpush1.bf16.msra.mxu0 0
  %136 = vmatprep.subr.bf16.mxu0 0
  %137 = vmatpush1.bf16.msra.mxu0 0
  %138 = vmatprep.subr.bf16.mxu0 0
  %139 = vmatpush1.bf16.msra.mxu0 0
  %140 = vmatprep.subr.bf16.mxu0 0
  %141 = vmatpush1.bf16.msra.mxu0 0
  %142 = vmatprep.subr.bf16.mxu0 0
  %143 = vmatpush1.bf16.msra.mxu0 0
  %144 = vmatprep.subr.bf16.mxu0 0
  %145 = vmatpush1.bf16.msra.mxu0 0
  %146 = vmatprep.mubr.bf16.mxu0 0
  %147 = vmatmul.mubr.bf16.gmra.mrb[0].mxu0 %v109
  %v148 = vpop.f32.mrb[0].mxu0
  %v149 = vadd.f32 0.0, %v148
  %v150 = vpop.f32.mrb[0].mxu0
  %v151 = vpop.f32.mrb[0].mxu0
  %v152 = vadd.f32 0.0, %v151
  %v153 = vpop.f32.mrb[0].mxu0
  %154 = vmatprep.mubr.bf16.mxu0 0
  %155 = vmatmul.mubr.bf16.gmra.mrb[0].mxu0 %v112
  %v156 = vpop.f32.mrb[0].mxu0
  %v157 = vadd.f32 0.0, %v156
  %v158 = vpop.f32.mrb[0].mxu0
  %v159 = vpop.f32.mrb[0].mxu0
  %v160 = vadd.f32 0.0, %v159
  %v161 = vpop.f32.mrb[0].mxu0
  %162 = vdwg.mxu0
  %v163 = vpack.c.bf16 %v152, %v149
  %v164 = vpack.c.bf16 %v160, %v157
  %v165 = vld [vmem:[%s2] sm:$0xff]
  %v166 = vld [vmem:[%s2 + $0x8] sm:$0xff]
  %v167 = vld [vmem:[%s2 + $0x10] sm:$0xff]
  %v168 = vld [vmem:[%s2 + $0x18] sm:$0xff]
  %v169 = vld [vmem:[%s2 + $0x20] sm:$0xff]
  %v170 = vld [vmem:[%s2 + $0x28] sm:$0xff]
  %v171 = vld [vmem:[%s2 + $0x30] sm:$0xff]
  %v172 = vld [vmem:[%s2 + $0x38] sm:$0xff]
  %v173 = vld [vmem:[%s2 + $0x40] sm:$0xff]
  %v174 = vld [vmem:[%s2 + $0x48] sm:$0xff]
  %v175 = vld [vmem:[%s2 + $0x50] sm:$0xff]
  %v176 = vld [vmem:[%s2 + $0x58] sm:$0xff]
  %s177 = scalar_lea.vmem %s1, 16
  %v178 = vld [vmem:[%s177] sm:$0xf]
  %v179 = vld [vmem:[%s177 + $0x4] sm:$0xf]
  %v180 = vld [vmem:[%s177 + $0x8] sm:$0xf]
  %v181 = vld [vmem:[%s177 + $0xc] sm:$0xf]
  %v186 = vunpack.c.l.b16 %v178
  %v187 = vunpack.c.l.b16 %v179
  %v188 = vunpack.c.l.b16 %v180
  %v189 = vunpack.c.l.b16 %v181
  %v190 = vpack.c.b16 %v187, %v186
  %v191 = vpack.c.b16 %v189, %v188
  %v193 = vsel %vm107, %v190, 0
  %v196 = vsel %vm107, %v191, 0
  %198 = vmatprep.subr.bf16.mxu0 0
  %199 = vmatpush1.bf16.msra.mxu0 %v89
  %200 = vmatprep.subr.bf16.mxu0 0
  %201 = vmatpush1.bf16.msra.mxu0 %v90
  %202 = vmatprep.subr.bf16.mxu0 0
  %203 = vmatpush1.bf16.msra.mxu0 %v91
  %204 = vmatprep.subr.bf16.mxu0 0
  %205 = vmatpush1.bf16.msra.mxu0 %v92
  %206 = vmatprep.subr.bf16.mxu0 0
  %207 = vmatpush1.bf16.msra.mxu0 0
  %208 = vmatprep.subr.bf16.mxu0 0
  %209 = vmatpush1.bf16.msra.mxu0 0
  %210 = vmatprep.subr.bf16.mxu0 0
  %211 = vmatpush1.bf16.msra.mxu0 0
  %212 = vmatprep.subr.bf16.mxu0 0
  %213 = vmatpush1.bf16.msra.mxu0 0
  %214 = vmatprep.subr.bf16.mxu0 0
  %215 = vmatpush1.bf16.msra.mxu0 0
  %216 = vmatprep.subr.bf16.mxu0 0
  %217 = vmatpush1.bf16.msra.mxu0 0
  %218 = vmatprep.subr.bf16.mxu0 0
  %219 = vmatpush1.bf16.msra.mxu0 0
  %220 = vmatprep.subr.bf16.mxu0 0
  %221 = vmatpush1.bf16.msra.mxu0 0
  %222 = vmatprep.subr.bf16.mxu0 0
  %223 = vmatpush1.bf16.msra.mxu0 0
  %224 = vmatprep.subr.bf16.mxu0 0
  %225 = vmatpush1.bf16.msra.mxu0 0
  %226 = vmatprep.subr.bf16.mxu0 0
  %227 = vmatpush1.bf16.msra.mxu0 0
  %228 = vmatprep.subr.bf16.mxu0 0
  %229 = vmatpush1.bf16.msra.mxu0 0
  %230 = vmatprep.mubr.bf16.mxu0 0
  %231 = vmatmul.mubr.bf16.gmra.mrb[0].mxu0 %v193
  %v232 = vpop.f32.mrb[0].mxu0
  %v233 = vadd.f32 0.0, %v232
  %v234 = vpop.f32.mrb[0].mxu0
  %v235 = vpop.f32.mrb[0].mxu0
  %v236 = vadd.f32 0.0, %v235
  %v237 = vpop.f32.mrb[0].mxu0
  %238 = vmatprep.mubr.bf16.mxu0 0
  %239 = vmatmul.mubr.bf16.gmra.mrb[0].mxu0 %v196
  %v240 = vpop.f32.mrb[0].mxu0
  %v241 = vadd.f32 0.0, %v240
  %v242 = vpop.f32.mrb[0].mxu0
  %v243 = vpop.f32.mrb[0].mxu0
  %v244 = vadd.f32 0.0, %v243
  %v245 = vpop.f32.mrb[0].mxu0
  %246 = vdwg.mxu0
  %v247 = vpack.c.bf16 %v236, %v233
  %v248 = vpack.c.bf16 %v244, %v241
  %s249 = scalar_lea.vmem %s2, 96
  %v250 = vld [vmem:[%s249] sm:$0xff]
  %v251 = vld [vmem:[%s249 + $0x8] sm:$0xff]
  %v252 = vld [vmem:[%s249 + $0x10] sm:$0xff]
  %v253 = vld [vmem:[%s249 + $0x18] sm:$0xff]
  %v254 = vld [vmem:[%s249 + $0x20] sm:$0xff]
  %v255 = vld [vmem:[%s249 + $0x28] sm:$0xff]
  %v256 = vld [vmem:[%s249 + $0x30] sm:$0xff]
  %v257 = vld [vmem:[%s249 + $0x38] sm:$0xff]
  %v258 = vld [vmem:[%s249 + $0x40] sm:$0xff]
  %v259 = vld [vmem:[%s249 + $0x48] sm:$0xff]
  %v260 = vld [vmem:[%s249 + $0x50] sm:$0xff]
  %v261 = vld [vmem:[%s249 + $0x58] sm:$0xff]
  %v274 = vunpack.c.l.b16 %v250
  %v275 = vunpack.c.h.b16 %v250
  %v276 = vunpack.c.l.b16 %v251
  %v277 = vunpack.c.h.b16 %v251
  %v278 = vunpack.c.l.b16 %v252
  %v279 = vunpack.c.h.b16 %v252
  %v280 = vunpack.c.l.b16 %v253
  %v281 = vunpack.c.h.b16 %v253
  %v282 = vunpack.c.l.b16 %v254
  %v283 = vunpack.c.h.b16 %v254
  %v284 = vunpack.c.l.b16 %v255
  %v285 = vunpack.c.h.b16 %v255
  %v286 = vunpack.c.l.b16 %v256
  %v287 = vunpack.c.h.b16 %v256
  %v288 = vunpack.c.l.b16 %v257
  %v289 = vunpack.c.h.b16 %v257
  %v290 = vunpack.c.l.b16 %v258
  %v291 = vunpack.c.h.b16 %v258
  %v292 = vunpack.c.l.b16 %v259
  %v293 = vunpack.c.h.b16 %v259
  %v294 = vunpack.c.l.b16 %v260
  %v295 = vunpack.c.h.b16 %v260
  %v296 = vunpack.c.l.b16 %v261
  %v297 = vunpack.c.h.b16 %v261
  %v298 = vpack.c.b16 %v276, %v274
  %v299 = vpack.c.b16 %v277, %v275
  %v300 = vpack.c.b16 %v280, %v278
  %v301 = vpack.c.b16 %v281, %v279
  %v302 = vpack.c.b16 %v284, %v282
  %v303 = vpack.c.b16 %v285, %v283
  %v304 = vpack.c.b16 %v288, %v286
  %v305 = vpack.c.b16 %v289, %v287
  %v306 = vpack.c.b16 %v292, %v290
  %v307 = vpack.c.b16 %v293, %v291
  %v308 = vpack.c.b16 %v296, %v294
  %v309 = vpack.c.b16 %v297, %v295
  %vm322 = vcmask 785408
  %v324 = vsel %vm322, %v247, 0
  %v327 = vsel %vm322, %v248, 0
  %329 = vmatprep.subr.bf16.mxu0 %v299
  %330 = vmatpush1.bf16.msra.mxu0 %v298
  %331 = vmatprep.subr.bf16.mxu0 %v301
  %332 = vmatpush1.bf16.msra.mxu0 %v300
  %333 = vmatprep.subr.bf16.mxu0 %v303
  %334 = vmatpush1.bf16.msra.mxu0 %v302
  %335 = vmatprep.subr.bf16.mxu0 %v305
  %336 = vmatpush1.bf16.msra.mxu0 %v304
  %337 = vmatprep.subr.bf16.mxu0 %v307
  %338 = vmatpush1.bf16.msra.mxu0 %v306
  %339 = vmatprep.subr.bf16.mxu0 %v309
  %340 = vmatpush1.bf16.msra.mxu0 %v308
  %341 = vmatprep.subr.bf16.mxu0 0
  %342 = vmatpush1.bf16.msra.mxu0 0
  %343 = vmatprep.subr.bf16.mxu0 0
  %344 = vmatpush1.bf16.msra.mxu0 0
  %345 = vmatprep.subr.bf16.mxu0 0
  %346 = vmatpush1.bf16.msra.mxu0 0
  %347 = vmatprep.subr.bf16.mxu0 0
  %348 = vmatpush1.bf16.msra.mxu0 0
  %349 = vmatprep.subr.bf16.mxu0 0
  %350 = vmatpush1.bf16.msra.mxu0 0
  %351 = vmatprep.subr.bf16.mxu0 0
  %352 = vmatpush1.bf16.msra.mxu0 0
  %353 = vmatprep.subr.bf16.mxu0 0
  %354 = vmatpush1.bf16.msra.mxu0 0
  %355 = vmatprep.subr.bf16.mxu0 0
  %356 = vmatpush1.bf16.msra.mxu0 0
  %357 = vmatprep.subr.bf16.mxu0 0
  %358 = vmatpush1.bf16.msra.mxu0 0
  %359 = vmatprep.subr.bf16.mxu0 0
  %360 = vmatpush1.bf16.msra.mxu0 0
  %361 = vmatprep.mubr.bf16.mxu0 0
  %362 = vmatmul.mubr.bf16.gmra.mrb[0].mxu0 %v324
  %v363 = vpop.f32.mrb[0].mxu0
  %v364 = vadd.f32 0.0, %v363
  %v365 = vpop.f32.mrb[0].mxu0
  %v366 = vadd.f32 0.0, %v365
  %v367 = vpop.f32.mrb[0].mxu0
  %v368 = vadd.f32 0.0, %v367
  %v369 = vpop.f32.mrb[0].mxu0
  %v370 = vadd.f32 0.0, %v369
  %371 = vmatprep.mubr.bf16.mxu0 0
  %372 = vmatmul.mubr.bf16.gmra.mrb[0].mxu0 %v327
  %v373 = vpop.f32.mrb[0].mxu0
  %v374 = vadd.f32 0.0, %v373
  %v375 = vpop.f32.mrb[0].mxu0
  %v376 = vadd.f32 0.0, %v375
  %v377 = vpop.f32.mrb[0].mxu0
  %v378 = vadd.f32 0.0, %v377
  %v379 = vpop.f32.mrb[0].mxu0
  %v380 = vadd.f32 0.0, %v379
  %381 = vdwg.mxu0
  %v394 = vunpack.c.l.b16 %v165
  %v395 = vunpack.c.h.b16 %v165
  %v396 = vunpack.c.l.b16 %v166
  %v397 = vunpack.c.h.b16 %v166
  %v398 = vunpack.c.l.b16 %v167
  %v399 = vunpack.c.h.b16 %v167
  %v400 = vunpack.c.l.b16 %v168
  %v401 = vunpack.c.h.b16 %v168
  %v402 = vunpack.c.l.b16 %v169
  %v403 = vunpack.c.h.b16 %v169
  %v404 = vunpack.c.l.b16 %v170
  %v405 = vunpack.c.h.b16 %v170
  %v406 = vunpack.c.l.b16 %v171
  %v407 = vunpack.c.h.b16 %v171
  %v408 = vunpack.c.l.b16 %v172
  %v409 = vunpack.c.h.b16 %v172
  %v410 = vunpack.c.l.b16 %v173
  %v411 = vunpack.c.h.b16 %v173
  %v412 = vunpack.c.l.b16 %v174
  %v413 = vunpack.c.h.b16 %v174
  %v414 = vunpack.c.l.b16 %v175
  %v415 = vunpack.c.h.b16 %v175
  %v416 = vunpack.c.l.b16 %v176
  %v417 = vunpack.c.h.b16 %v176
  %v418 = vpack.c.b16 %v396, %v394
  %v419 = vpack.c.b16 %v397, %v395
  %v420 = vpack.c.b16 %v400, %v398
  %v421 = vpack.c.b16 %v401, %v399
  %v422 = vpack.c.b16 %v404, %v402
  %v423 = vpack.c.b16 %v405, %v403
  %v424 = vpack.c.b16 %v408, %v406
  %v425 = vpack.c.b16 %v409, %v407
  %v426 = vpack.c.b16 %v412, %v410
  %v427 = vpack.c.b16 %v413, %v411
  %v428 = vpack.c.b16 %v416, %v414
  %v429 = vpack.c.b16 %v417, %v415
  %v443 = vsel %vm322, %v163, 0
  %v446 = vsel %vm322, %v164, 0
  %448 = vmatprep.subr.bf16.mxu0 %v419
  %449 = vmatpush1.bf16.msra.mxu0 %v418
  %450 = vmatprep.subr.bf16.mxu0 %v421
  %451 = vmatpush1.bf16.msra.mxu0 %v420
  %452 = vmatprep.subr.bf16.mxu0 %v423
  %453 = vmatpush1.bf16.msra.mxu0 %v422
  %454 = vmatprep.subr.bf16.mxu0 %v425
  %455 = vmatpush1.bf16.msra.mxu0 %v424
  %456 = vmatprep.subr.bf16.mxu0 %v427
  %457 = vmatpush1.bf16.msra.mxu0 %v426
  %458 = vmatprep.subr.bf16.mxu0 %v429
  %459 = vmatpush1.bf16.msra.mxu0 %v428
  %460 = vmatprep.subr.bf16.mxu0 0
  %461 = vmatpush1.bf16.msra.mxu0 0
  %462 = vmatprep.subr.bf16.mxu0 0
  %463 = vmatpush1.bf16.msra.mxu0 0
  %464 = vmatprep.subr.bf16.mxu0 0
  %465 = vmatpush1.bf16.msra.mxu0 0
  %466 = vmatprep.subr.bf16.mxu0 0
  %467 = vmatpush1.bf16.msra.mxu0 0
  %468 = vmatprep.subr.bf16.mxu0 0
  %469 = vmatpush1.bf16.msra.mxu0 0
  %470 = vmatprep.subr.bf16.mxu0 0
  %471 = vmatpush1.bf16.msra.mxu0 0
  %472 = vmatprep.subr.bf16.mxu0 0
  %473 = vmatpush1.bf16.msra.mxu0 0
  %474 = vmatprep.subr.bf16.mxu0 0
  %475 = vmatpush1.bf16.msra.mxu0 0
  %476 = vmatprep.subr.bf16.mxu0 0
  %477 = vmatpush1.bf16.msra.mxu0 0
  %478 = vmatprep.subr.bf16.mxu0 0
  %479 = vmatpush1.bf16.msra.mxu0 0
  %480 = vmatprep.mubr.bf16.mxu0 0
  %481 = vmatmul.mubr.bf16.gmra.mrb[0].mxu0 %v443
  %v482 = vpop.f32.mrb[0].mxu0
  %v483 = vadd.f32 %v364, %v482
  %v484 = vpop.f32.mrb[0].mxu0
  %v485 = vadd.f32 %v366, %v484
  %v486 = vpop.f32.mrb[0].mxu0
  %v487 = vadd.f32 %v368, %v486
  %v488 = vpop.f32.mrb[0].mxu0
  %v489 = vadd.f32 %v370, %v488
  %490 = vmatprep.mubr.bf16.mxu0 0
  %491 = vmatmul.mubr.bf16.gmra.mrb[0].mxu0 %v446
  %v492 = vpop.f32.mrb[0].mxu0
  %v493 = vadd.f32 %v374, %v492
  %v494 = vpop.f32.mrb[0].mxu0
  %v495 = vadd.f32 %v376, %v494
  %v496 = vpop.f32.mrb[0].mxu0
  %v497 = vadd.f32 %v378, %v496
  %v498 = vpop.f32.mrb[0].mxu0
  %v499 = vadd.f32 %v380, %v498
  %500 = vdwg.mxu0
  %s501 = scalar_lea.vmem %s1, 32
  %v502 = vld [vmem:[%s501] sm:$0xf]
  %v503 = vld [vmem:[%s501 + $0x4] sm:$0xf]
  %v504 = vld [vmem:[%s501 + $0x8] sm:$0xf]
  %v505 = vld [vmem:[%s501 + $0xc] sm:$0xf]
  %v510 = vunpack.c.l.b16 %v502
  %v511 = vunpack.c.l.b16 %v503
  %v512 = vunpack.c.l.b16 %v504
  %v513 = vunpack.c.l.b16 %v505
  %v514 = vpack.c.b16 %v511, %v510
  %v515 = vpack.c.b16 %v513, %v512
  %v517 = vsel %vm107, %v514, 0
  %v520 = vsel %vm107, %v515, 0
  %522 = vmatprep.subr.bf16.mxu0 0
  %523 = vmatpush1.bf16.msra.mxu0 %v89
  %524 = vmatprep.subr.bf16.mxu0 0
  %525 = vmatpush1.bf16.msra.mxu0 %v90
  %526 = vmatprep.subr.bf16.mxu0 0
  %527 = vmatpush1.bf16.msra.mxu0 %v91
  %528 = vmatprep.subr.bf16.mxu0 0
  %529 = vmatpush1.bf16.msra.mxu0 %v92
  %530 = vmatprep.subr.bf16.mxu0 0
  %531 = vmatpush1.bf16.msra.mxu0 0
  %532 = vmatprep.subr.bf16.mxu0 0
  %533 = vmatpush1.bf16.msra.mxu0 0
  %534 = vmatprep.subr.bf16.mxu0 0
  %535 = vmatpush1.bf16.msra.mxu0 0
  %536 = vmatprep.subr.bf16.mxu0 0
  %537 = vmatpush1.bf16.msra.mxu0 0
  %538 = vmatprep.subr.bf16.mxu0 0
  %539 = vmatpush1.bf16.msra.mxu0 0
  %540 = vmatprep.subr.bf16.mxu0 0
  %541 = vmatpush1.bf16.msra.mxu0 0
  %542 = vmatprep.subr.bf16.mxu0 0
  %543 = vmatpush1.bf16.msra.mxu0 0
  %544 = vmatprep.subr.bf16.mxu0 0
  %545 = vmatpush1.bf16.msra.mxu0 0
  %546 = vmatprep.subr.bf16.mxu0 0
  %547 = vmatpush1.bf16.msra.mxu0 0
  %548 = vmatprep.subr.bf16.mxu0 0
  %549 = vmatpush1.bf16.msra.mxu0 0
  %550 = vmatprep.subr.bf16.mxu0 0
  %551 = vmatpush1.bf16.msra.mxu0 0
  %552 = vmatprep.subr.bf16.mxu0 0
  %553 = vmatpush1.bf16.msra.mxu0 0
  %554 = vmatprep.mubr.bf16.mxu0 0
  %555 = vmatmul.mubr.bf16.gmra.mrb[0].mxu0 %v517
  %v556 = vpop.f32.mrb[0].mxu0
  %v557 = vadd.f32 0.0, %v556
  %v558 = vpop.f32.mrb[0].mxu0
  %v559 = vpop.f32.mrb[0].mxu0
  %v560 = vadd.f32 0.0, %v559
  %v561 = vpop.f32.mrb[0].mxu0
  %562 = vmatprep.mubr.bf16.mxu0 0
  %563 = vmatmul.mubr.bf16.gmra.mrb[0].mxu0 %v520
  %v564 = vpop.f32.mrb[0].mxu0
  %v565 = vadd.f32 0.0, %v564
  %v566 = vpop.f32.mrb[0].mxu0
  %v567 = vpop.f32.mrb[0].mxu0
  %v568 = vadd.f32 0.0, %v567
  %v569 = vpop.f32.mrb[0].mxu0
  %570 = vdwg.mxu0
  %v571 = vpack.c.bf16 %v560, %v557
  %v572 = vpack.c.bf16 %v568, %v565
  %s573 = scalar_lea.vmem %s2, 192
  %v574 = vld [vmem:[%s573] sm:$0xff]
  %v575 = vld [vmem:[%s573 + $0x8] sm:$0xff]
  %v576 = vld [vmem:[%s573 + $0x10] sm:$0xff]
  %v577 = vld [vmem:[%s573 + $0x18] sm:$0xff]
  %v578 = vld [vmem:[%s573 + $0x20] sm:$0xff]
  %v579 = vld [vmem:[%s573 + $0x28] sm:$0xff]
  %v580 = vld [vmem:[%s573 + $0x30] sm:$0xff]
  %v581 = vld [vmem:[%s573 + $0x38] sm:$0xff]
  %v582 = vld [vmem:[%s573 + $0x40] sm:$0xff]
  %v583 = vld [vmem:[%s573 + $0x48] sm:$0xff]
  %v584 = vld [vmem:[%s573 + $0x50] sm:$0xff]
  %v585 = vld [vmem:[%s573 + $0x58] sm:$0xff]
  %v598 = vunpack.c.l.b16 %v574
  %v599 = vunpack.c.h.b16 %v574
  %v600 = vunpack.c.l.b16 %v575
  %v601 = vunpack.c.h.b16 %v575
  %v602 = vunpack.c.l.b16 %v576
  %v603 = vunpack.c.h.b16 %v576
  %v604 = vunpack.c.l.b16 %v577
  %v605 = vunpack.c.h.b16 %v577
  %v606 = vunpack.c.l.b16 %v578
  %v607 = vunpack.c.h.b16 %v578
  %v608 = vunpack.c.l.b16 %v579
  %v609 = vunpack.c.h.b16 %v579
  %v610 = vunpack.c.l.b16 %v580
  %v611 = vunpack.c.h.b16 %v580
  %v612 = vunpack.c.l.b16 %v581
  %v613 = vunpack.c.h.b16 %v581
  %v614 = vunpack.c.l.b16 %v582
  %v615 = vunpack.c.h.b16 %v582
  %v616 = vunpack.c.l.b16 %v583
  %v617 = vunpack.c.h.b16 %v583
  %v618 = vunpack.c.l.b16 %v584
  %v619 = vunpack.c.h.b16 %v584
  %v620 = vunpack.c.l.b16 %v585
  %v621 = vunpack.c.h.b16 %v585
  %v622 = vpack.c.b16 %v600, %v598
  %v623 = vpack.c.b16 %v601, %v599
  %v624 = vpack.c.b16 %v604, %v602
  %v625 = vpack.c.b16 %v605, %v603
  %v626 = vpack.c.b16 %v608, %v606
  %v627 = vpack.c.b16 %v609, %v607
  %v628 = vpack.c.b16 %v612, %v610
  %v629 = vpack.c.b16 %v613, %v611
  %v630 = vpack.c.b16 %v616, %v614
  %v631 = vpack.c.b16 %v617, %v615
  %v632 = vpack.c.b16 %v620, %v618
  %v633 = vpack.c.b16 %v621, %v619
  %v647 = vsel %vm322, %v571, 0
  %v650 = vsel %vm322, %v572, 0
  %652 = vmatprep.subr.bf16.mxu0 %v623
  %653 = vmatpush1.bf16.msra.mxu0 %v622
  %654 = vmatprep.subr.bf16.mxu0 %v625
  %655 = vmatpush1.bf16.msra.mxu0 %v624
  %656 = vmatprep.subr.bf16.mxu0 %v627
  %657 = vmatpush1.bf16.msra.mxu0 %v626
  %658 = vmatprep.subr.bf16.mxu0 %v629
  %659 = vmatpush1.bf16.msra.mxu0 %v628
  %660 = vmatprep.subr.bf16.mxu0 %v631
  %661 = vmatpush1.bf16.msra.mxu0 %v630
  %662 = vmatprep.subr.bf16.mxu0 %v633
  %663 = vmatpush1.bf16.msra.mxu0 %v632
  %664 = vmatprep.subr.bf16.mxu0 0
  %665 = vmatpush1.bf16.msra.mxu0 0
  %666 = vmatprep.subr.bf16.mxu0 0
  %667 = vmatpush1.bf16.msra.mxu0 0
  %668 = vmatprep.subr.bf16.mxu0 0
  %669 = vmatpush1.bf16.msra.mxu0 0
  %670 = vmatprep.subr.bf16.mxu0 0
  %671 = vmatpush1.bf16.msra.mxu0 0
  %672 = vmatprep.subr.bf16.mxu0 0
  %673 = vmatpush1.bf16.msra.mxu0 0
  %674 = vmatprep.subr.bf16.mxu0 0
  %675 = vmatpush1.bf16.msra.mxu0 0
  %676 = vmatprep.subr.bf16.mxu0 0
  %677 = vmatpush1.bf16.msra.mxu0 0
  %678 = vmatprep.subr.bf16.mxu0 0
  %679 = vmatpush1.bf16.msra.mxu0 0
  %680 = vmatprep.subr.bf16.mxu0 0
  %681 = vmatpush1.bf16.msra.mxu0 0
  %682 = vmatprep.subr.bf16.mxu0 0
  %683 = vmatpush1.bf16.msra.mxu0 0
  %684 = vmatprep.mubr.bf16.mxu0 0
  %685 = vmatmul.mubr.bf16.gmra.mrb[0].mxu0 %v647
  %v686 = vpop.f32.mrb[0].mxu0
  %v687 = vadd.f32 0.0, %v686
  %v688 = vpop.f32.mrb[0].mxu0
  %v689 = vadd.f32 0.0, %v688
  %v690 = vpop.f32.mrb[0].mxu0
  %v691 = vadd.f32 0.0, %v690
  %v692 = vpop.f32.mrb[0].mxu0
  %v693 = vadd.f32 0.0, %v692
  %694 = vmatprep.mubr.bf16.mxu0 0
  %695 = vmatmul.mubr.bf16.gmra.mrb[0].mxu0 %v650
  %v696 = vpop.f32.mrb[0].mxu0
  %v697 = vadd.f32 0.0, %v696
  %v698 = vpop.f32.mrb[0].mxu0
  %v699 = vadd.f32 0.0, %v698
  %v700 = vpop.f32.mrb[0].mxu0
  %v701 = vadd.f32 0.0, %v700
  %v702 = vpop.f32.mrb[0].mxu0
  %v703 = vadd.f32 0.0, %v702
  %704 = vdwg.mxu0
  %v705 = vadd.f32 %v483, %v687
  %v706 = vadd.f32 %v485, %v689
  %v707 = vadd.f32 %v487, %v691
  %v708 = vadd.f32 %v489, %v693
  %v709 = vadd.f32 %v493, %v697
  %v710 = vadd.f32 %v495, %v699
  %v711 = vadd.f32 %v497, %v701
  %v712 = vadd.f32 %v499, %v703
  %s713 = scalar_lea.vmem %s1, 48
  %v714 = vld [vmem:[%s713] sm:$0xf]
  %v715 = vld [vmem:[%s713 + $0x4] sm:$0xf]
  %v716 = vld [vmem:[%s713 + $0x8] sm:$0xf]
  %v717 = vld [vmem:[%s713 + $0xc] sm:$0xf]
  %v722 = vunpack.c.l.b16 %v714
  %v723 = vunpack.c.l.b16 %v715
  %v724 = vunpack.c.l.b16 %v716
  %v725 = vunpack.c.l.b16 %v717
  %v726 = vpack.c.b16 %v723, %v722
  %v727 = vpack.c.b16 %v725, %v724
  %v729 = vsel %vm107, %v726, 0
  %v732 = vsel %vm107, %v727, 0
  %734 = vmatprep.subr.bf16.mxu0 0
  %735 = vmatpush1.bf16.msra.mxu0 %v89
  %736 = vmatprep.subr.bf16.mxu0 0
  %737 = vmatpush1.bf16.msra.mxu0 %v90
  %738 = vmatprep.subr.bf16.mxu0 0
  %739 = vmatpush1.bf16.msra.mxu0 %v91
  %740 = vmatprep.subr.bf16.mxu0 0
  %741 = vmatpush1.bf16.msra.mxu0 %v92
  %742 = vmatprep.subr.bf16.mxu0 0
  %743 = vmatpush1.bf16.msra.mxu0 0
  %744 = vmatprep.subr.bf16.mxu0 0
  %745 = vmatpush1.bf16.msra.mxu0 0
  %746 = vmatprep.subr.bf16.mxu0 0
  %747 = vmatpush1.bf16.msra.mxu0 0
  %748 = vmatprep.subr.bf16.mxu0 0
  %749 = vmatpush1.bf16.msra.mxu0 0
  %750 = vmatprep.subr.bf16.mxu0 0
  %751 = vmatpush1.bf16.msra.mxu0 0
  %752 = vmatprep.subr.bf16.mxu0 0
  %753 = vmatpush1.bf16.msra.mxu0 0
  %754 = vmatprep.subr.bf16.mxu0 0
  %755 = vmatpush1.bf16.msra.mxu0 0
  %756 = vmatprep.subr.bf16.mxu0 0
  %757 = vmatpush1.bf16.msra.mxu0 0
  %758 = vmatprep.subr.bf16.mxu0 0
  %759 = vmatpush1.bf16.msra.mxu0 0
  %760 = vmatprep.subr.bf16.mxu0 0
  %761 = vmatpush1.bf16.msra.mxu0 0
  %762 = vmatprep.subr.bf16.mxu0 0
  %763 = vmatpush1.bf16.msra.mxu0 0
  %764 = vmatprep.subr.bf16.mxu0 0
  %765 = vmatpush1.bf16.msra.mxu0 0
  %766 = vmatprep.mubr.bf16.mxu0 0
  %767 = vmatmul.mubr.bf16.gmra.mrb[0].mxu0 %v729
  %v768 = vpop.f32.mrb[0].mxu0
  %v769 = vadd.f32 0.0, %v768
  %v770 = vpop.f32.mrb[0].mxu0
  %v771 = vpop.f32.mrb[0].mxu0
  %v772 = vadd.f32 0.0, %v771
  %v773 = vpop.f32.mrb[0].mxu0
  %774 = vmatprep.mubr.bf16.mxu0 0
  %775 = vmatmul.mubr.bf16.gmra.mrb[0].mxu0 %v732
  %v776 = vpop.f32.mrb[0].mxu0
  %v777 = vadd.f32 0.0, %v776
  %v778 = vpop.f32.mrb[0].mxu0
  %v779 = vpop.f32.mrb[0].mxu0
  %v780 = vadd.f32 0.0, %v779
  %v781 = vpop.f32.mrb[0].mxu0
  %782 = vdwg.mxu0
  %v783 = vpack.c.bf16 %v772, %v769
  %v784 = vpack.c.bf16 %v780, %v777
  %s785 = scalar_lea.vmem %s2, 288
  %v786 = vld [vmem:[%s785] sm:$0xff]
  %v787 = vld [vmem:[%s785 + $0x8] sm:$0xff]
  %v788 = vld [vmem:[%s785 + $0x10] sm:$0xff]
  %v789 = vld [vmem:[%s785 + $0x18] sm:$0xff]
  %v790 = vld [vmem:[%s785 + $0x20] sm:$0xff]
  %v791 = vld [vmem:[%s785 + $0x28] sm:$0xff]
  %v792 = vld [vmem:[%s785 + $0x30] sm:$0xff]
  %v793 = vld [vmem:[%s785 + $0x38] sm:$0xff]
  %v794 = vld [vmem:[%s785 + $0x40] sm:$0xff]
  %v795 = vld [vmem:[%s785 + $0x48] sm:$0xff]
  %v796 = vld [vmem:[%s785 + $0x50] sm:$0xff]
  %v797 = vld [vmem:[%s785 + $0x58] sm:$0xff]
  %v810 = vunpack.c.l.b16 %v786
  %v811 = vunpack.c.h.b16 %v786
  %v812 = vunpack.c.l.b16 %v787
  %v813 = vunpack.c.h.b16 %v787
  %v814 = vunpack.c.l.b16 %v788
  %v815 = vunpack.c.h.b16 %v788
  %v816 = vunpack.c.l.b16 %v789
  %v817 = vunpack.c.h.b16 %v789
  %v818 = vunpack.c.l.b16 %v790
  %v819 = vunpack.c.h.b16 %v790
  %v820 = vunpack.c.l.b16 %v791
  %v821 = vunpack.c.h.b16 %v791
  %v822 = vunpack.c.l.b16 %v792
  %v823 = vunpack.c.h.b16 %v792
  %v824 = vunpack.c.l.b16 %v793
  %v825 = vunpack.c.h.b16 %v793
  %v826 = vunpack.c.l.b16 %v794
  %v827 = vunpack.c.h.b16 %v794
  %v828 = vunpack.c.l.b16 %v795
  %v829 = vunpack.c.h.b16 %v795
  %v830 = vunpack.c.l.b16 %v796
  %v831 = vunpack.c.h.b16 %v796
  %v832 = vunpack.c.l.b16 %v797
  %v833 = vunpack.c.h.b16 %v797
  %v834 = vpack.c.b16 %v812, %v810
  %v835 = vpack.c.b16 %v813, %v811
  %v836 = vpack.c.b16 %v816, %v814
  %v837 = vpack.c.b16 %v817, %v815
  %v838 = vpack.c.b16 %v820, %v818
  %v839 = vpack.c.b16 %v821, %v819
  %v840 = vpack.c.b16 %v824, %v822
  %v841 = vpack.c.b16 %v825, %v823
  %v842 = vpack.c.b16 %v828, %v826
  %v843 = vpack.c.b16 %v829, %v827
  %v844 = vpack.c.b16 %v832, %v830
  %v845 = vpack.c.b16 %v833, %v831
  %v859 = vsel %vm322, %v783, 0
  %v862 = vsel %vm322, %v784, 0
  %864 = vmatprep.subr.bf16.mxu0 %v835
  %865 = vmatpush1.bf16.msra.mxu0 %v834
  %866 = vmatprep.subr.bf16.mxu0 %v837
  %867 = vmatpush1.bf16.msra.mxu0 %v836
  %868 = vmatprep.subr.bf16.mxu0 %v839
  %869 = vmatpush1.bf16.msra.mxu0 %v838
  %870 = vmatprep.subr.bf16.mxu0 %v841
  %871 = vmatpush1.bf16.msra.mxu0 %v840
  %872 = vmatprep.subr.bf16.mxu0 %v843
  %873 = vmatpush1.bf16.msra.mxu0 %v842
  %874 = vmatprep.subr.bf16.mxu0 %v845
  %875 = vmatpush1.bf16.msra.mxu0 %v844
  %876 = vmatprep.subr.bf16.mxu0 0
  %877 = vmatpush1.bf16.msra.mxu0 0
  %878 = vmatprep.subr.bf16.mxu0 0
  %879 = vmatpush1.bf16.msra.mxu0 0
  %880 = vmatprep.subr.bf16.mxu0 0
  %881 = vmatpush1.bf16.msra.mxu0 0
  %882 = vmatprep.subr.bf16.mxu0 0
  %883 = vmatpush1.bf16.msra.mxu0 0
  %884 = vmatprep.subr.bf16.mxu0 0
  %885 = vmatpush1.bf16.msra.mxu0 0
  %886 = vmatprep.subr.bf16.mxu0 0
  %887 = vmatpush1.bf16.msra.mxu0 0
  %888 = vmatprep.subr.bf16.mxu0 0
  %889 = vmatpush1.bf16.msra.mxu0 0
  %890 = vmatprep.subr.bf16.mxu0 0
  %891 = vmatpush1.bf16.msra.mxu0 0
  %892 = vmatprep.subr.bf16.mxu0 0
  %893 = vmatpush1.bf16.msra.mxu0 0
  %894 = vmatprep.subr.bf16.mxu0 0
  %895 = vmatpush1.bf16.msra.mxu0 0
  %896 = vmatprep.mubr.bf16.mxu0 0
  %897 = vmatmul.mubr.bf16.gmra.mrb[0].mxu0 %v859
  %v898 = vpop.f32.mrb[0].mxu0
  %v899 = vadd.f32 0.0, %v898
  %v900 = vpop.f32.mrb[0].mxu0
  %v901 = vadd.f32 0.0, %v900
  %v902 = vpop.f32.mrb[0].mxu0
  %v903 = vadd.f32 0.0, %v902
  %v904 = vpop.f32.mrb[0].mxu0
  %v905 = vadd.f32 0.0, %v904
  %906 = vmatprep.mubr.bf16.mxu0 0
  %907 = vmatmul.mubr.bf16.gmra.mrb[0].mxu0 %v862
  %v908 = vpop.f32.mrb[0].mxu0
  %v909 = vadd.f32 0.0, %v908
  %v910 = vpop.f32.mrb[0].mxu0
  %v911 = vadd.f32 0.0, %v910
  %v912 = vpop.f32.mrb[0].mxu0
  %v913 = vadd.f32 0.0, %v912
  %v914 = vpop.f32.mrb[0].mxu0
  %v915 = vadd.f32 0.0, %v914
  %916 = vdwg.mxu0
  %v917 = vadd.f32 %v705, %v899
  %v918 = vadd.f32 %v706, %v901
  %v919 = vadd.f32 %v707, %v903
  %v920 = vadd.f32 %v708, %v905
  %v921 = vadd.f32 %v709, %v909
  %v922 = vadd.f32 %v710, %v911
  %v923 = vadd.f32 %v711, %v913
  %v924 = vadd.f32 %v712, %v915
  %v925 = vld [vmem:[%s3] sm:$0x3]
  %v927 = vlaneseq
  %v928 = vshrl.u32 %v927, 7
  %v929 = vsub.s32 0, %v928
  %v930 = vrot.slane %v925, %v929
  %v931 = vlaneseq
  %v932 = vshrl.u32 %v931, 7
  %v933 = vsub.s32 1, %v932
  %v934 = vrot.slane %v925, %v933
  %v937 = vadd.f32 %v917, %v930
  %v938 = vadd.f32 %v918, %v934
  %v939 = vadd.f32 %v919, %v930
  %v940 = vadd.f32 %v920, %v934
  %v941 = vadd.f32 %v921, %v930
  %v942 = vadd.f32 %v922, %v934
  %v943 = vadd.f32 %v923, %v930
  %v944 = vadd.f32 %v924, %v934
  %v945 = vmax.f32 %v937, 0.0
  %v946 = vmax.f32 %v938, 0.0
  %v947 = vmax.f32 %v939, 0.0
  %v948 = vmax.f32 %v940, 0.0
  %v949 = vmax.f32 %v941, 0.0
  %v950 = vmax.f32 %v942, 0.0
  %v951 = vmax.f32 %v943, 0.0
  %v952 = vmax.f32 %v944, 0.0
  %v953 = vpack.c.bf16 %v947, %v945
  %v954 = vpack.c.bf16 %v948, %v946
  %v955 = vpack.c.bf16 %v951, %v949
  %v956 = vpack.c.bf16 %v952, %v950
  %v957 = vld [vmem:[%s4] sm:$0xf]
  %v958 = vld [vmem:[%s4 + $0x4] sm:$0xf]
  %v961 = vunpack.c.l.b16 %v957
  %v962 = vunpack.c.l.b16 %v958
  %v963 = vpack.c.b16 %v962, %v961
  %vm964 = vcmask 261120
  %v966 = vsel %vm964, %v963, 0
  %968 = vmatprep.subr.bf16.mxu0 %v954
  %969 = vmatpush1.bf16.msra.mxu0 %v953
  %970 = vmatprep.subr.bf16.mxu0 %v956
  %971 = vmatpush1.bf16.msra.mxu0 %v955
  %972 = vmatprep.subr.bf16.mxu0 0
  %973 = vmatpush1.bf16.msra.mxu0 0
  %974 = vmatprep.subr.bf16.mxu0 0
  %975 = vmatpush1.bf16.msra.mxu0 0
  %976 = vmatprep.subr.bf16.mxu0 0
  %977 = vmatpush1.bf16.msra.mxu0 0
  %978 = vmatprep.subr.bf16.mxu0 0
  %979 = vmatpush1.bf16.msra.mxu0 0
  %980 = vmatprep.subr.bf16.mxu0 0
  %981 = vmatpush1.bf16.msra.mxu0 0
  %982 = vmatprep.subr.bf16.mxu0 0
  %983 = vmatpush1.bf16.msra.mxu0 0
  %984 = vmatprep.subr.bf16.mxu0 0
  %985 = vmatpush1.bf16.msra.mxu0 0
  %986 = vmatprep.subr.bf16.mxu0 0
  %987 = vmatpush1.bf16.msra.mxu0 0
  %988 = vmatprep.subr.bf16.mxu0 0
  %989 = vmatpush1.bf16.msra.mxu0 0
  %990 = vmatprep.subr.bf16.mxu0 0
  %991 = vmatpush1.bf16.msra.mxu0 0
  %992 = vmatprep.subr.bf16.mxu0 0
  %993 = vmatpush1.bf16.msra.mxu0 0
  %994 = vmatprep.subr.bf16.mxu0 0
  %995 = vmatpush1.bf16.msra.mxu0 0
  %996 = vmatprep.subr.bf16.mxu0 0
  %997 = vmatpush1.bf16.msra.mxu0 0
  %998 = vmatprep.subr.bf16.mxu0 0
  %999 = vmatpush1.bf16.msra.mxu0 0
  %1000 = vmatprep.mubr.bf16.mxu0 0
  %1001 = vmatmul.mubr.bf16.gmra.mrb[0].mxu0 %v966
  %v1002 = vpop.f32.mrb[0].mxu0
  %v1003 = vadd.f32 0.0, %v1002
  %v1004 = vpop.f32.mrb[0].mxu0
  %v1005 = vadd.f32 0.0, %v1004
  %v1006 = vpop.f32.mrb[0].mxu0
  %v1007 = vadd.f32 0.0, %v1006
  %v1008 = vpop.f32.mrb[0].mxu0
  %v1009 = vadd.f32 0.0, %v1008
  %1010 = vdwg.mxu0
  %v1011 = vpack.c.bf16 %v1007, %v1003
  %v1012 = vpack.c.bf16 %v1009, %v1005
  %v1013 = vld [vmem:[%s5] sm:$0xff]
  %v1014 = vld [vmem:[%s5 + $0x8] sm:$0xff]
  %v1015 = vld [vmem:[%s5 + $0x10] sm:$0xff]
  %v1016 = vld [vmem:[%s5 + $0x18] sm:$0xff]
  %v1017 = vld [vmem:[%s5 + $0x20] sm:$0xff]
  %v1018 = vld [vmem:[%s5 + $0x28] sm:$0xff]
  %v1019 = vld [vmem:[%s5 + $0x30] sm:$0xff]
  %v1020 = vld [vmem:[%s5 + $0x38] sm:$0xff]
  %v1021 = vld [vmem:[%s5 + $0x40] sm:$0xff]
  %v1022 = vld [vmem:[%s5 + $0x48] sm:$0xff]
  %v1023 = vld [vmem:[%s5 + $0x50] sm:$0xff]
  %v1024 = vld [vmem:[%s5 + $0x58] sm:$0xff]
  %v1025 = vld [vmem:[%s5 + $0x60] sm:$0xff]
  %v1026 = vld [vmem:[%s5 + $0x68] sm:$0xff]
  %v1027 = vld [vmem:[%s5 + $0x70] sm:$0xff]
  %v1028 = vld [vmem:[%s5 + $0x78] sm:$0xff]
  %v1029 = vld [vmem:[%s5 + $0x80] sm:$0xff]
  %v1030 = vld [vmem:[%s5 + $0x88] sm:$0xff]
  %v1031 = vld [vmem:[%s5 + $0x90] sm:$0xff]
  %v1032 = vld [vmem:[%s5 + $0x98] sm:$0xff]
  %v1033 = vld [vmem:[%s5 + $0xa0] sm:$0xff]
  %v1034 = vld [vmem:[%s5 + $0xa8] sm:$0xff]
  %v1035 = vld [vmem:[%s5 + $0xb0] sm:$0xff]
  %v1036 = vld [vmem:[%s5 + $0xb8] sm:$0xff]
  %v1037 = vld [vmem:[%s5 + $0xc0] sm:$0xff]
  %v1038 = vld [vmem:[%s5 + $0xc8] sm:$0xff]
  %v1039 = vld [vmem:[%s5 + $0xd0] sm:$0xff]
  %v1040 = vld [vmem:[%s5 + $0xd8] sm:$0xff]
  %v1041 = vld [vmem:[%s5 + $0xe0] sm:$0xff]
  %v1042 = vld [vmem:[%s5 + $0xe8] sm:$0xff]
  %v1043 = vld [vmem:[%s5 + $0xf0] sm:$0xff]
  %v1044 = vld [vmem:[%s5 + $0xf8] sm:$0xff]
  %s1045 = scalar_lea.vmem %s4, 8
  %v1046 = vld [vmem:[%s1045] sm:$0xf]
  %v1047 = vld [vmem:[%s1045 + $0x4] sm:$0xf]
  %v1050 = vunpack.c.l.b16 %v1046
  %v1051 = vunpack.c.l.b16 %v1047
  %v1052 = vpack.c.b16 %v1051, %v1050
  %v1054 = vsel %vm964, %v1052, 0
  %1056 = vmatprep.subr.bf16.mxu0 %v954
  %1057 = vmatpush1.bf16.msra.mxu0 %v953
  %1058 = vmatprep.subr.bf16.mxu0 %v956
  %1059 = vmatpush1.bf16.msra.mxu0 %v955
  %1060 = vmatprep.subr.bf16.mxu0 0
  %1061 = vmatpush1.bf16.msra.mxu0 0
  %1062 = vmatprep.subr.bf16.mxu0 0
  %1063 = vmatpush1.bf16.msra.mxu0 0
  %1064 = vmatprep.subr.bf16.mxu0 0
  %1065 = vmatpush1.bf16.msra.mxu0 0
  %1066 = vmatprep.subr.bf16.mxu0 0
  %1067 = vmatpush1.bf16.msra.mxu0 0
  %1068 = vmatprep.subr.bf16.mxu0 0
  %1069 = vmatpush1.bf16.msra.mxu0 0
  %1070 = vmatprep.subr.bf16.mxu0 0
  %1071 = vmatpush1.bf16.msra.mxu0 0
  %1072 = vmatprep.subr.bf16.mxu0 0
  %1073 = vmatpush1.bf16.msra.mxu0 0
  %1074 = vmatprep.subr.bf16.mxu0 0
  %1075 = vmatpush1.bf16.msra.mxu0 0
  %1076 = vmatprep.subr.bf16.mxu0 0
  %1077 = vmatpush1.bf16.msra.mxu0 0
  %1078 = vmatprep.subr.bf16.mxu0 0
  %1079 = vmatpush1.bf16.msra.mxu0 0
  %1080 = vmatprep.subr.bf16.mxu0 0
  %1081 = vmatpush1.bf16.msra.mxu0 0
  %1082 = vmatprep.subr.bf16.mxu0 0
  %1083 = vmatpush1.bf16.msra.mxu0 0
  %1084 = vmatprep.subr.bf16.mxu0 0
  %1085 = vmatpush1.bf16.msra.mxu0 0
  %1086 = vmatprep.subr.bf16.mxu0 0
  %1087 = vmatpush1.bf16.msra.mxu0 0
  %1088 = vmatprep.mubr.bf16.mxu0 0
  %1089 = vmatmul.mubr.bf16.gmra.mrb[0].mxu0 %v1054
  %v1090 = vpop.f32.mrb[0].mxu0
  %v1091 = vadd.f32 0.0, %v1090
  %v1092 = vpop.f32.mrb[0].mxu0
  %v1093 = vadd.f32 0.0, %v1092
  %v1094 = vpop.f32.mrb[0].mxu0
  %v1095 = vadd.f32 0.0, %v1094
  %v1096 = vpop.f32.mrb[0].mxu0
  %v1097 = vadd.f32 0.0, %v1096
  %1098 = vdwg.mxu0
  %v1099 = vpack.c.bf16 %v1095, %v1091
  %v1100 = vpack.c.bf16 %v1097, %v1093
  %s1101 = scalar_lea.vmem %s5, 256
  %v1102 = vld [vmem:[%s1101] sm:$0xff]
  %v1103 = vld [vmem:[%s1101 + $0x8] sm:$0xff]
  %v1104 = vld [vmem:[%s1101 + $0x10] sm:$0xff]
  %v1105 = vld [vmem:[%s1101 + $0x18] sm:$0xff]
  %v1106 = vld [vmem:[%s1101 + $0x20] sm:$0xff]
  %v1107 = vld [vmem:[%s1101 + $0x28] sm:$0xff]
  %v1108 = vld [vmem:[%s1101 + $0x30] sm:$0xff]
  %v1109 = vld [vmem:[%s1101 + $0x38] sm:$0xff]
  %v1110 = vld [vmem:[%s1101 + $0x40] sm:$0xff]
  %v1111 = vld [vmem:[%s1101 + $0x48] sm:$0xff]
  %v1112 = vld [vmem:[%s1101 + $0x50] sm:$0xff]
  %v1113 = vld [vmem:[%s1101 + $0x58] sm:$0xff]
  %v1114 = vld [vmem:[%s1101 + $0x60] sm:$0xff]
  %v1115 = vld [vmem:[%s1101 + $0x68] sm:$0xff]
  %v1116 = vld [vmem:[%s1101 + $0x70] sm:$0xff]
  %v1117 = vld [vmem:[%s1101 + $0x78] sm:$0xff]
  %v1118 = vld [vmem:[%s1101 + $0x80] sm:$0xff]
  %v1119 = vld [vmem:[%s1101 + $0x88] sm:$0xff]
  %v1120 = vld [vmem:[%s1101 + $0x90] sm:$0xff]
  %v1121 = vld [vmem:[%s1101 + $0x98] sm:$0xff]
  %v1122 = vld [vmem:[%s1101 + $0xa0] sm:$0xff]
  %v1123 = vld [vmem:[%s1101 + $0xa8] sm:$0xff]
  %v1124 = vld [vmem:[%s1101 + $0xb0] sm:$0xff]
  %v1125 = vld [vmem:[%s1101 + $0xb8] sm:$0xff]
  %v1126 = vld [vmem:[%s1101 + $0xc0] sm:$0xff]
  %v1127 = vld [vmem:[%s1101 + $0xc8] sm:$0xff]
  %v1128 = vld [vmem:[%s1101 + $0xd0] sm:$0xff]
  %v1129 = vld [vmem:[%s1101 + $0xd8] sm:$0xff]
  %v1130 = vld [vmem:[%s1101 + $0xe0] sm:$0xff]
  %v1131 = vld [vmem:[%s1101 + $0xe8] sm:$0xff]
  %v1132 = vld [vmem:[%s1101 + $0xf0] sm:$0xff]
  %v1133 = vld [vmem:[%s1101 + $0xf8] sm:$0xff]
  %v1166 = vunpack.c.l.b16 %v1102
  %v1167 = vunpack.c.h.b16 %v1102
  %v1168 = vunpack.c.l.b16 %v1103
  %v1169 = vunpack.c.h.b16 %v1103
  %v1170 = vunpack.c.l.b16 %v1104
  %v1171 = vunpack.c.h.b16 %v1104
  %v1172 = vunpack.c.l.b16 %v1105
  %v1173 = vunpack.c.h.b16 %v1105
  %v1174 = vunpack.c.l.b16 %v1106
  %v1175 = vunpack.c.h.b16 %v1106
  %v1176 = vunpack.c.l.b16 %v1107
  %v1177 = vunpack.c.h.b16 %v1107
  %v1178 = vunpack.c.l.b16 %v1108
  %v1179 = vunpack.c.h.b16 %v1108
  %v1180 = vunpack.c.l.b16 %v1109
  %v1181 = vunpack.c.h.b16 %v1109
  %v1182 = vunpack.c.l.b16 %v1110
  %v1183 = vunpack.c.h.b16 %v1110
  %v1184 = vunpack.c.l.b16 %v1111
  %v1185 = vunpack.c.h.b16 %v1111
  %v1186 = vunpack.c.l.b16 %v1112
  %v1187 = vunpack.c.h.b16 %v1112
  %v1188 = vunpack.c.l.b16 %v1113
  %v1189 = vunpack.c.h.b16 %v1113
  %v1190 = vunpack.c.l.b16 %v1114
  %v1191 = vunpack.c.h.b16 %v1114
  %v1192 = vunpack.c.l.b16 %v1115
  %v1193 = vunpack.c.h.b16 %v1115
  %v1194 = vunpack.c.l.b16 %v1116
  %v1195 = vunpack.c.h.b16 %v1116
  %v1196 = vunpack.c.l.b16 %v1117
  %v1197 = vunpack.c.h.b16 %v1117
  %v1198 = vunpack.c.l.b16 %v1118
  %v1199 = vunpack.c.h.b16 %v1118
  %v1200 = vunpack.c.l.b16 %v1119
  %v1201 = vunpack.c.h.b16 %v1119
  %v1202 = vunpack.c.l.b16 %v1120
  %v1203 = vunpack.c.h.b16 %v1120
  %v1204 = vunpack.c.l.b16 %v1121
  %v1205 = vunpack.c.h.b16 %v1121
  %v1206 = vunpack.c.l.b16 %v1122
  %v1207 = vunpack.c.h.b16 %v1122
  %v1208 = vunpack.c.l.b16 %v1123
  %v1209 = vunpack.c.h.b16 %v1123
  %v1210 = vunpack.c.l.b16 %v1124
  %v1211 = vunpack.c.h.b16 %v1124
  %v1212 = vunpack.c.l.b16 %v1125
  %v1213 = vunpack.c.h.b16 %v1125
  %v1214 = vunpack.c.l.b16 %v1126
  %v1215 = vunpack.c.h.b16 %v1126
  %v1216 = vunpack.c.l.b16 %v1127
  %v1217 = vunpack.c.h.b16 %v1127
  %v1218 = vunpack.c.l.b16 %v1128
  %v1219 = vunpack.c.h.b16 %v1128
  %v1220 = vunpack.c.l.b16 %v1129
  %v1221 = vunpack.c.h.b16 %v1129
  %v1222 = vunpack.c.l.b16 %v1130
  %v1223 = vunpack.c.h.b16 %v1130
  %v1224 = vunpack.c.l.b16 %v1131
  %v1225 = vunpack.c.h.b16 %v1131
  %v1226 = vunpack.c.l.b16 %v1132
  %v1227 = vunpack.c.h.b16 %v1132
  %v1228 = vunpack.c.l.b16 %v1133
  %v1229 = vunpack.c.h.b16 %v1133
  %v1230 = vpack.c.b16 %v1168, %v1166
  %v1231 = vpack.c.b16 %v1169, %v1167
  %v1232 = vpack.c.b16 %v1172, %v1170
  %v1233 = vpack.c.b16 %v1173, %v1171
  %v1234 = vpack.c.b16 %v1176, %v1174
  %v1235 = vpack.c.b16 %v1177, %v1175
  %v1236 = vpack.c.b16 %v1180, %v1178
  %v1237 = vpack.c.b16 %v1181, %v1179
  %v1238 = vpack.c.b16 %v1184, %v1182
  %v1239 = vpack.c.b16 %v1185, %v1183
  %v1240 = vpack.c.b16 %v1188, %v1186
  %v1241 = vpack.c.b16 %v1189, %v1187
  %v1242 = vpack.c.b16 %v1192, %v1190
  %v1243 = vpack.c.b16 %v1193, %v1191
  %v1244 = vpack.c.b16 %v1196, %v1194
  %v1245 = vpack.c.b16 %v1197, %v1195
  %v1246 = vpack.c.b16 %v1200, %v1198
  %v1247 = vpack.c.b16 %v1201, %v1199
  %v1248 = vpack.c.b16 %v1204, %v1202
  %v1249 = vpack.c.b16 %v1205, %v1203
  %v1250 = vpack.c.b16 %v1208, %v1206
  %v1251 = vpack.c.b16 %v1209, %v1207
  %v1252 = vpack.c.b16 %v1212, %v1210
  %v1253 = vpack.c.b16 %v1213, %v1211
  %v1254 = vpack.c.b16 %v1216, %v1214
  %v1255 = vpack.c.b16 %v1217, %v1215
  %v1256 = vpack.c.b16 %v1220, %v1218
  %v1257 = vpack.c.b16 %v1221, %v1219
  %v1258 = vpack.c.b16 %v1224, %v1222
  %v1259 = vpack.c.b16 %v1225, %v1223
  %v1260 = vpack.c.b16 %v1228, %v1226
  %v1261 = vpack.c.b16 %v1229, %v1227
  %1294 = vmatprep.subr.bf16.mxu0 %v1231
  %1295 = vmatpush1.bf16.msra.mxu0 %v1230
  %1296 = vmatprep.subr.bf16.mxu0 %v1233
  %1297 = vmatpush1.bf16.msra.mxu0 %v1232
  %1298 = vmatprep.subr.bf16.mxu0 %v1235
  %1299 = vmatpush1.bf16.msra.mxu0 %v1234
  %1300 = vmatprep.subr.bf16.mxu0 %v1237
  %1301 = vmatpush1.bf16.msra.mxu0 %v1236
  %1302 = vmatprep.subr.bf16.mxu0 %v1239
  %1303 = vmatpush1.bf16.msra.mxu0 %v1238
  %1304 = vmatprep.subr.bf16.mxu0 %v1241
  %1305 = vmatpush1.bf16.msra.mxu0 %v1240
  %1306 = vmatprep.subr.bf16.mxu0 %v1243
  %1307 = vmatpush1.bf16.msra.mxu0 %v1242
  %1308 = vmatprep.subr.bf16.mxu0 %v1245
  %1309 = vmatpush1.bf16.msra.mxu0 %v1244
  %1310 = vmatprep.subr.bf16.mxu0 %v1247
  %1311 = vmatpush1.bf16.msra.mxu0 %v1246
  %1312 = vmatprep.subr.bf16.mxu0 %v1249
  %1313 = vmatpush1.bf16.msra.mxu0 %v1248
  %1314 = vmatprep.subr.bf16.mxu0 %v1251
  %1315 = vmatpush1.bf16.msra.mxu0 %v1250
  %1316 = vmatprep.subr.bf16.mxu0 %v1253
  %1317 = vmatpush1.bf16.msra.mxu0 %v1252
  %1318 = vmatprep.subr.bf16.mxu0 %v1255
  %1319 = vmatpush1.bf16.msra.mxu0 %v1254
  %1320 = vmatprep.subr.bf16.mxu0 %v1257
  %1321 = vmatpush1.bf16.msra.mxu0 %v1256
  %1322 = vmatprep.subr.bf16.mxu0 %v1259
  %1323 = vmatpush1.bf16.msra.mxu0 %v1258
  %1324 = vmatprep.subr.bf16.mxu0 %v1261
  %1325 = vmatpush1.bf16.msra.mxu0 %v1260
  %1326 = vmatprep.mubr.bf16.mxu0 %v1100
  %1327 = vmatmul.mubr.bf16.gmra.mrb[0].mxu0 %v1099
  %v1328 = vpop.f32.mrb[0].mxu0
  %v1329 = vadd.f32 0.0, %v1328
  %v1330 = vpop.f32.mrb[0].mxu0
  %v1331 = vadd.f32 0.0, %v1330
  %v1332 = vpop.f32.mrb[0].mxu0
  %v1333 = vadd.f32 0.0, %v1332
  %v1334 = vpop.f32.mrb[0].mxu0
  %v1335 = vadd.f32 0.0, %v1334
  %1336 = vdwg.mxu0
  %v1369 = vunpack.c.l.b16 %v1013
  %v1370 = vunpack.c.h.b16 %v1013
  %v1371 = vunpack.c.l.b16 %v1014
  %v1372 = vunpack.c.h.b16 %v1014
  %v1373 = vunpack.c.l.b16 %v1015
  %v1374 = vunpack.c.h.b16 %v1015
  %v1375 = vunpack.c.l.b16 %v1016
  %v1376 = vunpack.c.h.b16 %v1016
  %v1377 = vunpack.c.l.b16 %v1017
  %v1378 = vunpack.c.h.b16 %v1017
  %v1379 = vunpack.c.l.b16 %v1018
  %v1380 = vunpack.c.h.b16 %v1018
  %v1381 = vunpack.c.l.b16 %v1019
  %v1382 = vunpack.c.h.b16 %v1019
  %v1383 = vunpack.c.l.b16 %v1020
  %v1384 = vunpack.c.h.b16 %v1020
  %v1385 = vunpack.c.l.b16 %v1021
  %v1386 = vunpack.c.h.b16 %v1021
  %v1387 = vunpack.c.l.b16 %v1022
  %v1388 = vunpack.c.h.b16 %v1022
  %v1389 = vunpack.c.l.b16 %v1023
  %v1390 = vunpack.c.h.b16 %v1023
  %v1391 = vunpack.c.l.b16 %v1024
  %v1392 = vunpack.c.h.b16 %v1024
  %v1393 = vunpack.c.l.b16 %v1025
  %v1394 = vunpack.c.h.b16 %v1025
  %v1395 = vunpack.c.l.b16 %v1026
  %v1396 = vunpack.c.h.b16 %v1026
  %v1397 = vunpack.c.l.b16 %v1027
  %v1398 = vunpack.c.h.b16 %v1027
  %v1399 = vunpack.c.l.b16 %v1028
  %v1400 = vunpack.c.h.b16 %v1028
  %v1401 = vunpack.c.l.b16 %v1029
  %v1402 = vunpack.c.h.b16 %v1029
  %v1403 = vunpack.c.l.b16 %v1030
  %v1404 = vunpack.c.h.b16 %v1030
  %v1405 = vunpack.c.l.b16 %v1031
  %v1406 = vunpack.c.h.b16 %v1031
  %v1407 = vunpack.c.l.b16 %v1032
  %v1408 = vunpack.c.h.b16 %v1032
  %v1409 = vunpack.c.l.b16 %v1033
  %v1410 = vunpack.c.h.b16 %v1033
  %v1411 = vunpack.c.l.b16 %v1034
  %v1412 = vunpack.c.h.b16 %v1034
  %v1413 = vunpack.c.l.b16 %v1035
  %v1414 = vunpack.c.h.b16 %v1035
  %v1415 = vunpack.c.l.b16 %v1036
  %v1416 = vunpack.c.h.b16 %v1036
  %v1417 = vunpack.c.l.b16 %v1037
  %v1418 = vunpack.c.h.b16 %v1037
  %v1419 = vunpack.c.l.b16 %v1038
  %v1420 = vunpack.c.h.b16 %v1038
  %v1421 = vunpack.c.l.b16 %v1039
  %v1422 = vunpack.c.h.b16 %v1039
  %v1423 = vunpack.c.l.b16 %v1040
  %v1424 = vunpack.c.h.b16 %v1040
  %v1425 = vunpack.c.l.b16 %v1041
  %v1426 = vunpack.c.h.b16 %v1041
  %v1427 = vunpack.c.l.b16 %v1042
  %v1428 = vunpack.c.h.b16 %v1042
  %v1429 = vunpack.c.l.b16 %v1043
  %v1430 = vunpack.c.h.b16 %v1043
  %v1431 = vunpack.c.l.b16 %v1044
  %v1432 = vunpack.c.h.b16 %v1044
  %v1433 = vpack.c.b16 %v1371, %v1369
  %v1434 = vpack.c.b16 %v1372, %v1370
  %v1435 = vpack.c.b16 %v1375, %v1373
  %v1436 = vpack.c.b16 %v1376, %v1374
  %v1437 = vpack.c.b16 %v1379, %v1377
  %v1438 = vpack.c.b16 %v1380, %v1378
  %v1439 = vpack.c.b16 %v1383, %v1381
  %v1440 = vpack.c.b16 %v1384, %v1382
  %v1441 = vpack.c.b16 %v1387, %v1385
  %v1442 = vpack.c.b16 %v1388, %v1386
  %v1443 = vpack.c.b16 %v1391, %v1389
  %v1444 = vpack.c.b16 %v1392, %v1390
  %v1445 = vpack.c.b16 %v1395, %v1393
  %v1446 = vpack.c.b16 %v1396, %v1394
  %v1447 = vpack.c.b16 %v1399, %v1397
  %v1448 = vpack.c.b16 %v1400, %v1398
  %v1449 = vpack.c.b16 %v1403, %v1401
  %v1450 = vpack.c.b16 %v1404, %v1402
  %v1451 = vpack.c.b16 %v1407, %v1405
  %v1452 = vpack.c.b16 %v1408, %v1406
  %v1453 = vpack.c.b16 %v1411, %v1409
  %v1454 = vpack.c.b16 %v1412, %v1410
  %v1455 = vpack.c.b16 %v1415, %v1413
  %v1456 = vpack.c.b16 %v1416, %v1414
  %v1457 = vpack.c.b16 %v1419, %v1417
  %v1458 = vpack.c.b16 %v1420, %v1418
  %v1459 = vpack.c.b16 %v1423, %v1421
  %v1460 = vpack.c.b16 %v1424, %v1422
  %v1461 = vpack.c.b16 %v1427, %v1425
  %v1462 = vpack.c.b16 %v1428, %v1426
  %v1463 = vpack.c.b16 %v1431, %v1429
  %v1464 = vpack.c.b16 %v1432, %v1430
  %1497 = vmatprep.subr.bf16.mxu0 %v1434
  %1498 = vmatpush1.bf16.msra.mxu0 %v1433
  %1499 = vmatprep.subr.bf16.mxu0 %v1436
  %1500 = vmatpush1.bf16.msra.mxu0 %v1435
  %1501 = vmatprep.subr.bf16.mxu0 %v1438
  %1502 = vmatpush1.bf16.msra.mxu0 %v1437
  %1503 = vmatprep.subr.bf16.mxu0 %v1440
  %1504 = vmatpush1.bf16.msra.mxu0 %v1439
  %1505 = vmatprep.subr.bf16.mxu0 %v1442
  %1506 = vmatpush1.bf16.msra.mxu0 %v1441
  %1507 = vmatprep.subr.bf16.mxu0 %v1444
  %1508 = vmatpush1.bf16.msra.mxu0 %v1443
  %1509 = vmatprep.subr.bf16.mxu0 %v1446
  %1510 = vmatpush1.bf16.msra.mxu0 %v1445
  %1511 = vmatprep.subr.bf16.mxu0 %v1448
  %1512 = vmatpush1.bf16.msra.mxu0 %v1447
  %1513 = vmatprep.subr.bf16.mxu0 %v1450
  %1514 = vmatpush1.bf16.msra.mxu0 %v1449
  %1515 = vmatprep.subr.bf16.mxu0 %v1452
  %1516 = vmatpush1.bf16.msra.mxu0 %v1451
  %1517 = vmatprep.subr.bf16.mxu0 %v1454
  %1518 = vmatpush1.bf16.msra.mxu0 %v1453
  %1519 = vmatprep.subr.bf16.mxu0 %v1456
  %1520 = vmatpush1.bf16.msra.mxu0 %v1455
  %1521 = vmatprep.subr.bf16.mxu0 %v1458
  %1522 = vmatpush1.bf16.msra.mxu0 %v1457
  %1523 = vmatprep.subr.bf16.mxu0 %v1460
  %1524 = vmatpush1.bf16.msra.mxu0 %v1459
  %1525 = vmatprep.subr.bf16.mxu0 %v1462
  %1526 = vmatpush1.bf16.msra.mxu0 %v1461
  %1527 = vmatprep.subr.bf16.mxu0 %v1464
  %1528 = vmatpush1.bf16.msra.mxu0 %v1463
  %1529 = vmatprep.mubr.bf16.mxu0 %v1012
  %1530 = vmatmul.mubr.bf16.gmra.mrb[0].mxu0 %v1011
  %v1531 = vpop.f32.mrb[0].mxu0
  %v1532 = vadd.f32 %v1329, %v1531
  %v1533 = vpop.f32.mrb[0].mxu0
  %v1534 = vadd.f32 %v1331, %v1533
  %v1535 = vpop.f32.mrb[0].mxu0
  %v1536 = vadd.f32 %v1333, %v1535
  %v1537 = vpop.f32.mrb[0].mxu0
  %v1538 = vadd.f32 %v1335, %v1537
  %1539 = vdwg.mxu0
  %s1540 = scalar_lea.vmem %s4, 16
  %v1541 = vld [vmem:[%s1540] sm:$0xf]
  %v1542 = vld [vmem:[%s1540 + $0x4] sm:$0xf]
  %v1545 = vunpack.c.l.b16 %v1541
  %v1546 = vunpack.c.l.b16 %v1542
  %v1547 = vpack.c.b16 %v1546, %v1545
  %v1549 = vsel %vm964, %v1547, 0
  %1551 = vmatprep.subr.bf16.mxu0 %v954
  %1552 = vmatpush1.bf16.msra.mxu0 %v953
  %1553 = vmatprep.subr.bf16.mxu0 %v956
  %1554 = vmatpush1.bf16.msra.mxu0 %v955
  %1555 = vmatprep.subr.bf16.mxu0 0
  %1556 = vmatpush1.bf16.msra.mxu0 0
  %1557 = vmatprep.subr.bf16.mxu0 0
  %1558 = vmatpush1.bf16.msra.mxu0 0
  %1559 = vmatprep.subr.bf16.mxu0 0
  %1560 = vmatpush1.bf16.msra.mxu0 0
  %1561 = vmatprep.subr.bf16.mxu0 0
  %1562 = vmatpush1.bf16.msra.mxu0 0
  %1563 = vmatprep.subr.bf16.mxu0 0
  %1564 = vmatpush1.bf16.msra.mxu0 0
  %1565 = vmatprep.subr.bf16.mxu0 0
  %1566 = vmatpush1.bf16.msra.mxu0 0
  %1567 = vmatprep.subr.bf16.mxu0 0
  %1568 = vmatpush1.bf16.msra.mxu0 0
  %1569 = vmatprep.subr.bf16.mxu0 0
  %1570 = vmatpush1.bf16.msra.mxu0 0
  %1571 = vmatprep.subr.bf16.mxu0 0
  %1572 = vmatpush1.bf16.msra.mxu0 0
  %1573 = vmatprep.subr.bf16.mxu0 0
  %1574 = vmatpush1.bf16.msra.mxu0 0
  %1575 = vmatprep.subr.bf16.mxu0 0
  %1576 = vmatpush1.bf16.msra.mxu0 0
  %1577 = vmatprep.subr.bf16.mxu0 0
  %1578 = vmatpush1.bf16.msra.mxu0 0
  %1579 = vmatprep.subr.bf16.mxu0 0
  %1580 = vmatpush1.bf16.msra.mxu0 0
  %1581 = vmatprep.subr.bf16.mxu0 0
  %1582 = vmatpush1.bf16.msra.mxu0 0
  %1583 = vmatprep.mubr.bf16.mxu0 0
  %1584 = vmatmul.mubr.bf16.gmra.mrb[0].mxu0 %v1549
  %v1585 = vpop.f32.mrb[0].mxu0
  %v1586 = vadd.f32 0.0, %v1585
  %v1587 = vpop.f32.mrb[0].mxu0
  %v1588 = vadd.f32 0.0, %v1587
  %v1589 = vpop.f32.mrb[0].mxu0
  %v1590 = vadd.f32 0.0, %v1589
  %v1591 = vpop.f32.mrb[0].mxu0
  %v1592 = vadd.f32 0.0, %v1591
  %1593 = vdwg.mxu0
  %v1594 = vpack.c.bf16 %v1590, %v1586
  %v1595 = vpack.c.bf16 %v1592, %v1588
  %s1596 = scalar_lea.vmem %s5, 512
  %v1597 = vld [vmem:[%s1596] sm:$0xff]
  %v1598 = vld [vmem:[%s1596 + $0x8] sm:$0xff]
  %v1599 = vld [vmem:[%s1596 + $0x10] sm:$0xff]
  %v1600 = vld [vmem:[%s1596 + $0x18] sm:$0xff]
  %v1601 = vld [vmem:[%s1596 + $0x20] sm:$0xff]
  %v1602 = vld [vmem:[%s1596 + $0x28] sm:$0xff]
  %v1603 = vld [vmem:[%s1596 + $0x30] sm:$0xff]
  %v1604 = vld [vmem:[%s1596 + $0x38] sm:$0xff]
  %v1605 = vld [vmem:[%s1596 + $0x40] sm:$0xff]
  %v1606 = vld [vmem:[%s1596 + $0x48] sm:$0xff]
  %v1607 = vld [vmem:[%s1596 + $0x50] sm:$0xff]
  %v1608 = vld [vmem:[%s1596 + $0x58] sm:$0xff]
  %v1609 = vld [vmem:[%s1596 + $0x60] sm:$0xff]
  %v1610 = vld [vmem:[%s1596 + $0x68] sm:$0xff]
  %v1611 = vld [vmem:[%s1596 + $0x70] sm:$0xff]
  %v1612 = vld [vmem:[%s1596 + $0x78] sm:$0xff]
  %v1613 = vld [vmem:[%s1596 + $0x80] sm:$0xff]
  %v1614 = vld [vmem:[%s1596 + $0x88] sm:$0xff]
  %v1615 = vld [vmem:[%s1596 + $0x90] sm:$0xff]
  %v1616 = vld [vmem:[%s1596 + $0x98] sm:$0xff]
  %v1617 = vld [vmem:[%s1596 + $0xa0] sm:$0xff]
  %v1618 = vld [vmem:[%s1596 + $0xa8] sm:$0xff]
  %v1619 = vld [vmem:[%s1596 + $0xb0] sm:$0xff]
  %v1620 = vld [vmem:[%s1596 + $0xb8] sm:$0xff]
  %v1621 = vld [vmem:[%s1596 + $0xc0] sm:$0xff]
  %v1622 = vld [vmem:[%s1596 + $0xc8] sm:$0xff]
  %v1623 = vld [vmem:[%s1596 + $0xd0] sm:$0xff]
  %v1624 = vld [vmem:[%s1596 + $0xd8] sm:$0xff]
  %v1625 = vld [vmem:[%s1596 + $0xe0] sm:$0xff]
  %v1626 = vld [vmem:[%s1596 + $0xe8] sm:$0xff]
  %v1627 = vld [vmem:[%s1596 + $0xf0] sm:$0xff]
  %v1628 = vld [vmem:[%s1596 + $0xf8] sm:$0xff]
  %v1661 = vunpack.c.l.b16 %v1597
  %v1662 = vunpack.c.h.b16 %v1597
  %v1663 = vunpack.c.l.b16 %v1598
  %v1664 = vunpack.c.h.b16 %v1598
  %v1665 = vunpack.c.l.b16 %v1599
  %v1666 = vunpack.c.h.b16 %v1599
  %v1667 = vunpack.c.l.b16 %v1600
  %v1668 = vunpack.c.h.b16 %v1600
  %v1669 = vunpack.c.l.b16 %v1601
  %v1670 = vunpack.c.h.b16 %v1601
  %v1671 = vunpack.c.l.b16 %v1602
  %v1672 = vunpack.c.h.b16 %v1602
  %v1673 = vunpack.c.l.b16 %v1603
  %v1674 = vunpack.c.h.b16 %v1603
  %v1675 = vunpack.c.l.b16 %v1604
  %v1676 = vunpack.c.h.b16 %v1604
  %v1677 = vunpack.c.l.b16 %v1605
  %v1678 = vunpack.c.h.b16 %v1605
  %v1679 = vunpack.c.l.b16 %v1606
  %v1680 = vunpack.c.h.b16 %v1606
  %v1681 = vunpack.c.l.b16 %v1607
  %v1682 = vunpack.c.h.b16 %v1607
  %v1683 = vunpack.c.l.b16 %v1608
  %v1684 = vunpack.c.h.b16 %v1608
  %v1685 = vunpack.c.l.b16 %v1609
  %v1686 = vunpack.c.h.b16 %v1609
  %v1687 = vunpack.c.l.b16 %v1610
  %v1688 = vunpack.c.h.b16 %v1610
  %v1689 = vunpack.c.l.b16 %v1611
  %v1690 = vunpack.c.h.b16 %v1611
  %v1691 = vunpack.c.l.b16 %v1612
  %v1692 = vunpack.c.h.b16 %v1612
  %v1693 = vunpack.c.l.b16 %v1613
  %v1694 = vunpack.c.h.b16 %v1613
  %v1695 = vunpack.c.l.b16 %v1614
  %v1696 = vunpack.c.h.b16 %v1614
  %v1697 = vunpack.c.l.b16 %v1615
  %v1698 = vunpack.c.h.b16 %v1615
  %v1699 = vunpack.c.l.b16 %v1616
  %v1700 = vunpack.c.h.b16 %v1616
  %v1701 = vunpack.c.l.b16 %v1617
  %v1702 = vunpack.c.h.b16 %v1617
  %v1703 = vunpack.c.l.b16 %v1618
  %v1704 = vunpack.c.h.b16 %v1618
  %v1705 = vunpack.c.l.b16 %v1619
  %v1706 = vunpack.c.h.b16 %v1619
  %v1707 = vunpack.c.l.b16 %v1620
  %v1708 = vunpack.c.h.b16 %v1620
  %v1709 = vunpack.c.l.b16 %v1621
  %v1710 = vunpack.c.h.b16 %v1621
  %v1711 = vunpack.c.l.b16 %v1622
  %v1712 = vunpack.c.h.b16 %v1622
  %v1713 = vunpack.c.l.b16 %v1623
  %v1714 = vunpack.c.h.b16 %v1623
  %v1715 = vunpack.c.l.b16 %v1624
  %v1716 = vunpack.c.h.b16 %v1624
  %v1717 = vunpack.c.l.b16 %v1625
  %v1718 = vunpack.c.h.b16 %v1625
  %v1719 = vunpack.c.l.b16 %v1626
  %v1720 = vunpack.c.h.b16 %v1626
  %v1721 = vunpack.c.l.b16 %v1627
  %v1722 = vunpack.c.h.b16 %v1627
  %v1723 = vunpack.c.l.b16 %v1628
  %v1724 = vunpack.c.h.b16 %v1628
  %v1725 = vpack.c.b16 %v1663, %v1661
  %v1726 = vpack.c.b16 %v1664, %v1662
  %v1727 = vpack.c.b16 %v1667, %v1665
  %v1728 = vpack.c.b16 %v1668, %v1666
  %v1729 = vpack.c.b16 %v1671, %v1669
  %v1730 = vpack.c.b16 %v1672, %v1670
  %v1731 = vpack.c.b16 %v1675, %v1673
  %v1732 = vpack.c.b16 %v1676, %v1674
  %v1733 = vpack.c.b16 %v1679, %v1677
  %v1734 = vpack.c.b16 %v1680, %v1678
  %v1735 = vpack.c.b16 %v1683, %v1681
  %v1736 = vpack.c.b16 %v1684, %v1682
  %v1737 = vpack.c.b16 %v1687, %v1685
  %v1738 = vpack.c.b16 %v1688, %v1686
  %v1739 = vpack.c.b16 %v1691, %v1689
  %v1740 = vpack.c.b16 %v1692, %v1690
  %v1741 = vpack.c.b16 %v1695, %v1693
  %v1742 = vpack.c.b16 %v1696, %v1694
  %v1743 = vpack.c.b16 %v1699, %v1697
  %v1744 = vpack.c.b16 %v1700, %v1698
  %v1745 = vpack.c.b16 %v1703, %v1701
  %v1746 = vpack.c.b16 %v1704, %v1702
  %v1747 = vpack.c.b16 %v1707, %v1705
  %v1748 = vpack.c.b16 %v1708, %v1706
  %v1749 = vpack.c.b16 %v1711, %v1709
  %v1750 = vpack.c.b16 %v1712, %v1710
  %v1751 = vpack.c.b16 %v1715, %v1713
  %v1752 = vpack.c.b16 %v1716, %v1714
  %v1753 = vpack.c.b16 %v1719, %v1717
  %v1754 = vpack.c.b16 %v1720, %v1718
  %v1755 = vpack.c.b16 %v1723, %v1721
  %v1756 = vpack.c.b16 %v1724, %v1722
  %1789 = vmatprep.subr.bf16.mxu0 %v1726
  %1790 = vmatpush1.bf16.msra.mxu0 %v1725
  %1791 = vmatprep.subr.bf16.mxu0 %v1728
  %1792 = vmatpush1.bf16.msra.mxu0 %v1727
  %1793 = vmatprep.subr.bf16.mxu0 %v1730
  %1794 = vmatpush1.bf16.msra.mxu0 %v1729
  %1795 = vmatprep.subr.bf16.mxu0 %v1732
  %1796 = vmatpush1.bf16.msra.mxu0 %v1731
  %1797 = vmatprep.subr.bf16.mxu0 %v1734
  %1798 = vmatpush1.bf16.msra.mxu0 %v1733
  %1799 = vmatprep.subr.bf16.mxu0 %v1736
  %1800 = vmatpush1.bf16.msra.mxu0 %v1735
  %1801 = vmatprep.subr.bf16.mxu0 %v1738
  %1802 = vmatpush1.bf16.msra.mxu0 %v1737
  %1803 = vmatprep.subr.bf16.mxu0 %v1740
  %1804 = vmatpush1.bf16.msra.mxu0 %v1739
  %1805 = vmatprep.subr.bf16.mxu0 %v1742
  %1806 = vmatpush1.bf16.msra.mxu0 %v1741
  %1807 = vmatprep.subr.bf16.mxu0 %v1744
  %1808 = vmatpush1.bf16.msra.mxu0 %v1743
  %1809 = vmatprep.subr.bf16.mxu0 %v1746
  %1810 = vmatpush1.bf16.msra.mxu0 %v1745
  %1811 = vmatprep.subr.bf16.mxu0 %v1748
  %1812 = vmatpush1.bf16.msra.mxu0 %v1747
  %1813 = vmatprep.subr.bf16.mxu0 %v1750
  %1814 = vmatpush1.bf16.msra.mxu0 %v1749
  %1815 = vmatprep.subr.bf16.mxu0 %v1752
  %1816 = vmatpush1.bf16.msra.mxu0 %v1751
  %1817 = vmatprep.subr.bf16.mxu0 %v1754
  %1818 = vmatpush1.bf16.msra.mxu0 %v1753
  %1819 = vmatprep.subr.bf16.mxu0 %v1756
  %1820 = vmatpush1.bf16.msra.mxu0 %v1755
  %1821 = vmatprep.mubr.bf16.mxu0 %v1595
  %1822 = vmatmul.mubr.bf16.gmra.mrb[0].mxu0 %v1594
  %v1823 = vpop.f32.mrb[0].mxu0
  %v1824 = vadd.f32 0.0, %v1823
  %v1825 = vpop.f32.mrb[0].mxu0
  %v1826 = vadd.f32 0.0, %v1825
  %v1827 = vpop.f32.mrb[0].mxu0
  %v1828 = vadd.f32 0.0, %v1827
  %v1829 = vpop.f32.mrb[0].mxu0
  %v1830 = vadd.f32 0.0, %v1829
  %1831 = vdwg.mxu0
  %v1832 = vadd.f32 %v1532, %v1824
  %v1833 = vadd.f32 %v1534, %v1826
  %v1834 = vadd.f32 %v1536, %v1828
  %v1835 = vadd.f32 %v1538, %v1830
  %s1836 = scalar_lea.vmem %s4, 24
  %v1837 = vld [vmem:[%s1836] sm:$0xf]
  %v1838 = vld [vmem:[%s1836 + $0x4] sm:$0xf]
  %v1841 = vunpack.c.l.b16 %v1837
  %v1842 = vunpack.c.l.b16 %v1838
  %v1843 = vpack.c.b16 %v1842, %v1841
  %v1845 = vsel %vm964, %v1843, 0
  %1847 = vmatprep.subr.bf16.mxu0 %v954
  %1848 = vmatpush1.bf16.msra.mxu0 %v953
  %1849 = vmatprep.subr.bf16.mxu0 %v956
  %1850 = vmatpush1.bf16.msra.mxu0 %v955
  %1851 = vmatprep.subr.bf16.mxu0 0
  %1852 = vmatpush1.bf16.msra.mxu0 0
  %1853 = vmatprep.subr.bf16.mxu0 0
  %1854 = vmatpush1.bf16.msra.mxu0 0
  %1855 = vmatprep.subr.bf16.mxu0 0
  %1856 = vmatpush1.bf16.msra.mxu0 0
  %1857 = vmatprep.subr.bf16.mxu0 0
  %1858 = vmatpush1.bf16.msra.mxu0 0
  %1859 = vmatprep.subr.bf16.mxu0 0
  %1860 = vmatpush1.bf16.msra.mxu0 0
  %1861 = vmatprep.subr.bf16.mxu0 0
  %1862 = vmatpush1.bf16.msra.mxu0 0
  %1863 = vmatprep.subr.bf16.mxu0 0
  %1864 = vmatpush1.bf16.msra.mxu0 0
  %1865 = vmatprep.subr.bf16.mxu0 0
  %1866 = vmatpush1.bf16.msra.mxu0 0
  %1867 = vmatprep.subr.bf16.mxu0 0
  %1868 = vmatpush1.bf16.msra.mxu0 0
  %1869 = vmatprep.subr.bf16.mxu0 0
  %1870 = vmatpush1.bf16.msra.mxu0 0
  %1871 = vmatprep.subr.bf16.mxu0 0
  %1872 = vmatpush1.bf16.msra.mxu0 0
  %1873 = vmatprep.subr.bf16.mxu0 0
  %1874 = vmatpush1.bf16.msra.mxu0 0
  %1875 = vmatprep.subr.bf16.mxu0 0
  %1876 = vmatpush1.bf16.msra.mxu0 0
  %1877 = vmatprep.subr.bf16.mxu0 0
  %1878 = vmatpush1.bf16.msra.mxu0 0
  %1879 = vmatprep.mubr.bf16.mxu0 0
  %1880 = vmatmul.mubr.bf16.gmra.mrb[0].mxu0 %v1845
  %v1881 = vpop.f32.mrb[0].mxu0
  %v1882 = vadd.f32 0.0, %v1881
  %v1883 = vpop.f32.mrb[0].mxu0
  %v1884 = vadd.f32 0.0, %v1883
  %v1885 = vpop.f32.mrb[0].mxu0
  %v1886 = vadd.f32 0.0, %v1885
  %v1887 = vpop.f32.mrb[0].mxu0
  %v1888 = vadd.f32 0.0, %v1887
  %1889 = vdwg.mxu0
  %v1890 = vpack.c.bf16 %v1886, %v1882
  %v1891 = vpack.c.bf16 %v1888, %v1884
  %s1892 = scalar_lea.vmem %s5, 768
  %v1893 = vld [vmem:[%s1892] sm:$0xff]
  %v1894 = vld [vmem:[%s1892 + $0x8] sm:$0xff]
  %v1895 = vld [vmem:[%s1892 + $0x10] sm:$0xff]
  %v1896 = vld [vmem:[%s1892 + $0x18] sm:$0xff]
  %v1897 = vld [vmem:[%s1892 + $0x20] sm:$0xff]
  %v1898 = vld [vmem:[%s1892 + $0x28] sm:$0xff]
  %v1899 = vld [vmem:[%s1892 + $0x30] sm:$0xff]
  %v1900 = vld [vmem:[%s1892 + $0x38] sm:$0xff]
  %v1901 = vld [vmem:[%s1892 + $0x40] sm:$0xff]
  %v1902 = vld [vmem:[%s1892 + $0x48] sm:$0xff]
  %v1903 = vld [vmem:[%s1892 + $0x50] sm:$0xff]
  %v1904 = vld [vmem:[%s1892 + $0x58] sm:$0xff]
  %v1905 = vld [vmem:[%s1892 + $0x60] sm:$0xff]
  %v1906 = vld [vmem:[%s1892 + $0x68] sm:$0xff]
  %v1907 = vld [vmem:[%s1892 + $0x70] sm:$0xff]
  %v1908 = vld [vmem:[%s1892 + $0x78] sm:$0xff]
  %v1909 = vld [vmem:[%s1892 + $0x80] sm:$0xff]
  %v1910 = vld [vmem:[%s1892 + $0x88] sm:$0xff]
  %v1911 = vld [vmem:[%s1892 + $0x90] sm:$0xff]
  %v1912 = vld [vmem:[%s1892 + $0x98] sm:$0xff]
  %v1913 = vld [vmem:[%s1892 + $0xa0] sm:$0xff]
  %v1914 = vld [vmem:[%s1892 + $0xa8] sm:$0xff]
  %v1915 = vld [vmem:[%s1892 + $0xb0] sm:$0xff]
  %v1916 = vld [vmem:[%s1892 + $0xb8] sm:$0xff]
  %v1917 = vld [vmem:[%s1892 + $0xc0] sm:$0xff]
  %v1918 = vld [vmem:[%s1892 + $0xc8] sm:$0xff]
  %v1919 = vld [vmem:[%s1892 + $0xd0] sm:$0xff]
  %v1920 = vld [vmem:[%s1892 + $0xd8] sm:$0xff]
  %v1921 = vld [vmem:[%s1892 + $0xe0] sm:$0xff]
  %v1922 = vld [vmem:[%s1892 + $0xe8] sm:$0xff]
  %v1923 = vld [vmem:[%s1892 + $0xf0] sm:$0xff]
  %v1924 = vld [vmem:[%s1892 + $0xf8] sm:$0xff]
  %v1957 = vunpack.c.l.b16 %v1893
  %v1958 = vunpack.c.h.b16 %v1893
  %v1959 = vunpack.c.l.b16 %v1894
  %v1960 = vunpack.c.h.b16 %v1894
  %v1961 = vunpack.c.l.b16 %v1895
  %v1962 = vunpack.c.h.b16 %v1895
  %v1963 = vunpack.c.l.b16 %v1896
  %v1964 = vunpack.c.h.b16 %v1896
  %v1965 = vunpack.c.l.b16 %v1897
  %v1966 = vunpack.c.h.b16 %v1897
  %v1967 = vunpack.c.l.b16 %v1898
  %v1968 = vunpack.c.h.b16 %v1898
  %v1969 = vunpack.c.l.b16 %v1899
  %v1970 = vunpack.c.h.b16 %v1899
  %v1971 = vunpack.c.l.b16 %v1900
  %v1972 = vunpack.c.h.b16 %v1900
  %v1973 = vunpack.c.l.b16 %v1901
  %v1974 = vunpack.c.h.b16 %v1901
  %v1975 = vunpack.c.l.b16 %v1902
  %v1976 = vunpack.c.h.b16 %v1902
  %v1977 = vunpack.c.l.b16 %v1903
  %v1978 = vunpack.c.h.b16 %v1903
  %v1979 = vunpack.c.l.b16 %v1904
  %v1980 = vunpack.c.h.b16 %v1904
  %v1981 = vunpack.c.l.b16 %v1905
  %v1982 = vunpack.c.h.b16 %v1905
  %v1983 = vunpack.c.l.b16 %v1906
  %v1984 = vunpack.c.h.b16 %v1906
  %v1985 = vunpack.c.l.b16 %v1907
  %v1986 = vunpack.c.h.b16 %v1907
  %v1987 = vunpack.c.l.b16 %v1908
  %v1988 = vunpack.c.h.b16 %v1908
  %v1989 = vunpack.c.l.b16 %v1909
  %v1990 = vunpack.c.h.b16 %v1909
  %v1991 = vunpack.c.l.b16 %v1910
  %v1992 = vunpack.c.h.b16 %v1910
  %v1993 = vunpack.c.l.b16 %v1911
  %v1994 = vunpack.c.h.b16 %v1911
  %v1995 = vunpack.c.l.b16 %v1912
  %v1996 = vunpack.c.h.b16 %v1912
  %v1997 = vunpack.c.l.b16 %v1913
  %v1998 = vunpack.c.h.b16 %v1913
  %v1999 = vunpack.c.l.b16 %v1914
  %v2000 = vunpack.c.h.b16 %v1914
  %v2001 = vunpack.c.l.b16 %v1915
  %v2002 = vunpack.c.h.b16 %v1915
  %v2003 = vunpack.c.l.b16 %v1916
  %v2004 = vunpack.c.h.b16 %v1916
  %v2005 = vunpack.c.l.b16 %v1917
  %v2006 = vunpack.c.h.b16 %v1917
  %v2007 = vunpack.c.l.b16 %v1918
  %v2008 = vunpack.c.h.b16 %v1918
  %v2009 = vunpack.c.l.b16 %v1919
  %v2010 = vunpack.c.h.b16 %v1919
  %v2011 = vunpack.c.l.b16 %v1920
  %v2012 = vunpack.c.h.b16 %v1920
  %v2013 = vunpack.c.l.b16 %v1921
  %v2014 = vunpack.c.h.b16 %v1921
  %v2015 = vunpack.c.l.b16 %v1922
  %v2016 = vunpack.c.h.b16 %v1922
  %v2017 = vunpack.c.l.b16 %v1923
  %v2018 = vunpack.c.h.b16 %v1923
  %v2019 = vunpack.c.l.b16 %v1924
  %v2020 = vunpack.c.h.b16 %v1924
  %v2021 = vpack.c.b16 %v1959, %v1957
  %v2022 = vpack.c.b16 %v1960, %v1958
  %v2023 = vpack.c.b16 %v1963, %v1961
  %v2024 = vpack.c.b16 %v1964, %v1962
  %v2025 = vpack.c.b16 %v1967, %v1965
  %v2026 = vpack.c.b16 %v1968, %v1966
  %v2027 = vpack.c.b16 %v1971, %v1969
  %v2028 = vpack.c.b16 %v1972, %v1970
  %v2029 = vpack.c.b16 %v1975, %v1973
  %v2030 = vpack.c.b16 %v1976, %v1974
  %v2031 = vpack.c.b16 %v1979, %v1977
  %v2032 = vpack.c.b16 %v1980, %v1978
  %v2033 = vpack.c.b16 %v1983, %v1981
  %v2034 = vpack.c.b16 %v1984, %v1982
  %v2035 = vpack.c.b16 %v1987, %v1985
  %v2036 = vpack.c.b16 %v1988, %v1986
  %v2037 = vpack.c.b16 %v1991, %v1989
  %v2038 = vpack.c.b16 %v1992, %v1990
  %v2039 = vpack.c.b16 %v1995, %v1993
  %v2040 = vpack.c.b16 %v1996, %v1994
  %v2041 = vpack.c.b16 %v1999, %v1997
  %v2042 = vpack.c.b16 %v2000, %v1998
  %v2043 = vpack.c.b16 %v2003, %v2001
  %v2044 = vpack.c.b16 %v2004, %v2002
  %v2045 = vpack.c.b16 %v2007, %v2005
  %v2046 = vpack.c.b16 %v2008, %v2006
  %v2047 = vpack.c.b16 %v2011, %v2009
  %v2048 = vpack.c.b16 %v2012, %v2010
  %v2049 = vpack.c.b16 %v2015, %v2013
  %v2050 = vpack.c.b16 %v2016, %v2014
  %v2051 = vpack.c.b16 %v2019, %v2017
  %v2052 = vpack.c.b16 %v2020, %v2018
  %2085 = vmatprep.subr.bf16.mxu0 %v2022
  %2086 = vmatpush1.bf16.msra.mxu0 %v2021
  %2087 = vmatprep.subr.bf16.mxu0 %v2024
  %2088 = vmatpush1.bf16.msra.mxu0 %v2023
  %2089 = vmatprep.subr.bf16.mxu0 %v2026
  %2090 = vmatpush1.bf16.msra.mxu0 %v2025
  %2091 = vmatprep.subr.bf16.mxu0 %v2028
  %2092 = vmatpush1.bf16.msra.mxu0 %v2027
  %2093 = vmatprep.subr.bf16.mxu0 %v2030
  %2094 = vmatpush1.bf16.msra.mxu0 %v2029
  %2095 = vmatprep.subr.bf16.mxu0 %v2032
  %2096 = vmatpush1.bf16.msra.mxu0 %v2031
  %2097 = vmatprep.subr.bf16.mxu0 %v2034
  %2098 = vmatpush1.bf16.msra.mxu0 %v2033
  %2099 = vmatprep.subr.bf16.mxu0 %v2036
  %2100 = vmatpush1.bf16.msra.mxu0 %v2035
  %2101 = vmatprep.subr.bf16.mxu0 %v2038
  %2102 = vmatpush1.bf16.msra.mxu0 %v2037
  %2103 = vmatprep.subr.bf16.mxu0 %v2040
  %2104 = vmatpush1.bf16.msra.mxu0 %v2039
  %2105 = vmatprep.subr.bf16.mxu0 %v2042
  %2106 = vmatpush1.bf16.msra.mxu0 %v2041
  %2107 = vmatprep.subr.bf16.mxu0 %v2044
  %2108 = vmatpush1.bf16.msra.mxu0 %v2043
  %2109 = vmatprep.subr.bf16.mxu0 %v2046
  %2110 = vmatpush1.bf16.msra.mxu0 %v2045
  %2111 = vmatprep.subr.bf16.mxu0 %v2048
  %2112 = vmatpush1.bf16.msra.mxu0 %v2047
  %2113 = vmatprep.subr.bf16.mxu0 %v2050
  %2114 = vmatpush1.bf16.msra.mxu0 %v2049
  %2115 = vmatprep.subr.bf16.mxu0 %v2052
  %2116 = vmatpush1.bf16.msra.mxu0 %v2051
  %2117 = vmatprep.mubr.bf16.mxu0 %v1891
  %2118 = vmatmul.mubr.bf16.gmra.mrb[0].mxu0 %v1890
  %v2119 = vpop.f32.mrb[0].mxu0
  %v2120 = vadd.f32 0.0, %v2119
  %v2121 = vpop.f32.mrb[0].mxu0
  %v2122 = vadd.f32 0.0, %v2121
  %v2123 = vpop.f32.mrb[0].mxu0
  %v2124 = vadd.f32 0.0, %v2123
  %v2125 = vpop.f32.mrb[0].mxu0
  %v2126 = vadd.f32 0.0, %v2125
  %2127 = vdwg.mxu0
  %v2128 = vadd.f32 %v1832, %v2120
  %v2129 = vadd.f32 %v1833, %v2122
  %v2130 = vadd.f32 %v1834, %v2124
  %v2131 = vadd.f32 %v1835, %v2126
  %v2132 = vld [vmem:[%s6] sm:$0x3]
  %v2134 = vlaneseq
  %v2135 = vshrl.u32 %v2134, 7
  %v2136 = vsub.s32 0, %v2135
  %v2137 = vrot.slane %v2132, %v2136
  %v2138 = vlaneseq
  %v2139 = vshrl.u32 %v2138, 7
  %v2140 = vsub.s32 1, %v2139
  %v2141 = vrot.slane %v2132, %v2140
  %v2144 = vadd.f32 %v2128, %v2137
  %v2145 = vadd.f32 %v2129, %v2141
  %v2146 = vadd.f32 %v2130, %v2137
  %v2147 = vadd.f32 %v2131, %v2141
  %v2148 = vmax.f32 %v2144, 0.0
  %v2149 = vmax.f32 %v2145, 0.0
  %v2150 = vmax.f32 %v2146, 0.0
  %v2151 = vmax.f32 %v2147, 0.0
  %v2152 = vpack.c.bf16 %v2150, %v2148
  %v2153 = vpack.c.bf16 %v2151, %v2149
  %v2154 = vld [vmem:[%s7] sm:$0xf]
  %vm2155 = vcmask 130048
  %v2157 = vsel %vm2155, %v2154, 0
  %2159 = vmatprep.subr.bf16.mxu0 %v2153
  %2160 = vmatpush1.bf16.msra.mxu0 %v2152
  %2161 = vmatprep.subr.bf16.mxu0 0
  %2162 = vmatpush1.bf16.msra.mxu0 0
  %2163 = vmatprep.subr.bf16.mxu0 0
  %2164 = vmatpush1.bf16.msra.mxu0 0
  %2165 = vmatprep.subr.bf16.mxu0 0
  %2166 = vmatpush1.bf16.msra.mxu0 0
  %2167 = vmatprep.subr.bf16.mxu0 0
  %2168 = vmatpush1.bf16.msra.mxu0 0
  %2169 = vmatprep.subr.bf16.mxu0 0
  %2170 = vmatpush1.bf16.msra.mxu0 0
  %2171 = vmatprep.subr.bf16.mxu0 0
  %2172 = vmatpush1.bf16.msra.mxu0 0
  %2173 = vmatprep.subr.bf16.mxu0 0
  %2174 = vmatpush1.bf16.msra.mxu0 0
  %2175 = vmatprep.subr.bf16.mxu0 0
  %2176 = vmatpush1.bf16.msra.mxu0 0
  %2177 = vmatprep.subr.bf16.mxu0 0
  %2178 = vmatpush1.bf16.msra.mxu0 0
  %2179 = vmatprep.subr.bf16.mxu0 0
  %2180 = vmatpush1.bf16.msra.mxu0 0
  %2181 = vmatprep.subr.bf16.mxu0 0
  %2182 = vmatpush1.bf16.msra.mxu0 0
  %2183 = vmatprep.subr.bf16.mxu0 0
  %2184 = vmatpush1.bf16.msra.mxu0 0
  %2185 = vmatprep.subr.bf16.mxu0 0
  %2186 = vmatpush1.bf16.msra.mxu0 0
  %2187 = vmatprep.subr.bf16.mxu0 0
  %2188 = vmatpush1.bf16.msra.mxu0 0
  %2189 = vmatprep.subr.bf16.mxu0 0
  %2190 = vmatpush1.bf16.msra.mxu0 0
  %2191 = vmatprep.mubr.bf16.mxu0 0
  %2192 = vmatmul.mubr.bf16.gmra.mrb[0].mxu0 %v2157
  %v2193 = vpop.f32.mrb[0].mxu0
  %v2194 = vadd.f32 0.0, %v2193
  %v2195 = vpop.f32.mrb[0].mxu0
  %v2196 = vadd.f32 0.0, %v2195
  %v2197 = vpop.f32.mrb[0].mxu0
  %v2198 = vpop.f32.mrb[0].mxu0
  %2199 = vdwg.mxu0
  %v2200 = vpack.c.bf16 %v2194, %v2194
  %v2201 = vpack.c.bf16 %v2196, %v2196
  %v2202 = vld [vmem:[%s8] sm:$0xff]
  %v2203 = vld [vmem:[%s8 + $0x8] sm:$0xff]
  %v2204 = vld [vmem:[%s8 + $0x10] sm:$0xff]
  %v2205 = vld [vmem:[%s8 + $0x18] sm:$0xff]
  %v2206 = vld [vmem:[%s8 + $0x20] sm:$0xff]
  %v2207 = vld [vmem:[%s8 + $0x28] sm:$0xff]
  %v2208 = vld [vmem:[%s8 + $0x30] sm:$0xff]
  %v2209 = vld [vmem:[%s8 + $0x38] sm:$0xff]
  %v2210 = vld [vmem:[%s8 + $0x40] sm:$0xff]
  %v2211 = vld [vmem:[%s8 + $0x48] sm:$0xff]
  %v2212 = vld [vmem:[%s8 + $0x50] sm:$0xff]
  %v2213 = vld [vmem:[%s8 + $0x58] sm:$0xff]
  %v2214 = vld [vmem:[%s8 + $0x60] sm:$0xff]
  %v2215 = vld [vmem:[%s8 + $0x68] sm:$0xff]
  %v2216 = vld [vmem:[%s8 + $0x70] sm:$0xff]
  %v2217 = vld [vmem:[%s8 + $0x78] sm:$0xff]
  %v2218 = vld [vmem:[%s8 + $0x80] sm:$0xff]
  %v2219 = vld [vmem:[%s8 + $0x88] sm:$0xff]
  %v2220 = vld [vmem:[%s8 + $0x90] sm:$0xff]
  %v2221 = vld [vmem:[%s8 + $0x98] sm:$0xff]
  %v2222 = vld [vmem:[%s8 + $0xa0] sm:$0xff]
  %v2223 = vld [vmem:[%s8 + $0xa8] sm:$0xff]
  %v2224 = vld [vmem:[%s8 + $0xb0] sm:$0xff]
  %v2225 = vld [vmem:[%s8 + $0xb8] sm:$0xff]
  %v2226 = vld [vmem:[%s8 + $0xc0] sm:$0xff]
  %v2227 = vld [vmem:[%s8 + $0xc8] sm:$0xff]
  %v2228 = vld [vmem:[%s8 + $0xd0] sm:$0xff]
  %v2229 = vld [vmem:[%s8 + $0xd8] sm:$0xff]
  %v2230 = vld [vmem:[%s8 + $0xe0] sm:$0xff]
  %v2231 = vld [vmem:[%s8 + $0xe8] sm:$0xff]
  %v2232 = vld [vmem:[%s8 + $0xf0] sm:$0xff]
  %v2233 = vld [vmem:[%s8 + $0xf8] sm:$0xff]
  %s2234 = scalar_lea.vmem %s7, 4
  %v2235 = vld [vmem:[%s2234] sm:$0xf]
  %v2237 = vsel %vm2155, %v2235, 0
  %2239 = vmatprep.subr.bf16.mxu0 %v2153
  %2240 = vmatpush1.bf16.msra.mxu0 %v2152
  %2241 = vmatprep.subr.bf16.mxu0 0
  %2242 = vmatpush1.bf16.msra.mxu0 0
  %2243 = vmatprep.subr.bf16.mxu0 0
  %2244 = vmatpush1.bf16.msra.mxu0 0
  %2245 = vmatprep.subr.bf16.mxu0 0
  %2246 = vmatpush1.bf16.msra.mxu0 0
  %2247 = vmatprep.subr.bf16.mxu0 0
  %2248 = vmatpush1.bf16.msra.mxu0 0
  %2249 = vmatprep.subr.bf16.mxu0 0
  %2250 = vmatpush1.bf16.msra.mxu0 0
  %2251 = vmatprep.subr.bf16.mxu0 0
  %2252 = vmatpush1.bf16.msra.mxu0 0
  %2253 = vmatprep.subr.bf16.mxu0 0
  %2254 = vmatpush1.bf16.msra.mxu0 0
  %2255 = vmatprep.subr.bf16.mxu0 0
  %2256 = vmatpush1.bf16.msra.mxu0 0
  %2257 = vmatprep.subr.bf16.mxu0 0
  %2258 = vmatpush1.bf16.msra.mxu0 0
  %2259 = vmatprep.subr.bf16.mxu0 0
  %2260 = vmatpush1.bf16.msra.mxu0 0
  %2261 = vmatprep.subr.bf16.mxu0 0
  %2262 = vmatpush1.bf16.msra.mxu0 0
  %2263 = vmatprep.subr.bf16.mxu0 0
  %2264 = vmatpush1.bf16.msra.mxu0 0
  %2265 = vmatprep.subr.bf16.mxu0 0
  %2266 = vmatpush1.bf16.msra.mxu0 0
  %2267 = vmatprep.subr.bf16.mxu0 0
  %2268 = vmatpush1.bf16.msra.mxu0 0
  %2269 = vmatprep.subr.bf16.mxu0 0
  %2270 = vmatpush1.bf16.msra.mxu0 0
  %2271 = vmatprep.mubr.bf16.mxu0 0
  %2272 = vmatmul.mubr.bf16.gmra.mrb[0].mxu0 %v2237
  %v2273 = vpop.f32.mrb[0].mxu0
  %v2274 = vadd.f32 0.0, %v2273
  %v2275 = vpop.f32.mrb[0].mxu0
  %v2276 = vadd.f32 0.0, %v2275
  %v2277 = vpop.f32.mrb[0].mxu0
  %v2278 = vpop.f32.mrb[0].mxu0
  %2279 = vdwg.mxu0
  %v2280 = vpack.c.bf16 %v2274, %v2274
  %v2281 = vpack.c.bf16 %v2276, %v2276
  %s2282 = scalar_lea.vmem %s8, 256
  %v2283 = vld [vmem:[%s2282] sm:$0xff]
  %v2284 = vld [vmem:[%s2282 + $0x8] sm:$0xff]
  %v2285 = vld [vmem:[%s2282 + $0x10] sm:$0xff]
  %v2286 = vld [vmem:[%s2282 + $0x18] sm:$0xff]
  %v2287 = vld [vmem:[%s2282 + $0x20] sm:$0xff]
  %v2288 = vld [vmem:[%s2282 + $0x28] sm:$0xff]
  %v2289 = vld [vmem:[%s2282 + $0x30] sm:$0xff]
  %v2290 = vld [vmem:[%s2282 + $0x38] sm:$0xff]
  %v2291 = vld [vmem:[%s2282 + $0x40] sm:$0xff]
  %v2292 = vld [vmem:[%s2282 + $0x48] sm:$0xff]
  %v2293 = vld [vmem:[%s2282 + $0x50] sm:$0xff]
  %v2294 = vld [vmem:[%s2282 + $0x58] sm:$0xff]
  %v2295 = vld [vmem:[%s2282 + $0x60] sm:$0xff]
  %v2296 = vld [vmem:[%s2282 + $0x68] sm:$0xff]
  %v2297 = vld [vmem:[%s2282 + $0x70] sm:$0xff]
  %v2298 = vld [vmem:[%s2282 + $0x78] sm:$0xff]
  %v2299 = vld [vmem:[%s2282 + $0x80] sm:$0xff]
  %v2300 = vld [vmem:[%s2282 + $0x88] sm:$0xff]
  %v2301 = vld [vmem:[%s2282 + $0x90] sm:$0xff]
  %v2302 = vld [vmem:[%s2282 + $0x98] sm:$0xff]
  %v2303 = vld [vmem:[%s2282 + $0xa0] sm:$0xff]
  %v2304 = vld [vmem:[%s2282 + $0xa8] sm:$0xff]
  %v2305 = vld [vmem:[%s2282 + $0xb0] sm:$0xff]
  %v2306 = vld [vmem:[%s2282 + $0xb8] sm:$0xff]
  %v2307 = vld [vmem:[%s2282 + $0xc0] sm:$0xff]
  %v2308 = vld [vmem:[%s2282 + $0xc8] sm:$0xff]
  %v2309 = vld [vmem:[%s2282 + $0xd0] sm:$0xff]
  %v2310 = vld [vmem:[%s2282 + $0xd8] sm:$0xff]
  %v2311 = vld [vmem:[%s2282 + $0xe0] sm:$0xff]
  %v2312 = vld [vmem:[%s2282 + $0xe8] sm:$0xff]
  %v2313 = vld [vmem:[%s2282 + $0xf0] sm:$0xff]
  %v2314 = vld [vmem:[%s2282 + $0xf8] sm:$0xff]
  %v2347 = vunpack.c.l.b16 %v2283
  %v2348 = vunpack.c.h.b16 %v2283
  %v2349 = vunpack.c.l.b16 %v2284
  %v2350 = vunpack.c.h.b16 %v2284
  %v2351 = vunpack.c.l.b16 %v2285
  %v2352 = vunpack.c.h.b16 %v2285
  %v2353 = vunpack.c.l.b16 %v2286
  %v2354 = vunpack.c.h.b16 %v2286
  %v2355 = vunpack.c.l.b16 %v2287
  %v2356 = vunpack.c.h.b16 %v2287
  %v2357 = vunpack.c.l.b16 %v2288
  %v2358 = vunpack.c.h.b16 %v2288
  %v2359 = vunpack.c.l.b16 %v2289
  %v2360 = vunpack.c.h.b16 %v2289
  %v2361 = vunpack.c.l.b16 %v2290
  %v2362 = vunpack.c.h.b16 %v2290
  %v2363 = vunpack.c.l.b16 %v2291
  %v2364 = vunpack.c.h.b16 %v2291
  %v2365 = vunpack.c.l.b16 %v2292
  %v2366 = vunpack.c.h.b16 %v2292
  %v2367 = vunpack.c.l.b16 %v2293
  %v2368 = vunpack.c.h.b16 %v2293
  %v2369 = vunpack.c.l.b16 %v2294
  %v2370 = vunpack.c.h.b16 %v2294
  %v2371 = vunpack.c.l.b16 %v2295
  %v2372 = vunpack.c.h.b16 %v2295
  %v2373 = vunpack.c.l.b16 %v2296
  %v2374 = vunpack.c.h.b16 %v2296
  %v2375 = vunpack.c.l.b16 %v2297
  %v2376 = vunpack.c.h.b16 %v2297
  %v2377 = vunpack.c.l.b16 %v2298
  %v2378 = vunpack.c.h.b16 %v2298
  %v2379 = vunpack.c.l.b16 %v2299
  %v2380 = vunpack.c.h.b16 %v2299
  %v2381 = vunpack.c.l.b16 %v2300
  %v2382 = vunpack.c.h.b16 %v2300
  %v2383 = vunpack.c.l.b16 %v2301
  %v2384 = vunpack.c.h.b16 %v2301
  %v2385 = vunpack.c.l.b16 %v2302
  %v2386 = vunpack.c.h.b16 %v2302
  %v2387 = vunpack.c.l.b16 %v2303
  %v2388 = vunpack.c.h.b16 %v2303
  %v2389 = vunpack.c.l.b16 %v2304
  %v2390 = vunpack.c.h.b16 %v2304
  %v2391 = vunpack.c.l.b16 %v2305
  %v2392 = vunpack.c.h.b16 %v2305
  %v2393 = vunpack.c.l.b16 %v2306
  %v2394 = vunpack.c.h.b16 %v2306
  %v2395 = vunpack.c.l.b16 %v2307
  %v2396 = vunpack.c.h.b16 %v2307
  %v2397 = vunpack.c.l.b16 %v2308
  %v2398 = vunpack.c.h.b16 %v2308
  %v2399 = vunpack.c.l.b16 %v2309
  %v2400 = vunpack.c.h.b16 %v2309
  %v2401 = vunpack.c.l.b16 %v2310
  %v2402 = vunpack.c.h.b16 %v2310
  %v2403 = vunpack.c.l.b16 %v2311
  %v2404 = vunpack.c.h.b16 %v2311
  %v2405 = vunpack.c.l.b16 %v2312
  %v2406 = vunpack.c.h.b16 %v2312
  %v2407 = vunpack.c.l.b16 %v2313
  %v2408 = vunpack.c.h.b16 %v2313
  %v2409 = vunpack.c.l.b16 %v2314
  %v2410 = vunpack.c.h.b16 %v2314
  %v2411 = vpack.c.b16 %v2349, %v2347
  %v2412 = vpack.c.b16 %v2350, %v2348
  %v2413 = vpack.c.b16 %v2353, %v2351
  %v2414 = vpack.c.b16 %v2354, %v2352
  %v2415 = vpack.c.b16 %v2357, %v2355
  %v2416 = vpack.c.b16 %v2358, %v2356
  %v2417 = vpack.c.b16 %v2361, %v2359
  %v2418 = vpack.c.b16 %v2362, %v2360
  %v2419 = vpack.c.b16 %v2365, %v2363
  %v2420 = vpack.c.b16 %v2366, %v2364
  %v2421 = vpack.c.b16 %v2369, %v2367
  %v2422 = vpack.c.b16 %v2370, %v2368
  %v2423 = vpack.c.b16 %v2373, %v2371
  %v2424 = vpack.c.b16 %v2374, %v2372
  %v2425 = vpack.c.b16 %v2377, %v2375
  %v2426 = vpack.c.b16 %v2378, %v2376
  %v2427 = vpack.c.b16 %v2381, %v2379
  %v2428 = vpack.c.b16 %v2382, %v2380
  %v2429 = vpack.c.b16 %v2385, %v2383
  %v2430 = vpack.c.b16 %v2386, %v2384
  %v2431 = vpack.c.b16 %v2389, %v2387
  %v2432 = vpack.c.b16 %v2390, %v2388
  %v2433 = vpack.c.b16 %v2393, %v2391
  %v2434 = vpack.c.b16 %v2394, %v2392
  %v2435 = vpack.c.b16 %v2397, %v2395
  %v2436 = vpack.c.b16 %v2398, %v2396
  %v2437 = vpack.c.b16 %v2401, %v2399
  %v2438 = vpack.c.b16 %v2402, %v2400
  %v2439 = vpack.c.b16 %v2405, %v2403
  %v2440 = vpack.c.b16 %v2406, %v2404
  %v2441 = vpack.c.b16 %v2409, %v2407
  %v2442 = vpack.c.b16 %v2410, %v2408
  %2475 = vmatprep.subr.bf16.mxu0 %v2412
  %2476 = vmatpush1.bf16.msra.mxu0 %v2411
  %2477 = vmatprep.subr.bf16.mxu0 %v2414
  %2478 = vmatpush1.bf16.msra.mxu0 %v2413
  %2479 = vmatprep.subr.bf16.mxu0 %v2416
  %2480 = vmatpush1.bf16.msra.mxu0 %v2415
  %2481 = vmatprep.subr.bf16.mxu0 %v2418
  %2482 = vmatpush1.bf16.msra.mxu0 %v2417
  %2483 = vmatprep.subr.bf16.mxu0 %v2420
  %2484 = vmatpush1.bf16.msra.mxu0 %v2419
  %2485 = vmatprep.subr.bf16.mxu0 %v2422
  %2486 = vmatpush1.bf16.msra.mxu0 %v2421
  %2487 = vmatprep.subr.bf16.mxu0 %v2424
  %2488 = vmatpush1.bf16.msra.mxu0 %v2423
  %2489 = vmatprep.subr.bf16.mxu0 %v2426
  %2490 = vmatpush1.bf16.msra.mxu0 %v2425
  %2491 = vmatprep.subr.bf16.mxu0 %v2428
  %2492 = vmatpush1.bf16.msra.mxu0 %v2427
  %2493 = vmatprep.subr.bf16.mxu0 %v2430
  %2494 = vmatpush1.bf16.msra.mxu0 %v2429
  %2495 = vmatprep.subr.bf16.mxu0 %v2432
  %2496 = vmatpush1.bf16.msra.mxu0 %v2431
  %2497 = vmatprep.subr.bf16.mxu0 %v2434
  %2498 = vmatpush1.bf16.msra.mxu0 %v2433
  %2499 = vmatprep.subr.bf16.mxu0 %v2436
  %2500 = vmatpush1.bf16.msra.mxu0 %v2435
  %2501 = vmatprep.subr.bf16.mxu0 %v2438
  %2502 = vmatpush1.bf16.msra.mxu0 %v2437
  %2503 = vmatprep.subr.bf16.mxu0 %v2440
  %2504 = vmatpush1.bf16.msra.mxu0 %v2439
  %2505 = vmatprep.subr.bf16.mxu0 %v2442
  %2506 = vmatpush1.bf16.msra.mxu0 %v2441
  %2507 = vmatprep.mubr.bf16.mxu0 %v2281
  %2508 = vmatmul.mubr.bf16.gmra.mrb[0].mxu0 %v2280
  %v2509 = vpop.f32.mrb[0].mxu0
  %v2510 = vadd.f32 0.0, %v2509
  %v2511 = vpop.f32.mrb[0].mxu0
  %v2512 = vadd.f32 0.0, %v2511
  %v2513 = vpop.f32.mrb[0].mxu0
  %v2514 = vpop.f32.mrb[0].mxu0
  %2515 = vdwg.mxu0
  %v2548 = vunpack.c.l.b16 %v2202
  %v2549 = vunpack.c.h.b16 %v2202
  %v2550 = vunpack.c.l.b16 %v2203
  %v2551 = vunpack.c.h.b16 %v2203
  %v2552 = vunpack.c.l.b16 %v2204
  %v2553 = vunpack.c.h.b16 %v2204
  %v2554 = vunpack.c.l.b16 %v2205
  %v2555 = vunpack.c.h.b16 %v2205
  %v2556 = vunpack.c.l.b16 %v2206
  %v2557 = vunpack.c.h.b16 %v2206
  %v2558 = vunpack.c.l.b16 %v2207
  %v2559 = vunpack.c.h.b16 %v2207
  %v2560 = vunpack.c.l.b16 %v2208
  %v2561 = vunpack.c.h.b16 %v2208
  %v2562 = vunpack.c.l.b16 %v2209
  %v2563 = vunpack.c.h.b16 %v2209
  %v2564 = vunpack.c.l.b16 %v2210
  %v2565 = vunpack.c.h.b16 %v2210
  %v2566 = vunpack.c.l.b16 %v2211
  %v2567 = vunpack.c.h.b16 %v2211
  %v2568 = vunpack.c.l.b16 %v2212
  %v2569 = vunpack.c.h.b16 %v2212
  %v2570 = vunpack.c.l.b16 %v2213
  %v2571 = vunpack.c.h.b16 %v2213
  %v2572 = vunpack.c.l.b16 %v2214
  %v2573 = vunpack.c.h.b16 %v2214
  %v2574 = vunpack.c.l.b16 %v2215
  %v2575 = vunpack.c.h.b16 %v2215
  %v2576 = vunpack.c.l.b16 %v2216
  %v2577 = vunpack.c.h.b16 %v2216
  %v2578 = vunpack.c.l.b16 %v2217
  %v2579 = vunpack.c.h.b16 %v2217
  %v2580 = vunpack.c.l.b16 %v2218
  %v2581 = vunpack.c.h.b16 %v2218
  %v2582 = vunpack.c.l.b16 %v2219
  %v2583 = vunpack.c.h.b16 %v2219
  %v2584 = vunpack.c.l.b16 %v2220
  %v2585 = vunpack.c.h.b16 %v2220
  %v2586 = vunpack.c.l.b16 %v2221
  %v2587 = vunpack.c.h.b16 %v2221
  %v2588 = vunpack.c.l.b16 %v2222
  %v2589 = vunpack.c.h.b16 %v2222
  %v2590 = vunpack.c.l.b16 %v2223
  %v2591 = vunpack.c.h.b16 %v2223
  %v2592 = vunpack.c.l.b16 %v2224
  %v2593 = vunpack.c.h.b16 %v2224
  %v2594 = vunpack.c.l.b16 %v2225
  %v2595 = vunpack.c.h.b16 %v2225
  %v2596 = vunpack.c.l.b16 %v2226
  %v2597 = vunpack.c.h.b16 %v2226
  %v2598 = vunpack.c.l.b16 %v2227
  %v2599 = vunpack.c.h.b16 %v2227
  %v2600 = vunpack.c.l.b16 %v2228
  %v2601 = vunpack.c.h.b16 %v2228
  %v2602 = vunpack.c.l.b16 %v2229
  %v2603 = vunpack.c.h.b16 %v2229
  %v2604 = vunpack.c.l.b16 %v2230
  %v2605 = vunpack.c.h.b16 %v2230
  %v2606 = vunpack.c.l.b16 %v2231
  %v2607 = vunpack.c.h.b16 %v2231
  %v2608 = vunpack.c.l.b16 %v2232
  %v2609 = vunpack.c.h.b16 %v2232
  %v2610 = vunpack.c.l.b16 %v2233
  %v2611 = vunpack.c.h.b16 %v2233
  %v2612 = vpack.c.b16 %v2550, %v2548
  %v2613 = vpack.c.b16 %v2551, %v2549
  %v2614 = vpack.c.b16 %v2554, %v2552
  %v2615 = vpack.c.b16 %v2555, %v2553
  %v2616 = vpack.c.b16 %v2558, %v2556
  %v2617 = vpack.c.b16 %v2559, %v2557
  %v2618 = vpack.c.b16 %v2562, %v2560
  %v2619 = vpack.c.b16 %v2563, %v2561
  %v2620 = vpack.c.b16 %v2566, %v2564
  %v2621 = vpack.c.b16 %v2567, %v2565
  %v2622 = vpack.c.b16 %v2570, %v2568
  %v2623 = vpack.c.b16 %v2571, %v2569
  %v2624 = vpack.c.b16 %v2574, %v2572
  %v2625 = vpack.c.b16 %v2575, %v2573
  %v2626 = vpack.c.b16 %v2578, %v2576
  %v2627 = vpack.c.b16 %v2579, %v2577
  %v2628 = vpack.c.b16 %v2582, %v2580
  %v2629 = vpack.c.b16 %v2583, %v2581
  %v2630 = vpack.c.b16 %v2586, %v2584
  %v2631 = vpack.c.b16 %v2587, %v2585
  %v2632 = vpack.c.b16 %v2590, %v2588
  %v2633 = vpack.c.b16 %v2591, %v2589
  %v2634 = vpack.c.b16 %v2594, %v2592
  %v2635 = vpack.c.b16 %v2595, %v2593
  %v2636 = vpack.c.b16 %v2598, %v2596
  %v2637 = vpack.c.b16 %v2599, %v2597
  %v2638 = vpack.c.b16 %v2602, %v2600
  %v2639 = vpack.c.b16 %v2603, %v2601
  %v2640 = vpack.c.b16 %v2606, %v2604
  %v2641 = vpack.c.b16 %v2607, %v2605
  %v2642 = vpack.c.b16 %v2610, %v2608
  %v2643 = vpack.c.b16 %v2611, %v2609
  %2676 = vmatprep.subr.bf16.mxu0 %v2613
  %2677 = vmatpush1.bf16.msra.mxu0 %v2612
  %2678 = vmatprep.subr.bf16.mxu0 %v2615
  %2679 = vmatpush1.bf16.msra.mxu0 %v2614
  %2680 = vmatprep.subr.bf16.mxu0 %v2617
  %2681 = vmatpush1.bf16.msra.mxu0 %v2616
  %2682 = vmatprep.subr.bf16.mxu0 %v2619
  %2683 = vmatpush1.bf16.msra.mxu0 %v2618
  %2684 = vmatprep.subr.bf16.mxu0 %v2621
  %2685 = vmatpush1.bf16.msra.mxu0 %v2620
  %2686 = vmatprep.subr.bf16.mxu0 %v2623
  %2687 = vmatpush1.bf16.msra.mxu0 %v2622
  %2688 = vmatprep.subr.bf16.mxu0 %v2625
  %2689 = vmatpush1.bf16.msra.mxu0 %v2624
  %2690 = vmatprep.subr.bf16.mxu0 %v2627
  %2691 = vmatpush1.bf16.msra.mxu0 %v2626
  %2692 = vmatprep.subr.bf16.mxu0 %v2629
  %2693 = vmatpush1.bf16.msra.mxu0 %v2628
  %2694 = vmatprep.subr.bf16.mxu0 %v2631
  %2695 = vmatpush1.bf16.msra.mxu0 %v2630
  %2696 = vmatprep.subr.bf16.mxu0 %v2633
  %2697 = vmatpush1.bf16.msra.mxu0 %v2632
  %2698 = vmatprep.subr.bf16.mxu0 %v2635
  %2699 = vmatpush1.bf16.msra.mxu0 %v2634
  %2700 = vmatprep.subr.bf16.mxu0 %v2637
  %2701 = vmatpush1.bf16.msra.mxu0 %v2636
  %2702 = vmatprep.subr.bf16.mxu0 %v2639
  %2703 = vmatpush1.bf16.msra.mxu0 %v2638
  %2704 = vmatprep.subr.bf16.mxu0 %v2641
  %2705 = vmatpush1.bf16.msra.mxu0 %v2640
  %2706 = vmatprep.subr.bf16.mxu0 %v2643
  %2707 = vmatpush1.bf16.msra.mxu0 %v2642
  %2708 = vmatprep.mubr.bf16.mxu0 %v2201
  %2709 = vmatmul.mubr.bf16.gmra.mrb[0].mxu0 %v2200
  %v2710 = vpop.f32.mrb[0].mxu0
  %v2711 = vadd.f32 %v2510, %v2710
  %v2712 = vpop.f32.mrb[0].mxu0
  %v2713 = vadd.f32 %v2512, %v2712
  %v2714 = vpop.f32.mrb[0].mxu0
  %v2715 = vpop.f32.mrb[0].mxu0
  %2716 = vdwg.mxu0
  %s2717 = scalar_lea.vmem %s7, 8
  %v2718 = vld [vmem:[%s2717] sm:$0xf]
  %v2720 = vsel %vm2155, %v2718, 0
  %2722 = vmatprep.subr.bf16.mxu0 %v2153
  %2723 = vmatpush1.bf16.msra.mxu0 %v2152
  %2724 = vmatprep.subr.bf16.mxu0 0
  %2725 = vmatpush1.bf16.msra.mxu0 0
  %2726 = vmatprep.subr.bf16.mxu0 0
  %2727 = vmatpush1.bf16.msra.mxu0 0
  %2728 = vmatprep.subr.bf16.mxu0 0
  %2729 = vmatpush1.bf16.msra.mxu0 0
  %2730 = vmatprep.subr.bf16.mxu0 0
  %2731 = vmatpush1.bf16.msra.mxu0 0
  %2732 = vmatprep.subr.bf16.mxu0 0
  %2733 = vmatpush1.bf16.msra.mxu0 0
  %2734 = vmatprep.subr.bf16.mxu0 0
  %2735 = vmatpush1.bf16.msra.mxu0 0
  %2736 = vmatprep.subr.bf16.mxu0 0
  %2737 = vmatpush1.bf16.msra.mxu0 0
  %2738 = vmatprep.subr.bf16.mxu0 0
  %2739 = vmatpush1.bf16.msra.mxu0 0
  %2740 = vmatprep.subr.bf16.mxu0 0
  %2741 = vmatpush1.bf16.msra.mxu0 0
  %2742 = vmatprep.subr.bf16.mxu0 0
  %2743 = vmatpush1.bf16.msra.mxu0 0
  %2744 = vmatprep.subr.bf16.mxu0 0
  %2745 = vmatpush1.bf16.msra.mxu0 0
  %2746 = vmatprep.subr.bf16.mxu0 0
  %2747 = vmatpush1.bf16.msra.mxu0 0
  %2748 = vmatprep.subr.bf16.mxu0 0
  %2749 = vmatpush1.bf16.msra.mxu0 0
  %2750 = vmatprep.subr.bf16.mxu0 0
  %2751 = vmatpush1.bf16.msra.mxu0 0
  %2752 = vmatprep.subr.bf16.mxu0 0
  %2753 = vmatpush1.bf16.msra.mxu0 0
  %2754 = vmatprep.mubr.bf16.mxu0 0
  %2755 = vmatmul.mubr.bf16.gmra.mrb[0].mxu0 %v2720
  %v2756 = vpop.f32.mrb[0].mxu0
  %v2757 = vadd.f32 0.0, %v2756
  %v2758 = vpop.f32.mrb[0].mxu0
  %v2759 = vadd.f32 0.0, %v2758
  %v2760 = vpop.f32.mrb[0].mxu0
  %v2761 = vpop.f32.mrb[0].mxu0
  %2762 = vdwg.mxu0
  %v2763 = vpack.c.bf16 %v2757, %v2757
  %v2764 = vpack.c.bf16 %v2759, %v2759
  %s2765 = scalar_lea.vmem %s8, 512
  %v2766 = vld [vmem:[%s2765] sm:$0xff]
  %v2767 = vld [vmem:[%s2765 + $0x8] sm:$0xff]
  %v2768 = vld [vmem:[%s2765 + $0x10] sm:$0xff]
  %v2769 = vld [vmem:[%s2765 + $0x18] sm:$0xff]
  %v2770 = vld [vmem:[%s2765 + $0x20] sm:$0xff]
  %v2771 = vld [vmem:[%s2765 + $0x28] sm:$0xff]
  %v2772 = vld [vmem:[%s2765 + $0x30] sm:$0xff]
  %v2773 = vld [vmem:[%s2765 + $0x38] sm:$0xff]
  %v2774 = vld [vmem:[%s2765 + $0x40] sm:$0xff]
  %v2775 = vld [vmem:[%s2765 + $0x48] sm:$0xff]
  %v2776 = vld [vmem:[%s2765 + $0x50] sm:$0xff]
  %v2777 = vld [vmem:[%s2765 + $0x58] sm:$0xff]
  %v2778 = vld [vmem:[%s2765 + $0x60] sm:$0xff]
  %v2779 = vld [vmem:[%s2765 + $0x68] sm:$0xff]
  %v2780 = vld [vmem:[%s2765 + $0x70] sm:$0xff]
  %v2781 = vld [vmem:[%s2765 + $0x78] sm:$0xff]
  %v2782 = vld [vmem:[%s2765 + $0x80] sm:$0xff]
  %v2783 = vld [vmem:[%s2765 + $0x88] sm:$0xff]
  %v2784 = vld [vmem:[%s2765 + $0x90] sm:$0xff]
  %v2785 = vld [vmem:[%s2765 + $0x98] sm:$0xff]
  %v2786 = vld [vmem:[%s2765 + $0xa0] sm:$0xff]
  %v2787 = vld [vmem:[%s2765 + $0xa8] sm:$0xff]
  %v2788 = vld [vmem:[%s2765 + $0xb0] sm:$0xff]
  %v2789 = vld [vmem:[%s2765 + $0xb8] sm:$0xff]
  %v2790 = vld [vmem:[%s2765 + $0xc0] sm:$0xff]
  %v2791 = vld [vmem:[%s2765 + $0xc8] sm:$0xff]
  %v2792 = vld [vmem:[%s2765 + $0xd0] sm:$0xff]
  %v2793 = vld [vmem:[%s2765 + $0xd8] sm:$0xff]
  %v2794 = vld [vmem:[%s2765 + $0xe0] sm:$0xff]
  %v2795 = vld [vmem:[%s2765 + $0xe8] sm:$0xff]
  %v2796 = vld [vmem:[%s2765 + $0xf0] sm:$0xff]
  %v2797 = vld [vmem:[%s2765 + $0xf8] sm:$0xff]
  %v2830 = vunpack.c.l.b16 %v2766
  %v2831 = vunpack.c.h.b16 %v2766
  %v2832 = vunpack.c.l.b16 %v2767
  %v2833 = vunpack.c.h.b16 %v2767
  %v2834 = vunpack.c.l.b16 %v2768
  %v2835 = vunpack.c.h.b16 %v2768
  %v2836 = vunpack.c.l.b16 %v2769
  %v2837 = vunpack.c.h.b16 %v2769
  %v2838 = vunpack.c.l.b16 %v2770
  %v2839 = vunpack.c.h.b16 %v2770
  %v2840 = vunpack.c.l.b16 %v2771
  %v2841 = vunpack.c.h.b16 %v2771
  %v2842 = vunpack.c.l.b16 %v2772
  %v2843 = vunpack.c.h.b16 %v2772
  %v2844 = vunpack.c.l.b16 %v2773
  %v2845 = vunpack.c.h.b16 %v2773
  %v2846 = vunpack.c.l.b16 %v2774
  %v2847 = vunpack.c.h.b16 %v2774
  %v2848 = vunpack.c.l.b16 %v2775
  %v2849 = vunpack.c.h.b16 %v2775
  %v2850 = vunpack.c.l.b16 %v2776
  %v2851 = vunpack.c.h.b16 %v2776
  %v2852 = vunpack.c.l.b16 %v2777
  %v2853 = vunpack.c.h.b16 %v2777
  %v2854 = vunpack.c.l.b16 %v2778
  %v2855 = vunpack.c.h.b16 %v2778
  %v2856 = vunpack.c.l.b16 %v2779
  %v2857 = vunpack.c.h.b16 %v2779
  %v2858 = vunpack.c.l.b16 %v2780
  %v2859 = vunpack.c.h.b16 %v2780
  %v2860 = vunpack.c.l.b16 %v2781
  %v2861 = vunpack.c.h.b16 %v2781
  %v2862 = vunpack.c.l.b16 %v2782
  %v2863 = vunpack.c.h.b16 %v2782
  %v2864 = vunpack.c.l.b16 %v2783
  %v2865 = vunpack.c.h.b16 %v2783
  %v2866 = vunpack.c.l.b16 %v2784
  %v2867 = vunpack.c.h.b16 %v2784
  %v2868 = vunpack.c.l.b16 %v2785
  %v2869 = vunpack.c.h.b16 %v2785
  %v2870 = vunpack.c.l.b16 %v2786
  %v2871 = vunpack.c.h.b16 %v2786
  %v2872 = vunpack.c.l.b16 %v2787
  %v2873 = vunpack.c.h.b16 %v2787
  %v2874 = vunpack.c.l.b16 %v2788
  %v2875 = vunpack.c.h.b16 %v2788
  %v2876 = vunpack.c.l.b16 %v2789
  %v2877 = vunpack.c.h.b16 %v2789
  %v2878 = vunpack.c.l.b16 %v2790
  %v2879 = vunpack.c.h.b16 %v2790
  %v2880 = vunpack.c.l.b16 %v2791
  %v2881 = vunpack.c.h.b16 %v2791
  %v2882 = vunpack.c.l.b16 %v2792
  %v2883 = vunpack.c.h.b16 %v2792
  %v2884 = vunpack.c.l.b16 %v2793
  %v2885 = vunpack.c.h.b16 %v2793
  %v2886 = vunpack.c.l.b16 %v2794
  %v2887 = vunpack.c.h.b16 %v2794
  %v2888 = vunpack.c.l.b16 %v2795
  %v2889 = vunpack.c.h.b16 %v2795
  %v2890 = vunpack.c.l.b16 %v2796
  %v2891 = vunpack.c.h.b16 %v2796
  %v2892 = vunpack.c.l.b16 %v2797
  %v2893 = vunpack.c.h.b16 %v2797
  %v2894 = vpack.c.b16 %v2832, %v2830
  %v2895 = vpack.c.b16 %v2833, %v2831
  %v2896 = vpack.c.b16 %v2836, %v2834
  %v2897 = vpack.c.b16 %v2837, %v2835
  %v2898 = vpack.c.b16 %v2840, %v2838
  %v2899 = vpack.c.b16 %v2841, %v2839
  %v2900 = vpack.c.b16 %v2844, %v2842
  %v2901 = vpack.c.b16 %v2845, %v2843
  %v2902 = vpack.c.b16 %v2848, %v2846
  %v2903 = vpack.c.b16 %v2849, %v2847
  %v2904 = vpack.c.b16 %v2852, %v2850
  %v2905 = vpack.c.b16 %v2853, %v2851
  %v2906 = vpack.c.b16 %v2856, %v2854
  %v2907 = vpack.c.b16 %v2857, %v2855
  %v2908 = vpack.c.b16 %v2860, %v2858
  %v2909 = vpack.c.b16 %v2861, %v2859
  %v2910 = vpack.c.b16 %v2864, %v2862
  %v2911 = vpack.c.b16 %v2865, %v2863
  %v2912 = vpack.c.b16 %v2868, %v2866
  %v2913 = vpack.c.b16 %v2869, %v2867
  %v2914 = vpack.c.b16 %v2872, %v2870
  %v2915 = vpack.c.b16 %v2873, %v2871
  %v2916 = vpack.c.b16 %v2876, %v2874
  %v2917 = vpack.c.b16 %v2877, %v2875
  %v2918 = vpack.c.b16 %v2880, %v2878
  %v2919 = vpack.c.b16 %v2881, %v2879
  %v2920 = vpack.c.b16 %v2884, %v2882
  %v2921 = vpack.c.b16 %v2885, %v2883
  %v2922 = vpack.c.b16 %v2888, %v2886
  %v2923 = vpack.c.b16 %v2889, %v2887
  %v2924 = vpack.c.b16 %v2892, %v2890
  %v2925 = vpack.c.b16 %v2893, %v2891
  %2958 = vmatprep.subr.bf16.mxu0 %v2895
  %2959 = vmatpush1.bf16.msra.mxu0 %v2894
  %2960 = vmatprep.subr.bf16.mxu0 %v2897
  %2961 = vmatpush1.bf16.msra.mxu0 %v2896
  %2962 = vmatprep.subr.bf16.mxu0 %v2899
  %2963 = vmatpush1.bf16.msra.mxu0 %v2898
  %2964 = vmatprep.subr.bf16.mxu0 %v2901
  %2965 = vmatpush1.bf16.msra.mxu0 %v2900
  %2966 = vmatprep.subr.bf16.mxu0 %v2903
  %2967 = vmatpush1.bf16.msra.mxu0 %v2902
  %2968 = vmatprep.subr.bf16.mxu0 %v2905
  %2969 = vmatpush1.bf16.msra.mxu0 %v2904
  %2970 = vmatprep.subr.bf16.mxu0 %v2907
  %2971 = vmatpush1.bf16.msra.mxu0 %v2906
  %2972 = vmatprep.subr.bf16.mxu0 %v2909
  %2973 = vmatpush1.bf16.msra.mxu0 %v2908
  %2974 = vmatprep.subr.bf16.mxu0 %v2911
  %2975 = vmatpush1.bf16.msra.mxu0 %v2910
  %2976 = vmatprep.subr.bf16.mxu0 %v2913
  %2977 = vmatpush1.bf16.msra.mxu0 %v2912
  %2978 = vmatprep.subr.bf16.mxu0 %v2915
  %2979 = vmatpush1.bf16.msra.mxu0 %v2914
  %2980 = vmatprep.subr.bf16.mxu0 %v2917
  %2981 = vmatpush1.bf16.msra.mxu0 %v2916
  %2982 = vmatprep.subr.bf16.mxu0 %v2919
  %2983 = vmatpush1.bf16.msra.mxu0 %v2918
  %2984 = vmatprep.subr.bf16.mxu0 %v2921
  %2985 = vmatpush1.bf16.msra.mxu0 %v2920
  %2986 = vmatprep.subr.bf16.mxu0 %v2923
  %2987 = vmatpush1.bf16.msra.mxu0 %v2922
  %2988 = vmatprep.subr.bf16.mxu0 %v2925
  %2989 = vmatpush1.bf16.msra.mxu0 %v2924
  %2990 = vmatprep.mubr.bf16.mxu0 %v2764
  %2991 = vmatmul.mubr.bf16.gmra.mrb[0].mxu0 %v2763
  %v2992 = vpop.f32.mrb[0].mxu0
  %v2993 = vadd.f32 0.0, %v2992
  %v2994 = vpop.f32.mrb[0].mxu0
  %v2995 = vadd.f32 0.0, %v2994
  %v2996 = vpop.f32.mrb[0].mxu0
  %v2997 = vpop.f32.mrb[0].mxu0
  %2998 = vdwg.mxu0
  %v2999 = vadd.f32 %v2711, %v2993
  %v3000 = vadd.f32 %v2713, %v2995
  %s3001 = scalar_lea.vmem %s7, 12
  %v3002 = vld [vmem:[%s3001] sm:$0xf]
  %v3004 = vsel %vm2155, %v3002, 0
  %3006 = vmatprep.subr.bf16.mxu0 %v2153
  %3007 = vmatpush1.bf16.msra.mxu0 %v2152
  %3008 = vmatprep.subr.bf16.mxu0 0
  %3009 = vmatpush1.bf16.msra.mxu0 0
  %3010 = vmatprep.subr.bf16.mxu0 0
  %3011 = vmatpush1.bf16.msra.mxu0 0
  %3012 = vmatprep.subr.bf16.mxu0 0
  %3013 = vmatpush1.bf16.msra.mxu0 0
  %3014 = vmatprep.subr.bf16.mxu0 0
  %3015 = vmatpush1.bf16.msra.mxu0 0
  %3016 = vmatprep.subr.bf16.mxu0 0
  %3017 = vmatpush1.bf16.msra.mxu0 0
  %3018 = vmatprep.subr.bf16.mxu0 0
  %3019 = vmatpush1.bf16.msra.mxu0 0
  %3020 = vmatprep.subr.bf16.mxu0 0
  %3021 = vmatpush1.bf16.msra.mxu0 0
  %3022 = vmatprep.subr.bf16.mxu0 0
  %3023 = vmatpush1.bf16.msra.mxu0 0
  %3024 = vmatprep.subr.bf16.mxu0 0
  %3025 = vmatpush1.bf16.msra.mxu0 0
  %3026 = vmatprep.subr.bf16.mxu0 0
  %3027 = vmatpush1.bf16.msra.mxu0 0
  %3028 = vmatprep.subr.bf16.mxu0 0
  %3029 = vmatpush1.bf16.msra.mxu0 0
  %3030 = vmatprep.subr.bf16.mxu0 0
  %3031 = vmatpush1.bf16.msra.mxu0 0
  %3032 = vmatprep.subr.bf16.mxu0 0
  %3033 = vmatpush1.bf16.msra.mxu0 0
  %3034 = vmatprep.subr.bf16.mxu0 0
  %3035 = vmatpush1.bf16.msra.mxu0 0
  %3036 = vmatprep.subr.bf16.mxu0 0
  %3037 = vmatpush1.bf16.msra.mxu0 0
  %3038 = vmatprep.mubr.bf16.mxu0 0
  %3039 = vmatmul.mubr.bf16.gmra.mrb[0].mxu0 %v3004
  %v3040 = vpop.f32.mrb[0].mxu0
  %v3041 = vadd.f32 0.0, %v3040
  %v3042 = vpop.f32.mrb[0].mxu0
  %v3043 = vadd.f32 0.0, %v3042
  %v3044 = vpop.f32.mrb[0].mxu0
  %v3045 = vpop.f32.mrb[0].mxu0
  %3046 = vdwg.mxu0
  %v3047 = vpack.c.bf16 %v3041, %v3041
  %v3048 = vpack.c.bf16 %v3043, %v3043
  %s3049 = scalar_lea.vmem %s8, 768
  %v3050 = vld [vmem:[%s3049] sm:$0xff]
  %v3051 = vld [vmem:[%s3049 + $0x8] sm:$0xff]
  %v3052 = vld [vmem:[%s3049 + $0x10] sm:$0xff]
  %v3053 = vld [vmem:[%s3049 + $0x18] sm:$0xff]
  %v3054 = vld [vmem:[%s3049 + $0x20] sm:$0xff]
  %v3055 = vld [vmem:[%s3049 + $0x28] sm:$0xff]
  %v3056 = vld [vmem:[%s3049 + $0x30] sm:$0xff]
  %v3057 = vld [vmem:[%s3049 + $0x38] sm:$0xff]
  %v3058 = vld [vmem:[%s3049 + $0x40] sm:$0xff]
  %v3059 = vld [vmem:[%s3049 + $0x48] sm:$0xff]
  %v3060 = vld [vmem:[%s3049 + $0x50] sm:$0xff]
  %v3061 = vld [vmem:[%s3049 + $0x58] sm:$0xff]
  %v3062 = vld [vmem:[%s3049 + $0x60] sm:$0xff]
  %v3063 = vld [vmem:[%s3049 + $0x68] sm:$0xff]
  %v3064 = vld [vmem:[%s3049 + $0x70] sm:$0xff]
  %v3065 = vld [vmem:[%s3049 + $0x78] sm:$0xff]
  %v3066 = vld [vmem:[%s3049 + $0x80] sm:$0xff]
  %v3067 = vld [vmem:[%s3049 + $0x88] sm:$0xff]
  %v3068 = vld [vmem:[%s3049 + $0x90] sm:$0xff]
  %v3069 = vld [vmem:[%s3049 + $0x98] sm:$0xff]
  %v3070 = vld [vmem:[%s3049 + $0xa0] sm:$0xff]
  %v3071 = vld [vmem:[%s3049 + $0xa8] sm:$0xff]
  %v3072 = vld [vmem:[%s3049 + $0xb0] sm:$0xff]
  %v3073 = vld [vmem:[%s3049 + $0xb8] sm:$0xff]
  %v3074 = vld [vmem:[%s3049 + $0xc0] sm:$0xff]
  %v3075 = vld [vmem:[%s3049 + $0xc8] sm:$0xff]
  %v3076 = vld [vmem:[%s3049 + $0xd0] sm:$0xff]
  %v3077 = vld [vmem:[%s3049 + $0xd8] sm:$0xff]
  %v3078 = vld [vmem:[%s3049 + $0xe0] sm:$0xff]
  %v3079 = vld [vmem:[%s3049 + $0xe8] sm:$0xff]
  %v3080 = vld [vmem:[%s3049 + $0xf0] sm:$0xff]
  %v3081 = vld [vmem:[%s3049 + $0xf8] sm:$0xff]
  %v3114 = vunpack.c.l.b16 %v3050
  %v3115 = vunpack.c.h.b16 %v3050
  %v3116 = vunpack.c.l.b16 %v3051
  %v3117 = vunpack.c.h.b16 %v3051
  %v3118 = vunpack.c.l.b16 %v3052
  %v3119 = vunpack.c.h.b16 %v3052
  %v3120 = vunpack.c.l.b16 %v3053
  %v3121 = vunpack.c.h.b16 %v3053
  %v3122 = vunpack.c.l.b16 %v3054
  %v3123 = vunpack.c.h.b16 %v3054
  %v3124 = vunpack.c.l.b16 %v3055
  %v3125 = vunpack.c.h.b16 %v3055
  %v3126 = vunpack.c.l.b16 %v3056
  %v3127 = vunpack.c.h.b16 %v3056
  %v3128 = vunpack.c.l.b16 %v3057
  %v3129 = vunpack.c.h.b16 %v3057
  %v3130 = vunpack.c.l.b16 %v3058
  %v3131 = vunpack.c.h.b16 %v3058
  %v3132 = vunpack.c.l.b16 %v3059
  %v3133 = vunpack.c.h.b16 %v3059
  %v3134 = vunpack.c.l.b16 %v3060
  %v3135 = vunpack.c.h.b16 %v3060
  %v3136 = vunpack.c.l.b16 %v3061
  %v3137 = vunpack.c.h.b16 %v3061
  %v3138 = vunpack.c.l.b16 %v3062
  %v3139 = vunpack.c.h.b16 %v3062
  %v3140 = vunpack.c.l.b16 %v3063
  %v3141 = vunpack.c.h.b16 %v3063
  %v3142 = vunpack.c.l.b16 %v3064
  %v3143 = vunpack.c.h.b16 %v3064
  %v3144 = vunpack.c.l.b16 %v3065
  %v3145 = vunpack.c.h.b16 %v3065
  %v3146 = vunpack.c.l.b16 %v3066
  %v3147 = vunpack.c.h.b16 %v3066
  %v3148 = vunpack.c.l.b16 %v3067
  %v3149 = vunpack.c.h.b16 %v3067
  %v3150 = vunpack.c.l.b16 %v3068
  %v3151 = vunpack.c.h.b16 %v3068
  %v3152 = vunpack.c.l.b16 %v3069
  %v3153 = vunpack.c.h.b16 %v3069
  %v3154 = vunpack.c.l.b16 %v3070
  %v3155 = vunpack.c.h.b16 %v3070
  %v3156 = vunpack.c.l.b16 %v3071
  %v3157 = vunpack.c.h.b16 %v3071
  %v3158 = vunpack.c.l.b16 %v3072
  %v3159 = vunpack.c.h.b16 %v3072
  %v3160 = vunpack.c.l.b16 %v3073
  %v3161 = vunpack.c.h.b16 %v3073
  %v3162 = vunpack.c.l.b16 %v3074
  %v3163 = vunpack.c.h.b16 %v3074
  %v3164 = vunpack.c.l.b16 %v3075
  %v3165 = vunpack.c.h.b16 %v3075
  %v3166 = vunpack.c.l.b16 %v3076
  %v3167 = vunpack.c.h.b16 %v3076
  %v3168 = vunpack.c.l.b16 %v3077
  %v3169 = vunpack.c.h.b16 %v3077
  %v3170 = vunpack.c.l.b16 %v3078
  %v3171 = vunpack.c.h.b16 %v3078
  %v3172 = vunpack.c.l.b16 %v3079
  %v3173 = vunpack.c.h.b16 %v3079
  %v3174 = vunpack.c.l.b16 %v3080
  %v3175 = vunpack.c.h.b16 %v3080
  %v3176 = vunpack.c.l.b16 %v3081
  %v3177 = vunpack.c.h.b16 %v3081
  %v3178 = vpack.c.b16 %v3116, %v3114
  %v3179 = vpack.c.b16 %v3117, %v3115
  %v3180 = vpack.c.b16 %v3120, %v3118
  %v3181 = vpack.c.b16 %v3121, %v3119
  %v3182 = vpack.c.b16 %v3124, %v3122
  %v3183 = vpack.c.b16 %v3125, %v3123
  %v3184 = vpack.c.b16 %v3128, %v3126
  %v3185 = vpack.c.b16 %v3129, %v3127
  %v3186 = vpack.c.b16 %v3132, %v3130
  %v3187 = vpack.c.b16 %v3133, %v3131
  %v3188 = vpack.c.b16 %v3136, %v3134
  %v3189 = vpack.c.b16 %v3137, %v3135
  %v3190 = vpack.c.b16 %v3140, %v3138
  %v3191 = vpack.c.b16 %v3141, %v3139
  %v3192 = vpack.c.b16 %v3144, %v3142
  %v3193 = vpack.c.b16 %v3145, %v3143
  %v3194 = vpack.c.b16 %v3148, %v3146
  %v3195 = vpack.c.b16 %v3149, %v3147
  %v3196 = vpack.c.b16 %v3152, %v3150
  %v3197 = vpack.c.b16 %v3153, %v3151
  %v3198 = vpack.c.b16 %v3156, %v3154
  %v3199 = vpack.c.b16 %v3157, %v3155
  %v3200 = vpack.c.b16 %v3160, %v3158
  %v3201 = vpack.c.b16 %v3161, %v3159
  %v3202 = vpack.c.b16 %v3164, %v3162
  %v3203 = vpack.c.b16 %v3165, %v3163
  %v3204 = vpack.c.b16 %v3168, %v3166
  %v3205 = vpack.c.b16 %v3169, %v3167
  %v3206 = vpack.c.b16 %v3172, %v3170
  %v3207 = vpack.c.b16 %v3173, %v3171
  %v3208 = vpack.c.b16 %v3176, %v3174
  %v3209 = vpack.c.b16 %v3177, %v3175
  %3242 = vmatprep.subr.bf16.mxu0 %v3179
  %3243 = vmatpush1.bf16.msra.mxu0 %v3178
  %3244 = vmatprep.subr.bf16.mxu0 %v3181
  %3245 = vmatpush1.bf16.msra.mxu0 %v3180
  %3246 = vmatprep.subr.bf16.mxu0 %v3183
  %3247 = vmatpush1.bf16.msra.mxu0 %v3182
  %3248 = vmatprep.subr.bf16.mxu0 %v3185
  %3249 = vmatpush1.bf16.msra.mxu0 %v3184
  %3250 = vmatprep.subr.bf16.mxu0 %v3187
  %3251 = vmatpush1.bf16.msra.mxu0 %v3186
  %3252 = vmatprep.subr.bf16.mxu0 %v3189
  %3253 = vmatpush1.bf16.msra.mxu0 %v3188
  %3254 = vmatprep.subr.bf16.mxu0 %v3191
  %3255 = vmatpush1.bf16.msra.mxu0 %v3190
  %3256 = vmatprep.subr.bf16.mxu0 %v3193
  %3257 = vmatpush1.bf16.msra.mxu0 %v3192
  %3258 = vmatprep.subr.bf16.mxu0 %v3195
  %3259 = vmatpush1.bf16.msra.mxu0 %v3194
  %3260 = vmatprep.subr.bf16.mxu0 %v3197
  %3261 = vmatpush1.bf16.msra.mxu0 %v3196
  %3262 = vmatprep.subr.bf16.mxu0 %v3199
  %3263 = vmatpush1.bf16.msra.mxu0 %v3198
  %3264 = vmatprep.subr.bf16.mxu0 %v3201
  %3265 = vmatpush1.bf16.msra.mxu0 %v3200
  %3266 = vmatprep.subr.bf16.mxu0 %v3203
  %3267 = vmatpush1.bf16.msra.mxu0 %v3202
  %3268 = vmatprep.subr.bf16.mxu0 %v3205
  %3269 = vmatpush1.bf16.msra.mxu0 %v3204
  %3270 = vmatprep.subr.bf16.mxu0 %v3207
  %3271 = vmatpush1.bf16.msra.mxu0 %v3206
  %3272 = vmatprep.subr.bf16.mxu0 %v3209
  %3273 = vmatpush1.bf16.msra.mxu0 %v3208
  %3274 = vmatprep.mubr.bf16.mxu0 %v3048
  %3275 = vmatmul.mubr.bf16.gmra.mrb[0].mxu0 %v3047
  %v3276 = vpop.f32.mrb[0].mxu0
  %v3277 = vadd.f32 0.0, %v3276
  %v3278 = vpop.f32.mrb[0].mxu0
  %v3279 = vadd.f32 0.0, %v3278
  %v3280 = vpop.f32.mrb[0].mxu0
  %v3281 = vpop.f32.mrb[0].mxu0
  %3282 = vdwg.mxu0
  %v3283 = vadd.f32 %v2999, %v3277
  %v3284 = vadd.f32 %v3000, %v3279
  %v3285 = vld [vmem:[%s9] sm:$0x3]
  %v3287 = vlaneseq
  %v3288 = vshrl.u32 %v3287, 7
  %v3289 = vsub.s32 0, %v3288
  %v3290 = vrot.slane %v3285, %v3289
  %v3291 = vlaneseq
  %v3292 = vshrl.u32 %v3291, 7
  %v3293 = vsub.s32 1, %v3292
  %v3294 = vrot.slane %v3285, %v3293
  %v3297 = vadd.f32 %v3283, %v3290
  %v3298 = vadd.f32 %v3284, %v3294
  %v3299 = vmax.f32 %v3297, 0.0
  %v3300 = vmax.f32 %v3298, 0.0
  %v3301 = vpack.c.bf16 %v3299, %v3299
  %v3302 = vpack.c.bf16 %v3300, %v3300
  %v3303 = vld [vmem:[%s10] sm:$0x3]
  %vm3304 = vcmask 64512
  %v3306 = vsel %vm3304, %v3303, 0
  %vm3308 = vcmask 1043456
  %v3310 = vsel %vm3308, %v3301, 0
  %v3313 = vsel %vm3308, %v3302, 0
  %3315 = vmatprep.subr.bf16.mxu0 %v3313
  %3316 = vmatpush1.bf16.msra.mxu0 %v3310
  %3317 = vmatprep.subr.bf16.mxu0 0
  %3318 = vmatpush1.bf16.msra.mxu0 0
  %3319 = vmatprep.subr.bf16.mxu0 0
  %3320 = vmatpush1.bf16.msra.mxu0 0
  %3321 = vmatprep.subr.bf16.mxu0 0
  %3322 = vmatpush1.bf16.msra.mxu0 0
  %3323 = vmatprep.subr.bf16.mxu0 0
  %3324 = vmatpush1.bf16.msra.mxu0 0
  %3325 = vmatprep.subr.bf16.mxu0 0
  %3326 = vmatpush1.bf16.msra.mxu0 0
  %3327 = vmatprep.subr.bf16.mxu0 0
  %3328 = vmatpush1.bf16.msra.mxu0 0
  %3329 = vmatprep.subr.bf16.mxu0 0
  %3330 = vmatpush1.bf16.msra.mxu0 0
  %3331 = vmatprep.subr.bf16.mxu0 0
  %3332 = vmatpush1.bf16.msra.mxu0 0
  %3333 = vmatprep.subr.bf16.mxu0 0
  %3334 = vmatpush1.bf16.msra.mxu0 0
  %3335 = vmatprep.subr.bf16.mxu0 0
  %3336 = vmatpush1.bf16.msra.mxu0 0
  %3337 = vmatprep.subr.bf16.mxu0 0
  %3338 = vmatpush1.bf16.msra.mxu0 0
  %3339 = vmatprep.subr.bf16.mxu0 0
  %3340 = vmatpush1.bf16.msra.mxu0 0
  %3341 = vmatprep.subr.bf16.mxu0 0
  %3342 = vmatpush1.bf16.msra.mxu0 0
  %3343 = vmatprep.subr.bf16.mxu0 0
  %3344 = vmatpush1.bf16.msra.mxu0 0
  %3345 = vmatprep.subr.bf16.mxu0 0
  %3346 = vmatpush1.bf16.msra.mxu0 0
  %3347 = vmatprep.mubr.bf16.mxu0 0
  %3348 = vmatmul.mubr.bf16.gmra.mrb[0].mxu0 %v3306
  %v3349 = vpop.f32.mrb[0].mxu0
  %v3350 = vadd.f32 0.0, %v3349
  %v3351 = vpop.f32.mrb[0].mxu0
  %v3352 = vadd.f32 0.0, %v3351
  %v3353 = vpop.f32.mrb[0].mxu0
  %v3354 = vpop.f32.mrb[0].mxu0
  %3355 = vdwg.mxu0
  %v3356 = vpack.c.bf16 %v3350, %v3350
  %v3357 = vpack.c.bf16 %v3352, %v3352
  %v3358 = vld [vmem:[%s11] sm:$0xff]
  %v3359 = vld [vmem:[%s11 + $0x8] sm:$0xff]
  %v3360 = vld [vmem:[%s11 + $0x10] sm:$0xff]
  %v3361 = vld [vmem:[%s11 + $0x18] sm:$0xff]
  %v3362 = vld [vmem:[%s11 + $0x20] sm:$0xff]
  %v3363 = vld [vmem:[%s11 + $0x28] sm:$0xff]
  %v3364 = vld [vmem:[%s11 + $0x30] sm:$0xff]
  %v3365 = vld [vmem:[%s11 + $0x38] sm:$0xff]
  %v3366 = vld [vmem:[%s11 + $0x40] sm:$0xff]
  %v3367 = vld [vmem:[%s11 + $0x48] sm:$0xff]
  %v3368 = vld [vmem:[%s11 + $0x50] sm:$0xff]
  %v3369 = vld [vmem:[%s11 + $0x58] sm:$0xff]
  %v3370 = vld [vmem:[%s11 + $0x60] sm:$0xff]
  %v3371 = vld [vmem:[%s11 + $0x68] sm:$0xff]
  %v3372 = vld [vmem:[%s11 + $0x70] sm:$0xff]
  %v3373 = vld [vmem:[%s11 + $0x78] sm:$0xff]
  %v3374 = vld [vmem:[%s11 + $0x80] sm:$0xff]
  %v3375 = vld [vmem:[%s11 + $0x88] sm:$0xff]
  %v3376 = vld [vmem:[%s11 + $0x90] sm:$0xff]
  %v3377 = vld [vmem:[%s11 + $0x98] sm:$0xff]
  %v3378 = vld [vmem:[%s11 + $0xa0] sm:$0xff]
  %v3379 = vld [vmem:[%s11 + $0xa8] sm:$0xff]
  %v3380 = vld [vmem:[%s11 + $0xb0] sm:$0xff]
  %v3381 = vld [vmem:[%s11 + $0xb8] sm:$0xff]
  %v3382 = vld [vmem:[%s11 + $0xc0] sm:$0xff]
  %v3383 = vld [vmem:[%s11 + $0xc8] sm:$0xff]
  %v3384 = vld [vmem:[%s11 + $0xd0] sm:$0xff]
  %v3385 = vld [vmem:[%s11 + $0xd8] sm:$0xff]
  %v3386 = vld [vmem:[%s11 + $0xe0] sm:$0xff]
  %v3387 = vld [vmem:[%s11 + $0xe8] sm:$0xff]
  %v3388 = vld [vmem:[%s11 + $0xf0] sm:$0xff]
  %v3389 = vld [vmem:[%s11 + $0xf8] sm:$0xff]
  %s3390 = scalar_lea.vmem %s10, 2
  %v3391 = vld [vmem:[%s3390] sm:$0x3]
  %v3393 = vsel %vm3304, %v3391, 0
  %3395 = vmatprep.subr.bf16.mxu0 %v3313
  %3396 = vmatpush1.bf16.msra.mxu0 %v3310
  %3397 = vmatprep.subr.bf16.mxu0 0
  %3398 = vmatpush1.bf16.msra.mxu0 0
  %3399 = vmatprep.subr.bf16.mxu0 0
  %3400 = vmatpush1.bf16.msra.mxu0 0
  %3401 = vmatprep.subr.bf16.mxu0 0
  %3402 = vmatpush1.bf16.msra.mxu0 0
  %3403 = vmatprep.subr.bf16.mxu0 0
  %3404 = vmatpush1.bf16.msra.mxu0 0
  %3405 = vmatprep.subr.bf16.mxu0 0
  %3406 = vmatpush1.bf16.msra.mxu0 0
  %3407 = vmatprep.subr.bf16.mxu0 0
  %3408 = vmatpush1.bf16.msra.mxu0 0
  %3409 = vmatprep.subr.bf16.mxu0 0
  %3410 = vmatpush1.bf16.msra.mxu0 0
  %3411 = vmatprep.subr.bf16.mxu0 0
  %3412 = vmatpush1.bf16.msra.mxu0 0
  %3413 = vmatprep.subr.bf16.mxu0 0
  %3414 = vmatpush1.bf16.msra.mxu0 0
  %3415 = vmatprep.subr.bf16.mxu0 0
  %3416 = vmatpush1.bf16.msra.mxu0 0
  %3417 = vmatprep.subr.bf16.mxu0 0
  %3418 = vmatpush1.bf16.msra.mxu0 0
  %3419 = vmatprep.subr.bf16.mxu0 0
  %3420 = vmatpush1.bf16.msra.mxu0 0
  %3421 = vmatprep.subr.bf16.mxu0 0
  %3422 = vmatpush1.bf16.msra.mxu0 0
  %3423 = vmatprep.subr.bf16.mxu0 0
  %3424 = vmatpush1.bf16.msra.mxu0 0
  %3425 = vmatprep.subr.bf16.mxu0 0
  %3426 = vmatpush1.bf16.msra.mxu0 0
  %3427 = vmatprep.mubr.bf16.mxu0 0
  %3428 = vmatmul.mubr.bf16.gmra.mrb[0].mxu0 %v3393
  %v3429 = vpop.f32.mrb[0].mxu0
  %v3430 = vadd.f32 0.0, %v3429
  %v3431 = vpop.f32.mrb[0].mxu0
  %v3432 = vadd.f32 0.0, %v3431
  %v3433 = vpop.f32.mrb[0].mxu0
  %v3434 = vpop.f32.mrb[0].mxu0
  %3435 = vdwg.mxu0
  %v3436 = vpack.c.bf16 %v3430, %v3430
  %v3437 = vpack.c.bf16 %v3432, %v3432
  %s3438 = scalar_lea.vmem %s11, 256
  %v3439 = vld [vmem:[%s3438] sm:$0xff]
  %v3440 = vld [vmem:[%s3438 + $0x8] sm:$0xff]
  %v3441 = vld [vmem:[%s3438 + $0x10] sm:$0xff]
  %v3442 = vld [vmem:[%s3438 + $0x18] sm:$0xff]
  %v3443 = vld [vmem:[%s3438 + $0x20] sm:$0xff]
  %v3444 = vld [vmem:[%s3438 + $0x28] sm:$0xff]
  %v3445 = vld [vmem:[%s3438 + $0x30] sm:$0xff]
  %v3446 = vld [vmem:[%s3438 + $0x38] sm:$0xff]
  %v3447 = vld [vmem:[%s3438 + $0x40] sm:$0xff]
  %v3448 = vld [vmem:[%s3438 + $0x48] sm:$0xff]
  %v3449 = vld [vmem:[%s3438 + $0x50] sm:$0xff]
  %v3450 = vld [vmem:[%s3438 + $0x58] sm:$0xff]
  %v3451 = vld [vmem:[%s3438 + $0x60] sm:$0xff]
  %v3452 = vld [vmem:[%s3438 + $0x68] sm:$0xff]
  %v3453 = vld [vmem:[%s3438 + $0x70] sm:$0xff]
  %v3454 = vld [vmem:[%s3438 + $0x78] sm:$0xff]
  %v3455 = vld [vmem:[%s3438 + $0x80] sm:$0xff]
  %v3456 = vld [vmem:[%s3438 + $0x88] sm:$0xff]
  %v3457 = vld [vmem:[%s3438 + $0x90] sm:$0xff]
  %v3458 = vld [vmem:[%s3438 + $0x98] sm:$0xff]
  %v3459 = vld [vmem:[%s3438 + $0xa0] sm:$0xff]
  %v3460 = vld [vmem:[%s3438 + $0xa8] sm:$0xff]
  %v3461 = vld [vmem:[%s3438 + $0xb0] sm:$0xff]
  %v3462 = vld [vmem:[%s3438 + $0xb8] sm:$0xff]
  %v3463 = vld [vmem:[%s3438 + $0xc0] sm:$0xff]
  %v3464 = vld [vmem:[%s3438 + $0xc8] sm:$0xff]
  %v3465 = vld [vmem:[%s3438 + $0xd0] sm:$0xff]
  %v3466 = vld [vmem:[%s3438 + $0xd8] sm:$0xff]
  %v3467 = vld [vmem:[%s3438 + $0xe0] sm:$0xff]
  %v3468 = vld [vmem:[%s3438 + $0xe8] sm:$0xff]
  %v3469 = vld [vmem:[%s3438 + $0xf0] sm:$0xff]
  %v3470 = vld [vmem:[%s3438 + $0xf8] sm:$0xff]
  %v3503 = vunpack.c.l.b16 %v3439
  %v3504 = vunpack.c.h.b16 %v3439
  %v3505 = vunpack.c.l.b16 %v3440
  %v3506 = vunpack.c.h.b16 %v3440
  %v3507 = vunpack.c.l.b16 %v3441
  %v3508 = vunpack.c.h.b16 %v3441
  %v3509 = vunpack.c.l.b16 %v3442
  %v3510 = vunpack.c.h.b16 %v3442
  %v3511 = vunpack.c.l.b16 %v3443
  %v3512 = vunpack.c.h.b16 %v3443
  %v3513 = vunpack.c.l.b16 %v3444
  %v3514 = vunpack.c.h.b16 %v3444
  %v3515 = vunpack.c.l.b16 %v3445
  %v3516 = vunpack.c.h.b16 %v3445
  %v3517 = vunpack.c.l.b16 %v3446
  %v3518 = vunpack.c.h.b16 %v3446
  %v3519 = vunpack.c.l.b16 %v3447
  %v3520 = vunpack.c.h.b16 %v3447
  %v3521 = vunpack.c.l.b16 %v3448
  %v3522 = vunpack.c.h.b16 %v3448
  %v3523 = vunpack.c.l.b16 %v3449
  %v3524 = vunpack.c.h.b16 %v3449
  %v3525 = vunpack.c.l.b16 %v3450
  %v3526 = vunpack.c.h.b16 %v3450
  %v3527 = vunpack.c.l.b16 %v3451
  %v3528 = vunpack.c.h.b16 %v3451
  %v3529 = vunpack.c.l.b16 %v3452
  %v3530 = vunpack.c.h.b16 %v3452
  %v3531 = vunpack.c.l.b16 %v3453
  %v3532 = vunpack.c.h.b16 %v3453
  %v3533 = vunpack.c.l.b16 %v3454
  %v3534 = vunpack.c.h.b16 %v3454
  %v3535 = vunpack.c.l.b16 %v3455
  %v3536 = vunpack.c.h.b16 %v3455
  %v3537 = vunpack.c.l.b16 %v3456
  %v3538 = vunpack.c.h.b16 %v3456
  %v3539 = vunpack.c.l.b16 %v3457
  %v3540 = vunpack.c.h.b16 %v3457
  %v3541 = vunpack.c.l.b16 %v3458
  %v3542 = vunpack.c.h.b16 %v3458
  %v3543 = vunpack.c.l.b16 %v3459
  %v3544 = vunpack.c.h.b16 %v3459
  %v3545 = vunpack.c.l.b16 %v3460
  %v3546 = vunpack.c.h.b16 %v3460
  %v3547 = vunpack.c.l.b16 %v3461
  %v3548 = vunpack.c.h.b16 %v3461
  %v3549 = vunpack.c.l.b16 %v3462
  %v3550 = vunpack.c.h.b16 %v3462
  %v3551 = vunpack.c.l.b16 %v3463
  %v3552 = vunpack.c.h.b16 %v3463
  %v3553 = vunpack.c.l.b16 %v3464
  %v3554 = vunpack.c.h.b16 %v3464
  %v3555 = vunpack.c.l.b16 %v3465
  %v3556 = vunpack.c.h.b16 %v3465
  %v3557 = vunpack.c.l.b16 %v3466
  %v3558 = vunpack.c.h.b16 %v3466
  %v3559 = vunpack.c.l.b16 %v3467
  %v3560 = vunpack.c.h.b16 %v3467
  %v3561 = vunpack.c.l.b16 %v3468
  %v3562 = vunpack.c.h.b16 %v3468
  %v3563 = vunpack.c.l.b16 %v3469
  %v3564 = vunpack.c.h.b16 %v3469
  %v3565 = vunpack.c.l.b16 %v3470
  %v3566 = vunpack.c.h.b16 %v3470
  %v3567 = vpack.c.b16 %v3505, %v3503
  %v3568 = vpack.c.b16 %v3506, %v3504
  %v3569 = vpack.c.b16 %v3509, %v3507
  %v3570 = vpack.c.b16 %v3510, %v3508
  %v3571 = vpack.c.b16 %v3513, %v3511
  %v3572 = vpack.c.b16 %v3514, %v3512
  %v3573 = vpack.c.b16 %v3517, %v3515
  %v3574 = vpack.c.b16 %v3518, %v3516
  %v3575 = vpack.c.b16 %v3521, %v3519
  %v3576 = vpack.c.b16 %v3522, %v3520
  %v3577 = vpack.c.b16 %v3525, %v3523
  %v3578 = vpack.c.b16 %v3526, %v3524
  %v3579 = vpack.c.b16 %v3529, %v3527
  %v3580 = vpack.c.b16 %v3530, %v3528
  %v3581 = vpack.c.b16 %v3533, %v3531
  %v3582 = vpack.c.b16 %v3534, %v3532
  %v3583 = vpack.c.b16 %v3537, %v3535
  %v3584 = vpack.c.b16 %v3538, %v3536
  %v3585 = vpack.c.b16 %v3541, %v3539
  %v3586 = vpack.c.b16 %v3542, %v3540
  %v3587 = vpack.c.b16 %v3545, %v3543
  %v3588 = vpack.c.b16 %v3546, %v3544
  %v3589 = vpack.c.b16 %v3549, %v3547
  %v3590 = vpack.c.b16 %v3550, %v3548
  %v3591 = vpack.c.b16 %v3553, %v3551
  %v3592 = vpack.c.b16 %v3554, %v3552
  %v3593 = vpack.c.b16 %v3557, %v3555
  %v3594 = vpack.c.b16 %v3558, %v3556
  %v3595 = vpack.c.b16 %v3561, %v3559
  %v3596 = vpack.c.b16 %v3562, %v3560
  %v3597 = vpack.c.b16 %v3565, %v3563
  %v3598 = vpack.c.b16 %v3566, %v3564
  %3631 = vmatprep.subr.bf16.mxu0 %v3568
  %3632 = vmatpush1.bf16.msra.mxu0 %v3567
  %3633 = vmatprep.subr.bf16.mxu0 %v3570
  %3634 = vmatpush1.bf16.msra.mxu0 %v3569
  %3635 = vmatprep.subr.bf16.mxu0 %v3572
  %3636 = vmatpush1.bf16.msra.mxu0 %v3571
  %3637 = vmatprep.subr.bf16.mxu0 %v3574
  %3638 = vmatpush1.bf16.msra.mxu0 %v3573
  %3639 = vmatprep.subr.bf16.mxu0 %v3576
  %3640 = vmatpush1.bf16.msra.mxu0 %v3575
  %3641 = vmatprep.subr.bf16.mxu0 %v3578
  %3642 = vmatpush1.bf16.msra.mxu0 %v3577
  %3643 = vmatprep.subr.bf16.mxu0 %v3580
  %3644 = vmatpush1.bf16.msra.mxu0 %v3579
  %3645 = vmatprep.subr.bf16.mxu0 %v3582
  %3646 = vmatpush1.bf16.msra.mxu0 %v3581
  %3647 = vmatprep.subr.bf16.mxu0 %v3584
  %3648 = vmatpush1.bf16.msra.mxu0 %v3583
  %3649 = vmatprep.subr.bf16.mxu0 %v3586
  %3650 = vmatpush1.bf16.msra.mxu0 %v3585
  %3651 = vmatprep.subr.bf16.mxu0 %v3588
  %3652 = vmatpush1.bf16.msra.mxu0 %v3587
  %3653 = vmatprep.subr.bf16.mxu0 %v3590
  %3654 = vmatpush1.bf16.msra.mxu0 %v3589
  %3655 = vmatprep.subr.bf16.mxu0 %v3592
  %3656 = vmatpush1.bf16.msra.mxu0 %v3591
  %3657 = vmatprep.subr.bf16.mxu0 %v3594
  %3658 = vmatpush1.bf16.msra.mxu0 %v3593
  %3659 = vmatprep.subr.bf16.mxu0 %v3596
  %3660 = vmatpush1.bf16.msra.mxu0 %v3595
  %3661 = vmatprep.subr.bf16.mxu0 %v3598
  %3662 = vmatpush1.bf16.msra.mxu0 %v3597
  %3663 = vmatprep.mubr.bf16.mxu0 %v3437
  %3664 = vmatmul.mubr.bf16.gmra.mrb[0].mxu0 %v3436
  %v3665 = vpop.f32.mrb[0].mxu0
  %v3666 = vadd.f32 0.0, %v3665
  %v3667 = vpop.f32.mrb[0].mxu0
  %v3668 = vadd.f32 0.0, %v3667
  %v3669 = vpop.f32.mrb[0].mxu0
  %v3670 = vpop.f32.mrb[0].mxu0
  %3671 = vdwg.mxu0
  %v3704 = vunpack.c.l.b16 %v3358
  %v3705 = vunpack.c.h.b16 %v3358
  %v3706 = vunpack.c.l.b16 %v3359
  %v3707 = vunpack.c.h.b16 %v3359
  %v3708 = vunpack.c.l.b16 %v3360
  %v3709 = vunpack.c.h.b16 %v3360
  %v3710 = vunpack.c.l.b16 %v3361
  %v3711 = vunpack.c.h.b16 %v3361
  %v3712 = vunpack.c.l.b16 %v3362
  %v3713 = vunpack.c.h.b16 %v3362
  %v3714 = vunpack.c.l.b16 %v3363
  %v3715 = vunpack.c.h.b16 %v3363
  %v3716 = vunpack.c.l.b16 %v3364
  %v3717 = vunpack.c.h.b16 %v3364
  %v3718 = vunpack.c.l.b16 %v3365
  %v3719 = vunpack.c.h.b16 %v3365
  %v3720 = vunpack.c.l.b16 %v3366
  %v3721 = vunpack.c.h.b16 %v3366
  %v3722 = vunpack.c.l.b16 %v3367
  %v3723 = vunpack.c.h.b16 %v3367
  %v3724 = vunpack.c.l.b16 %v3368
  %v3725 = vunpack.c.h.b16 %v3368
  %v3726 = vunpack.c.l.b16 %v3369
  %v3727 = vunpack.c.h.b16 %v3369
  %v3728 = vunpack.c.l.b16 %v3370
  %v3729 = vunpack.c.h.b16 %v3370
  %v3730 = vunpack.c.l.b16 %v3371
  %v3731 = vunpack.c.h.b16 %v3371
  %v3732 = vunpack.c.l.b16 %v3372
  %v3733 = vunpack.c.h.b16 %v3372
  %v3734 = vunpack.c.l.b16 %v3373
  %v3735 = vunpack.c.h.b16 %v3373
  %v3736 = vunpack.c.l.b16 %v3374
  %v3737 = vunpack.c.h.b16 %v3374
  %v3738 = vunpack.c.l.b16 %v3375
  %v3739 = vunpack.c.h.b16 %v3375
  %v3740 = vunpack.c.l.b16 %v3376
  %v3741 = vunpack.c.h.b16 %v3376
  %v3742 = vunpack.c.l.b16 %v3377
  %v3743 = vunpack.c.h.b16 %v3377
  %v3744 = vunpack.c.l.b16 %v3378
  %v3745 = vunpack.c.h.b16 %v3378
  %v3746 = vunpack.c.l.b16 %v3379
  %v3747 = vunpack.c.h.b16 %v3379
  %v3748 = vunpack.c.l.b16 %v3380
  %v3749 = vunpack.c.h.b16 %v3380
  %v3750 = vunpack.c.l.b16 %v3381
  %v3751 = vunpack.c.h.b16 %v3381
  %v3752 = vunpack.c.l.b16 %v3382
  %v3753 = vunpack.c.h.b16 %v3382
  %v3754 = vunpack.c.l.b16 %v3383
  %v3755 = vunpack.c.h.b16 %v3383
  %v3756 = vunpack.c.l.b16 %v3384
  %v3757 = vunpack.c.h.b16 %v3384
  %v3758 = vunpack.c.l.b16 %v3385
  %v3759 = vunpack.c.h.b16 %v3385
  %v3760 = vunpack.c.l.b16 %v3386
  %v3761 = vunpack.c.h.b16 %v3386
  %v3762 = vunpack.c.l.b16 %v3387
  %v3763 = vunpack.c.h.b16 %v3387
  %v3764 = vunpack.c.l.b16 %v3388
  %v3765 = vunpack.c.h.b16 %v3388
  %v3766 = vunpack.c.l.b16 %v3389
  %v3767 = vunpack.c.h.b16 %v3389
  %v3768 = vpack.c.b16 %v3706, %v3704
  %v3769 = vpack.c.b16 %v3707, %v3705
  %v3770 = vpack.c.b16 %v3710, %v3708
  %v3771 = vpack.c.b16 %v3711, %v3709
  %v3772 = vpack.c.b16 %v3714, %v3712
  %v3773 = vpack.c.b16 %v3715, %v3713
  %v3774 = vpack.c.b16 %v3718, %v3716
  %v3775 = vpack.c.b16 %v3719, %v3717
  %v3776 = vpack.c.b16 %v3722, %v3720
  %v3777 = vpack.c.b16 %v3723, %v3721
  %v3778 = vpack.c.b16 %v3726, %v3724
  %v3779 = vpack.c.b16 %v3727, %v3725
  %v3780 = vpack.c.b16 %v3730, %v3728
  %v3781 = vpack.c.b16 %v3731, %v3729
  %v3782 = vpack.c.b16 %v3734, %v3732
  %v3783 = vpack.c.b16 %v3735, %v3733
  %v3784 = vpack.c.b16 %v3738, %v3736
  %v3785 = vpack.c.b16 %v3739, %v3737
  %v3786 = vpack.c.b16 %v3742, %v3740
  %v3787 = vpack.c.b16 %v3743, %v3741
  %v3788 = vpack.c.b16 %v3746, %v3744
  %v3789 = vpack.c.b16 %v3747, %v3745
  %v3790 = vpack.c.b16 %v3750, %v3748
  %v3791 = vpack.c.b16 %v3751, %v3749
  %v3792 = vpack.c.b16 %v3754, %v3752
  %v3793 = vpack.c.b16 %v3755, %v3753
  %v3794 = vpack.c.b16 %v3758, %v3756
  %v3795 = vpack.c.b16 %v3759, %v3757
  %v3796 = vpack.c.b16 %v3762, %v3760
  %v3797 = vpack.c.b16 %v3763, %v3761
  %v3798 = vpack.c.b16 %v3766, %v3764
  %v3799 = vpack.c.b16 %v3767, %v3765
  %3832 = vmatprep.subr.bf16.mxu0 %v3769
  %3833 = vmatpush1.bf16.msra.mxu0 %v3768
  %3834 = vmatprep.subr.bf16.mxu0 %v3771
  %3835 = vmatpush1.bf16.msra.mxu0 %v3770
  %3836 = vmatprep.subr.bf16.mxu0 %v3773
  %3837 = vmatpush1.bf16.msra.mxu0 %v3772
  %3838 = vmatprep.subr.bf16.mxu0 %v3775
  %3839 = vmatpush1.bf16.msra.mxu0 %v3774
  %3840 = vmatprep.subr.bf16.mxu0 %v3777
  %3841 = vmatpush1.bf16.msra.mxu0 %v3776
  %3842 = vmatprep.subr.bf16.mxu0 %v3779
  %3843 = vmatpush1.bf16.msra.mxu0 %v3778
  %3844 = vmatprep.subr.bf16.mxu0 %v3781
  %3845 = vmatpush1.bf16.msra.mxu0 %v3780
  %3846 = vmatprep.subr.bf16.mxu0 %v3783
  %3847 = vmatpush1.bf16.msra.mxu0 %v3782
  %3848 = vmatprep.subr.bf16.mxu0 %v3785
  %3849 = vmatpush1.bf16.msra.mxu0 %v3784
  %3850 = vmatprep.subr.bf16.mxu0 %v3787
  %3851 = vmatpush1.bf16.msra.mxu0 %v3786
  %3852 = vmatprep.subr.bf16.mxu0 %v3789
  %3853 = vmatpush1.bf16.msra.mxu0 %v3788
  %3854 = vmatprep.subr.bf16.mxu0 %v3791
  %3855 = vmatpush1.bf16.msra.mxu0 %v3790
  %3856 = vmatprep.subr.bf16.mxu0 %v3793
  %3857 = vmatpush1.bf16.msra.mxu0 %v3792
  %3858 = vmatprep.subr.bf16.mxu0 %v3795
  %3859 = vmatpush1.bf16.msra.mxu0 %v3794
  %3860 = vmatprep.subr.bf16.mxu0 %v3797
  %3861 = vmatpush1.bf16.msra.mxu0 %v3796
  %3862 = vmatprep.subr.bf16.mxu0 %v3799
  %3863 = vmatpush1.bf16.msra.mxu0 %v3798
  %3864 = vmatprep.mubr.bf16.mxu0 %v3357
  %3865 = vmatmul.mubr.bf16.gmra.mrb[0].mxu0 %v3356
  %v3866 = vpop.f32.mrb[0].mxu0
  %v3867 = vadd.f32 %v3666, %v3866
  %v3868 = vpop.f32.mrb[0].mxu0
  %v3869 = vadd.f32 %v3668, %v3868
  %v3870 = vpop.f32.mrb[0].mxu0
  %v3871 = vpop.f32.mrb[0].mxu0
  %3872 = vdwg.mxu0
  %s3873 = scalar_lea.vmem %s10, 4
  %v3874 = vld [vmem:[%s3873] sm:$0x3]
  %v3876 = vsel %vm3304, %v3874, 0
  %3878 = vmatprep.subr.bf16.mxu0 %v3313
  %3879 = vmatpush1.bf16.msra.mxu0 %v3310
  %3880 = vmatprep.subr.bf16.mxu0 0
  %3881 = vmatpush1.bf16.msra.mxu0 0
  %3882 = vmatprep.subr.bf16.mxu0 0
  %3883 = vmatpush1.bf16.msra.mxu0 0
  %3884 = vmatprep.subr.bf16.mxu0 0
  %3885 = vmatpush1.bf16.msra.mxu0 0
  %3886 = vmatprep.subr.bf16.mxu0 0
  %3887 = vmatpush1.bf16.msra.mxu0 0
  %3888 = vmatprep.subr.bf16.mxu0 0
  %3889 = vmatpush1.bf16.msra.mxu0 0
  %3890 = vmatprep.subr.bf16.mxu0 0
  %3891 = vmatpush1.bf16.msra.mxu0 0
  %3892 = vmatprep.subr.bf16.mxu0 0
  %3893 = vmatpush1.bf16.msra.mxu0 0
  %3894 = vmatprep.subr.bf16.mxu0 0
  %3895 = vmatpush1.bf16.msra.mxu0 0
  %3896 = vmatprep.subr.bf16.mxu0 0
  %3897 = vmatpush1.bf16.msra.mxu0 0
  %3898 = vmatprep.subr.bf16.mxu0 0
  %3899 = vmatpush1.bf16.msra.mxu0 0
  %3900 = vmatprep.subr.bf16.mxu0 0
  %3901 = vmatpush1.bf16.msra.mxu0 0
  %3902 = vmatprep.subr.bf16.mxu0 0
  %3903 = vmatpush1.bf16.msra.mxu0 0
  %3904 = vmatprep.subr.bf16.mxu0 0
  %3905 = vmatpush1.bf16.msra.mxu0 0
  %3906 = vmatprep.subr.bf16.mxu0 0
  %3907 = vmatpush1.bf16.msra.mxu0 0
  %3908 = vmatprep.subr.bf16.mxu0 0
  %3909 = vmatpush1.bf16.msra.mxu0 0
  %3910 = vmatprep.mubr.bf16.mxu0 0
  %3911 = vmatmul.mubr.bf16.gmra.mrb[0].mxu0 %v3876
  %v3912 = vpop.f32.mrb[0].mxu0
  %v3913 = vadd.f32 0.0, %v3912
  %v3914 = vpop.f32.mrb[0].mxu0
  %v3915 = vadd.f32 0.0, %v3914
  %v3916 = vpop.f32.mrb[0].mxu0
  %v3917 = vpop.f32.mrb[0].mxu0
  %3918 = vdwg.mxu0
  %v3919 = vpack.c.bf16 %v3913, %v3913
  %v3920 = vpack.c.bf16 %v3915, %v3915
  %s3921 = scalar_lea.vmem %s11, 512
  %v3922 = vld [vmem:[%s3921] sm:$0xff]
  %v3923 = vld [vmem:[%s3921 + $0x8] sm:$0xff]
  %v3924 = vld [vmem:[%s3921 + $0x10] sm:$0xff]
  %v3925 = vld [vmem:[%s3921 + $0x18] sm:$0xff]
  %v3926 = vld [vmem:[%s3921 + $0x20] sm:$0xff]
  %v3927 = vld [vmem:[%s3921 + $0x28] sm:$0xff]
  %v3928 = vld [vmem:[%s3921 + $0x30] sm:$0xff]
  %v3929 = vld [vmem:[%s3921 + $0x38] sm:$0xff]
  %v3930 = vld [vmem:[%s3921 + $0x40] sm:$0xff]
  %v3931 = vld [vmem:[%s3921 + $0x48] sm:$0xff]
  %v3932 = vld [vmem:[%s3921 + $0x50] sm:$0xff]
  %v3933 = vld [vmem:[%s3921 + $0x58] sm:$0xff]
  %v3934 = vld [vmem:[%s3921 + $0x60] sm:$0xff]
  %v3935 = vld [vmem:[%s3921 + $0x68] sm:$0xff]
  %v3936 = vld [vmem:[%s3921 + $0x70] sm:$0xff]
  %v3937 = vld [vmem:[%s3921 + $0x78] sm:$0xff]
  %v3938 = vld [vmem:[%s3921 + $0x80] sm:$0xff]
  %v3939 = vld [vmem:[%s3921 + $0x88] sm:$0xff]
  %v3940 = vld [vmem:[%s3921 + $0x90] sm:$0xff]
  %v3941 = vld [vmem:[%s3921 + $0x98] sm:$0xff]
  %v3942 = vld [vmem:[%s3921 + $0xa0] sm:$0xff]
  %v3943 = vld [vmem:[%s3921 + $0xa8] sm:$0xff]
  %v3944 = vld [vmem:[%s3921 + $0xb0] sm:$0xff]
  %v3945 = vld [vmem:[%s3921 + $0xb8] sm:$0xff]
  %v3946 = vld [vmem:[%s3921 + $0xc0] sm:$0xff]
  %v3947 = vld [vmem:[%s3921 + $0xc8] sm:$0xff]
  %v3948 = vld [vmem:[%s3921 + $0xd0] sm:$0xff]
  %v3949 = vld [vmem:[%s3921 + $0xd8] sm:$0xff]
  %v3950 = vld [vmem:[%s3921 + $0xe0] sm:$0xff]
  %v3951 = vld [vmem:[%s3921 + $0xe8] sm:$0xff]
  %v3952 = vld [vmem:[%s3921 + $0xf0] sm:$0xff]
  %v3953 = vld [vmem:[%s3921 + $0xf8] sm:$0xff]
  %v3986 = vunpack.c.l.b16 %v3922
  %v3987 = vunpack.c.h.b16 %v3922
  %v3988 = vunpack.c.l.b16 %v3923
  %v3989 = vunpack.c.h.b16 %v3923
  %v3990 = vunpack.c.l.b16 %v3924
  %v3991 = vunpack.c.h.b16 %v3924
  %v3992 = vunpack.c.l.b16 %v3925
  %v3993 = vunpack.c.h.b16 %v3925
  %v3994 = vunpack.c.l.b16 %v3926
  %v3995 = vunpack.c.h.b16 %v3926
  %v3996 = vunpack.c.l.b16 %v3927
  %v3997 = vunpack.c.h.b16 %v3927
  %v3998 = vunpack.c.l.b16 %v3928
  %v3999 = vunpack.c.h.b16 %v3928
  %v4000 = vunpack.c.l.b16 %v3929
  %v4001 = vunpack.c.h.b16 %v3929
  %v4002 = vunpack.c.l.b16 %v3930
  %v4003 = vunpack.c.h.b16 %v3930
  %v4004 = vunpack.c.l.b16 %v3931
  %v4005 = vunpack.c.h.b16 %v3931
  %v4006 = vunpack.c.l.b16 %v3932
  %v4007 = vunpack.c.h.b16 %v3932
  %v4008 = vunpack.c.l.b16 %v3933
  %v4009 = vunpack.c.h.b16 %v3933
  %v4010 = vunpack.c.l.b16 %v3934
  %v4011 = vunpack.c.h.b16 %v3934
  %v4012 = vunpack.c.l.b16 %v3935
  %v4013 = vunpack.c.h.b16 %v3935
  %v4014 = vunpack.c.l.b16 %v3936
  %v4015 = vunpack.c.h.b16 %v3936
  %v4016 = vunpack.c.l.b16 %v3937
  %v4017 = vunpack.c.h.b16 %v3937
  %v4018 = vunpack.c.l.b16 %v3938
  %v4019 = vunpack.c.h.b16 %v3938
  %v4020 = vunpack.c.l.b16 %v3939
  %v4021 = vunpack.c.h.b16 %v3939
  %v4022 = vunpack.c.l.b16 %v3940
  %v4023 = vunpack.c.h.b16 %v3940
  %v4024 = vunpack.c.l.b16 %v3941
  %v4025 = vunpack.c.h.b16 %v3941
  %v4026 = vunpack.c.l.b16 %v3942
  %v4027 = vunpack.c.h.b16 %v3942
  %v4028 = vunpack.c.l.b16 %v3943
  %v4029 = vunpack.c.h.b16 %v3943
  %v4030 = vunpack.c.l.b16 %v3944
  %v4031 = vunpack.c.h.b16 %v3944
  %v4032 = vunpack.c.l.b16 %v3945
  %v4033 = vunpack.c.h.b16 %v3945
  %v4034 = vunpack.c.l.b16 %v3946
  %v4035 = vunpack.c.h.b16 %v3946
  %v4036 = vunpack.c.l.b16 %v3947
  %v4037 = vunpack.c.h.b16 %v3947
  %v4038 = vunpack.c.l.b16 %v3948
  %v4039 = vunpack.c.h.b16 %v3948
  %v4040 = vunpack.c.l.b16 %v3949
  %v4041 = vunpack.c.h.b16 %v3949
  %v4042 = vunpack.c.l.b16 %v3950
  %v4043 = vunpack.c.h.b16 %v3950
  %v4044 = vunpack.c.l.b16 %v3951
  %v4045 = vunpack.c.h.b16 %v3951
  %v4046 = vunpack.c.l.b16 %v3952
  %v4047 = vunpack.c.h.b16 %v3952
  %v4048 = vunpack.c.l.b16 %v3953
  %v4049 = vunpack.c.h.b16 %v3953
  %v4050 = vpack.c.b16 %v3988, %v3986
  %v4051 = vpack.c.b16 %v3989, %v3987
  %v4052 = vpack.c.b16 %v3992, %v3990
  %v4053 = vpack.c.b16 %v3993, %v3991
  %v4054 = vpack.c.b16 %v3996, %v3994
  %v4055 = vpack.c.b16 %v3997, %v3995
  %v4056 = vpack.c.b16 %v4000, %v3998
  %v4057 = vpack.c.b16 %v4001, %v3999
  %v4058 = vpack.c.b16 %v4004, %v4002
  %v4059 = vpack.c.b16 %v4005, %v4003
  %v4060 = vpack.c.b16 %v4008, %v4006
  %v4061 = vpack.c.b16 %v4009, %v4007
  %v4062 = vpack.c.b16 %v4012, %v4010
  %v4063 = vpack.c.b16 %v4013, %v4011
  %v4064 = vpack.c.b16 %v4016, %v4014
  %v4065 = vpack.c.b16 %v4017, %v4015
  %v4066 = vpack.c.b16 %v4020, %v4018
  %v4067 = vpack.c.b16 %v4021, %v4019
  %v4068 = vpack.c.b16 %v4024, %v4022
  %v4069 = vpack.c.b16 %v4025, %v4023
  %v4070 = vpack.c.b16 %v4028, %v4026
  %v4071 = vpack.c.b16 %v4029, %v4027
  %v4072 = vpack.c.b16 %v4032, %v4030
  %v4073 = vpack.c.b16 %v4033, %v4031
  %v4074 = vpack.c.b16 %v4036, %v4034
  %v4075 = vpack.c.b16 %v4037, %v4035
  %v4076 = vpack.c.b16 %v4040, %v4038
  %v4077 = vpack.c.b16 %v4041, %v4039
  %v4078 = vpack.c.b16 %v4044, %v4042
  %v4079 = vpack.c.b16 %v4045, %v4043
  %v4080 = vpack.c.b16 %v4048, %v4046
  %v4081 = vpack.c.b16 %v4049, %v4047
  %4114 = vmatprep.subr.bf16.mxu0 %v4051
  %4115 = vmatpush1.bf16.msra.mxu0 %v4050
  %4116 = vmatprep.subr.bf16.mxu0 %v4053
  %4117 = vmatpush1.bf16.msra.mxu0 %v4052
  %4118 = vmatprep.subr.bf16.mxu0 %v4055
  %4119 = vmatpush1.bf16.msra.mxu0 %v4054
  %4120 = vmatprep.subr.bf16.mxu0 %v4057
  %4121 = vmatpush1.bf16.msra.mxu0 %v4056
  %4122 = vmatprep.subr.bf16.mxu0 %v4059
  %4123 = vmatpush1.bf16.msra.mxu0 %v4058
  %4124 = vmatprep.subr.bf16.mxu0 %v4061
  %4125 = vmatpush1.bf16.msra.mxu0 %v4060
  %4126 = vmatprep.subr.bf16.mxu0 %v4063
  %4127 = vmatpush1.bf16.msra.mxu0 %v4062
  %4128 = vmatprep.subr.bf16.mxu0 %v4065
  %4129 = vmatpush1.bf16.msra.mxu0 %v4064
  %4130 = vmatprep.subr.bf16.mxu0 %v4067
  %4131 = vmatpush1.bf16.msra.mxu0 %v4066
  %4132 = vmatprep.subr.bf16.mxu0 %v4069
  %4133 = vmatpush1.bf16.msra.mxu0 %v4068
  %4134 = vmatprep.subr.bf16.mxu0 %v4071
  %4135 = vmatpush1.bf16.msra.mxu0 %v4070
  %4136 = vmatprep.subr.bf16.mxu0 %v4073
  %4137 = vmatpush1.bf16.msra.mxu0 %v4072
  %4138 = vmatprep.subr.bf16.mxu0 %v4075
  %4139 = vmatpush1.bf16.msra.mxu0 %v4074
  %4140 = vmatprep.subr.bf16.mxu0 %v4077
  %4141 = vmatpush1.bf16.msra.mxu0 %v4076
  %4142 = vmatprep.subr.bf16.mxu0 %v4079
  %4143 = vmatpush1.bf16.msra.mxu0 %v4078
  %4144 = vmatprep.subr.bf16.mxu0 %v4081
  %4145 = vmatpush1.bf16.msra.mxu0 %v4080
  %4146 = vmatprep.mubr.bf16.mxu0 %v3920
  %4147 = vmatmul.mubr.bf16.gmra.mrb[0].mxu0 %v3919
  %v4148 = vpop.f32.mrb[0].mxu0
  %v4149 = vadd.f32 0.0, %v4148
  %v4150 = vpop.f32.mrb[0].mxu0
  %v4151 = vadd.f32 0.0, %v4150
  %v4152 = vpop.f32.mrb[0].mxu0
  %v4153 = vpop.f32.mrb[0].mxu0
  %4154 = vdwg.mxu0
  %v4155 = vadd.f32 %v3867, %v4149
  %v4156 = vadd.f32 %v3869, %v4151
  %s4157 = scalar_lea.vmem %s10, 6
  %v4158 = vld [vmem:[%s4157] sm:$0x3]
  %v4160 = vsel %vm3304, %v4158, 0
  %4162 = vmatprep.subr.bf16.mxu0 %v3313
  %4163 = vmatpush1.bf16.msra.mxu0 %v3310
  %4164 = vmatprep.subr.bf16.mxu0 0
  %4165 = vmatpush1.bf16.msra.mxu0 0
  %4166 = vmatprep.subr.bf16.mxu0 0
  %4167 = vmatpush1.bf16.msra.mxu0 0
  %4168 = vmatprep.subr.bf16.mxu0 0
  %4169 = vmatpush1.bf16.msra.mxu0 0
  %4170 = vmatprep.subr.bf16.mxu0 0
  %4171 = vmatpush1.bf16.msra.mxu0 0
  %4172 = vmatprep.subr.bf16.mxu0 0
  %4173 = vmatpush1.bf16.msra.mxu0 0
  %4174 = vmatprep.subr.bf16.mxu0 0
  %4175 = vmatpush1.bf16.msra.mxu0 0
  %4176 = vmatprep.subr.bf16.mxu0 0
  %4177 = vmatpush1.bf16.msra.mxu0 0
  %4178 = vmatprep.subr.bf16.mxu0 0
  %4179 = vmatpush1.bf16.msra.mxu0 0
  %4180 = vmatprep.subr.bf16.mxu0 0
  %4181 = vmatpush1.bf16.msra.mxu0 0
  %4182 = vmatprep.subr.bf16.mxu0 0
  %4183 = vmatpush1.bf16.msra.mxu0 0
  %4184 = vmatprep.subr.bf16.mxu0 0
  %4185 = vmatpush1.bf16.msra.mxu0 0
  %4186 = vmatprep.subr.bf16.mxu0 0
  %4187 = vmatpush1.bf16.msra.mxu0 0
  %4188 = vmatprep.subr.bf16.mxu0 0
  %4189 = vmatpush1.bf16.msra.mxu0 0
  %4190 = vmatprep.subr.bf16.mxu0 0
  %4191 = vmatpush1.bf16.msra.mxu0 0
  %4192 = vmatprep.subr.bf16.mxu0 0
  %4193 = vmatpush1.bf16.msra.mxu0 0
  %4194 = vmatprep.mubr.bf16.mxu0 0
  %4195 = vmatmul.mubr.bf16.gmra.mrb[0].mxu0 %v4160
  %v4196 = vpop.f32.mrb[0].mxu0
  %v4197 = vadd.f32 0.0, %v4196
  %v4198 = vpop.f32.mrb[0].mxu0
  %v4199 = vadd.f32 0.0, %v4198
  %v4200 = vpop.f32.mrb[0].mxu0
  %v4201 = vpop.f32.mrb[0].mxu0
  %4202 = vdwg.mxu0
  %v4203 = vpack.c.bf16 %v4197, %v4197
  %v4204 = vpack.c.bf16 %v4199, %v4199
  %s4205 = scalar_lea.vmem %s11, 768
  %v4206 = vld [vmem:[%s4205] sm:$0xff]
  %v4207 = vld [vmem:[%s4205 + $0x8] sm:$0xff]
  %v4208 = vld [vmem:[%s4205 + $0x10] sm:$0xff]
  %v4209 = vld [vmem:[%s4205 + $0x18] sm:$0xff]
  %v4210 = vld [vmem:[%s4205 + $0x20] sm:$0xff]
  %v4211 = vld [vmem:[%s4205 + $0x28] sm:$0xff]
  %v4212 = vld [vmem:[%s4205 + $0x30] sm:$0xff]
  %v4213 = vld [vmem:[%s4205 + $0x38] sm:$0xff]
  %v4214 = vld [vmem:[%s4205 + $0x40] sm:$0xff]
  %v4215 = vld [vmem:[%s4205 + $0x48] sm:$0xff]
  %v4216 = vld [vmem:[%s4205 + $0x50] sm:$0xff]
  %v4217 = vld [vmem:[%s4205 + $0x58] sm:$0xff]
  %v4218 = vld [vmem:[%s4205 + $0x60] sm:$0xff]
  %v4219 = vld [vmem:[%s4205 + $0x68] sm:$0xff]
  %v4220 = vld [vmem:[%s4205 + $0x70] sm:$0xff]
  %v4221 = vld [vmem:[%s4205 + $0x78] sm:$0xff]
  %v4222 = vld [vmem:[%s4205 + $0x80] sm:$0xff]
  %v4223 = vld [vmem:[%s4205 + $0x88] sm:$0xff]
  %v4224 = vld [vmem:[%s4205 + $0x90] sm:$0xff]
  %v4225 = vld [vmem:[%s4205 + $0x98] sm:$0xff]
  %v4226 = vld [vmem:[%s4205 + $0xa0] sm:$0xff]
  %v4227 = vld [vmem:[%s4205 + $0xa8] sm:$0xff]
  %v4228 = vld [vmem:[%s4205 + $0xb0] sm:$0xff]
  %v4229 = vld [vmem:[%s4205 + $0xb8] sm:$0xff]
  %v4230 = vld [vmem:[%s4205 + $0xc0] sm:$0xff]
  %v4231 = vld [vmem:[%s4205 + $0xc8] sm:$0xff]
  %v4232 = vld [vmem:[%s4205 + $0xd0] sm:$0xff]
  %v4233 = vld [vmem:[%s4205 + $0xd8] sm:$0xff]
  %v4234 = vld [vmem:[%s4205 + $0xe0] sm:$0xff]
  %v4235 = vld [vmem:[%s4205 + $0xe8] sm:$0xff]
  %v4236 = vld [vmem:[%s4205 + $0xf0] sm:$0xff]
  %v4237 = vld [vmem:[%s4205 + $0xf8] sm:$0xff]
  %v4270 = vunpack.c.l.b16 %v4206
  %v4271 = vunpack.c.h.b16 %v4206
  %v4272 = vunpack.c.l.b16 %v4207
  %v4273 = vunpack.c.h.b16 %v4207
  %v4274 = vunpack.c.l.b16 %v4208
  %v4275 = vunpack.c.h.b16 %v4208
  %v4276 = vunpack.c.l.b16 %v4209
  %v4277 = vunpack.c.h.b16 %v4209
  %v4278 = vunpack.c.l.b16 %v4210
  %v4279 = vunpack.c.h.b16 %v4210
  %v4280 = vunpack.c.l.b16 %v4211
  %v4281 = vunpack.c.h.b16 %v4211
  %v4282 = vunpack.c.l.b16 %v4212
  %v4283 = vunpack.c.h.b16 %v4212
  %v4284 = vunpack.c.l.b16 %v4213
  %v4285 = vunpack.c.h.b16 %v4213
  %v4286 = vunpack.c.l.b16 %v4214
  %v4287 = vunpack.c.h.b16 %v4214
  %v4288 = vunpack.c.l.b16 %v4215
  %v4289 = vunpack.c.h.b16 %v4215
  %v4290 = vunpack.c.l.b16 %v4216
  %v4291 = vunpack.c.h.b16 %v4216
  %v4292 = vunpack.c.l.b16 %v4217
  %v4293 = vunpack.c.h.b16 %v4217
  %v4294 = vunpack.c.l.b16 %v4218
  %v4295 = vunpack.c.h.b16 %v4218
  %v4296 = vunpack.c.l.b16 %v4219
  %v4297 = vunpack.c.h.b16 %v4219
  %v4298 = vunpack.c.l.b16 %v4220
  %v4299 = vunpack.c.h.b16 %v4220
  %v4300 = vunpack.c.l.b16 %v4221
  %v4301 = vunpack.c.h.b16 %v4221
  %v4302 = vunpack.c.l.b16 %v4222
  %v4303 = vunpack.c.h.b16 %v4222
  %v4304 = vunpack.c.l.b16 %v4223
  %v4305 = vunpack.c.h.b16 %v4223
  %v4306 = vunpack.c.l.b16 %v4224
  %v4307 = vunpack.c.h.b16 %v4224
  %v4308 = vunpack.c.l.b16 %v4225
  %v4309 = vunpack.c.h.b16 %v4225
  %v4310 = vunpack.c.l.b16 %v4226
  %v4311 = vunpack.c.h.b16 %v4226
  %v4312 = vunpack.c.l.b16 %v4227
  %v4313 = vunpack.c.h.b16 %v4227
  %v4314 = vunpack.c.l.b16 %v4228
  %v4315 = vunpack.c.h.b16 %v4228
  %v4316 = vunpack.c.l.b16 %v4229
  %v4317 = vunpack.c.h.b16 %v4229
  %v4318 = vunpack.c.l.b16 %v4230
  %v4319 = vunpack.c.h.b16 %v4230
  %v4320 = vunpack.c.l.b16 %v4231
  %v4321 = vunpack.c.h.b16 %v4231
  %v4322 = vunpack.c.l.b16 %v4232
  %v4323 = vunpack.c.h.b16 %v4232
  %v4324 = vunpack.c.l.b16 %v4233
  %v4325 = vunpack.c.h.b16 %v4233
  %v4326 = vunpack.c.l.b16 %v4234
  %v4327 = vunpack.c.h.b16 %v4234
  %v4328 = vunpack.c.l.b16 %v4235
  %v4329 = vunpack.c.h.b16 %v4235
  %v4330 = vunpack.c.l.b16 %v4236
  %v4331 = vunpack.c.h.b16 %v4236
  %v4332 = vunpack.c.l.b16 %v4237
  %v4333 = vunpack.c.h.b16 %v4237
  %v4334 = vpack.c.b16 %v4272, %v4270
  %v4335 = vpack.c.b16 %v4273, %v4271
  %v4336 = vpack.c.b16 %v4276, %v4274
  %v4337 = vpack.c.b16 %v4277, %v4275
  %v4338 = vpack.c.b16 %v4280, %v4278
  %v4339 = vpack.c.b16 %v4281, %v4279
  %v4340 = vpack.c.b16 %v4284, %v4282
  %v4341 = vpack.c.b16 %v4285, %v4283
  %v4342 = vpack.c.b16 %v4288, %v4286
  %v4343 = vpack.c.b16 %v4289, %v4287
  %v4344 = vpack.c.b16 %v4292, %v4290
  %v4345 = vpack.c.b16 %v4293, %v4291
  %v4346 = vpack.c.b16 %v4296, %v4294
  %v4347 = vpack.c.b16 %v4297, %v4295
  %v4348 = vpack.c.b16 %v4300, %v4298
  %v4349 = vpack.c.b16 %v4301, %v4299
  %v4350 = vpack.c.b16 %v4304, %v4302
  %v4351 = vpack.c.b16 %v4305, %v4303
  %v4352 = vpack.c.b16 %v4308, %v4306
  %v4353 = vpack.c.b16 %v4309, %v4307
  %v4354 = vpack.c.b16 %v4312, %v4310
  %v4355 = vpack.c.b16 %v4313, %v4311
  %v4356 = vpack.c.b16 %v4316, %v4314
  %v4357 = vpack.c.b16 %v4317, %v4315
  %v4358 = vpack.c.b16 %v4320, %v4318
  %v4359 = vpack.c.b16 %v4321, %v4319
  %v4360 = vpack.c.b16 %v4324, %v4322
  %v4361 = vpack.c.b16 %v4325, %v4323
  %v4362 = vpack.c.b16 %v4328, %v4326
  %v4363 = vpack.c.b16 %v4329, %v4327
  %v4364 = vpack.c.b16 %v4332, %v4330
  %v4365 = vpack.c.b16 %v4333, %v4331
  %4398 = vmatprep.subr.bf16.mxu0 %v4335
  %4399 = vmatpush1.bf16.msra.mxu0 %v4334
  %4400 = vmatprep.subr.bf16.mxu0 %v4337
  %4401 = vmatpush1.bf16.msra.mxu0 %v4336
  %4402 = vmatprep.subr.bf16.mxu0 %v4339
  %4403 = vmatpush1.bf16.msra.mxu0 %v4338
  %4404 = vmatprep.subr.bf16.mxu0 %v4341
  %4405 = vmatpush1.bf16.msra.mxu0 %v4340
  %4406 = vmatprep.subr.bf16.mxu0 %v4343
  %4407 = vmatpush1.bf16.msra.mxu0 %v4342
  %4408 = vmatprep.subr.bf16.mxu0 %v4345
  %4409 = vmatpush1.bf16.msra.mxu0 %v4344
  %4410 = vmatprep.subr.bf16.mxu0 %v4347
  %4411 = vmatpush1.bf16.msra.mxu0 %v4346
  %4412 = vmatprep.subr.bf16.mxu0 %v4349
  %4413 = vmatpush1.bf16.msra.mxu0 %v4348
  %4414 = vmatprep.subr.bf16.mxu0 %v4351
  %4415 = vmatpush1.bf16.msra.mxu0 %v4350
  %4416 = vmatprep.subr.bf16.mxu0 %v4353
  %4417 = vmatpush1.bf16.msra.mxu0 %v4352
  %4418 = vmatprep.subr.bf16.mxu0 %v4355
  %4419 = vmatpush1.bf16.msra.mxu0 %v4354
  %4420 = vmatprep.subr.bf16.mxu0 %v4357
  %4421 = vmatpush1.bf16.msra.mxu0 %v4356
  %4422 = vmatprep.subr.bf16.mxu0 %v4359
  %4423 = vmatpush1.bf16.msra.mxu0 %v4358
  %4424 = vmatprep.subr.bf16.mxu0 %v4361
  %4425 = vmatpush1.bf16.msra.mxu0 %v4360
  %4426 = vmatprep.subr.bf16.mxu0 %v4363
  %4427 = vmatpush1.bf16.msra.mxu0 %v4362
  %4428 = vmatprep.subr.bf16.mxu0 %v4365
  %4429 = vmatpush1.bf16.msra.mxu0 %v4364
  %4430 = vmatprep.mubr.bf16.mxu0 %v4204
  %4431 = vmatmul.mubr.bf16.gmra.mrb[0].mxu0 %v4203
  %v4432 = vpop.f32.mrb[0].mxu0
  %v4433 = vadd.f32 0.0, %v4432
  %v4434 = vpop.f32.mrb[0].mxu0
  %v4435 = vadd.f32 0.0, %v4434
  %v4436 = vpop.f32.mrb[0].mxu0
  %v4437 = vpop.f32.mrb[0].mxu0
  %4438 = vdwg.mxu0
  %v4439 = vadd.f32 %v4155, %v4433
  %v4440 = vadd.f32 %v4156, %v4435
  %v4441 = vld [vmem:[%s12] sm:$0x3]
  %v4443 = vlaneseq
  %v4444 = vshrl.u32 %v4443, 7
  %v4445 = vsub.s32 0, %v4444
  %v4446 = vrot.slane %v4441, %v4445
  %v4447 = vlaneseq
  %v4448 = vshrl.u32 %v4447, 7
  %v4449 = vsub.s32 1, %v4448
  %v4450 = vrot.slane %v4441, %v4449
  %v4453 = vadd.f32 %v4439, %v4446
  %v4454 = vadd.f32 %v4440, %v4450
  %v4455 = vmax.f32 %v4453, 0.0
  %v4456 = vmax.f32 %v4454, 0.0
  %v4457 = vpack.c.bf16 %v4455, %v4455
  %v4458 = vpack.c.bf16 %v4456, %v4456
  %v4459 = vld [vmem:[%s13] sm:$0xf]
  %vm4460 = vcmask 31744
  %v4462 = vsel %vm4460, %v4459, 0
  %vm4464 = vcmask 1041408
  %v4466 = vsel %vm4464, %v4457, 0
  %v4469 = vsel %vm4464, %v4458, 0
  %4471 = vmatprep.subr.bf16.mxu0 %v4469
  %4472 = vmatpush1.bf16.msra.mxu0 %v4466
  %4473 = vmatprep.subr.bf16.mxu0 0
  %4474 = vmatpush1.bf16.msra.mxu0 0
  %4475 = vmatprep.subr.bf16.mxu0 0
  %4476 = vmatpush1.bf16.msra.mxu0 0
  %4477 = vmatprep.subr.bf16.mxu0 0
  %4478 = vmatpush1.bf16.msra.mxu0 0
  %4479 = vmatprep.subr.bf16.mxu0 0
  %4480 = vmatpush1.bf16.msra.mxu0 0
  %4481 = vmatprep.subr.bf16.mxu0 0
  %4482 = vmatpush1.bf16.msra.mxu0 0
  %4483 = vmatprep.subr.bf16.mxu0 0
  %4484 = vmatpush1.bf16.msra.mxu0 0
  %4485 = vmatprep.subr.bf16.mxu0 0
  %4486 = vmatpush1.bf16.msra.mxu0 0
  %4487 = vmatprep.subr.bf16.mxu0 0
  %4488 = vmatpush1.bf16.msra.mxu0 0
  %4489 = vmatprep.subr.bf16.mxu0 0
  %4490 = vmatpush1.bf16.msra.mxu0 0
  %4491 = vmatprep.subr.bf16.mxu0 0
  %4492 = vmatpush1.bf16.msra.mxu0 0
  %4493 = vmatprep.subr.bf16.mxu0 0
  %4494 = vmatpush1.bf16.msra.mxu0 0
  %4495 = vmatprep.subr.bf16.mxu0 0
  %4496 = vmatpush1.bf16.msra.mxu0 0
  %4497 = vmatprep.subr.bf16.mxu0 0
  %4498 = vmatpush1.bf16.msra.mxu0 0
  %4499 = vmatprep.subr.bf16.mxu0 0
  %4500 = vmatpush1.bf16.msra.mxu0 0
  %4501 = vmatprep.subr.bf16.mxu0 0
  %4502 = vmatpush1.bf16.msra.mxu0 0
  %4503 = vmatprep.mubr.bf16.mxu0 0
  %4504 = vmatmul.mubr.bf16.gmra.mrb[0].mxu0 %v4462
  %v4505 = vpop.f32.mrb[0].mxu0
  %v4506 = vadd.f32 0.0, %v4505
  %v4507 = vpop.f32.mrb[0].mxu0
  %v4508 = vadd.f32 0.0, %v4507
  %v4509 = vpop.f32.mrb[0].mxu0
  %v4510 = vpop.f32.mrb[0].mxu0
  %4511 = vdwg.mxu0
  %v4512 = vpack.c.bf16 %v4506, %v4506
  %v4513 = vpack.c.bf16 %v4508, %v4508
  %v4514 = vld [vmem:[%s14] sm:$0xff]
  %v4515 = vld [vmem:[%s14 + $0x8] sm:$0xff]
  %v4516 = vld [vmem:[%s14 + $0x10] sm:$0xff]
  %v4517 = vld [vmem:[%s14 + $0x18] sm:$0xff]
  %v4518 = vld [vmem:[%s14 + $0x20] sm:$0xff]
  %v4519 = vld [vmem:[%s14 + $0x28] sm:$0xff]
  %v4520 = vld [vmem:[%s14 + $0x30] sm:$0xff]
  %v4521 = vld [vmem:[%s14 + $0x38] sm:$0xff]
  %v4522 = vld [vmem:[%s14 + $0x40] sm:$0xff]
  %v4523 = vld [vmem:[%s14 + $0x48] sm:$0xff]
  %v4524 = vld [vmem:[%s14 + $0x50] sm:$0xff]
  %v4525 = vld [vmem:[%s14 + $0x58] sm:$0xff]
  %v4526 = vld [vmem:[%s14 + $0x60] sm:$0xff]
  %v4527 = vld [vmem:[%s14 + $0x68] sm:$0xff]
  %v4528 = vld [vmem:[%s14 + $0x70] sm:$0xff]
  %v4529 = vld [vmem:[%s14 + $0x78] sm:$0xff]
  %v4530 = vld [vmem:[%s14 + $0x80] sm:$0xff]
  %v4531 = vld [vmem:[%s14 + $0x88] sm:$0xff]
  %v4532 = vld [vmem:[%s14 + $0x90] sm:$0xff]
  %v4533 = vld [vmem:[%s14 + $0x98] sm:$0xff]
  %v4534 = vld [vmem:[%s14 + $0xa0] sm:$0xff]
  %v4535 = vld [vmem:[%s14 + $0xa8] sm:$0xff]
  %v4536 = vld [vmem:[%s14 + $0xb0] sm:$0xff]
  %v4537 = vld [vmem:[%s14 + $0xb8] sm:$0xff]
  %v4538 = vld [vmem:[%s14 + $0xc0] sm:$0xff]
  %v4539 = vld [vmem:[%s14 + $0xc8] sm:$0xff]
  %v4540 = vld [vmem:[%s14 + $0xd0] sm:$0xff]
  %v4541 = vld [vmem:[%s14 + $0xd8] sm:$0xff]
  %v4542 = vld [vmem:[%s14 + $0xe0] sm:$0xff]
  %v4543 = vld [vmem:[%s14 + $0xe8] sm:$0xff]
  %v4544 = vld [vmem:[%s14 + $0xf0] sm:$0xff]
  %v4545 = vld [vmem:[%s14 + $0xf8] sm:$0xff]
  %s4546 = scalar_lea.vmem %s13, 4
  %v4547 = vld [vmem:[%s4546] sm:$0xf]
  %v4549 = vsel %vm4460, %v4547, 0
  %4551 = vmatprep.subr.bf16.mxu0 %v4469
  %4552 = vmatpush1.bf16.msra.mxu0 %v4466
  %4553 = vmatprep.subr.bf16.mxu0 0
  %4554 = vmatpush1.bf16.msra.mxu0 0
  %4555 = vmatprep.subr.bf16.mxu0 0
  %4556 = vmatpush1.bf16.msra.mxu0 0
  %4557 = vmatprep.subr.bf16.mxu0 0
  %4558 = vmatpush1.bf16.msra.mxu0 0
  %4559 = vmatprep.subr.bf16.mxu0 0
  %4560 = vmatpush1.bf16.msra.mxu0 0
  %4561 = vmatprep.subr.bf16.mxu0 0
  %4562 = vmatpush1.bf16.msra.mxu0 0
  %4563 = vmatprep.subr.bf16.mxu0 0
  %4564 = vmatpush1.bf16.msra.mxu0 0
  %4565 = vmatprep.subr.bf16.mxu0 0
  %4566 = vmatpush1.bf16.msra.mxu0 0
  %4567 = vmatprep.subr.bf16.mxu0 0
  %4568 = vmatpush1.bf16.msra.mxu0 0
  %4569 = vmatprep.subr.bf16.mxu0 0
  %4570 = vmatpush1.bf16.msra.mxu0 0
  %4571 = vmatprep.subr.bf16.mxu0 0
  %4572 = vmatpush1.bf16.msra.mxu0 0
  %4573 = vmatprep.subr.bf16.mxu0 0
  %4574 = vmatpush1.bf16.msra.mxu0 0
  %4575 = vmatprep.subr.bf16.mxu0 0
  %4576 = vmatpush1.bf16.msra.mxu0 0
  %4577 = vmatprep.subr.bf16.mxu0 0
  %4578 = vmatpush1.bf16.msra.mxu0 0
  %4579 = vmatprep.subr.bf16.mxu0 0
  %4580 = vmatpush1.bf16.msra.mxu0 0
  %4581 = vmatprep.subr.bf16.mxu0 0
  %4582 = vmatpush1.bf16.msra.mxu0 0
  %4583 = vmatprep.mubr.bf16.mxu0 0
  %4584 = vmatmul.mubr.bf16.gmra.mrb[0].mxu0 %v4549
  %v4585 = vpop.f32.mrb[0].mxu0
  %v4586 = vadd.f32 0.0, %v4585
  %v4587 = vpop.f32.mrb[0].mxu0
  %v4588 = vadd.f32 0.0, %v4587
  %v4589 = vpop.f32.mrb[0].mxu0
  %v4590 = vpop.f32.mrb[0].mxu0
  %4591 = vdwg.mxu0
  %v4592 = vpack.c.bf16 %v4586, %v4586
  %v4593 = vpack.c.bf16 %v4588, %v4588
  %s4594 = scalar_lea.vmem %s14, 256
  %v4595 = vld [vmem:[%s4594] sm:$0xff]
  %v4596 = vld [vmem:[%s4594 + $0x8] sm:$0xff]
  %v4597 = vld [vmem:[%s4594 + $0x10] sm:$0xff]
  %v4598 = vld [vmem:[%s4594 + $0x18] sm:$0xff]
  %v4599 = vld [vmem:[%s4594 + $0x20] sm:$0xff]
  %v4600 = vld [vmem:[%s4594 + $0x28] sm:$0xff]
  %v4601 = vld [vmem:[%s4594 + $0x30] sm:$0xff]
  %v4602 = vld [vmem:[%s4594 + $0x38] sm:$0xff]
  %v4603 = vld [vmem:[%s4594 + $0x40] sm:$0xff]
  %v4604 = vld [vmem:[%s4594 + $0x48] sm:$0xff]
  %v4605 = vld [vmem:[%s4594 + $0x50] sm:$0xff]
  %v4606 = vld [vmem:[%s4594 + $0x58] sm:$0xff]
  %v4607 = vld [vmem:[%s4594 + $0x60] sm:$0xff]
  %v4608 = vld [vmem:[%s4594 + $0x68] sm:$0xff]
  %v4609 = vld [vmem:[%s4594 + $0x70] sm:$0xff]
  %v4610 = vld [vmem:[%s4594 + $0x78] sm:$0xff]
  %v4611 = vld [vmem:[%s4594 + $0x80] sm:$0xff]
  %v4612 = vld [vmem:[%s4594 + $0x88] sm:$0xff]
  %v4613 = vld [vmem:[%s4594 + $0x90] sm:$0xff]
  %v4614 = vld [vmem:[%s4594 + $0x98] sm:$0xff]
  %v4615 = vld [vmem:[%s4594 + $0xa0] sm:$0xff]
  %v4616 = vld [vmem:[%s4594 + $0xa8] sm:$0xff]
  %v4617 = vld [vmem:[%s4594 + $0xb0] sm:$0xff]
  %v4618 = vld [vmem:[%s4594 + $0xb8] sm:$0xff]
  %v4619 = vld [vmem:[%s4594 + $0xc0] sm:$0xff]
  %v4620 = vld [vmem:[%s4594 + $0xc8] sm:$0xff]
  %v4621 = vld [vmem:[%s4594 + $0xd0] sm:$0xff]
  %v4622 = vld [vmem:[%s4594 + $0xd8] sm:$0xff]
  %v4623 = vld [vmem:[%s4594 + $0xe0] sm:$0xff]
  %v4624 = vld [vmem:[%s4594 + $0xe8] sm:$0xff]
  %v4625 = vld [vmem:[%s4594 + $0xf0] sm:$0xff]
  %v4626 = vld [vmem:[%s4594 + $0xf8] sm:$0xff]
  %v4659 = vunpack.c.l.b16 %v4595
  %v4660 = vunpack.c.h.b16 %v4595
  %v4661 = vunpack.c.l.b16 %v4596
  %v4662 = vunpack.c.h.b16 %v4596
  %v4663 = vunpack.c.l.b16 %v4597
  %v4664 = vunpack.c.h.b16 %v4597
  %v4665 = vunpack.c.l.b16 %v4598
  %v4666 = vunpack.c.h.b16 %v4598
  %v4667 = vunpack.c.l.b16 %v4599
  %v4668 = vunpack.c.h.b16 %v4599
  %v4669 = vunpack.c.l.b16 %v4600
  %v4670 = vunpack.c.h.b16 %v4600
  %v4671 = vunpack.c.l.b16 %v4601
  %v4672 = vunpack.c.h.b16 %v4601
  %v4673 = vunpack.c.l.b16 %v4602
  %v4674 = vunpack.c.h.b16 %v4602
  %v4675 = vunpack.c.l.b16 %v4603
  %v4676 = vunpack.c.h.b16 %v4603
  %v4677 = vunpack.c.l.b16 %v4604
  %v4678 = vunpack.c.h.b16 %v4604
  %v4679 = vunpack.c.l.b16 %v4605
  %v4680 = vunpack.c.h.b16 %v4605
  %v4681 = vunpack.c.l.b16 %v4606
  %v4682 = vunpack.c.h.b16 %v4606
  %v4683 = vunpack.c.l.b16 %v4607
  %v4684 = vunpack.c.h.b16 %v4607
  %v4685 = vunpack.c.l.b16 %v4608
  %v4686 = vunpack.c.h.b16 %v4608
  %v4687 = vunpack.c.l.b16 %v4609
  %v4688 = vunpack.c.h.b16 %v4609
  %v4689 = vunpack.c.l.b16 %v4610
  %v4690 = vunpack.c.h.b16 %v4610
  %v4691 = vunpack.c.l.b16 %v4611
  %v4692 = vunpack.c.h.b16 %v4611
  %v4693 = vunpack.c.l.b16 %v4612
  %v4694 = vunpack.c.h.b16 %v4612
  %v4695 = vunpack.c.l.b16 %v4613
  %v4696 = vunpack.c.h.b16 %v4613
  %v4697 = vunpack.c.l.b16 %v4614
  %v4698 = vunpack.c.h.b16 %v4614
  %v4699 = vunpack.c.l.b16 %v4615
  %v4700 = vunpack.c.h.b16 %v4615
  %v4701 = vunpack.c.l.b16 %v4616
  %v4702 = vunpack.c.h.b16 %v4616
  %v4703 = vunpack.c.l.b16 %v4617
  %v4704 = vunpack.c.h.b16 %v4617
  %v4705 = vunpack.c.l.b16 %v4618
  %v4706 = vunpack.c.h.b16 %v4618
  %v4707 = vunpack.c.l.b16 %v4619
  %v4708 = vunpack.c.h.b16 %v4619
  %v4709 = vunpack.c.l.b16 %v4620
  %v4710 = vunpack.c.h.b16 %v4620
  %v4711 = vunpack.c.l.b16 %v4621
  %v4712 = vunpack.c.h.b16 %v4621
  %v4713 = vunpack.c.l.b16 %v4622
  %v4714 = vunpack.c.h.b16 %v4622
  %v4715 = vunpack.c.l.b16 %v4623
  %v4716 = vunpack.c.h.b16 %v4623
  %v4717 = vunpack.c.l.b16 %v4624
  %v4718 = vunpack.c.h.b16 %v4624
  %v4719 = vunpack.c.l.b16 %v4625
  %v4720 = vunpack.c.h.b16 %v4625
  %v4721 = vunpack.c.l.b16 %v4626
  %v4722 = vunpack.c.h.b16 %v4626
  %v4723 = vpack.c.b16 %v4661, %v4659
  %v4724 = vpack.c.b16 %v4662, %v4660
  %v4725 = vpack.c.b16 %v4665, %v4663
  %v4726 = vpack.c.b16 %v4666, %v4664
  %v4727 = vpack.c.b16 %v4669, %v4667
  %v4728 = vpack.c.b16 %v4670, %v4668
  %v4729 = vpack.c.b16 %v4673, %v4671
  %v4730 = vpack.c.b16 %v4674, %v4672
  %v4731 = vpack.c.b16 %v4677, %v4675
  %v4732 = vpack.c.b16 %v4678, %v4676
  %v4733 = vpack.c.b16 %v4681, %v4679
  %v4734 = vpack.c.b16 %v4682, %v4680
  %v4735 = vpack.c.b16 %v4685, %v4683
  %v4736 = vpack.c.b16 %v4686, %v4684
  %v4737 = vpack.c.b16 %v4689, %v4687
  %v4738 = vpack.c.b16 %v4690, %v4688
  %v4739 = vpack.c.b16 %v4693, %v4691
  %v4740 = vpack.c.b16 %v4694, %v4692
  %v4741 = vpack.c.b16 %v4697, %v4695
  %v4742 = vpack.c.b16 %v4698, %v4696
  %v4743 = vpack.c.b16 %v4701, %v4699
  %v4744 = vpack.c.b16 %v4702, %v4700
  %v4745 = vpack.c.b16 %v4705, %v4703
  %v4746 = vpack.c.b16 %v4706, %v4704
  %v4747 = vpack.c.b16 %v4709, %v4707
  %v4748 = vpack.c.b16 %v4710, %v4708
  %v4749 = vpack.c.b16 %v4713, %v4711
  %v4750 = vpack.c.b16 %v4714, %v4712
  %v4751 = vpack.c.b16 %v4717, %v4715
  %v4752 = vpack.c.b16 %v4718, %v4716
  %v4753 = vpack.c.b16 %v4721, %v4719
  %v4754 = vpack.c.b16 %v4722, %v4720
  %4787 = vmatprep.subr.bf16.mxu0 %v4724
  %4788 = vmatpush1.bf16.msra.mxu0 %v4723
  %4789 = vmatprep.subr.bf16.mxu0 %v4726
  %4790 = vmatpush1.bf16.msra.mxu0 %v4725
  %4791 = vmatprep.subr.bf16.mxu0 %v4728
  %4792 = vmatpush1.bf16.msra.mxu0 %v4727
  %4793 = vmatprep.subr.bf16.mxu0 %v4730
  %4794 = vmatpush1.bf16.msra.mxu0 %v4729
  %4795 = vmatprep.subr.bf16.mxu0 %v4732
  %4796 = vmatpush1.bf16.msra.mxu0 %v4731
  %4797 = vmatprep.subr.bf16.mxu0 %v4734
  %4798 = vmatpush1.bf16.msra.mxu0 %v4733
  %4799 = vmatprep.subr.bf16.mxu0 %v4736
  %4800 = vmatpush1.bf16.msra.mxu0 %v4735
  %4801 = vmatprep.subr.bf16.mxu0 %v4738
  %4802 = vmatpush1.bf16.msra.mxu0 %v4737
  %4803 = vmatprep.subr.bf16.mxu0 %v4740
  %4804 = vmatpush1.bf16.msra.mxu0 %v4739
  %4805 = vmatprep.subr.bf16.mxu0 %v4742
  %4806 = vmatpush1.bf16.msra.mxu0 %v4741
  %4807 = vmatprep.subr.bf16.mxu0 %v4744
  %4808 = vmatpush1.bf16.msra.mxu0 %v4743
  %4809 = vmatprep.subr.bf16.mxu0 %v4746
  %4810 = vmatpush1.bf16.msra.mxu0 %v4745
  %4811 = vmatprep.subr.bf16.mxu0 %v4748
  %4812 = vmatpush1.bf16.msra.mxu0 %v4747
  %4813 = vmatprep.subr.bf16.mxu0 %v4750
  %4814 = vmatpush1.bf16.msra.mxu0 %v4749
  %4815 = vmatprep.subr.bf16.mxu0 %v4752
  %4816 = vmatpush1.bf16.msra.mxu0 %v4751
  %4817 = vmatprep.subr.bf16.mxu0 %v4754
  %4818 = vmatpush1.bf16.msra.mxu0 %v4753
  %4819 = vmatprep.mubr.bf16.mxu0 %v4593
  %4820 = vmatmul.mubr.bf16.gmra.mrb[0].mxu0 %v4592
  %v4821 = vpop.f32.mrb[0].mxu0
  %v4822 = vadd.f32 0.0, %v4821
  %v4823 = vpop.f32.mrb[0].mxu0
  %v4824 = vadd.f32 0.0, %v4823
  %v4825 = vpop.f32.mrb[0].mxu0
  %v4826 = vpop.f32.mrb[0].mxu0
  %4827 = vdwg.mxu0
  %v4860 = vunpack.c.l.b16 %v4514
  %v4861 = vunpack.c.h.b16 %v4514
  %v4862 = vunpack.c.l.b16 %v4515
  %v4863 = vunpack.c.h.b16 %v4515
  %v4864 = vunpack.c.l.b16 %v4516
  %v4865 = vunpack.c.h.b16 %v4516
  %v4866 = vunpack.c.l.b16 %v4517
  %v4867 = vunpack.c.h.b16 %v4517
  %v4868 = vunpack.c.l.b16 %v4518
  %v4869 = vunpack.c.h.b16 %v4518
  %v4870 = vunpack.c.l.b16 %v4519
  %v4871 = vunpack.c.h.b16 %v4519
  %v4872 = vunpack.c.l.b16 %v4520
  %v4873 = vunpack.c.h.b16 %v4520
  %v4874 = vunpack.c.l.b16 %v4521
  %v4875 = vunpack.c.h.b16 %v4521
  %v4876 = vunpack.c.l.b16 %v4522
  %v4877 = vunpack.c.h.b16 %v4522
  %v4878 = vunpack.c.l.b16 %v4523
  %v4879 = vunpack.c.h.b16 %v4523
  %v4880 = vunpack.c.l.b16 %v4524
  %v4881 = vunpack.c.h.b16 %v4524
  %v4882 = vunpack.c.l.b16 %v4525
  %v4883 = vunpack.c.h.b16 %v4525
  %v4884 = vunpack.c.l.b16 %v4526
  %v4885 = vunpack.c.h.b16 %v4526
  %v4886 = vunpack.c.l.b16 %v4527
  %v4887 = vunpack.c.h.b16 %v4527
  %v4888 = vunpack.c.l.b16 %v4528
  %v4889 = vunpack.c.h.b16 %v4528
  %v4890 = vunpack.c.l.b16 %v4529
  %v4891 = vunpack.c.h.b16 %v4529
  %v4892 = vunpack.c.l.b16 %v4530
  %v4893 = vunpack.c.h.b16 %v4530
  %v4894 = vunpack.c.l.b16 %v4531
  %v4895 = vunpack.c.h.b16 %v4531
  %v4896 = vunpack.c.l.b16 %v4532
  %v4897 = vunpack.c.h.b16 %v4532
  %v4898 = vunpack.c.l.b16 %v4533
  %v4899 = vunpack.c.h.b16 %v4533
  %v4900 = vunpack.c.l.b16 %v4534
  %v4901 = vunpack.c.h.b16 %v4534
  %v4902 = vunpack.c.l.b16 %v4535
  %v4903 = vunpack.c.h.b16 %v4535
  %v4904 = vunpack.c.l.b16 %v4536
  %v4905 = vunpack.c.h.b16 %v4536
  %v4906 = vunpack.c.l.b16 %v4537
  %v4907 = vunpack.c.h.b16 %v4537
  %v4908 = vunpack.c.l.b16 %v4538
  %v4909 = vunpack.c.h.b16 %v4538
  %v4910 = vunpack.c.l.b16 %v4539
  %v4911 = vunpack.c.h.b16 %v4539
  %v4912 = vunpack.c.l.b16 %v4540
  %v4913 = vunpack.c.h.b16 %v4540
  %v4914 = vunpack.c.l.b16 %v4541
  %v4915 = vunpack.c.h.b16 %v4541
  %v4916 = vunpack.c.l.b16 %v4542
  %v4917 = vunpack.c.h.b16 %v4542
  %v4918 = vunpack.c.l.b16 %v4543
  %v4919 = vunpack.c.h.b16 %v4543
  %v4920 = vunpack.c.l.b16 %v4544
  %v4921 = vunpack.c.h.b16 %v4544
  %v4922 = vunpack.c.l.b16 %v4545
  %v4923 = vunpack.c.h.b16 %v4545
  %v4924 = vpack.c.b16 %v4862, %v4860
  %v4925 = vpack.c.b16 %v4863, %v4861
  %v4926 = vpack.c.b16 %v4866, %v4864
  %v4927 = vpack.c.b16 %v4867, %v4865
  %v4928 = vpack.c.b16 %v4870, %v4868
  %v4929 = vpack.c.b16 %v4871, %v4869
  %v4930 = vpack.c.b16 %v4874, %v4872
  %v4931 = vpack.c.b16 %v4875, %v4873
  %v4932 = vpack.c.b16 %v4878, %v4876
  %v4933 = vpack.c.b16 %v4879, %v4877
  %v4934 = vpack.c.b16 %v4882, %v4880
  %v4935 = vpack.c.b16 %v4883, %v4881
  %v4936 = vpack.c.b16 %v4886, %v4884
  %v4937 = vpack.c.b16 %v4887, %v4885
  %v4938 = vpack.c.b16 %v4890, %v4888
  %v4939 = vpack.c.b16 %v4891, %v4889
  %v4940 = vpack.c.b16 %v4894, %v4892
  %v4941 = vpack.c.b16 %v4895, %v4893
  %v4942 = vpack.c.b16 %v4898, %v4896
  %v4943 = vpack.c.b16 %v4899, %v4897
  %v4944 = vpack.c.b16 %v4902, %v4900
  %v4945 = vpack.c.b16 %v4903, %v4901
  %v4946 = vpack.c.b16 %v4906, %v4904
  %v4947 = vpack.c.b16 %v4907, %v4905
  %v4948 = vpack.c.b16 %v4910, %v4908
  %v4949 = vpack.c.b16 %v4911, %v4909
  %v4950 = vpack.c.b16 %v4914, %v4912
  %v4951 = vpack.c.b16 %v4915, %v4913
  %v4952 = vpack.c.b16 %v4918, %v4916
  %v4953 = vpack.c.b16 %v4919, %v4917
  %v4954 = vpack.c.b16 %v4922, %v4920
  %v4955 = vpack.c.b16 %v4923, %v4921
  %4988 = vmatprep.subr.bf16.mxu0 %v4925
  %4989 = vmatpush1.bf16.msra.mxu0 %v4924
  %4990 = vmatprep.subr.bf16.mxu0 %v4927
  %4991 = vmatpush1.bf16.msra.mxu0 %v4926
  %4992 = vmatprep.subr.bf16.mxu0 %v4929
  %4993 = vmatpush1.bf16.msra.mxu0 %v4928
  %4994 = vmatprep.subr.bf16.mxu0 %v4931
  %4995 = vmatpush1.bf16.msra.mxu0 %v4930
  %4996 = vmatprep.subr.bf16.mxu0 %v4933
  %4997 = vmatpush1.bf16.msra.mxu0 %v4932
  %4998 = vmatprep.subr.bf16.mxu0 %v4935
  %4999 = vmatpush1.bf16.msra.mxu0 %v4934
  %5000 = vmatprep.subr.bf16.mxu0 %v4937
  %5001 = vmatpush1.bf16.msra.mxu0 %v4936
  %5002 = vmatprep.subr.bf16.mxu0 %v4939
  %5003 = vmatpush1.bf16.msra.mxu0 %v4938
  %5004 = vmatprep.subr.bf16.mxu0 %v4941
  %5005 = vmatpush1.bf16.msra.mxu0 %v4940
  %5006 = vmatprep.subr.bf16.mxu0 %v4943
  %5007 = vmatpush1.bf16.msra.mxu0 %v4942
  %5008 = vmatprep.subr.bf16.mxu0 %v4945
  %5009 = vmatpush1.bf16.msra.mxu0 %v4944
  %5010 = vmatprep.subr.bf16.mxu0 %v4947
  %5011 = vmatpush1.bf16.msra.mxu0 %v4946
  %5012 = vmatprep.subr.bf16.mxu0 %v4949
  %5013 = vmatpush1.bf16.msra.mxu0 %v4948
  %5014 = vmatprep.subr.bf16.mxu0 %v4951
  %5015 = vmatpush1.bf16.msra.mxu0 %v4950
  %5016 = vmatprep.subr.bf16.mxu0 %v4953
  %5017 = vmatpush1.bf16.msra.mxu0 %v4952
  %5018 = vmatprep.subr.bf16.mxu0 %v4955
  %5019 = vmatpush1.bf16.msra.mxu0 %v4954
  %5020 = vmatprep.mubr.bf16.mxu0 %v4513
  %5021 = vmatmul.mubr.bf16.gmra.mrb[0].mxu0 %v4512
  %v5022 = vpop.f32.mrb[0].mxu0
  %v5023 = vadd.f32 %v4822, %v5022
  %v5024 = vpop.f32.mrb[0].mxu0
  %v5025 = vadd.f32 %v4824, %v5024
  %v5026 = vpop.f32.mrb[0].mxu0
  %v5027 = vpop.f32.mrb[0].mxu0
  %5028 = vdwg.mxu0
  %s5029 = scalar_lea.vmem %s13, 8
  %v5030 = vld [vmem:[%s5029] sm:$0xf]
  %v5032 = vsel %vm4460, %v5030, 0
  %5034 = vmatprep.subr.bf16.mxu0 %v4469
  %5035 = vmatpush1.bf16.msra.mxu0 %v4466
  %5036 = vmatprep.subr.bf16.mxu0 0
  %5037 = vmatpush1.bf16.msra.mxu0 0
  %5038 = vmatprep.subr.bf16.mxu0 0
  %5039 = vmatpush1.bf16.msra.mxu0 0
  %5040 = vmatprep.subr.bf16.mxu0 0
  %5041 = vmatpush1.bf16.msra.mxu0 0
  %5042 = vmatprep.subr.bf16.mxu0 0
  %5043 = vmatpush1.bf16.msra.mxu0 0
  %5044 = vmatprep.subr.bf16.mxu0 0
  %5045 = vmatpush1.bf16.msra.mxu0 0
  %5046 = vmatprep.subr.bf16.mxu0 0
  %5047 = vmatpush1.bf16.msra.mxu0 0
  %5048 = vmatprep.subr.bf16.mxu0 0
  %5049 = vmatpush1.bf16.msra.mxu0 0
  %5050 = vmatprep.subr.bf16.mxu0 0
  %5051 = vmatpush1.bf16.msra.mxu0 0
  %5052 = vmatprep.subr.bf16.mxu0 0
  %5053 = vmatpush1.bf16.msra.mxu0 0
  %5054 = vmatprep.subr.bf16.mxu0 0
  %5055 = vmatpush1.bf16.msra.mxu0 0
  %5056 = vmatprep.subr.bf16.mxu0 0
  %5057 = vmatpush1.bf16.msra.mxu0 0
  %5058 = vmatprep.subr.bf16.mxu0 0
  %5059 = vmatpush1.bf16.msra.mxu0 0
  %5060 = vmatprep.subr.bf16.mxu0 0
  %5061 = vmatpush1.bf16.msra.mxu0 0
  %5062 = vmatprep.subr.bf16.mxu0 0
  %5063 = vmatpush1.bf16.msra.mxu0 0
  %5064 = vmatprep.subr.bf16.mxu0 0
  %5065 = vmatpush1.bf16.msra.mxu0 0
  %5066 = vmatprep.mubr.bf16.mxu0 0
  %5067 = vmatmul.mubr.bf16.gmra.mrb[0].mxu0 %v5032
  %v5068 = vpop.f32.mrb[0].mxu0
  %v5069 = vadd.f32 0.0, %v5068
  %v5070 = vpop.f32.mrb[0].mxu0
  %v5071 = vadd.f32 0.0, %v5070
  %v5072 = vpop.f32.mrb[0].mxu0
  %v5073 = vpop.f32.mrb[0].mxu0
  %5074 = vdwg.mxu0
  %v5075 = vpack.c.bf16 %v5069, %v5069
  %v5076 = vpack.c.bf16 %v5071, %v5071
  %s5077 = scalar_lea.vmem %s14, 512
  %v5078 = vld [vmem:[%s5077] sm:$0xff]
  %v5079 = vld [vmem:[%s5077 + $0x8] sm:$0xff]
  %v5080 = vld [vmem:[%s5077 + $0x10] sm:$0xff]
  %v5081 = vld [vmem:[%s5077 + $0x18] sm:$0xff]
  %v5082 = vld [vmem:[%s5077 + $0x20] sm:$0xff]
  %v5083 = vld [vmem:[%s5077 + $0x28] sm:$0xff]
  %v5084 = vld [vmem:[%s5077 + $0x30] sm:$0xff]
  %v5085 = vld [vmem:[%s5077 + $0x38] sm:$0xff]
  %v5086 = vld [vmem:[%s5077 + $0x40] sm:$0xff]
  %v5087 = vld [vmem:[%s5077 + $0x48] sm:$0xff]
  %v5088 = vld [vmem:[%s5077 + $0x50] sm:$0xff]
  %v5089 = vld [vmem:[%s5077 + $0x58] sm:$0xff]
  %v5090 = vld [vmem:[%s5077 + $0x60] sm:$0xff]
  %v5091 = vld [vmem:[%s5077 + $0x68] sm:$0xff]
  %v5092 = vld [vmem:[%s5077 + $0x70] sm:$0xff]
  %v5093 = vld [vmem:[%s5077 + $0x78] sm:$0xff]
  %v5094 = vld [vmem:[%s5077 + $0x80] sm:$0xff]
  %v5095 = vld [vmem:[%s5077 + $0x88] sm:$0xff]
  %v5096 = vld [vmem:[%s5077 + $0x90] sm:$0xff]
  %v5097 = vld [vmem:[%s5077 + $0x98] sm:$0xff]
  %v5098 = vld [vmem:[%s5077 + $0xa0] sm:$0xff]
  %v5099 = vld [vmem:[%s5077 + $0xa8] sm:$0xff]
  %v5100 = vld [vmem:[%s5077 + $0xb0] sm:$0xff]
  %v5101 = vld [vmem:[%s5077 + $0xb8] sm:$0xff]
  %v5102 = vld [vmem:[%s5077 + $0xc0] sm:$0xff]
  %v5103 = vld [vmem:[%s5077 + $0xc8] sm:$0xff]
  %v5104 = vld [vmem:[%s5077 + $0xd0] sm:$0xff]
  %v5105 = vld [vmem:[%s5077 + $0xd8] sm:$0xff]
  %v5106 = vld [vmem:[%s5077 + $0xe0] sm:$0xff]
  %v5107 = vld [vmem:[%s5077 + $0xe8] sm:$0xff]
  %v5108 = vld [vmem:[%s5077 + $0xf0] sm:$0xff]
  %v5109 = vld [vmem:[%s5077 + $0xf8] sm:$0xff]
  %v5142 = vunpack.c.l.b16 %v5078
  %v5143 = vunpack.c.h.b16 %v5078
  %v5144 = vunpack.c.l.b16 %v5079
  %v5145 = vunpack.c.h.b16 %v5079
  %v5146 = vunpack.c.l.b16 %v5080
  %v5147 = vunpack.c.h.b16 %v5080
  %v5148 = vunpack.c.l.b16 %v5081
  %v5149 = vunpack.c.h.b16 %v5081
  %v5150 = vunpack.c.l.b16 %v5082
  %v5151 = vunpack.c.h.b16 %v5082
  %v5152 = vunpack.c.l.b16 %v5083
  %v5153 = vunpack.c.h.b16 %v5083
  %v5154 = vunpack.c.l.b16 %v5084
  %v5155 = vunpack.c.h.b16 %v5084
  %v5156 = vunpack.c.l.b16 %v5085
  %v5157 = vunpack.c.h.b16 %v5085
  %v5158 = vunpack.c.l.b16 %v5086
  %v5159 = vunpack.c.h.b16 %v5086
  %v5160 = vunpack.c.l.b16 %v5087
  %v5161 = vunpack.c.h.b16 %v5087
  %v5162 = vunpack.c.l.b16 %v5088
  %v5163 = vunpack.c.h.b16 %v5088
  %v5164 = vunpack.c.l.b16 %v5089
  %v5165 = vunpack.c.h.b16 %v5089
  %v5166 = vunpack.c.l.b16 %v5090
  %v5167 = vunpack.c.h.b16 %v5090
  %v5168 = vunpack.c.l.b16 %v5091
  %v5169 = vunpack.c.h.b16 %v5091
  %v5170 = vunpack.c.l.b16 %v5092
  %v5171 = vunpack.c.h.b16 %v5092
  %v5172 = vunpack.c.l.b16 %v5093
  %v5173 = vunpack.c.h.b16 %v5093
  %v5174 = vunpack.c.l.b16 %v5094
  %v5175 = vunpack.c.h.b16 %v5094
  %v5176 = vunpack.c.l.b16 %v5095
  %v5177 = vunpack.c.h.b16 %v5095
  %v5178 = vunpack.c.l.b16 %v5096
  %v5179 = vunpack.c.h.b16 %v5096
  %v5180 = vunpack.c.l.b16 %v5097
  %v5181 = vunpack.c.h.b16 %v5097
  %v5182 = vunpack.c.l.b16 %v5098
  %v5183 = vunpack.c.h.b16 %v5098
  %v5184 = vunpack.c.l.b16 %v5099
  %v5185 = vunpack.c.h.b16 %v5099
  %v5186 = vunpack.c.l.b16 %v5100
  %v5187 = vunpack.c.h.b16 %v5100
  %v5188 = vunpack.c.l.b16 %v5101
  %v5189 = vunpack.c.h.b16 %v5101
  %v5190 = vunpack.c.l.b16 %v5102
  %v5191 = vunpack.c.h.b16 %v5102
  %v5192 = vunpack.c.l.b16 %v5103
  %v5193 = vunpack.c.h.b16 %v5103
  %v5194 = vunpack.c.l.b16 %v5104
  %v5195 = vunpack.c.h.b16 %v5104
  %v5196 = vunpack.c.l.b16 %v5105
  %v5197 = vunpack.c.h.b16 %v5105
  %v5198 = vunpack.c.l.b16 %v5106
  %v5199 = vunpack.c.h.b16 %v5106
  %v5200 = vunpack.c.l.b16 %v5107
  %v5201 = vunpack.c.h.b16 %v5107
  %v5202 = vunpack.c.l.b16 %v5108
  %v5203 = vunpack.c.h.b16 %v5108
  %v5204 = vunpack.c.l.b16 %v5109
  %v5205 = vunpack.c.h.b16 %v5109
  %v5206 = vpack.c.b16 %v5144, %v5142
  %v5207 = vpack.c.b16 %v5145, %v5143
  %v5208 = vpack.c.b16 %v5148, %v5146
  %v5209 = vpack.c.b16 %v5149, %v5147
  %v5210 = vpack.c.b16 %v5152, %v5150
  %v5211 = vpack.c.b16 %v5153, %v5151
  %v5212 = vpack.c.b16 %v5156, %v5154
  %v5213 = vpack.c.b16 %v5157, %v5155
  %v5214 = vpack.c.b16 %v5160, %v5158
  %v5215 = vpack.c.b16 %v5161, %v5159
  %v5216 = vpack.c.b16 %v5164, %v5162
  %v5217 = vpack.c.b16 %v5165, %v5163
  %v5218 = vpack.c.b16 %v5168, %v5166
  %v5219 = vpack.c.b16 %v5169, %v5167
  %v5220 = vpack.c.b16 %v5172, %v5170
  %v5221 = vpack.c.b16 %v5173, %v5171
  %v5222 = vpack.c.b16 %v5176, %v5174
  %v5223 = vpack.c.b16 %v5177, %v5175
  %v5224 = vpack.c.b16 %v5180, %v5178
  %v5225 = vpack.c.b16 %v5181, %v5179
  %v5226 = vpack.c.b16 %v5184, %v5182
  %v5227 = vpack.c.b16 %v5185, %v5183
  %v5228 = vpack.c.b16 %v5188, %v5186
  %v5229 = vpack.c.b16 %v5189, %v5187
  %v5230 = vpack.c.b16 %v5192, %v5190
  %v5231 = vpack.c.b16 %v5193, %v5191
  %v5232 = vpack.c.b16 %v5196, %v5194
  %v5233 = vpack.c.b16 %v5197, %v5195
  %v5234 = vpack.c.b16 %v5200, %v5198
  %v5235 = vpack.c.b16 %v5201, %v5199
  %v5236 = vpack.c.b16 %v5204, %v5202
  %v5237 = vpack.c.b16 %v5205, %v5203
  %5270 = vmatprep.subr.bf16.mxu0 %v5207
  %5271 = vmatpush1.bf16.msra.mxu0 %v5206
  %5272 = vmatprep.subr.bf16.mxu0 %v5209
  %5273 = vmatpush1.bf16.msra.mxu0 %v5208
  %5274 = vmatprep.subr.bf16.mxu0 %v5211
  %5275 = vmatpush1.bf16.msra.mxu0 %v5210
  %5276 = vmatprep.subr.bf16.mxu0 %v5213
  %5277 = vmatpush1.bf16.msra.mxu0 %v5212
  %5278 = vmatprep.subr.bf16.mxu0 %v5215
  %5279 = vmatpush1.bf16.msra.mxu0 %v5214
  %5280 = vmatprep.subr.bf16.mxu0 %v5217
  %5281 = vmatpush1.bf16.msra.mxu0 %v5216
  %5282 = vmatprep.subr.bf16.mxu0 %v5219
  %5283 = vmatpush1.bf16.msra.mxu0 %v5218
  %5284 = vmatprep.subr.bf16.mxu0 %v5221
  %5285 = vmatpush1.bf16.msra.mxu0 %v5220
  %5286 = vmatprep.subr.bf16.mxu0 %v5223
  %5287 = vmatpush1.bf16.msra.mxu0 %v5222
  %5288 = vmatprep.subr.bf16.mxu0 %v5225
  %5289 = vmatpush1.bf16.msra.mxu0 %v5224
  %5290 = vmatprep.subr.bf16.mxu0 %v5227
  %5291 = vmatpush1.bf16.msra.mxu0 %v5226
  %5292 = vmatprep.subr.bf16.mxu0 %v5229
  %5293 = vmatpush1.bf16.msra.mxu0 %v5228
  %5294 = vmatprep.subr.bf16.mxu0 %v5231
  %5295 = vmatpush1.bf16.msra.mxu0 %v5230
  %5296 = vmatprep.subr.bf16.mxu0 %v5233
  %5297 = vmatpush1.bf16.msra.mxu0 %v5232
  %5298 = vmatprep.subr.bf16.mxu0 %v5235
  %5299 = vmatpush1.bf16.msra.mxu0 %v5234
  %5300 = vmatprep.subr.bf16.mxu0 %v5237
  %5301 = vmatpush1.bf16.msra.mxu0 %v5236
  %5302 = vmatprep.mubr.bf16.mxu0 %v5076
  %5303 = vmatmul.mubr.bf16.gmra.mrb[0].mxu0 %v5075
  %v5304 = vpop.f32.mrb[0].mxu0
  %v5305 = vadd.f32 0.0, %v5304
  %v5306 = vpop.f32.mrb[0].mxu0
  %v5307 = vadd.f32 0.0, %v5306
  %v5308 = vpop.f32.mrb[0].mxu0
  %v5309 = vpop.f32.mrb[0].mxu0
  %5310 = vdwg.mxu0
  %v5311 = vadd.f32 %v5023, %v5305
  %v5312 = vadd.f32 %v5025, %v5307
  %s5313 = scalar_lea.vmem %s13, 12
  %v5314 = vld [vmem:[%s5313] sm:$0xf]
  %v5316 = vsel %vm4460, %v5314, 0
  %5318 = vmatprep.subr.bf16.mxu0 %v4469
  %5319 = vmatpush1.bf16.msra.mxu0 %v4466
  %5320 = vmatprep.subr.bf16.mxu0 0
  %5321 = vmatpush1.bf16.msra.mxu0 0
  %5322 = vmatprep.subr.bf16.mxu0 0
  %5323 = vmatpush1.bf16.msra.mxu0 0
  %5324 = vmatprep.subr.bf16.mxu0 0
  %5325 = vmatpush1.bf16.msra.mxu0 0
  %5326 = vmatprep.subr.bf16.mxu0 0
  %5327 = vmatpush1.bf16.msra.mxu0 0
  %5328 = vmatprep.subr.bf16.mxu0 0
  %5329 = vmatpush1.bf16.msra.mxu0 0
  %5330 = vmatprep.subr.bf16.mxu0 0
  %5331 = vmatpush1.bf16.msra.mxu0 0
  %5332 = vmatprep.subr.bf16.mxu0 0
  %5333 = vmatpush1.bf16.msra.mxu0 0
  %5334 = vmatprep.subr.bf16.mxu0 0
  %5335 = vmatpush1.bf16.msra.mxu0 0
  %5336 = vmatprep.subr.bf16.mxu0 0
  %5337 = vmatpush1.bf16.msra.mxu0 0
  %5338 = vmatprep.subr.bf16.mxu0 0
  %5339 = vmatpush1.bf16.msra.mxu0 0
  %5340 = vmatprep.subr.bf16.mxu0 0
  %5341 = vmatpush1.bf16.msra.mxu0 0
  %5342 = vmatprep.subr.bf16.mxu0 0
  %5343 = vmatpush1.bf16.msra.mxu0 0
  %5344 = vmatprep.subr.bf16.mxu0 0
  %5345 = vmatpush1.bf16.msra.mxu0 0
  %5346 = vmatprep.subr.bf16.mxu0 0
  %5347 = vmatpush1.bf16.msra.mxu0 0
  %5348 = vmatprep.subr.bf16.mxu0 0
  %5349 = vmatpush1.bf16.msra.mxu0 0
  %5350 = vmatprep.mubr.bf16.mxu0 0
  %5351 = vmatmul.mubr.bf16.gmra.mrb[0].mxu0 %v5316
  %v5352 = vpop.f32.mrb[0].mxu0
  %v5353 = vadd.f32 0.0, %v5352
  %v5354 = vpop.f32.mrb[0].mxu0
  %v5355 = vadd.f32 0.0, %v5354
  %v5356 = vpop.f32.mrb[0].mxu0
  %v5357 = vpop.f32.mrb[0].mxu0
  %5358 = vdwg.mxu0
  %v5359 = vpack.c.bf16 %v5353, %v5353
  %v5360 = vpack.c.bf16 %v5355, %v5355
  %s5361 = scalar_lea.vmem %s14, 768
  %v5362 = vld [vmem:[%s5361] sm:$0xff]
  %v5363 = vld [vmem:[%s5361 + $0x8] sm:$0xff]
  %v5364 = vld [vmem:[%s5361 + $0x10] sm:$0xff]
  %v5365 = vld [vmem:[%s5361 + $0x18] sm:$0xff]
  %v5366 = vld [vmem:[%s5361 + $0x20] sm:$0xff]
  %v5367 = vld [vmem:[%s5361 + $0x28] sm:$0xff]
  %v5368 = vld [vmem:[%s5361 + $0x30] sm:$0xff]
  %v5369 = vld [vmem:[%s5361 + $0x38] sm:$0xff]
  %v5370 = vld [vmem:[%s5361 + $0x40] sm:$0xff]
  %v5371 = vld [vmem:[%s5361 + $0x48] sm:$0xff]
  %v5372 = vld [vmem:[%s5361 + $0x50] sm:$0xff]
  %v5373 = vld [vmem:[%s5361 + $0x58] sm:$0xff]
  %v5374 = vld [vmem:[%s5361 + $0x60] sm:$0xff]
  %v5375 = vld [vmem:[%s5361 + $0x68] sm:$0xff]
  %v5376 = vld [vmem:[%s5361 + $0x70] sm:$0xff]
  %v5377 = vld [vmem:[%s5361 + $0x78] sm:$0xff]
  %v5378 = vld [vmem:[%s5361 + $0x80] sm:$0xff]
  %v5379 = vld [vmem:[%s5361 + $0x88] sm:$0xff]
  %v5380 = vld [vmem:[%s5361 + $0x90] sm:$0xff]
  %v5381 = vld [vmem:[%s5361 + $0x98] sm:$0xff]
  %v5382 = vld [vmem:[%s5361 + $0xa0] sm:$0xff]
  %v5383 = vld [vmem:[%s5361 + $0xa8] sm:$0xff]
  %v5384 = vld [vmem:[%s5361 + $0xb0] sm:$0xff]
  %v5385 = vld [vmem:[%s5361 + $0xb8] sm:$0xff]
  %v5386 = vld [vmem:[%s5361 + $0xc0] sm:$0xff]
  %v5387 = vld [vmem:[%s5361 + $0xc8] sm:$0xff]
  %v5388 = vld [vmem:[%s5361 + $0xd0] sm:$0xff]
  %v5389 = vld [vmem:[%s5361 + $0xd8] sm:$0xff]
  %v5390 = vld [vmem:[%s5361 + $0xe0] sm:$0xff]
  %v5391 = vld [vmem:[%s5361 + $0xe8] sm:$0xff]
  %v5392 = vld [vmem:[%s5361 + $0xf0] sm:$0xff]
  %v5393 = vld [vmem:[%s5361 + $0xf8] sm:$0xff]
  %v5426 = vunpack.c.l.b16 %v5362
  %v5427 = vunpack.c.h.b16 %v5362
  %v5428 = vunpack.c.l.b16 %v5363
  %v5429 = vunpack.c.h.b16 %v5363
  %v5430 = vunpack.c.l.b16 %v5364
  %v5431 = vunpack.c.h.b16 %v5364
  %v5432 = vunpack.c.l.b16 %v5365
  %v5433 = vunpack.c.h.b16 %v5365
  %v5434 = vunpack.c.l.b16 %v5366
  %v5435 = vunpack.c.h.b16 %v5366
  %v5436 = vunpack.c.l.b16 %v5367
  %v5437 = vunpack.c.h.b16 %v5367
  %v5438 = vunpack.c.l.b16 %v5368
  %v5439 = vunpack.c.h.b16 %v5368
  %v5440 = vunpack.c.l.b16 %v5369
  %v5441 = vunpack.c.h.b16 %v5369
  %v5442 = vunpack.c.l.b16 %v5370
  %v5443 = vunpack.c.h.b16 %v5370
  %v5444 = vunpack.c.l.b16 %v5371
  %v5445 = vunpack.c.h.b16 %v5371
  %v5446 = vunpack.c.l.b16 %v5372
  %v5447 = vunpack.c.h.b16 %v5372
  %v5448 = vunpack.c.l.b16 %v5373
  %v5449 = vunpack.c.h.b16 %v5373
  %v5450 = vunpack.c.l.b16 %v5374
  %v5451 = vunpack.c.h.b16 %v5374
  %v5452 = vunpack.c.l.b16 %v5375
  %v5453 = vunpack.c.h.b16 %v5375
  %v5454 = vunpack.c.l.b16 %v5376
  %v5455 = vunpack.c.h.b16 %v5376
  %v5456 = vunpack.c.l.b16 %v5377
  %v5457 = vunpack.c.h.b16 %v5377
  %v5458 = vunpack.c.l.b16 %v5378
  %v5459 = vunpack.c.h.b16 %v5378
  %v5460 = vunpack.c.l.b16 %v5379
  %v5461 = vunpack.c.h.b16 %v5379
  %v5462 = vunpack.c.l.b16 %v5380
  %v5463 = vunpack.c.h.b16 %v5380
  %v5464 = vunpack.c.l.b16 %v5381
  %v5465 = vunpack.c.h.b16 %v5381
  %v5466 = vunpack.c.l.b16 %v5382
  %v5467 = vunpack.c.h.b16 %v5382
  %v5468 = vunpack.c.l.b16 %v5383
  %v5469 = vunpack.c.h.b16 %v5383
  %v5470 = vunpack.c.l.b16 %v5384
  %v5471 = vunpack.c.h.b16 %v5384
  %v5472 = vunpack.c.l.b16 %v5385
  %v5473 = vunpack.c.h.b16 %v5385
  %v5474 = vunpack.c.l.b16 %v5386
  %v5475 = vunpack.c.h.b16 %v5386
  %v5476 = vunpack.c.l.b16 %v5387
  %v5477 = vunpack.c.h.b16 %v5387
  %v5478 = vunpack.c.l.b16 %v5388
  %v5479 = vunpack.c.h.b16 %v5388
  %v5480 = vunpack.c.l.b16 %v5389
  %v5481 = vunpack.c.h.b16 %v5389
  %v5482 = vunpack.c.l.b16 %v5390
  %v5483 = vunpack.c.h.b16 %v5390
  %v5484 = vunpack.c.l.b16 %v5391
  %v5485 = vunpack.c.h.b16 %v5391
  %v5486 = vunpack.c.l.b16 %v5392
  %v5487 = vunpack.c.h.b16 %v5392
  %v5488 = vunpack.c.l.b16 %v5393
  %v5489 = vunpack.c.h.b16 %v5393
  %v5490 = vpack.c.b16 %v5428, %v5426
  %v5491 = vpack.c.b16 %v5429, %v5427
  %v5492 = vpack.c.b16 %v5432, %v5430
  %v5493 = vpack.c.b16 %v5433, %v5431
  %v5494 = vpack.c.b16 %v5436, %v5434
  %v5495 = vpack.c.b16 %v5437, %v5435
  %v5496 = vpack.c.b16 %v5440, %v5438
  %v5497 = vpack.c.b16 %v5441, %v5439
  %v5498 = vpack.c.b16 %v5444, %v5442
  %v5499 = vpack.c.b16 %v5445, %v5443
  %v5500 = vpack.c.b16 %v5448, %v5446
  %v5501 = vpack.c.b16 %v5449, %v5447
  %v5502 = vpack.c.b16 %v5452, %v5450
  %v5503 = vpack.c.b16 %v5453, %v5451
  %v5504 = vpack.c.b16 %v5456, %v5454
  %v5505 = vpack.c.b16 %v5457, %v5455
  %v5506 = vpack.c.b16 %v5460, %v5458
  %v5507 = vpack.c.b16 %v5461, %v5459
  %v5508 = vpack.c.b16 %v5464, %v5462
  %v5509 = vpack.c.b16 %v5465, %v5463
  %v5510 = vpack.c.b16 %v5468, %v5466
  %v5511 = vpack.c.b16 %v5469, %v5467
  %v5512 = vpack.c.b16 %v5472, %v5470
  %v5513 = vpack.c.b16 %v5473, %v5471
  %v5514 = vpack.c.b16 %v5476, %v5474
  %v5515 = vpack.c.b16 %v5477, %v5475
  %v5516 = vpack.c.b16 %v5480, %v5478
  %v5517 = vpack.c.b16 %v5481, %v5479
  %v5518 = vpack.c.b16 %v5484, %v5482
  %v5519 = vpack.c.b16 %v5485, %v5483
  %v5520 = vpack.c.b16 %v5488, %v5486
  %v5521 = vpack.c.b16 %v5489, %v5487
  %5554 = vmatprep.subr.bf16.mxu0 %v5491
  %5555 = vmatpush1.bf16.msra.mxu0 %v5490
  %5556 = vmatprep.subr.bf16.mxu0 %v5493
  %5557 = vmatpush1.bf16.msra.mxu0 %v5492
  %5558 = vmatprep.subr.bf16.mxu0 %v5495
  %5559 = vmatpush1.bf16.msra.mxu0 %v5494
  %5560 = vmatprep.subr.bf16.mxu0 %v5497
  %5561 = vmatpush1.bf16.msra.mxu0 %v5496
  %5562 = vmatprep.subr.bf16.mxu0 %v5499
  %5563 = vmatpush1.bf16.msra.mxu0 %v5498
  %5564 = vmatprep.subr.bf16.mxu0 %v5501
  %5565 = vmatpush1.bf16.msra.mxu0 %v5500
  %5566 = vmatprep.subr.bf16.mxu0 %v5503
  %5567 = vmatpush1.bf16.msra.mxu0 %v5502
  %5568 = vmatprep.subr.bf16.mxu0 %v5505
  %5569 = vmatpush1.bf16.msra.mxu0 %v5504
  %5570 = vmatprep.subr.bf16.mxu0 %v5507
  %5571 = vmatpush1.bf16.msra.mxu0 %v5506
  %5572 = vmatprep.subr.bf16.mxu0 %v5509
  %5573 = vmatpush1.bf16.msra.mxu0 %v5508
  %5574 = vmatprep.subr.bf16.mxu0 %v5511
  %5575 = vmatpush1.bf16.msra.mxu0 %v5510
  %5576 = vmatprep.subr.bf16.mxu0 %v5513
  %5577 = vmatpush1.bf16.msra.mxu0 %v5512
  %5578 = vmatprep.subr.bf16.mxu0 %v5515
  %5579 = vmatpush1.bf16.msra.mxu0 %v5514
  %5580 = vmatprep.subr.bf16.mxu0 %v5517
  %5581 = vmatpush1.bf16.msra.mxu0 %v5516
  %5582 = vmatprep.subr.bf16.mxu0 %v5519
  %5583 = vmatpush1.bf16.msra.mxu0 %v5518
  %5584 = vmatprep.subr.bf16.mxu0 %v5521
  %5585 = vmatpush1.bf16.msra.mxu0 %v5520
  %5586 = vmatprep.mubr.bf16.mxu0 %v5360
  %5587 = vmatmul.mubr.bf16.gmra.mrb[0].mxu0 %v5359
  %v5588 = vpop.f32.mrb[0].mxu0
  %v5589 = vadd.f32 0.0, %v5588
  %v5590 = vpop.f32.mrb[0].mxu0
  %v5591 = vadd.f32 0.0, %v5590
  %v5592 = vpop.f32.mrb[0].mxu0
  %v5593 = vpop.f32.mrb[0].mxu0
  %5594 = vdwg.mxu0
  %v5595 = vadd.f32 %v5311, %v5589
  %v5596 = vadd.f32 %v5312, %v5591
  %v5597 = vld [vmem:[%s15] sm:$0x3]
  %v5599 = vlaneseq
  %v5600 = vshrl.u32 %v5599, 7
  %v5601 = vsub.s32 0, %v5600
  %v5602 = vrot.slane %v5597, %v5601
  %v5603 = vlaneseq
  %v5604 = vshrl.u32 %v5603, 7
  %v5605 = vsub.s32 1, %v5604
  %v5606 = vrot.slane %v5597, %v5605
  %v5609 = vadd.f32 %v5595, %v5602
  %v5610 = vadd.f32 %v5596, %v5606
  %v5611 = vmax.f32 %v5609, 0.0
  %v5612 = vmax.f32 %v5610, 0.0
  %v5613 = vpack.c.bf16 %v5611, %v5611
  %v5614 = vpack.c.bf16 %v5612, %v5612
  %v5615 = vld [vmem:[%s16] sm:$0xf]
  %v5616 = vld [vmem:[%s16 + $0x4] sm:$0xf]
  %v5619 = vunpack.c.l.b16 %v5615
  %v5620 = vunpack.c.l.b16 %v5616
  %v5621 = vpack.c.b16 %v5620, %v5619
  %v5623 = vsel %vm3304, %v5621, 0
  %v5626 = vsel %vm3308, %v5613, 0
  %v5629 = vsel %vm3308, %v5614, 0
  %5631 = vmatprep.subr.bf16.mxu0 %v5629
  %5632 = vmatpush1.bf16.msra.mxu0 %v5626
  %5633 = vmatprep.subr.bf16.mxu0 0
  %5634 = vmatpush1.bf16.msra.mxu0 0
  %5635 = vmatprep.subr.bf16.mxu0 0
  %5636 = vmatpush1.bf16.msra.mxu0 0
  %5637 = vmatprep.subr.bf16.mxu0 0
  %5638 = vmatpush1.bf16.msra.mxu0 0
  %5639 = vmatprep.subr.bf16.mxu0 0
  %5640 = vmatpush1.bf16.msra.mxu0 0
  %5641 = vmatprep.subr.bf16.mxu0 0
  %5642 = vmatpush1.bf16.msra.mxu0 0
  %5643 = vmatprep.subr.bf16.mxu0 0
  %5644 = vmatpush1.bf16.msra.mxu0 0
  %5645 = vmatprep.subr.bf16.mxu0 0
  %5646 = vmatpush1.bf16.msra.mxu0 0
  %5647 = vmatprep.subr.bf16.mxu0 0
  %5648 = vmatpush1.bf16.msra.mxu0 0
  %5649 = vmatprep.subr.bf16.mxu0 0
  %5650 = vmatpush1.bf16.msra.mxu0 0
  %5651 = vmatprep.subr.bf16.mxu0 0
  %5652 = vmatpush1.bf16.msra.mxu0 0
  %5653 = vmatprep.subr.bf16.mxu0 0
  %5654 = vmatpush1.bf16.msra.mxu0 0
  %5655 = vmatprep.subr.bf16.mxu0 0
  %5656 = vmatpush1.bf16.msra.mxu0 0
  %5657 = vmatprep.subr.bf16.mxu0 0
  %5658 = vmatpush1.bf16.msra.mxu0 0
  %5659 = vmatprep.subr.bf16.mxu0 0
  %5660 = vmatpush1.bf16.msra.mxu0 0
  %5661 = vmatprep.subr.bf16.mxu0 0
  %5662 = vmatpush1.bf16.msra.mxu0 0
  %5663 = vmatprep.mubr.bf16.mxu0 0
  %5664 = vmatmul.mubr.bf16.gmra.mrb[0].mxu0 %v5623
  %v5665 = vpop.f32.mrb[0].mxu0
  %v5666 = vadd.f32 0.0, %v5665
  %v5667 = vpop.f32.mrb[0].mxu0
  %v5668 = vadd.f32 0.0, %v5667
  %v5669 = vpop.f32.mrb[0].mxu0
  %v5670 = vadd.f32 0.0, %v5669
  %v5671 = vpop.f32.mrb[0].mxu0
  %v5672 = vadd.f32 0.0, %v5671
  %5673 = vdwg.mxu0
  %v5674 = vpack.c.bf16 %v5670, %v5666
  %v5675 = vpack.c.bf16 %v5672, %v5668
  %v5676 = vld [vmem:[%s17] sm:$0xff]
  %v5677 = vld [vmem:[%s17 + $0x8] sm:$0xff]
  %v5678 = vld [vmem:[%s17 + $0x10] sm:$0xff]
  %v5679 = vld [vmem:[%s17 + $0x18] sm:$0xff]
  %v5680 = vld [vmem:[%s17 + $0x20] sm:$0xff]
  %v5681 = vld [vmem:[%s17 + $0x28] sm:$0xff]
  %v5682 = vld [vmem:[%s17 + $0x30] sm:$0xff]
  %v5683 = vld [vmem:[%s17 + $0x38] sm:$0xff]
  %v5684 = vld [vmem:[%s17 + $0x40] sm:$0xff]
  %v5685 = vld [vmem:[%s17 + $0x48] sm:$0xff]
  %v5686 = vld [vmem:[%s17 + $0x50] sm:$0xff]
  %v5687 = vld [vmem:[%s17 + $0x58] sm:$0xff]
  %v5688 = vld [vmem:[%s17 + $0x60] sm:$0xff]
  %v5689 = vld [vmem:[%s17 + $0x68] sm:$0xff]
  %v5690 = vld [vmem:[%s17 + $0x70] sm:$0xff]
  %v5691 = vld [vmem:[%s17 + $0x78] sm:$0xff]
  %v5692 = vld [vmem:[%s17 + $0x80] sm:$0xff]
  %v5693 = vld [vmem:[%s17 + $0x88] sm:$0xff]
  %v5694 = vld [vmem:[%s17 + $0x90] sm:$0xff]
  %v5695 = vld [vmem:[%s17 + $0x98] sm:$0xff]
  %v5696 = vld [vmem:[%s17 + $0xa0] sm:$0xff]
  %v5697 = vld [vmem:[%s17 + $0xa8] sm:$0xff]
  %v5698 = vld [vmem:[%s17 + $0xb0] sm:$0xff]
  %v5699 = vld [vmem:[%s17 + $0xb8] sm:$0xff]
  %v5700 = vld [vmem:[%s17 + $0xc0] sm:$0xff]
  %v5701 = vld [vmem:[%s17 + $0xc8] sm:$0xff]
  %v5702 = vld [vmem:[%s17 + $0xd0] sm:$0xff]
  %v5703 = vld [vmem:[%s17 + $0xd8] sm:$0xff]
  %v5704 = vld [vmem:[%s17 + $0xe0] sm:$0xff]
  %v5705 = vld [vmem:[%s17 + $0xe8] sm:$0xff]
  %v5706 = vld [vmem:[%s17 + $0xf0] sm:$0xff]
  %v5707 = vld [vmem:[%s17 + $0xf8] sm:$0xff]
  %s5708 = scalar_lea.vmem %s16, 8
  %v5709 = vld [vmem:[%s5708] sm:$0xf]
  %v5710 = vld [vmem:[%s5708 + $0x4] sm:$0xf]
  %v5713 = vunpack.c.l.b16 %v5709
  %v5714 = vunpack.c.l.b16 %v5710
  %v5715 = vpack.c.b16 %v5714, %v5713
  %v5717 = vsel %vm3304, %v5715, 0
  %5719 = vmatprep.subr.bf16.mxu0 %v5629
  %5720 = vmatpush1.bf16.msra.mxu0 %v5626
  %5721 = vmatprep.subr.bf16.mxu0 0
  %5722 = vmatpush1.bf16.msra.mxu0 0
  %5723 = vmatprep.subr.bf16.mxu0 0
  %5724 = vmatpush1.bf16.msra.mxu0 0
  %5725 = vmatprep.subr.bf16.mxu0 0
  %5726 = vmatpush1.bf16.msra.mxu0 0
  %5727 = vmatprep.subr.bf16.mxu0 0
  %5728 = vmatpush1.bf16.msra.mxu0 0
  %5729 = vmatprep.subr.bf16.mxu0 0
  %5730 = vmatpush1.bf16.msra.mxu0 0
  %5731 = vmatprep.subr.bf16.mxu0 0
  %5732 = vmatpush1.bf16.msra.mxu0 0
  %5733 = vmatprep.subr.bf16.mxu0 0
  %5734 = vmatpush1.bf16.msra.mxu0 0
  %5735 = vmatprep.subr.bf16.mxu0 0
  %5736 = vmatpush1.bf16.msra.mxu0 0
  %5737 = vmatprep.subr.bf16.mxu0 0
  %5738 = vmatpush1.bf16.msra.mxu0 0
  %5739 = vmatprep.subr.bf16.mxu0 0
  %5740 = vmatpush1.bf16.msra.mxu0 0
  %5741 = vmatprep.subr.bf16.mxu0 0
  %5742 = vmatpush1.bf16.msra.mxu0 0
  %5743 = vmatprep.subr.bf16.mxu0 0
  %5744 = vmatpush1.bf16.msra.mxu0 0
  %5745 = vmatprep.subr.bf16.mxu0 0
  %5746 = vmatpush1.bf16.msra.mxu0 0
  %5747 = vmatprep.subr.bf16.mxu0 0
  %5748 = vmatpush1.bf16.msra.mxu0 0
  %5749 = vmatprep.subr.bf16.mxu0 0
  %5750 = vmatpush1.bf16.msra.mxu0 0
  %5751 = vmatprep.mubr.bf16.mxu0 0
  %5752 = vmatmul.mubr.bf16.gmra.mrb[0].mxu0 %v5717
  %v5753 = vpop.f32.mrb[0].mxu0
  %v5754 = vadd.f32 0.0, %v5753
  %v5755 = vpop.f32.mrb[0].mxu0
  %v5756 = vadd.f32 0.0, %v5755
  %v5757 = vpop.f32.mrb[0].mxu0
  %v5758 = vadd.f32 0.0, %v5757
  %v5759 = vpop.f32.mrb[0].mxu0
  %v5760 = vadd.f32 0.0, %v5759
  %5761 = vdwg.mxu0
  %v5762 = vpack.c.bf16 %v5758, %v5754
  %v5763 = vpack.c.bf16 %v5760, %v5756
  %s5764 = scalar_lea.vmem %s17, 256
  %v5765 = vld [vmem:[%s5764] sm:$0xff]
  %v5766 = vld [vmem:[%s5764 + $0x8] sm:$0xff]
  %v5767 = vld [vmem:[%s5764 + $0x10] sm:$0xff]
  %v5768 = vld [vmem:[%s5764 + $0x18] sm:$0xff]
  %v5769 = vld [vmem:[%s5764 + $0x20] sm:$0xff]
  %v5770 = vld [vmem:[%s5764 + $0x28] sm:$0xff]
  %v5771 = vld [vmem:[%s5764 + $0x30] sm:$0xff]
  %v5772 = vld [vmem:[%s5764 + $0x38] sm:$0xff]
  %v5773 = vld [vmem:[%s5764 + $0x40] sm:$0xff]
  %v5774 = vld [vmem:[%s5764 + $0x48] sm:$0xff]
  %v5775 = vld [vmem:[%s5764 + $0x50] sm:$0xff]
  %v5776 = vld [vmem:[%s5764 + $0x58] sm:$0xff]
  %v5777 = vld [vmem:[%s5764 + $0x60] sm:$0xff]
  %v5778 = vld [vmem:[%s5764 + $0x68] sm:$0xff]
  %v5779 = vld [vmem:[%s5764 + $0x70] sm:$0xff]
  %v5780 = vld [vmem:[%s5764 + $0x78] sm:$0xff]
  %v5781 = vld [vmem:[%s5764 + $0x80] sm:$0xff]
  %v5782 = vld [vmem:[%s5764 + $0x88] sm:$0xff]
  %v5783 = vld [vmem:[%s5764 + $0x90] sm:$0xff]
  %v5784 = vld [vmem:[%s5764 + $0x98] sm:$0xff]
  %v5785 = vld [vmem:[%s5764 + $0xa0] sm:$0xff]
  %v5786 = vld [vmem:[%s5764 + $0xa8] sm:$0xff]
  %v5787 = vld [vmem:[%s5764 + $0xb0] sm:$0xff]
  %v5788 = vld [vmem:[%s5764 + $0xb8] sm:$0xff]
  %v5789 = vld [vmem:[%s5764 + $0xc0] sm:$0xff]
  %v5790 = vld [vmem:[%s5764 + $0xc8] sm:$0xff]
  %v5791 = vld [vmem:[%s5764 + $0xd0] sm:$0xff]
  %v5792 = vld [vmem:[%s5764 + $0xd8] sm:$0xff]
  %v5793 = vld [vmem:[%s5764 + $0xe0] sm:$0xff]
  %v5794 = vld [vmem:[%s5764 + $0xe8] sm:$0xff]
  %v5795 = vld [vmem:[%s5764 + $0xf0] sm:$0xff]
  %v5796 = vld [vmem:[%s5764 + $0xf8] sm:$0xff]
  %v5829 = vunpack.c.l.b16 %v5765
  %v5830 = vunpack.c.h.b16 %v5765
  %v5831 = vunpack.c.l.b16 %v5766
  %v5832 = vunpack.c.h.b16 %v5766
  %v5833 = vunpack.c.l.b16 %v5767
  %v5834 = vunpack.c.h.b16 %v5767
  %v5835 = vunpack.c.l.b16 %v5768
  %v5836 = vunpack.c.h.b16 %v5768
  %v5837 = vunpack.c.l.b16 %v5769
  %v5838 = vunpack.c.h.b16 %v5769
  %v5839 = vunpack.c.l.b16 %v5770
  %v5840 = vunpack.c.h.b16 %v5770
  %v5841 = vunpack.c.l.b16 %v5771
  %v5842 = vunpack.c.h.b16 %v5771
  %v5843 = vunpack.c.l.b16 %v5772
  %v5844 = vunpack.c.h.b16 %v5772
  %v5845 = vunpack.c.l.b16 %v5773
  %v5846 = vunpack.c.h.b16 %v5773
  %v5847 = vunpack.c.l.b16 %v5774
  %v5848 = vunpack.c.h.b16 %v5774
  %v5849 = vunpack.c.l.b16 %v5775
  %v5850 = vunpack.c.h.b16 %v5775
  %v5851 = vunpack.c.l.b16 %v5776
  %v5852 = vunpack.c.h.b16 %v5776
  %v5853 = vunpack.c.l.b16 %v5777
  %v5854 = vunpack.c.h.b16 %v5777
  %v5855 = vunpack.c.l.b16 %v5778
  %v5856 = vunpack.c.h.b16 %v5778
  %v5857 = vunpack.c.l.b16 %v5779
  %v5858 = vunpack.c.h.b16 %v5779
  %v5859 = vunpack.c.l.b16 %v5780
  %v5860 = vunpack.c.h.b16 %v5780
  %v5861 = vunpack.c.l.b16 %v5781
  %v5862 = vunpack.c.h.b16 %v5781
  %v5863 = vunpack.c.l.b16 %v5782
  %v5864 = vunpack.c.h.b16 %v5782
  %v5865 = vunpack.c.l.b16 %v5783
  %v5866 = vunpack.c.h.b16 %v5783
  %v5867 = vunpack.c.l.b16 %v5784
  %v5868 = vunpack.c.h.b16 %v5784
  %v5869 = vunpack.c.l.b16 %v5785
  %v5870 = vunpack.c.h.b16 %v5785
  %v5871 = vunpack.c.l.b16 %v5786
  %v5872 = vunpack.c.h.b16 %v5786
  %v5873 = vunpack.c.l.b16 %v5787
  %v5874 = vunpack.c.h.b16 %v5787
  %v5875 = vunpack.c.l.b16 %v5788
  %v5876 = vunpack.c.h.b16 %v5788
  %v5877 = vunpack.c.l.b16 %v5789
  %v5878 = vunpack.c.h.b16 %v5789
  %v5879 = vunpack.c.l.b16 %v5790
  %v5880 = vunpack.c.h.b16 %v5790
  %v5881 = vunpack.c.l.b16 %v5791
  %v5882 = vunpack.c.h.b16 %v5791
  %v5883 = vunpack.c.l.b16 %v5792
  %v5884 = vunpack.c.h.b16 %v5792
  %v5885 = vunpack.c.l.b16 %v5793
  %v5886 = vunpack.c.h.b16 %v5793
  %v5887 = vunpack.c.l.b16 %v5794
  %v5888 = vunpack.c.h.b16 %v5794
  %v5889 = vunpack.c.l.b16 %v5795
  %v5890 = vunpack.c.h.b16 %v5795
  %v5891 = vunpack.c.l.b16 %v5796
  %v5892 = vunpack.c.h.b16 %v5796
  %v5893 = vpack.c.b16 %v5831, %v5829
  %v5894 = vpack.c.b16 %v5832, %v5830
  %v5895 = vpack.c.b16 %v5835, %v5833
  %v5896 = vpack.c.b16 %v5836, %v5834
  %v5897 = vpack.c.b16 %v5839, %v5837
  %v5898 = vpack.c.b16 %v5840, %v5838
  %v5899 = vpack.c.b16 %v5843, %v5841
  %v5900 = vpack.c.b16 %v5844, %v5842
  %v5901 = vpack.c.b16 %v5847, %v5845
  %v5902 = vpack.c.b16 %v5848, %v5846
  %v5903 = vpack.c.b16 %v5851, %v5849
  %v5904 = vpack.c.b16 %v5852, %v5850
  %v5905 = vpack.c.b16 %v5855, %v5853
  %v5906 = vpack.c.b16 %v5856, %v5854
  %v5907 = vpack.c.b16 %v5859, %v5857
  %v5908 = vpack.c.b16 %v5860, %v5858
  %v5909 = vpack.c.b16 %v5863, %v5861
  %v5910 = vpack.c.b16 %v5864, %v5862
  %v5911 = vpack.c.b16 %v5867, %v5865
  %v5912 = vpack.c.b16 %v5868, %v5866
  %v5913 = vpack.c.b16 %v5871, %v5869
  %v5914 = vpack.c.b16 %v5872, %v5870
  %v5915 = vpack.c.b16 %v5875, %v5873
  %v5916 = vpack.c.b16 %v5876, %v5874
  %v5917 = vpack.c.b16 %v5879, %v5877
  %v5918 = vpack.c.b16 %v5880, %v5878
  %v5919 = vpack.c.b16 %v5883, %v5881
  %v5920 = vpack.c.b16 %v5884, %v5882
  %v5921 = vpack.c.b16 %v5887, %v5885
  %v5922 = vpack.c.b16 %v5888, %v5886
  %v5923 = vpack.c.b16 %v5891, %v5889
  %v5924 = vpack.c.b16 %v5892, %v5890
  %5957 = vmatprep.subr.bf16.mxu0 %v5894
  %5958 = vmatpush1.bf16.msra.mxu0 %v5893
  %5959 = vmatprep.subr.bf16.mxu0 %v5896
  %5960 = vmatpush1.bf16.msra.mxu0 %v5895
  %5961 = vmatprep.subr.bf16.mxu0 %v5898
  %5962 = vmatpush1.bf16.msra.mxu0 %v5897
  %5963 = vmatprep.subr.bf16.mxu0 %v5900
  %5964 = vmatpush1.bf16.msra.mxu0 %v5899
  %5965 = vmatprep.subr.bf16.mxu0 %v5902
  %5966 = vmatpush1.bf16.msra.mxu0 %v5901
  %5967 = vmatprep.subr.bf16.mxu0 %v5904
  %5968 = vmatpush1.bf16.msra.mxu0 %v5903
  %5969 = vmatprep.subr.bf16.mxu0 %v5906
  %5970 = vmatpush1.bf16.msra.mxu0 %v5905
  %5971 = vmatprep.subr.bf16.mxu0 %v5908
  %5972 = vmatpush1.bf16.msra.mxu0 %v5907
  %5973 = vmatprep.subr.bf16.mxu0 %v5910
  %5974 = vmatpush1.bf16.msra.mxu0 %v5909
  %5975 = vmatprep.subr.bf16.mxu0 %v5912
  %5976 = vmatpush1.bf16.msra.mxu0 %v5911
  %5977 = vmatprep.subr.bf16.mxu0 %v5914
  %5978 = vmatpush1.bf16.msra.mxu0 %v5913
  %5979 = vmatprep.subr.bf16.mxu0 %v5916
  %5980 = vmatpush1.bf16.msra.mxu0 %v5915
  %5981 = vmatprep.subr.bf16.mxu0 %v5918
  %5982 = vmatpush1.bf16.msra.mxu0 %v5917
  %5983 = vmatprep.subr.bf16.mxu0 %v5920
  %5984 = vmatpush1.bf16.msra.mxu0 %v5919
  %5985 = vmatprep.subr.bf16.mxu0 %v5922
  %5986 = vmatpush1.bf16.msra.mxu0 %v5921
  %5987 = vmatprep.subr.bf16.mxu0 %v5924
  %5988 = vmatpush1.bf16.msra.mxu0 %v5923
  %5989 = vmatprep.mubr.bf16.mxu0 %v5763
  %5990 = vmatmul.mubr.bf16.gmra.mrb[0].mxu0 %v5762
  %v5991 = vpop.f32.mrb[0].mxu0
  %v5992 = vadd.f32 0.0, %v5991
  %v5993 = vpop.f32.mrb[0].mxu0
  %v5994 = vadd.f32 0.0, %v5993
  %v5995 = vpop.f32.mrb[0].mxu0
  %v5996 = vadd.f32 0.0, %v5995
  %v5997 = vpop.f32.mrb[0].mxu0
  %v5998 = vadd.f32 0.0, %v5997
  %5999 = vdwg.mxu0
  %v6032 = vunpack.c.l.b16 %v5676
  %v6033 = vunpack.c.h.b16 %v5676
  %v6034 = vunpack.c.l.b16 %v5677
  %v6035 = vunpack.c.h.b16 %v5677
  %v6036 = vunpack.c.l.b16 %v5678
  %v6037 = vunpack.c.h.b16 %v5678
  %v6038 = vunpack.c.l.b16 %v5679
  %v6039 = vunpack.c.h.b16 %v5679
  %v6040 = vunpack.c.l.b16 %v5680
  %v6041 = vunpack.c.h.b16 %v5680
  %v6042 = vunpack.c.l.b16 %v5681
  %v6043 = vunpack.c.h.b16 %v5681
  %v6044 = vunpack.c.l.b16 %v5682
  %v6045 = vunpack.c.h.b16 %v5682
  %v6046 = vunpack.c.l.b16 %v5683
  %v6047 = vunpack.c.h.b16 %v5683
  %v6048 = vunpack.c.l.b16 %v5684
  %v6049 = vunpack.c.h.b16 %v5684
  %v6050 = vunpack.c.l.b16 %v5685
  %v6051 = vunpack.c.h.b16 %v5685
  %v6052 = vunpack.c.l.b16 %v5686
  %v6053 = vunpack.c.h.b16 %v5686
  %v6054 = vunpack.c.l.b16 %v5687
  %v6055 = vunpack.c.h.b16 %v5687
  %v6056 = vunpack.c.l.b16 %v5688
  %v6057 = vunpack.c.h.b16 %v5688
  %v6058 = vunpack.c.l.b16 %v5689
  %v6059 = vunpack.c.h.b16 %v5689
  %v6060 = vunpack.c.l.b16 %v5690
  %v6061 = vunpack.c.h.b16 %v5690
  %v6062 = vunpack.c.l.b16 %v5691
  %v6063 = vunpack.c.h.b16 %v5691
  %v6064 = vunpack.c.l.b16 %v5692
  %v6065 = vunpack.c.h.b16 %v5692
  %v6066 = vunpack.c.l.b16 %v5693
  %v6067 = vunpack.c.h.b16 %v5693
  %v6068 = vunpack.c.l.b16 %v5694
  %v6069 = vunpack.c.h.b16 %v5694
  %v6070 = vunpack.c.l.b16 %v5695
  %v6071 = vunpack.c.h.b16 %v5695
  %v6072 = vunpack.c.l.b16 %v5696
  %v6073 = vunpack.c.h.b16 %v5696
  %v6074 = vunpack.c.l.b16 %v5697
  %v6075 = vunpack.c.h.b16 %v5697
  %v6076 = vunpack.c.l.b16 %v5698
  %v6077 = vunpack.c.h.b16 %v5698
  %v6078 = vunpack.c.l.b16 %v5699
  %v6079 = vunpack.c.h.b16 %v5699
  %v6080 = vunpack.c.l.b16 %v5700
  %v6081 = vunpack.c.h.b16 %v5700
  %v6082 = vunpack.c.l.b16 %v5701
  %v6083 = vunpack.c.h.b16 %v5701
  %v6084 = vunpack.c.l.b16 %v5702
  %v6085 = vunpack.c.h.b16 %v5702
  %v6086 = vunpack.c.l.b16 %v5703
  %v6087 = vunpack.c.h.b16 %v5703
  %v6088 = vunpack.c.l.b16 %v5704
  %v6089 = vunpack.c.h.b16 %v5704
  %v6090 = vunpack.c.l.b16 %v5705
  %v6091 = vunpack.c.h.b16 %v5705
  %v6092 = vunpack.c.l.b16 %v5706
  %v6093 = vunpack.c.h.b16 %v5706
  %v6094 = vunpack.c.l.b16 %v5707
  %v6095 = vunpack.c.h.b16 %v5707
  %v6096 = vpack.c.b16 %v6034, %v6032
  %v6097 = vpack.c.b16 %v6035, %v6033
  %v6098 = vpack.c.b16 %v6038, %v6036
  %v6099 = vpack.c.b16 %v6039, %v6037
  %v6100 = vpack.c.b16 %v6042, %v6040
  %v6101 = vpack.c.b16 %v6043, %v6041
  %v6102 = vpack.c.b16 %v6046, %v6044
  %v6103 = vpack.c.b16 %v6047, %v6045
  %v6104 = vpack.c.b16 %v6050, %v6048
  %v6105 = vpack.c.b16 %v6051, %v6049
  %v6106 = vpack.c.b16 %v6054, %v6052
  %v6107 = vpack.c.b16 %v6055, %v6053
  %v6108 = vpack.c.b16 %v6058, %v6056
  %v6109 = vpack.c.b16 %v6059, %v6057
  %v6110 = vpack.c.b16 %v6062, %v6060
  %v6111 = vpack.c.b16 %v6063, %v6061
  %v6112 = vpack.c.b16 %v6066, %v6064
  %v6113 = vpack.c.b16 %v6067, %v6065
  %v6114 = vpack.c.b16 %v6070, %v6068
  %v6115 = vpack.c.b16 %v6071, %v6069
  %v6116 = vpack.c.b16 %v6074, %v6072
  %v6117 = vpack.c.b16 %v6075, %v6073
  %v6118 = vpack.c.b16 %v6078, %v6076
  %v6119 = vpack.c.b16 %v6079, %v6077
  %v6120 = vpack.c.b16 %v6082, %v6080
  %v6121 = vpack.c.b16 %v6083, %v6081
  %v6122 = vpack.c.b16 %v6086, %v6084
  %v6123 = vpack.c.b16 %v6087, %v6085
  %v6124 = vpack.c.b16 %v6090, %v6088
  %v6125 = vpack.c.b16 %v6091, %v6089
  %v6126 = vpack.c.b16 %v6094, %v6092
  %v6127 = vpack.c.b16 %v6095, %v6093
  %6160 = vmatprep.subr.bf16.mxu0 %v6097
  %6161 = vmatpush1.bf16.msra.mxu0 %v6096
  %6162 = vmatprep.subr.bf16.mxu0 %v6099
  %6163 = vmatpush1.bf16.msra.mxu0 %v6098
  %6164 = vmatprep.subr.bf16.mxu0 %v6101
  %6165 = vmatpush1.bf16.msra.mxu0 %v6100
  %6166 = vmatprep.subr.bf16.mxu0 %v6103
  %6167 = vmatpush1.bf16.msra.mxu0 %v6102
  %6168 = vmatprep.subr.bf16.mxu0 %v6105
  %6169 = vmatpush1.bf16.msra.mxu0 %v6104
  %6170 = vmatprep.subr.bf16.mxu0 %v6107
  %6171 = vmatpush1.bf16.msra.mxu0 %v6106
  %6172 = vmatprep.subr.bf16.mxu0 %v6109
  %6173 = vmatpush1.bf16.msra.mxu0 %v6108
  %6174 = vmatprep.subr.bf16.mxu0 %v6111
  %6175 = vmatpush1.bf16.msra.mxu0 %v6110
  %6176 = vmatprep.subr.bf16.mxu0 %v6113
  %6177 = vmatpush1.bf16.msra.mxu0 %v6112
  %6178 = vmatprep.subr.bf16.mxu0 %v6115
  %6179 = vmatpush1.bf16.msra.mxu0 %v6114
  %6180 = vmatprep.subr.bf16.mxu0 %v6117
  %6181 = vmatpush1.bf16.msra.mxu0 %v6116
  %6182 = vmatprep.subr.bf16.mxu0 %v6119
  %6183 = vmatpush1.bf16.msra.mxu0 %v6118
  %6184 = vmatprep.subr.bf16.mxu0 %v6121
  %6185 = vmatpush1.bf16.msra.mxu0 %v6120
  %6186 = vmatprep.subr.bf16.mxu0 %v6123
  %6187 = vmatpush1.bf16.msra.mxu0 %v6122
  %6188 = vmatprep.subr.bf16.mxu0 %v6125
  %6189 = vmatpush1.bf16.msra.mxu0 %v6124
  %6190 = vmatprep.subr.bf16.mxu0 %v6127
  %6191 = vmatpush1.bf16.msra.mxu0 %v6126
  %6192 = vmatprep.mubr.bf16.mxu0 %v5675
  %6193 = vmatmul.mubr.bf16.gmra.mrb[0].mxu0 %v5674
  %v6194 = vpop.f32.mrb[0].mxu0
  %v6195 = vadd.f32 %v5992, %v6194
  %v6196 = vpop.f32.mrb[0].mxu0
  %v6197 = vadd.f32 %v5994, %v6196
  %v6198 = vpop.f32.mrb[0].mxu0
  %v6199 = vadd.f32 %v5996, %v6198
  %v6200 = vpop.f32.mrb[0].mxu0
  %v6201 = vadd.f32 %v5998, %v6200
  %6202 = vdwg.mxu0
  %s6203 = scalar_lea.vmem %s16, 16
  %v6204 = vld [vmem:[%s6203] sm:$0xf]
  %v6205 = vld [vmem:[%s6203 + $0x4] sm:$0xf]
  %v6208 = vunpack.c.l.b16 %v6204
  %v6209 = vunpack.c.l.b16 %v6205
  %v6210 = vpack.c.b16 %v6209, %v6208
  %v6212 = vsel %vm3304, %v6210, 0
  %6214 = vmatprep.subr.bf16.mxu0 %v5629
  %6215 = vmatpush1.bf16.msra.mxu0 %v5626
  %6216 = vmatprep.subr.bf16.mxu0 0
  %6217 = vmatpush1.bf16.msra.mxu0 0
  %6218 = vmatprep.subr.bf16.mxu0 0
  %6219 = vmatpush1.bf16.msra.mxu0 0
  %6220 = vmatprep.subr.bf16.mxu0 0
  %6221 = vmatpush1.bf16.msra.mxu0 0
  %6222 = vmatprep.subr.bf16.mxu0 0
  %6223 = vmatpush1.bf16.msra.mxu0 0
  %6224 = vmatprep.subr.bf16.mxu0 0
  %6225 = vmatpush1.bf16.msra.mxu0 0
  %6226 = vmatprep.subr.bf16.mxu0 0
  %6227 = vmatpush1.bf16.msra.mxu0 0
  %6228 = vmatprep.subr.bf16.mxu0 0
  %6229 = vmatpush1.bf16.msra.mxu0 0
  %6230 = vmatprep.subr.bf16.mxu0 0
  %6231 = vmatpush1.bf16.msra.mxu0 0
  %6232 = vmatprep.subr.bf16.mxu0 0
  %6233 = vmatpush1.bf16.msra.mxu0 0
  %6234 = vmatprep.subr.bf16.mxu0 0
  %6235 = vmatpush1.bf16.msra.mxu0 0
  %6236 = vmatprep.subr.bf16.mxu0 0
  %6237 = vmatpush1.bf16.msra.mxu0 0
  %6238 = vmatprep.subr.bf16.mxu0 0
  %6239 = vmatpush1.bf16.msra.mxu0 0
  %6240 = vmatprep.subr.bf16.mxu0 0
  %6241 = vmatpush1.bf16.msra.mxu0 0
  %6242 = vmatprep.subr.bf16.mxu0 0
  %6243 = vmatpush1.bf16.msra.mxu0 0
  %6244 = vmatprep.subr.bf16.mxu0 0
  %6245 = vmatpush1.bf16.msra.mxu0 0
  %6246 = vmatprep.mubr.bf16.mxu0 0
  %6247 = vmatmul.mubr.bf16.gmra.mrb[0].mxu0 %v6212
  %v6248 = vpop.f32.mrb[0].mxu0
  %v6249 = vadd.f32 0.0, %v6248
  %v6250 = vpop.f32.mrb[0].mxu0
  %v6251 = vadd.f32 0.0, %v6250
  %v6252 = vpop.f32.mrb[0].mxu0
  %v6253 = vadd.f32 0.0, %v6252
  %v6254 = vpop.f32.mrb[0].mxu0
  %v6255 = vadd.f32 0.0, %v6254
  %6256 = vdwg.mxu0
  %v6257 = vpack.c.bf16 %v6253, %v6249
  %v6258 = vpack.c.bf16 %v6255, %v6251
  %s6259 = scalar_lea.vmem %s17, 512
  %v6260 = vld [vmem:[%s6259] sm:$0xff]
  %v6261 = vld [vmem:[%s6259 + $0x8] sm:$0xff]
  %v6262 = vld [vmem:[%s6259 + $0x10] sm:$0xff]
  %v6263 = vld [vmem:[%s6259 + $0x18] sm:$0xff]
  %v6264 = vld [vmem:[%s6259 + $0x20] sm:$0xff]
  %v6265 = vld [vmem:[%s6259 + $0x28] sm:$0xff]
  %v6266 = vld [vmem:[%s6259 + $0x30] sm:$0xff]
  %v6267 = vld [vmem:[%s6259 + $0x38] sm:$0xff]
  %v6268 = vld [vmem:[%s6259 + $0x40] sm:$0xff]
  %v6269 = vld [vmem:[%s6259 + $0x48] sm:$0xff]
  %v6270 = vld [vmem:[%s6259 + $0x50] sm:$0xff]
  %v6271 = vld [vmem:[%s6259 + $0x58] sm:$0xff]
  %v6272 = vld [vmem:[%s6259 + $0x60] sm:$0xff]
  %v6273 = vld [vmem:[%s6259 + $0x68] sm:$0xff]
  %v6274 = vld [vmem:[%s6259 + $0x70] sm:$0xff]
  %v6275 = vld [vmem:[%s6259 + $0x78] sm:$0xff]
  %v6276 = vld [vmem:[%s6259 + $0x80] sm:$0xff]
  %v6277 = vld [vmem:[%s6259 + $0x88] sm:$0xff]
  %v6278 = vld [vmem:[%s6259 + $0x90] sm:$0xff]
  %v6279 = vld [vmem:[%s6259 + $0x98] sm:$0xff]
  %v6280 = vld [vmem:[%s6259 + $0xa0] sm:$0xff]
  %v6281 = vld [vmem:[%s6259 + $0xa8] sm:$0xff]
  %v6282 = vld [vmem:[%s6259 + $0xb0] sm:$0xff]
  %v6283 = vld [vmem:[%s6259 + $0xb8] sm:$0xff]
  %v6284 = vld [vmem:[%s6259 + $0xc0] sm:$0xff]
  %v6285 = vld [vmem:[%s6259 + $0xc8] sm:$0xff]
  %v6286 = vld [vmem:[%s6259 + $0xd0] sm:$0xff]
  %v6287 = vld [vmem:[%s6259 + $0xd8] sm:$0xff]
  %v6288 = vld [vmem:[%s6259 + $0xe0] sm:$0xff]
  %v6289 = vld [vmem:[%s6259 + $0xe8] sm:$0xff]
  %v6290 = vld [vmem:[%s6259 + $0xf0] sm:$0xff]
  %v6291 = vld [vmem:[%s6259 + $0xf8] sm:$0xff]
  %v6324 = vunpack.c.l.b16 %v6260
  %v6325 = vunpack.c.h.b16 %v6260
  %v6326 = vunpack.c.l.b16 %v6261
  %v6327 = vunpack.c.h.b16 %v6261
  %v6328 = vunpack.c.l.b16 %v6262
  %v6329 = vunpack.c.h.b16 %v6262
  %v6330 = vunpack.c.l.b16 %v6263
  %v6331 = vunpack.c.h.b16 %v6263
  %v6332 = vunpack.c.l.b16 %v6264
  %v6333 = vunpack.c.h.b16 %v6264
  %v6334 = vunpack.c.l.b16 %v6265
  %v6335 = vunpack.c.h.b16 %v6265
  %v6336 = vunpack.c.l.b16 %v6266
  %v6337 = vunpack.c.h.b16 %v6266
  %v6338 = vunpack.c.l.b16 %v6267
  %v6339 = vunpack.c.h.b16 %v6267
  %v6340 = vunpack.c.l.b16 %v6268
  %v6341 = vunpack.c.h.b16 %v6268
  %v6342 = vunpack.c.l.b16 %v6269
  %v6343 = vunpack.c.h.b16 %v6269
  %v6344 = vunpack.c.l.b16 %v6270
  %v6345 = vunpack.c.h.b16 %v6270
  %v6346 = vunpack.c.l.b16 %v6271
  %v6347 = vunpack.c.h.b16 %v6271
  %v6348 = vunpack.c.l.b16 %v6272
  %v6349 = vunpack.c.h.b16 %v6272
  %v6350 = vunpack.c.l.b16 %v6273
  %v6351 = vunpack.c.h.b16 %v6273
  %v6352 = vunpack.c.l.b16 %v6274
  %v6353 = vunpack.c.h.b16 %v6274
  %v6354 = vunpack.c.l.b16 %v6275
  %v6355 = vunpack.c.h.b16 %v6275
  %v6356 = vunpack.c.l.b16 %v6276
  %v6357 = vunpack.c.h.b16 %v6276
  %v6358 = vunpack.c.l.b16 %v6277
  %v6359 = vunpack.c.h.b16 %v6277
  %v6360 = vunpack.c.l.b16 %v6278
  %v6361 = vunpack.c.h.b16 %v6278
  %v6362 = vunpack.c.l.b16 %v6279
  %v6363 = vunpack.c.h.b16 %v6279
  %v6364 = vunpack.c.l.b16 %v6280
  %v6365 = vunpack.c.h.b16 %v6280
  %v6366 = vunpack.c.l.b16 %v6281
  %v6367 = vunpack.c.h.b16 %v6281
  %v6368 = vunpack.c.l.b16 %v6282
  %v6369 = vunpack.c.h.b16 %v6282
  %v6370 = vunpack.c.l.b16 %v6283
  %v6371 = vunpack.c.h.b16 %v6283
  %v6372 = vunpack.c.l.b16 %v6284
  %v6373 = vunpack.c.h.b16 %v6284
  %v6374 = vunpack.c.l.b16 %v6285
  %v6375 = vunpack.c.h.b16 %v6285
  %v6376 = vunpack.c.l.b16 %v6286
  %v6377 = vunpack.c.h.b16 %v6286
  %v6378 = vunpack.c.l.b16 %v6287
  %v6379 = vunpack.c.h.b16 %v6287
  %v6380 = vunpack.c.l.b16 %v6288
  %v6381 = vunpack.c.h.b16 %v6288
  %v6382 = vunpack.c.l.b16 %v6289
  %v6383 = vunpack.c.h.b16 %v6289
  %v6384 = vunpack.c.l.b16 %v6290
  %v6385 = vunpack.c.h.b16 %v6290
  %v6386 = vunpack.c.l.b16 %v6291
  %v6387 = vunpack.c.h.b16 %v6291
  %v6388 = vpack.c.b16 %v6326, %v6324
  %v6389 = vpack.c.b16 %v6327, %v6325
  %v6390 = vpack.c.b16 %v6330, %v6328
  %v6391 = vpack.c.b16 %v6331, %v6329
  %v6392 = vpack.c.b16 %v6334, %v6332
  %v6393 = vpack.c.b16 %v6335, %v6333
  %v6394 = vpack.c.b16 %v6338, %v6336
  %v6395 = vpack.c.b16 %v6339, %v6337
  %v6396 = vpack.c.b16 %v6342, %v6340
  %v6397 = vpack.c.b16 %v6343, %v6341
  %v6398 = vpack.c.b16 %v6346, %v6344
  %v6399 = vpack.c.b16 %v6347, %v6345
  %v6400 = vpack.c.b16 %v6350, %v6348
  %v6401 = vpack.c.b16 %v6351, %v6349
  %v6402 = vpack.c.b16 %v6354, %v6352
  %v6403 = vpack.c.b16 %v6355, %v6353
  %v6404 = vpack.c.b16 %v6358, %v6356
  %v6405 = vpack.c.b16 %v6359, %v6357
  %v6406 = vpack.c.b16 %v6362, %v6360
  %v6407 = vpack.c.b16 %v6363, %v6361
  %v6408 = vpack.c.b16 %v6366, %v6364
  %v6409 = vpack.c.b16 %v6367, %v6365
  %v6410 = vpack.c.b16 %v6370, %v6368
  %v6411 = vpack.c.b16 %v6371, %v6369
  %v6412 = vpack.c.b16 %v6374, %v6372
  %v6413 = vpack.c.b16 %v6375, %v6373
  %v6414 = vpack.c.b16 %v6378, %v6376
  %v6415 = vpack.c.b16 %v6379, %v6377
  %v6416 = vpack.c.b16 %v6382, %v6380
  %v6417 = vpack.c.b16 %v6383, %v6381
  %v6418 = vpack.c.b16 %v6386, %v6384
  %v6419 = vpack.c.b16 %v6387, %v6385
  %6452 = vmatprep.subr.bf16.mxu0 %v6389
  %6453 = vmatpush1.bf16.msra.mxu0 %v6388
  %6454 = vmatprep.subr.bf16.mxu0 %v6391
  %6455 = vmatpush1.bf16.msra.mxu0 %v6390
  %6456 = vmatprep.subr.bf16.mxu0 %v6393
  %6457 = vmatpush1.bf16.msra.mxu0 %v6392
  %6458 = vmatprep.subr.bf16.mxu0 %v6395
  %6459 = vmatpush1.bf16.msra.mxu0 %v6394
  %6460 = vmatprep.subr.bf16.mxu0 %v6397
  %6461 = vmatpush1.bf16.msra.mxu0 %v6396
  %6462 = vmatprep.subr.bf16.mxu0 %v6399
  %6463 = vmatpush1.bf16.msra.mxu0 %v6398
  %6464 = vmatprep.subr.bf16.mxu0 %v6401
  %6465 = vmatpush1.bf16.msra.mxu0 %v6400
  %6466 = vmatprep.subr.bf16.mxu0 %v6403
  %6467 = vmatpush1.bf16.msra.mxu0 %v6402
  %6468 = vmatprep.subr.bf16.mxu0 %v6405
  %6469 = vmatpush1.bf16.msra.mxu0 %v6404
  %6470 = vmatprep.subr.bf16.mxu0 %v6407
  %6471 = vmatpush1.bf16.msra.mxu0 %v6406
  %6472 = vmatprep.subr.bf16.mxu0 %v6409
  %6473 = vmatpush1.bf16.msra.mxu0 %v6408
  %6474 = vmatprep.subr.bf16.mxu0 %v6411
  %6475 = vmatpush1.bf16.msra.mxu0 %v6410
  %6476 = vmatprep.subr.bf16.mxu0 %v6413
  %6477 = vmatpush1.bf16.msra.mxu0 %v6412
  %6478 = vmatprep.subr.bf16.mxu0 %v6415
  %6479 = vmatpush1.bf16.msra.mxu0 %v6414
  %6480 = vmatprep.subr.bf16.mxu0 %v6417
  %6481 = vmatpush1.bf16.msra.mxu0 %v6416
  %6482 = vmatprep.subr.bf16.mxu0 %v6419
  %6483 = vmatpush1.bf16.msra.mxu0 %v6418
  %6484 = vmatprep.mubr.bf16.mxu0 %v6258
  %6485 = vmatmul.mubr.bf16.gmra.mrb[0].mxu0 %v6257
  %v6486 = vpop.f32.mrb[0].mxu0
  %v6487 = vadd.f32 0.0, %v6486
  %v6488 = vpop.f32.mrb[0].mxu0
  %v6489 = vadd.f32 0.0, %v6488
  %v6490 = vpop.f32.mrb[0].mxu0
  %v6491 = vadd.f32 0.0, %v6490
  %v6492 = vpop.f32.mrb[0].mxu0
  %v6493 = vadd.f32 0.0, %v6492
  %6494 = vdwg.mxu0
  %v6495 = vadd.f32 %v6195, %v6487
  %v6496 = vadd.f32 %v6197, %v6489
  %v6497 = vadd.f32 %v6199, %v6491
  %v6498 = vadd.f32 %v6201, %v6493
  %s6499 = scalar_lea.vmem %s16, 24
  %v6500 = vld [vmem:[%s6499] sm:$0xf]
  %v6501 = vld [vmem:[%s6499 + $0x4] sm:$0xf]
  %v6504 = vunpack.c.l.b16 %v6500
  %v6505 = vunpack.c.l.b16 %v6501
  %v6506 = vpack.c.b16 %v6505, %v6504
  %v6508 = vsel %vm3304, %v6506, 0
  %6510 = vmatprep.subr.bf16.mxu0 %v5629
  %6511 = vmatpush1.bf16.msra.mxu0 %v5626
  %6512 = vmatprep.subr.bf16.mxu0 0
  %6513 = vmatpush1.bf16.msra.mxu0 0
  %6514 = vmatprep.subr.bf16.mxu0 0
  %6515 = vmatpush1.bf16.msra.mxu0 0
  %6516 = vmatprep.subr.bf16.mxu0 0
  %6517 = vmatpush1.bf16.msra.mxu0 0
  %6518 = vmatprep.subr.bf16.mxu0 0
  %6519 = vmatpush1.bf16.msra.mxu0 0
  %6520 = vmatprep.subr.bf16.mxu0 0
  %6521 = vmatpush1.bf16.msra.mxu0 0
  %6522 = vmatprep.subr.bf16.mxu0 0
  %6523 = vmatpush1.bf16.msra.mxu0 0
  %6524 = vmatprep.subr.bf16.mxu0 0
  %6525 = vmatpush1.bf16.msra.mxu0 0
  %6526 = vmatprep.subr.bf16.mxu0 0
  %6527 = vmatpush1.bf16.msra.mxu0 0
  %6528 = vmatprep.subr.bf16.mxu0 0
  %6529 = vmatpush1.bf16.msra.mxu0 0
  %6530 = vmatprep.subr.bf16.mxu0 0
  %6531 = vmatpush1.bf16.msra.mxu0 0
  %6532 = vmatprep.subr.bf16.mxu0 0
  %6533 = vmatpush1.bf16.msra.mxu0 0
  %6534 = vmatprep.subr.bf16.mxu0 0
  %6535 = vmatpush1.bf16.msra.mxu0 0
  %6536 = vmatprep.subr.bf16.mxu0 0
  %6537 = vmatpush1.bf16.msra.mxu0 0
  %6538 = vmatprep.subr.bf16.mxu0 0
  %6539 = vmatpush1.bf16.msra.mxu0 0
  %6540 = vmatprep.subr.bf16.mxu0 0
  %6541 = vmatpush1.bf16.msra.mxu0 0
  %6542 = vmatprep.mubr.bf16.mxu0 0
  %6543 = vmatmul.mubr.bf16.gmra.mrb[0].mxu0 %v6508
  %v6544 = vpop.f32.mrb[0].mxu0
  %v6545 = vadd.f32 0.0, %v6544
  %v6546 = vpop.f32.mrb[0].mxu0
  %v6547 = vadd.f32 0.0, %v6546
  %v6548 = vpop.f32.mrb[0].mxu0
  %v6549 = vadd.f32 0.0, %v6548
  %v6550 = vpop.f32.mrb[0].mxu0
  %v6551 = vadd.f32 0.0, %v6550
  %6552 = vdwg.mxu0
  %v6553 = vpack.c.bf16 %v6549, %v6545
  %v6554 = vpack.c.bf16 %v6551, %v6547
  %s6555 = scalar_lea.vmem %s17, 768
  %v6556 = vld [vmem:[%s6555] sm:$0xff]
  %v6557 = vld [vmem:[%s6555 + $0x8] sm:$0xff]
  %v6558 = vld [vmem:[%s6555 + $0x10] sm:$0xff]
  %v6559 = vld [vmem:[%s6555 + $0x18] sm:$0xff]
  %v6560 = vld [vmem:[%s6555 + $0x20] sm:$0xff]
  %v6561 = vld [vmem:[%s6555 + $0x28] sm:$0xff]
  %v6562 = vld [vmem:[%s6555 + $0x30] sm:$0xff]
  %v6563 = vld [vmem:[%s6555 + $0x38] sm:$0xff]
  %v6564 = vld [vmem:[%s6555 + $0x40] sm:$0xff]
  %v6565 = vld [vmem:[%s6555 + $0x48] sm:$0xff]
  %v6566 = vld [vmem:[%s6555 + $0x50] sm:$0xff]
  %v6567 = vld [vmem:[%s6555 + $0x58] sm:$0xff]
  %v6568 = vld [vmem:[%s6555 + $0x60] sm:$0xff]
  %v6569 = vld [vmem:[%s6555 + $0x68] sm:$0xff]
  %v6570 = vld [vmem:[%s6555 + $0x70] sm:$0xff]
  %v6571 = vld [vmem:[%s6555 + $0x78] sm:$0xff]
  %v6572 = vld [vmem:[%s6555 + $0x80] sm:$0xff]
  %v6573 = vld [vmem:[%s6555 + $0x88] sm:$0xff]
  %v6574 = vld [vmem:[%s6555 + $0x90] sm:$0xff]
  %v6575 = vld [vmem:[%s6555 + $0x98] sm:$0xff]
  %v6576 = vld [vmem:[%s6555 + $0xa0] sm:$0xff]
  %v6577 = vld [vmem:[%s6555 + $0xa8] sm:$0xff]
  %v6578 = vld [vmem:[%s6555 + $0xb0] sm:$0xff]
  %v6579 = vld [vmem:[%s6555 + $0xb8] sm:$0xff]
  %v6580 = vld [vmem:[%s6555 + $0xc0] sm:$0xff]
  %v6581 = vld [vmem:[%s6555 + $0xc8] sm:$0xff]
  %v6582 = vld [vmem:[%s6555 + $0xd0] sm:$0xff]
  %v6583 = vld [vmem:[%s6555 + $0xd8] sm:$0xff]
  %v6584 = vld [vmem:[%s6555 + $0xe0] sm:$0xff]
  %v6585 = vld [vmem:[%s6555 + $0xe8] sm:$0xff]
  %v6586 = vld [vmem:[%s6555 + $0xf0] sm:$0xff]
  %v6587 = vld [vmem:[%s6555 + $0xf8] sm:$0xff]
  %v6620 = vunpack.c.l.b16 %v6556
  %v6621 = vunpack.c.h.b16 %v6556
  %v6622 = vunpack.c.l.b16 %v6557
  %v6623 = vunpack.c.h.b16 %v6557
  %v6624 = vunpack.c.l.b16 %v6558
  %v6625 = vunpack.c.h.b16 %v6558
  %v6626 = vunpack.c.l.b16 %v6559
  %v6627 = vunpack.c.h.b16 %v6559
  %v6628 = vunpack.c.l.b16 %v6560
  %v6629 = vunpack.c.h.b16 %v6560
  %v6630 = vunpack.c.l.b16 %v6561
  %v6631 = vunpack.c.h.b16 %v6561
  %v6632 = vunpack.c.l.b16 %v6562
  %v6633 = vunpack.c.h.b16 %v6562
  %v6634 = vunpack.c.l.b16 %v6563
  %v6635 = vunpack.c.h.b16 %v6563
  %v6636 = vunpack.c.l.b16 %v6564
  %v6637 = vunpack.c.h.b16 %v6564
  %v6638 = vunpack.c.l.b16 %v6565
  %v6639 = vunpack.c.h.b16 %v6565
  %v6640 = vunpack.c.l.b16 %v6566
  %v6641 = vunpack.c.h.b16 %v6566
  %v6642 = vunpack.c.l.b16 %v6567
  %v6643 = vunpack.c.h.b16 %v6567
  %v6644 = vunpack.c.l.b16 %v6568
  %v6645 = vunpack.c.h.b16 %v6568
  %v6646 = vunpack.c.l.b16 %v6569
  %v6647 = vunpack.c.h.b16 %v6569
  %v6648 = vunpack.c.l.b16 %v6570
  %v6649 = vunpack.c.h.b16 %v6570
  %v6650 = vunpack.c.l.b16 %v6571
  %v6651 = vunpack.c.h.b16 %v6571
  %v6652 = vunpack.c.l.b16 %v6572
  %v6653 = vunpack.c.h.b16 %v6572
  %v6654 = vunpack.c.l.b16 %v6573
  %v6655 = vunpack.c.h.b16 %v6573
  %v6656 = vunpack.c.l.b16 %v6574
  %v6657 = vunpack.c.h.b16 %v6574
  %v6658 = vunpack.c.l.b16 %v6575
  %v6659 = vunpack.c.h.b16 %v6575
  %v6660 = vunpack.c.l.b16 %v6576
  %v6661 = vunpack.c.h.b16 %v6576
  %v6662 = vunpack.c.l.b16 %v6577
  %v6663 = vunpack.c.h.b16 %v6577
  %v6664 = vunpack.c.l.b16 %v6578
  %v6665 = vunpack.c.h.b16 %v6578
  %v6666 = vunpack.c.l.b16 %v6579
  %v6667 = vunpack.c.h.b16 %v6579
  %v6668 = vunpack.c.l.b16 %v6580
  %v6669 = vunpack.c.h.b16 %v6580
  %v6670 = vunpack.c.l.b16 %v6581
  %v6671 = vunpack.c.h.b16 %v6581
  %v6672 = vunpack.c.l.b16 %v6582
  %v6673 = vunpack.c.h.b16 %v6582
  %v6674 = vunpack.c.l.b16 %v6583
  %v6675 = vunpack.c.h.b16 %v6583
  %v6676 = vunpack.c.l.b16 %v6584
  %v6677 = vunpack.c.h.b16 %v6584
  %v6678 = vunpack.c.l.b16 %v6585
  %v6679 = vunpack.c.h.b16 %v6585
  %v6680 = vunpack.c.l.b16 %v6586
  %v6681 = vunpack.c.h.b16 %v6586
  %v6682 = vunpack.c.l.b16 %v6587
  %v6683 = vunpack.c.h.b16 %v6587
  %v6684 = vpack.c.b16 %v6622, %v6620
  %v6685 = vpack.c.b16 %v6623, %v6621
  %v6686 = vpack.c.b16 %v6626, %v6624
  %v6687 = vpack.c.b16 %v6627, %v6625
  %v6688 = vpack.c.b16 %v6630, %v6628
  %v6689 = vpack.c.b16 %v6631, %v6629
  %v6690 = vpack.c.b16 %v6634, %v6632
  %v6691 = vpack.c.b16 %v6635, %v6633
  %v6692 = vpack.c.b16 %v6638, %v6636
  %v6693 = vpack.c.b16 %v6639, %v6637
  %v6694 = vpack.c.b16 %v6642, %v6640
  %v6695 = vpack.c.b16 %v6643, %v6641
  %v6696 = vpack.c.b16 %v6646, %v6644
  %v6697 = vpack.c.b16 %v6647, %v6645
  %v6698 = vpack.c.b16 %v6650, %v6648
  %v6699 = vpack.c.b16 %v6651, %v6649
  %v6700 = vpack.c.b16 %v6654, %v6652
  %v6701 = vpack.c.b16 %v6655, %v6653
  %v6702 = vpack.c.b16 %v6658, %v6656
  %v6703 = vpack.c.b16 %v6659, %v6657
  %v6704 = vpack.c.b16 %v6662, %v6660
  %v6705 = vpack.c.b16 %v6663, %v6661
  %v6706 = vpack.c.b16 %v6666, %v6664
  %v6707 = vpack.c.b16 %v6667, %v6665
  %v6708 = vpack.c.b16 %v6670, %v6668
  %v6709 = vpack.c.b16 %v6671, %v6669
  %v6710 = vpack.c.b16 %v6674, %v6672
  %v6711 = vpack.c.b16 %v6675, %v6673
  %v6712 = vpack.c.b16 %v6678, %v6676
  %v6713 = vpack.c.b16 %v6679, %v6677
  %v6714 = vpack.c.b16 %v6682, %v6680
  %v6715 = vpack.c.b16 %v6683, %v6681
  %6748 = vmatprep.subr.bf16.mxu0 %v6685
  %6749 = vmatpush1.bf16.msra.mxu0 %v6684
  %6750 = vmatprep.subr.bf16.mxu0 %v6687
  %6751 = vmatpush1.bf16.msra.mxu0 %v6686
  %6752 = vmatprep.subr.bf16.mxu0 %v6689
  %6753 = vmatpush1.bf16.msra.mxu0 %v6688
  %6754 = vmatprep.subr.bf16.mxu0 %v6691
  %6755 = vmatpush1.bf16.msra.mxu0 %v6690
  %6756 = vmatprep.subr.bf16.mxu0 %v6693
  %6757 = vmatpush1.bf16.msra.mxu0 %v6692
  %6758 = vmatprep.subr.bf16.mxu0 %v6695
  %6759 = vmatpush1.bf16.msra.mxu0 %v6694
  %6760 = vmatprep.subr.bf16.mxu0 %v6697
  %6761 = vmatpush1.bf16.msra.mxu0 %v6696
  %6762 = vmatprep.subr.bf16.mxu0 %v6699
  %6763 = vmatpush1.bf16.msra.mxu0 %v6698
  %6764 = vmatprep.subr.bf16.mxu0 %v6701
  %6765 = vmatpush1.bf16.msra.mxu0 %v6700
  %6766 = vmatprep.subr.bf16.mxu0 %v6703
  %6767 = vmatpush1.bf16.msra.mxu0 %v6702
  %6768 = vmatprep.subr.bf16.mxu0 %v6705
  %6769 = vmatpush1.bf16.msra.mxu0 %v6704
  %6770 = vmatprep.subr.bf16.mxu0 %v6707
  %6771 = vmatpush1.bf16.msra.mxu0 %v6706
  %6772 = vmatprep.subr.bf16.mxu0 %v6709
  %6773 = vmatpush1.bf16.msra.mxu0 %v6708
  %6774 = vmatprep.subr.bf16.mxu0 %v6711
  %6775 = vmatpush1.bf16.msra.mxu0 %v6710
  %6776 = vmatprep.subr.bf16.mxu0 %v6713
  %6777 = vmatpush1.bf16.msra.mxu0 %v6712
  %6778 = vmatprep.subr.bf16.mxu0 %v6715
  %6779 = vmatpush1.bf16.msra.mxu0 %v6714
  %6780 = vmatprep.mubr.bf16.mxu0 %v6554
  %6781 = vmatmul.mubr.bf16.gmra.mrb[0].mxu0 %v6553
  %v6782 = vpop.f32.mrb[0].mxu0
  %v6783 = vadd.f32 0.0, %v6782
  %v6784 = vpop.f32.mrb[0].mxu0
  %v6785 = vadd.f32 0.0, %v6784
  %v6786 = vpop.f32.mrb[0].mxu0
  %v6787 = vadd.f32 0.0, %v6786
  %v6788 = vpop.f32.mrb[0].mxu0
  %v6789 = vadd.f32 0.0, %v6788
  %6790 = vdwg.mxu0
  %v6791 = vadd.f32 %v6495, %v6783
  %v6792 = vadd.f32 %v6496, %v6785
  %v6793 = vadd.f32 %v6497, %v6787
  %v6794 = vadd.f32 %v6498, %v6789
  %v6795 = vld [vmem:[%s18] sm:$0x3]
  %v6797 = vlaneseq
  %v6798 = vshrl.u32 %v6797, 7
  %v6799 = vsub.s32 0, %v6798
  %v6800 = vrot.slane %v6795, %v6799
  %v6801 = vlaneseq
  %v6802 = vshrl.u32 %v6801, 7
  %v6803 = vsub.s32 1, %v6802
  %v6804 = vrot.slane %v6795, %v6803
  %v6807 = vadd.f32 %v6791, %v6800
  %v6808 = vadd.f32 %v6792, %v6804
  %v6809 = vadd.f32 %v6793, %v6800
  %v6810 = vadd.f32 %v6794, %v6804
  %v6811 = vmax.f32 %v6807, 0.0
  %v6812 = vmax.f32 %v6808, 0.0
  %v6813 = vmax.f32 %v6809, 0.0
  %v6814 = vmax.f32 %v6810, 0.0
  %v6815 = vpack.c.bf16 %v6813, %v6811
  %v6816 = vpack.c.bf16 %v6814, %v6812
  %v6817 = vld [vmem:[%s19] sm:$0xf]
  %v6818 = vld [vmem:[%s19 + $0x4] sm:$0xf]
  %v6819 = vld [vmem:[%s19 + $0x8] sm:$0xf]
  %v6820 = vld [vmem:[%s19 + $0xc] sm:$0xf]
  %v6825 = vunpack.c.l.b16 %v6817
  %v6826 = vunpack.c.l.b16 %v6818
  %v6827 = vunpack.c.l.b16 %v6819
  %v6828 = vunpack.c.l.b16 %v6820
  %v6829 = vpack.c.b16 %v6826, %v6825
  %v6830 = vpack.c.b16 %v6828, %v6827
  %v6832 = vsel %vm2155, %v6829, 0
  %v6835 = vsel %vm2155, %v6830, 0
  %6837 = vmatprep.subr.bf16.mxu0 %v6816
  %6838 = vmatpush1.bf16.msra.mxu0 %v6815
  %6839 = vmatprep.subr.bf16.mxu0 0
  %6840 = vmatpush1.bf16.msra.mxu0 0
  %6841 = vmatprep.subr.bf16.mxu0 0
  %6842 = vmatpush1.bf16.msra.mxu0 0
  %6843 = vmatprep.subr.bf16.mxu0 0
  %6844 = vmatpush1.bf16.msra.mxu0 0
  %6845 = vmatprep.subr.bf16.mxu0 0
  %6846 = vmatpush1.bf16.msra.mxu0 0
  %6847 = vmatprep.subr.bf16.mxu0 0
  %6848 = vmatpush1.bf16.msra.mxu0 0
  %6849 = vmatprep.subr.bf16.mxu0 0
  %6850 = vmatpush1.bf16.msra.mxu0 0
  %6851 = vmatprep.subr.bf16.mxu0 0
  %6852 = vmatpush1.bf16.msra.mxu0 0
  %6853 = vmatprep.subr.bf16.mxu0 0
  %6854 = vmatpush1.bf16.msra.mxu0 0
  %6855 = vmatprep.subr.bf16.mxu0 0
  %6856 = vmatpush1.bf16.msra.mxu0 0
  %6857 = vmatprep.subr.bf16.mxu0 0
  %6858 = vmatpush1.bf16.msra.mxu0 0
  %6859 = vmatprep.subr.bf16.mxu0 0
  %6860 = vmatpush1.bf16.msra.mxu0 0
  %6861 = vmatprep.subr.bf16.mxu0 0
  %6862 = vmatpush1.bf16.msra.mxu0 0
  %6863 = vmatprep.subr.bf16.mxu0 0
  %6864 = vmatpush1.bf16.msra.mxu0 0
  %6865 = vmatprep.subr.bf16.mxu0 0
  %6866 = vmatpush1.bf16.msra.mxu0 0
  %6867 = vmatprep.subr.bf16.mxu0 0
  %6868 = vmatpush1.bf16.msra.mxu0 0
  %6869 = vmatprep.mubr.bf16.mxu0 0
  %6870 = vmatmul.mubr.bf16.gmra.mrb[0].mxu0 %v6832
  %v6871 = vpop.f32.mrb[0].mxu0
  %v6872 = vadd.f32 0.0, %v6871
  %v6873 = vpop.f32.mrb[0].mxu0
  %v6874 = vadd.f32 0.0, %v6873
  %v6875 = vpop.f32.mrb[0].mxu0
  %v6876 = vadd.f32 0.0, %v6875
  %v6877 = vpop.f32.mrb[0].mxu0
  %v6878 = vadd.f32 0.0, %v6877
  %6879 = vmatprep.mubr.bf16.mxu0 0
  %6880 = vmatmul.mubr.bf16.gmra.mrb[0].mxu0 %v6835
  %v6881 = vpop.f32.mrb[0].mxu0
  %v6882 = vadd.f32 0.0, %v6881
  %v6883 = vpop.f32.mrb[0].mxu0
  %v6884 = vadd.f32 0.0, %v6883
  %v6885 = vpop.f32.mrb[0].mxu0
  %v6886 = vadd.f32 0.0, %v6885
  %v6887 = vpop.f32.mrb[0].mxu0
  %v6888 = vadd.f32 0.0, %v6887
  %6889 = vdwg.mxu0
  %v6890 = vpack.c.bf16 %v6876, %v6872
  %v6891 = vpack.c.bf16 %v6878, %v6874
  %v6892 = vpack.c.bf16 %v6886, %v6882
  %v6893 = vpack.c.bf16 %v6888, %v6884
  %v6894 = vld [vmem:[%s20] sm:$0xff]
  %v6895 = vld [vmem:[%s20 + $0x8] sm:$0xff]
  %v6896 = vld [vmem:[%s20 + $0x10] sm:$0xff]
  %v6897 = vld [vmem:[%s20 + $0x18] sm:$0xff]
  %v6898 = vld [vmem:[%s20 + $0x20] sm:$0xff]
  %v6899 = vld [vmem:[%s20 + $0x28] sm:$0xff]
  %v6900 = vld [vmem:[%s20 + $0x30] sm:$0xff]
  %v6901 = vld [vmem:[%s20 + $0x38] sm:$0xff]
  %v6902 = vld [vmem:[%s20 + $0x40] sm:$0xff]
  %v6903 = vld [vmem:[%s20 + $0x48] sm:$0xff]
  %v6904 = vld [vmem:[%s20 + $0x50] sm:$0xff]
  %v6905 = vld [vmem:[%s20 + $0x58] sm:$0xff]
  %v6906 = vld [vmem:[%s20 + $0x60] sm:$0xff]
  %v6907 = vld [vmem:[%s20 + $0x68] sm:$0xff]
  %v6908 = vld [vmem:[%s20 + $0x70] sm:$0xff]
  %v6909 = vld [vmem:[%s20 + $0x78] sm:$0xff]
  %v6910 = vld [vmem:[%s20 + $0x80] sm:$0xff]
  %v6911 = vld [vmem:[%s20 + $0x88] sm:$0xff]
  %v6912 = vld [vmem:[%s20 + $0x90] sm:$0xff]
  %v6913 = vld [vmem:[%s20 + $0x98] sm:$0xff]
  %v6914 = vld [vmem:[%s20 + $0xa0] sm:$0xff]
  %v6915 = vld [vmem:[%s20 + $0xa8] sm:$0xff]
  %v6916 = vld [vmem:[%s20 + $0xb0] sm:$0xff]
  %v6917 = vld [vmem:[%s20 + $0xb8] sm:$0xff]
  %v6918 = vld [vmem:[%s20 + $0xc0] sm:$0xff]
  %v6919 = vld [vmem:[%s20 + $0xc8] sm:$0xff]
  %v6920 = vld [vmem:[%s20 + $0xd0] sm:$0xff]
  %v6921 = vld [vmem:[%s20 + $0xd8] sm:$0xff]
  %v6922 = vld [vmem:[%s20 + $0xe0] sm:$0xff]
  %v6923 = vld [vmem:[%s20 + $0xe8] sm:$0xff]
  %v6924 = vld [vmem:[%s20 + $0xf0] sm:$0xff]
  %v6925 = vld [vmem:[%s20 + $0xf8] sm:$0xff]
  %s6926 = scalar_lea.vmem %s19, 16
  %v6927 = vld [vmem:[%s6926] sm:$0xf]
  %v6928 = vld [vmem:[%s6926 + $0x4] sm:$0xf]
  %v6929 = vld [vmem:[%s6926 + $0x8] sm:$0xf]
  %v6930 = vld [vmem:[%s6926 + $0xc] sm:$0xf]
  %v6935 = vunpack.c.l.b16 %v6927
  %v6936 = vunpack.c.l.b16 %v6928
  %v6937 = vunpack.c.l.b16 %v6929
  %v6938 = vunpack.c.l.b16 %v6930
  %v6939 = vpack.c.b16 %v6936, %v6935
  %v6940 = vpack.c.b16 %v6938, %v6937
  %v6942 = vsel %vm2155, %v6939, 0
  %v6945 = vsel %vm2155, %v6940, 0
  %6947 = vmatprep.subr.bf16.mxu0 %v6816
  %6948 = vmatpush1.bf16.msra.mxu0 %v6815
  %6949 = vmatprep.subr.bf16.mxu0 0
  %6950 = vmatpush1.bf16.msra.mxu0 0
  %6951 = vmatprep.subr.bf16.mxu0 0
  %6952 = vmatpush1.bf16.msra.mxu0 0
  %6953 = vmatprep.subr.bf16.mxu0 0
  %6954 = vmatpush1.bf16.msra.mxu0 0
  %6955 = vmatprep.subr.bf16.mxu0 0
  %6956 = vmatpush1.bf16.msra.mxu0 0
  %6957 = vmatprep.subr.bf16.mxu0 0
  %6958 = vmatpush1.bf16.msra.mxu0 0
  %6959 = vmatprep.subr.bf16.mxu0 0
  %6960 = vmatpush1.bf16.msra.mxu0 0
  %6961 = vmatprep.subr.bf16.mxu0 0
  %6962 = vmatpush1.bf16.msra.mxu0 0
  %6963 = vmatprep.subr.bf16.mxu0 0
  %6964 = vmatpush1.bf16.msra.mxu0 0
  %6965 = vmatprep.subr.bf16.mxu0 0
  %6966 = vmatpush1.bf16.msra.mxu0 0
  %6967 = vmatprep.subr.bf16.mxu0 0
  %6968 = vmatpush1.bf16.msra.mxu0 0
  %6969 = vmatprep.subr.bf16.mxu0 0
  %6970 = vmatpush1.bf16.msra.mxu0 0
  %6971 = vmatprep.subr.bf16.mxu0 0
  %6972 = vmatpush1.bf16.msra.mxu0 0
  %6973 = vmatprep.subr.bf16.mxu0 0
  %6974 = vmatpush1.bf16.msra.mxu0 0
  %6975 = vmatprep.subr.bf16.mxu0 0
  %6976 = vmatpush1.bf16.msra.mxu0 0
  %6977 = vmatprep.subr.bf16.mxu0 0
  %6978 = vmatpush1.bf16.msra.mxu0 0
  %6979 = vmatprep.mubr.bf16.mxu0 0
  %6980 = vmatmul.mubr.bf16.gmra.mrb[0].mxu0 %v6942
  %v6981 = vpop.f32.mrb[0].mxu0
  %v6982 = vadd.f32 0.0, %v6981
  %v6983 = vpop.f32.mrb[0].mxu0
  %v6984 = vadd.f32 0.0, %v6983
  %v6985 = vpop.f32.mrb[0].mxu0
  %v6986 = vadd.f32 0.0, %v6985
  %v6987 = vpop.f32.mrb[0].mxu0
  %v6988 = vadd.f32 0.0, %v6987
  %6989 = vmatprep.mubr.bf16.mxu0 0
  %6990 = vmatmul.mubr.bf16.gmra.mrb[0].mxu0 %v6945
  %v6991 = vpop.f32.mrb[0].mxu0
  %v6992 = vadd.f32 0.0, %v6991
  %v6993 = vpop.f32.mrb[0].mxu0
  %v6994 = vadd.f32 0.0, %v6993
  %v6995 = vpop.f32.mrb[0].mxu0
  %v6996 = vadd.f32 0.0, %v6995
  %v6997 = vpop.f32.mrb[0].mxu0
  %v6998 = vadd.f32 0.0, %v6997
  %6999 = vdwg.mxu0
  %v7000 = vpack.c.bf16 %v6986, %v6982
  %v7001 = vpack.c.bf16 %v6988, %v6984
  %v7002 = vpack.c.bf16 %v6996, %v6992
  %v7003 = vpack.c.bf16 %v6998, %v6994
  %s7004 = scalar_lea.vmem %s20, 256
  %v7005 = vld [vmem:[%s7004] sm:$0xff]
  %v7006 = vld [vmem:[%s7004 + $0x8] sm:$0xff]
  %v7007 = vld [vmem:[%s7004 + $0x10] sm:$0xff]
  %v7008 = vld [vmem:[%s7004 + $0x18] sm:$0xff]
  %v7009 = vld [vmem:[%s7004 + $0x20] sm:$0xff]
  %v7010 = vld [vmem:[%s7004 + $0x28] sm:$0xff]
  %v7011 = vld [vmem:[%s7004 + $0x30] sm:$0xff]
  %v7012 = vld [vmem:[%s7004 + $0x38] sm:$0xff]
  %v7013 = vld [vmem:[%s7004 + $0x40] sm:$0xff]
  %v7014 = vld [vmem:[%s7004 + $0x48] sm:$0xff]
  %v7015 = vld [vmem:[%s7004 + $0x50] sm:$0xff]
  %v7016 = vld [vmem:[%s7004 + $0x58] sm:$0xff]
  %v7017 = vld [vmem:[%s7004 + $0x60] sm:$0xff]
  %v7018 = vld [vmem:[%s7004 + $0x68] sm:$0xff]
  %v7019 = vld [vmem:[%s7004 + $0x70] sm:$0xff]
  %v7020 = vld [vmem:[%s7004 + $0x78] sm:$0xff]
  %v7021 = vld [vmem:[%s7004 + $0x80] sm:$0xff]
  %v7022 = vld [vmem:[%s7004 + $0x88] sm:$0xff]
  %v7023 = vld [vmem:[%s7004 + $0x90] sm:$0xff]
  %v7024 = vld [vmem:[%s7004 + $0x98] sm:$0xff]
  %v7025 = vld [vmem:[%s7004 + $0xa0] sm:$0xff]
  %v7026 = vld [vmem:[%s7004 + $0xa8] sm:$0xff]
  %v7027 = vld [vmem:[%s7004 + $0xb0] sm:$0xff]
  %v7028 = vld [vmem:[%s7004 + $0xb8] sm:$0xff]
  %v7029 = vld [vmem:[%s7004 + $0xc0] sm:$0xff]
  %v7030 = vld [vmem:[%s7004 + $0xc8] sm:$0xff]
  %v7031 = vld [vmem:[%s7004 + $0xd0] sm:$0xff]
  %v7032 = vld [vmem:[%s7004 + $0xd8] sm:$0xff]
  %v7033 = vld [vmem:[%s7004 + $0xe0] sm:$0xff]
  %v7034 = vld [vmem:[%s7004 + $0xe8] sm:$0xff]
  %v7035 = vld [vmem:[%s7004 + $0xf0] sm:$0xff]
  %v7036 = vld [vmem:[%s7004 + $0xf8] sm:$0xff]
  %v7069 = vunpack.c.l.b16 %v7005
  %v7070 = vunpack.c.h.b16 %v7005
  %v7071 = vunpack.c.l.b16 %v7006
  %v7072 = vunpack.c.h.b16 %v7006
  %v7073 = vunpack.c.l.b16 %v7007
  %v7074 = vunpack.c.h.b16 %v7007
  %v7075 = vunpack.c.l.b16 %v7008
  %v7076 = vunpack.c.h.b16 %v7008
  %v7077 = vunpack.c.l.b16 %v7009
  %v7078 = vunpack.c.h.b16 %v7009
  %v7079 = vunpack.c.l.b16 %v7010
  %v7080 = vunpack.c.h.b16 %v7010
  %v7081 = vunpack.c.l.b16 %v7011
  %v7082 = vunpack.c.h.b16 %v7011
  %v7083 = vunpack.c.l.b16 %v7012
  %v7084 = vunpack.c.h.b16 %v7012
  %v7085 = vunpack.c.l.b16 %v7013
  %v7086 = vunpack.c.h.b16 %v7013
  %v7087 = vunpack.c.l.b16 %v7014
  %v7088 = vunpack.c.h.b16 %v7014
  %v7089 = vunpack.c.l.b16 %v7015
  %v7090 = vunpack.c.h.b16 %v7015
  %v7091 = vunpack.c.l.b16 %v7016
  %v7092 = vunpack.c.h.b16 %v7016
  %v7093 = vunpack.c.l.b16 %v7017
  %v7094 = vunpack.c.h.b16 %v7017
  %v7095 = vunpack.c.l.b16 %v7018
  %v7096 = vunpack.c.h.b16 %v7018
  %v7097 = vunpack.c.l.b16 %v7019
  %v7098 = vunpack.c.h.b16 %v7019
  %v7099 = vunpack.c.l.b16 %v7020
  %v7100 = vunpack.c.h.b16 %v7020
  %v7101 = vunpack.c.l.b16 %v7021
  %v7102 = vunpack.c.h.b16 %v7021
  %v7103 = vunpack.c.l.b16 %v7022
  %v7104 = vunpack.c.h.b16 %v7022
  %v7105 = vunpack.c.l.b16 %v7023
  %v7106 = vunpack.c.h.b16 %v7023
  %v7107 = vunpack.c.l.b16 %v7024
  %v7108 = vunpack.c.h.b16 %v7024
  %v7109 = vunpack.c.l.b16 %v7025
  %v7110 = vunpack.c.h.b16 %v7025
  %v7111 = vunpack.c.l.b16 %v7026
  %v7112 = vunpack.c.h.b16 %v7026
  %v7113 = vunpack.c.l.b16 %v7027
  %v7114 = vunpack.c.h.b16 %v7027
  %v7115 = vunpack.c.l.b16 %v7028
  %v7116 = vunpack.c.h.b16 %v7028
  %v7117 = vunpack.c.l.b16 %v7029
  %v7118 = vunpack.c.h.b16 %v7029
  %v7119 = vunpack.c.l.b16 %v7030
  %v7120 = vunpack.c.h.b16 %v7030
  %v7121 = vunpack.c.l.b16 %v7031
  %v7122 = vunpack.c.h.b16 %v7031
  %v7123 = vunpack.c.l.b16 %v7032
  %v7124 = vunpack.c.h.b16 %v7032
  %v7125 = vunpack.c.l.b16 %v7033
  %v7126 = vunpack.c.h.b16 %v7033
  %v7127 = vunpack.c.l.b16 %v7034
  %v7128 = vunpack.c.h.b16 %v7034
  %v7129 = vunpack.c.l.b16 %v7035
  %v7130 = vunpack.c.h.b16 %v7035
  %v7131 = vunpack.c.l.b16 %v7036
  %v7132 = vunpack.c.h.b16 %v7036
  %v7133 = vpack.c.b16 %v7071, %v7069
  %v7134 = vpack.c.b16 %v7072, %v7070
  %v7135 = vpack.c.b16 %v7075, %v7073
  %v7136 = vpack.c.b16 %v7076, %v7074
  %v7137 = vpack.c.b16 %v7079, %v7077
  %v7138 = vpack.c.b16 %v7080, %v7078
  %v7139 = vpack.c.b16 %v7083, %v7081
  %v7140 = vpack.c.b16 %v7084, %v7082
  %v7141 = vpack.c.b16 %v7087, %v7085
  %v7142 = vpack.c.b16 %v7088, %v7086
  %v7143 = vpack.c.b16 %v7091, %v7089
  %v7144 = vpack.c.b16 %v7092, %v7090
  %v7145 = vpack.c.b16 %v7095, %v7093
  %v7146 = vpack.c.b16 %v7096, %v7094
  %v7147 = vpack.c.b16 %v7099, %v7097
  %v7148 = vpack.c.b16 %v7100, %v7098
  %v7149 = vpack.c.b16 %v7103, %v7101
  %v7150 = vpack.c.b16 %v7104, %v7102
  %v7151 = vpack.c.b16 %v7107, %v7105
  %v7152 = vpack.c.b16 %v7108, %v7106
  %v7153 = vpack.c.b16 %v7111, %v7109
  %v7154 = vpack.c.b16 %v7112, %v7110
  %v7155 = vpack.c.b16 %v7115, %v7113
  %v7156 = vpack.c.b16 %v7116, %v7114
  %v7157 = vpack.c.b16 %v7119, %v7117
  %v7158 = vpack.c.b16 %v7120, %v7118
  %v7159 = vpack.c.b16 %v7123, %v7121
  %v7160 = vpack.c.b16 %v7124, %v7122
  %v7161 = vpack.c.b16 %v7127, %v7125
  %v7162 = vpack.c.b16 %v7128, %v7126
  %v7163 = vpack.c.b16 %v7131, %v7129
  %v7164 = vpack.c.b16 %v7132, %v7130
  %7197 = vmatprep.subr.bf16.mxu0 %v7134
  %7198 = vmatpush1.bf16.msra.mxu0 %v7133
  %7199 = vmatprep.subr.bf16.mxu0 %v7136
  %7200 = vmatpush1.bf16.msra.mxu0 %v7135
  %7201 = vmatprep.subr.bf16.mxu0 %v7138
  %7202 = vmatpush1.bf16.msra.mxu0 %v7137
  %7203 = vmatprep.subr.bf16.mxu0 %v7140
  %7204 = vmatpush1.bf16.msra.mxu0 %v7139
  %7205 = vmatprep.subr.bf16.mxu0 %v7142
  %7206 = vmatpush1.bf16.msra.mxu0 %v7141
  %7207 = vmatprep.subr.bf16.mxu0 %v7144
  %7208 = vmatpush1.bf16.msra.mxu0 %v7143
  %7209 = vmatprep.subr.bf16.mxu0 %v7146
  %7210 = vmatpush1.bf16.msra.mxu0 %v7145
  %7211 = vmatprep.subr.bf16.mxu0 %v7148
  %7212 = vmatpush1.bf16.msra.mxu0 %v7147
  %7213 = vmatprep.subr.bf16.mxu0 %v7150
  %7214 = vmatpush1.bf16.msra.mxu0 %v7149
  %7215 = vmatprep.subr.bf16.mxu0 %v7152
  %7216 = vmatpush1.bf16.msra.mxu0 %v7151
  %7217 = vmatprep.subr.bf16.mxu0 %v7154
  %7218 = vmatpush1.bf16.msra.mxu0 %v7153
  %7219 = vmatprep.subr.bf16.mxu0 %v7156
  %7220 = vmatpush1.bf16.msra.mxu0 %v7155
  %7221 = vmatprep.subr.bf16.mxu0 %v7158
  %7222 = vmatpush1.bf16.msra.mxu0 %v7157
  %7223 = vmatprep.subr.bf16.mxu0 %v7160
  %7224 = vmatpush1.bf16.msra.mxu0 %v7159
  %7225 = vmatprep.subr.bf16.mxu0 %v7162
  %7226 = vmatpush1.bf16.msra.mxu0 %v7161
  %7227 = vmatprep.subr.bf16.mxu0 %v7164
  %7228 = vmatpush1.bf16.msra.mxu0 %v7163
  %7229 = vmatprep.mubr.bf16.mxu0 %v7001
  %7230 = vmatmul.mubr.bf16.gmra.mrb[0].mxu0 %v7000
  %v7231 = vpop.f32.mrb[0].mxu0
  %v7232 = vadd.f32 0.0, %v7231
  %v7233 = vpop.f32.mrb[0].mxu0
  %v7234 = vadd.f32 0.0, %v7233
  %v7235 = vpop.f32.mrb[0].mxu0
  %v7236 = vadd.f32 0.0, %v7235
  %v7237 = vpop.f32.mrb[0].mxu0
  %v7238 = vadd.f32 0.0, %v7237
  %7239 = vmatprep.mubr.bf16.mxu0 %v7003
  %7240 = vmatmul.mubr.bf16.gmra.mrb[0].mxu0 %v7002
  %v7241 = vpop.f32.mrb[0].mxu0
  %v7242 = vadd.f32 0.0, %v7241
  %v7243 = vpop.f32.mrb[0].mxu0
  %v7244 = vadd.f32 0.0, %v7243
  %v7245 = vpop.f32.mrb[0].mxu0
  %v7246 = vadd.f32 0.0, %v7245
  %v7247 = vpop.f32.mrb[0].mxu0
  %v7248 = vadd.f32 0.0, %v7247
  %7249 = vdwg.mxu0
  %v7282 = vunpack.c.l.b16 %v6894
  %v7283 = vunpack.c.h.b16 %v6894
  %v7284 = vunpack.c.l.b16 %v6895
  %v7285 = vunpack.c.h.b16 %v6895
  %v7286 = vunpack.c.l.b16 %v6896
  %v7287 = vunpack.c.h.b16 %v6896
  %v7288 = vunpack.c.l.b16 %v6897
  %v7289 = vunpack.c.h.b16 %v6897
  %v7290 = vunpack.c.l.b16 %v6898
  %v7291 = vunpack.c.h.b16 %v6898
  %v7292 = vunpack.c.l.b16 %v6899
  %v7293 = vunpack.c.h.b16 %v6899
  %v7294 = vunpack.c.l.b16 %v6900
  %v7295 = vunpack.c.h.b16 %v6900
  %v7296 = vunpack.c.l.b16 %v6901
  %v7297 = vunpack.c.h.b16 %v6901
  %v7298 = vunpack.c.l.b16 %v6902
  %v7299 = vunpack.c.h.b16 %v6902
  %v7300 = vunpack.c.l.b16 %v6903
  %v7301 = vunpack.c.h.b16 %v6903
  %v7302 = vunpack.c.l.b16 %v6904
  %v7303 = vunpack.c.h.b16 %v6904
  %v7304 = vunpack.c.l.b16 %v6905
  %v7305 = vunpack.c.h.b16 %v6905
  %v7306 = vunpack.c.l.b16 %v6906
  %v7307 = vunpack.c.h.b16 %v6906
  %v7308 = vunpack.c.l.b16 %v6907
  %v7309 = vunpack.c.h.b16 %v6907
  %v7310 = vunpack.c.l.b16 %v6908
  %v7311 = vunpack.c.h.b16 %v6908
  %v7312 = vunpack.c.l.b16 %v6909
  %v7313 = vunpack.c.h.b16 %v6909
  %v7314 = vunpack.c.l.b16 %v6910
  %v7315 = vunpack.c.h.b16 %v6910
  %v7316 = vunpack.c.l.b16 %v6911
  %v7317 = vunpack.c.h.b16 %v6911
  %v7318 = vunpack.c.l.b16 %v6912
  %v7319 = vunpack.c.h.b16 %v6912
  %v7320 = vunpack.c.l.b16 %v6913
  %v7321 = vunpack.c.h.b16 %v6913
  %v7322 = vunpack.c.l.b16 %v6914
  %v7323 = vunpack.c.h.b16 %v6914
  %v7324 = vunpack.c.l.b16 %v6915
  %v7325 = vunpack.c.h.b16 %v6915
  %v7326 = vunpack.c.l.b16 %v6916
  %v7327 = vunpack.c.h.b16 %v6916
  %v7328 = vunpack.c.l.b16 %v6917
  %v7329 = vunpack.c.h.b16 %v6917
  %v7330 = vunpack.c.l.b16 %v6918
  %v7331 = vunpack.c.h.b16 %v6918
  %v7332 = vunpack.c.l.b16 %v6919
  %v7333 = vunpack.c.h.b16 %v6919
  %v7334 = vunpack.c.l.b16 %v6920
  %v7335 = vunpack.c.h.b16 %v6920
  %v7336 = vunpack.c.l.b16 %v6921
  %v7337 = vunpack.c.h.b16 %v6921
  %v7338 = vunpack.c.l.b16 %v6922
  %v7339 = vunpack.c.h.b16 %v6922
  %v7340 = vunpack.c.l.b16 %v6923
  %v7341 = vunpack.c.h.b16 %v6923
  %v7342 = vunpack.c.l.b16 %v6924
  %v7343 = vunpack.c.h.b16 %v6924
  %v7344 = vunpack.c.l.b16 %v6925
  %v7345 = vunpack.c.h.b16 %v6925
  %v7346 = vpack.c.b16 %v7284, %v7282
  %v7347 = vpack.c.b16 %v7285, %v7283
  %v7348 = vpack.c.b16 %v7288, %v7286
  %v7349 = vpack.c.b16 %v7289, %v7287
  %v7350 = vpack.c.b16 %v7292, %v7290
  %v7351 = vpack.c.b16 %v7293, %v7291
  %v7352 = vpack.c.b16 %v7296, %v7294
  %v7353 = vpack.c.b16 %v7297, %v7295
  %v7354 = vpack.c.b16 %v7300, %v7298
  %v7355 = vpack.c.b16 %v7301, %v7299
  %v7356 = vpack.c.b16 %v7304, %v7302
  %v7357 = vpack.c.b16 %v7305, %v7303
  %v7358 = vpack.c.b16 %v7308, %v7306
  %v7359 = vpack.c.b16 %v7309, %v7307
  %v7360 = vpack.c.b16 %v7312, %v7310
  %v7361 = vpack.c.b16 %v7313, %v7311
  %v7362 = vpack.c.b16 %v7316, %v7314
  %v7363 = vpack.c.b16 %v7317, %v7315
  %v7364 = vpack.c.b16 %v7320, %v7318
  %v7365 = vpack.c.b16 %v7321, %v7319
  %v7366 = vpack.c.b16 %v7324, %v7322
  %v7367 = vpack.c.b16 %v7325, %v7323
  %v7368 = vpack.c.b16 %v7328, %v7326
  %v7369 = vpack.c.b16 %v7329, %v7327
  %v7370 = vpack.c.b16 %v7332, %v7330
  %v7371 = vpack.c.b16 %v7333, %v7331
  %v7372 = vpack.c.b16 %v7336, %v7334
  %v7373 = vpack.c.b16 %v7337, %v7335
  %v7374 = vpack.c.b16 %v7340, %v7338
  %v7375 = vpack.c.b16 %v7341, %v7339
  %v7376 = vpack.c.b16 %v7344, %v7342
  %v7377 = vpack.c.b16 %v7345, %v7343
  %7410 = vmatprep.subr.bf16.mxu0 %v7347
  %7411 = vmatpush1.bf16.msra.mxu0 %v7346
  %7412 = vmatprep.subr.bf16.mxu0 %v7349
  %7413 = vmatpush1.bf16.msra.mxu0 %v7348
  %7414 = vmatprep.subr.bf16.mxu0 %v7351
  %7415 = vmatpush1.bf16.msra.mxu0 %v7350
  %7416 = vmatprep.subr.bf16.mxu0 %v7353
  %7417 = vmatpush1.bf16.msra.mxu0 %v7352
  %7418 = vmatprep.subr.bf16.mxu0 %v7355
  %7419 = vmatpush1.bf16.msra.mxu0 %v7354
  %7420 = vmatprep.subr.bf16.mxu0 %v7357
  %7421 = vmatpush1.bf16.msra.mxu0 %v7356
  %7422 = vmatprep.subr.bf16.mxu0 %v7359
  %7423 = vmatpush1.bf16.msra.mxu0 %v7358
  %7424 = vmatprep.subr.bf16.mxu0 %v7361
  %7425 = vmatpush1.bf16.msra.mxu0 %v7360
  %7426 = vmatprep.subr.bf16.mxu0 %v7363
  %7427 = vmatpush1.bf16.msra.mxu0 %v7362
  %7428 = vmatprep.subr.bf16.mxu0 %v7365
  %7429 = vmatpush1.bf16.msra.mxu0 %v7364
  %7430 = vmatprep.subr.bf16.mxu0 %v7367
  %7431 = vmatpush1.bf16.msra.mxu0 %v7366
  %7432 = vmatprep.subr.bf16.mxu0 %v7369
  %7433 = vmatpush1.bf16.msra.mxu0 %v7368
  %7434 = vmatprep.subr.bf16.mxu0 %v7371
  %7435 = vmatpush1.bf16.msra.mxu0 %v7370
  %7436 = vmatprep.subr.bf16.mxu0 %v7373
  %7437 = vmatpush1.bf16.msra.mxu0 %v7372
  %7438 = vmatprep.subr.bf16.mxu0 %v7375
  %7439 = vmatpush1.bf16.msra.mxu0 %v7374
  %7440 = vmatprep.subr.bf16.mxu0 %v7377
  %7441 = vmatpush1.bf16.msra.mxu0 %v7376
  %7442 = vmatprep.mubr.bf16.mxu0 %v6891
  %7443 = vmatmul.mubr.bf16.gmra.mrb[0].mxu0 %v6890
  %v7444 = vpop.f32.mrb[0].mxu0
  %v7445 = vadd.f32 %v7232, %v7444
  %v7446 = vpop.f32.mrb[0].mxu0
  %v7447 = vadd.f32 %v7234, %v7446
  %v7448 = vpop.f32.mrb[0].mxu0
  %v7449 = vadd.f32 %v7236, %v7448
  %v7450 = vpop.f32.mrb[0].mxu0
  %v7451 = vadd.f32 %v7238, %v7450
  %7452 = vmatprep.mubr.bf16.mxu0 %v6893
  %7453 = vmatmul.mubr.bf16.gmra.mrb[0].mxu0 %v6892
  %v7454 = vpop.f32.mrb[0].mxu0
  %v7455 = vadd.f32 %v7242, %v7454
  %v7456 = vpop.f32.mrb[0].mxu0
  %v7457 = vadd.f32 %v7244, %v7456
  %v7458 = vpop.f32.mrb[0].mxu0
  %v7459 = vadd.f32 %v7246, %v7458
  %v7460 = vpop.f32.mrb[0].mxu0
  %v7461 = vadd.f32 %v7248, %v7460
  %7462 = vdwg.mxu0
  %s7463 = scalar_lea.vmem %s19, 32
  %v7464 = vld [vmem:[%s7463] sm:$0xf]
  %v7465 = vld [vmem:[%s7463 + $0x4] sm:$0xf]
  %v7466 = vld [vmem:[%s7463 + $0x8] sm:$0xf]
  %v7467 = vld [vmem:[%s7463 + $0xc] sm:$0xf]
  %v7472 = vunpack.c.l.b16 %v7464
  %v7473 = vunpack.c.l.b16 %v7465
  %v7474 = vunpack.c.l.b16 %v7466
  %v7475 = vunpack.c.l.b16 %v7467
  %v7476 = vpack.c.b16 %v7473, %v7472
  %v7477 = vpack.c.b16 %v7475, %v7474
  %v7479 = vsel %vm2155, %v7476, 0
  %v7482 = vsel %vm2155, %v7477, 0
  %7484 = vmatprep.subr.bf16.mxu0 %v6816
  %7485 = vmatpush1.bf16.msra.mxu0 %v6815
  %7486 = vmatprep.subr.bf16.mxu0 0
  %7487 = vmatpush1.bf16.msra.mxu0 0
  %7488 = vmatprep.subr.bf16.mxu0 0
  %7489 = vmatpush1.bf16.msra.mxu0 0
  %7490 = vmatprep.subr.bf16.mxu0 0
  %7491 = vmatpush1.bf16.msra.mxu0 0
  %7492 = vmatprep.subr.bf16.mxu0 0
  %7493 = vmatpush1.bf16.msra.mxu0 0
  %7494 = vmatprep.subr.bf16.mxu0 0
  %7495 = vmatpush1.bf16.msra.mxu0 0
  %7496 = vmatprep.subr.bf16.mxu0 0
  %7497 = vmatpush1.bf16.msra.mxu0 0
  %7498 = vmatprep.subr.bf16.mxu0 0
  %7499 = vmatpush1.bf16.msra.mxu0 0
  %7500 = vmatprep.subr.bf16.mxu0 0
  %7501 = vmatpush1.bf16.msra.mxu0 0
  %7502 = vmatprep.subr.bf16.mxu0 0
  %7503 = vmatpush1.bf16.msra.mxu0 0
  %7504 = vmatprep.subr.bf16.mxu0 0
  %7505 = vmatpush1.bf16.msra.mxu0 0
  %7506 = vmatprep.subr.bf16.mxu0 0
  %7507 = vmatpush1.bf16.msra.mxu0 0
  %7508 = vmatprep.subr.bf16.mxu0 0
  %7509 = vmatpush1.bf16.msra.mxu0 0
  %7510 = vmatprep.subr.bf16.mxu0 0
  %7511 = vmatpush1.bf16.msra.mxu0 0
  %7512 = vmatprep.subr.bf16.mxu0 0
  %7513 = vmatpush1.bf16.msra.mxu0 0
  %7514 = vmatprep.subr.bf16.mxu0 0
  %7515 = vmatpush1.bf16.msra.mxu0 0
  %7516 = vmatprep.mubr.bf16.mxu0 0
  %7517 = vmatmul.mubr.bf16.gmra.mrb[0].mxu0 %v7479
  %v7518 = vpop.f32.mrb[0].mxu0
  %v7519 = vadd.f32 0.0, %v7518
  %v7520 = vpop.f32.mrb[0].mxu0
  %v7521 = vadd.f32 0.0, %v7520
  %v7522 = vpop.f32.mrb[0].mxu0
  %v7523 = vadd.f32 0.0, %v7522
  %v7524 = vpop.f32.mrb[0].mxu0
  %v7525 = vadd.f32 0.0, %v7524
  %7526 = vmatprep.mubr.bf16.mxu0 0
  %7527 = vmatmul.mubr.bf16.gmra.mrb[0].mxu0 %v7482
  %v7528 = vpop.f32.mrb[0].mxu0
  %v7529 = vadd.f32 0.0, %v7528
  %v7530 = vpop.f32.mrb[0].mxu0
  %v7531 = vadd.f32 0.0, %v7530
  %v7532 = vpop.f32.mrb[0].mxu0
  %v7533 = vadd.f32 0.0, %v7532
  %v7534 = vpop.f32.mrb[0].mxu0
  %v7535 = vadd.f32 0.0, %v7534
  %7536 = vdwg.mxu0
  %v7537 = vpack.c.bf16 %v7523, %v7519
  %v7538 = vpack.c.bf16 %v7525, %v7521
  %v7539 = vpack.c.bf16 %v7533, %v7529
  %v7540 = vpack.c.bf16 %v7535, %v7531
  %s7541 = scalar_lea.vmem %s20, 512
  %v7542 = vld [vmem:[%s7541] sm:$0xff]
  %v7543 = vld [vmem:[%s7541 + $0x8] sm:$0xff]
  %v7544 = vld [vmem:[%s7541 + $0x10] sm:$0xff]
  %v7545 = vld [vmem:[%s7541 + $0x18] sm:$0xff]
  %v7546 = vld [vmem:[%s7541 + $0x20] sm:$0xff]
  %v7547 = vld [vmem:[%s7541 + $0x28] sm:$0xff]
  %v7548 = vld [vmem:[%s7541 + $0x30] sm:$0xff]
  %v7549 = vld [vmem:[%s7541 + $0x38] sm:$0xff]
  %v7550 = vld [vmem:[%s7541 + $0x40] sm:$0xff]
  %v7551 = vld [vmem:[%s7541 + $0x48] sm:$0xff]
  %v7552 = vld [vmem:[%s7541 + $0x50] sm:$0xff]
  %v7553 = vld [vmem:[%s7541 + $0x58] sm:$0xff]
  %v7554 = vld [vmem:[%s7541 + $0x60] sm:$0xff]
  %v7555 = vld [vmem:[%s7541 + $0x68] sm:$0xff]
  %v7556 = vld [vmem:[%s7541 + $0x70] sm:$0xff]
  %v7557 = vld [vmem:[%s7541 + $0x78] sm:$0xff]
  %v7558 = vld [vmem:[%s7541 + $0x80] sm:$0xff]
  %v7559 = vld [vmem:[%s7541 + $0x88] sm:$0xff]
  %v7560 = vld [vmem:[%s7541 + $0x90] sm:$0xff]
  %v7561 = vld [vmem:[%s7541 + $0x98] sm:$0xff]
  %v7562 = vld [vmem:[%s7541 + $0xa0] sm:$0xff]
  %v7563 = vld [vmem:[%s7541 + $0xa8] sm:$0xff]
  %v7564 = vld [vmem:[%s7541 + $0xb0] sm:$0xff]
  %v7565 = vld [vmem:[%s7541 + $0xb8] sm:$0xff]
  %v7566 = vld [vmem:[%s7541 + $0xc0] sm:$0xff]
  %v7567 = vld [vmem:[%s7541 + $0xc8] sm:$0xff]
  %v7568 = vld [vmem:[%s7541 + $0xd0] sm:$0xff]
  %v7569 = vld [vmem:[%s7541 + $0xd8] sm:$0xff]
  %v7570 = vld [vmem:[%s7541 + $0xe0] sm:$0xff]
  %v7571 = vld [vmem:[%s7541 + $0xe8] sm:$0xff]
  %v7572 = vld [vmem:[%s7541 + $0xf0] sm:$0xff]
  %v7573 = vld [vmem:[%s7541 + $0xf8] sm:$0xff]
  %v7606 = vunpack.c.l.b16 %v7542
  %v7607 = vunpack.c.h.b16 %v7542
  %v7608 = vunpack.c.l.b16 %v7543
  %v7609 = vunpack.c.h.b16 %v7543
  %v7610 = vunpack.c.l.b16 %v7544
  %v7611 = vunpack.c.h.b16 %v7544
  %v7612 = vunpack.c.l.b16 %v7545
  %v7613 = vunpack.c.h.b16 %v7545
  %v7614 = vunpack.c.l.b16 %v7546
  %v7615 = vunpack.c.h.b16 %v7546
  %v7616 = vunpack.c.l.b16 %v7547
  %v7617 = vunpack.c.h.b16 %v7547
  %v7618 = vunpack.c.l.b16 %v7548
  %v7619 = vunpack.c.h.b16 %v7548
  %v7620 = vunpack.c.l.b16 %v7549
  %v7621 = vunpack.c.h.b16 %v7549
  %v7622 = vunpack.c.l.b16 %v7550
  %v7623 = vunpack.c.h.b16 %v7550
  %v7624 = vunpack.c.l.b16 %v7551
  %v7625 = vunpack.c.h.b16 %v7551
  %v7626 = vunpack.c.l.b16 %v7552
  %v7627 = vunpack.c.h.b16 %v7552
  %v7628 = vunpack.c.l.b16 %v7553
  %v7629 = vunpack.c.h.b16 %v7553
  %v7630 = vunpack.c.l.b16 %v7554
  %v7631 = vunpack.c.h.b16 %v7554
  %v7632 = vunpack.c.l.b16 %v7555
  %v7633 = vunpack.c.h.b16 %v7555
  %v7634 = vunpack.c.l.b16 %v7556
  %v7635 = vunpack.c.h.b16 %v7556
  %v7636 = vunpack.c.l.b16 %v7557
  %v7637 = vunpack.c.h.b16 %v7557
  %v7638 = vunpack.c.l.b16 %v7558
  %v7639 = vunpack.c.h.b16 %v7558
  %v7640 = vunpack.c.l.b16 %v7559
  %v7641 = vunpack.c.h.b16 %v7559
  %v7642 = vunpack.c.l.b16 %v7560
  %v7643 = vunpack.c.h.b16 %v7560
  %v7644 = vunpack.c.l.b16 %v7561
  %v7645 = vunpack.c.h.b16 %v7561
  %v7646 = vunpack.c.l.b16 %v7562
  %v7647 = vunpack.c.h.b16 %v7562
  %v7648 = vunpack.c.l.b16 %v7563
  %v7649 = vunpack.c.h.b16 %v7563
  %v7650 = vunpack.c.l.b16 %v7564
  %v7651 = vunpack.c.h.b16 %v7564
  %v7652 = vunpack.c.l.b16 %v7565
  %v7653 = vunpack.c.h.b16 %v7565
  %v7654 = vunpack.c.l.b16 %v7566
  %v7655 = vunpack.c.h.b16 %v7566
  %v7656 = vunpack.c.l.b16 %v7567
  %v7657 = vunpack.c.h.b16 %v7567
  %v7658 = vunpack.c.l.b16 %v7568
  %v7659 = vunpack.c.h.b16 %v7568
  %v7660 = vunpack.c.l.b16 %v7569
  %v7661 = vunpack.c.h.b16 %v7569
  %v7662 = vunpack.c.l.b16 %v7570
  %v7663 = vunpack.c.h.b16 %v7570
  %v7664 = vunpack.c.l.b16 %v7571
  %v7665 = vunpack.c.h.b16 %v7571
  %v7666 = vunpack.c.l.b16 %v7572
  %v7667 = vunpack.c.h.b16 %v7572
  %v7668 = vunpack.c.l.b16 %v7573
  %v7669 = vunpack.c.h.b16 %v7573
  %v7670 = vpack.c.b16 %v7608, %v7606
  %v7671 = vpack.c.b16 %v7609, %v7607
  %v7672 = vpack.c.b16 %v7612, %v7610
  %v7673 = vpack.c.b16 %v7613, %v7611
  %v7674 = vpack.c.b16 %v7616, %v7614
  %v7675 = vpack.c.b16 %v7617, %v7615
  %v7676 = vpack.c.b16 %v7620, %v7618
  %v7677 = vpack.c.b16 %v7621, %v7619
  %v7678 = vpack.c.b16 %v7624, %v7622
  %v7679 = vpack.c.b16 %v7625, %v7623
  %v7680 = vpack.c.b16 %v7628, %v7626
  %v7681 = vpack.c.b16 %v7629, %v7627
  %v7682 = vpack.c.b16 %v7632, %v7630
  %v7683 = vpack.c.b16 %v7633, %v7631
  %v7684 = vpack.c.b16 %v7636, %v7634
  %v7685 = vpack.c.b16 %v7637, %v7635
  %v7686 = vpack.c.b16 %v7640, %v7638
  %v7687 = vpack.c.b16 %v7641, %v7639
  %v7688 = vpack.c.b16 %v7644, %v7642
  %v7689 = vpack.c.b16 %v7645, %v7643
  %v7690 = vpack.c.b16 %v7648, %v7646
  %v7691 = vpack.c.b16 %v7649, %v7647
  %v7692 = vpack.c.b16 %v7652, %v7650
  %v7693 = vpack.c.b16 %v7653, %v7651
  %v7694 = vpack.c.b16 %v7656, %v7654
  %v7695 = vpack.c.b16 %v7657, %v7655
  %v7696 = vpack.c.b16 %v7660, %v7658
  %v7697 = vpack.c.b16 %v7661, %v7659
  %v7698 = vpack.c.b16 %v7664, %v7662
  %v7699 = vpack.c.b16 %v7665, %v7663
  %v7700 = vpack.c.b16 %v7668, %v7666
  %v7701 = vpack.c.b16 %v7669, %v7667
  %7734 = vmatprep.subr.bf16.mxu0 %v7671
  %7735 = vmatpush1.bf16.msra.mxu0 %v7670
  %7736 = vmatprep.subr.bf16.mxu0 %v7673
  %7737 = vmatpush1.bf16.msra.mxu0 %v7672
  %7738 = vmatprep.subr.bf16.mxu0 %v7675
  %7739 = vmatpush1.bf16.msra.mxu0 %v7674
  %7740 = vmatprep.subr.bf16.mxu0 %v7677
  %7741 = vmatpush1.bf16.msra.mxu0 %v7676
  %7742 = vmatprep.subr.bf16.mxu0 %v7679
  %7743 = vmatpush1.bf16.msra.mxu0 %v7678
  %7744 = vmatprep.subr.bf16.mxu0 %v7681
  %7745 = vmatpush1.bf16.msra.mxu0 %v7680
  %7746 = vmatprep.subr.bf16.mxu0 %v7683
  %7747 = vmatpush1.bf16.msra.mxu0 %v7682
  %7748 = vmatprep.subr.bf16.mxu0 %v7685
  %7749 = vmatpush1.bf16.msra.mxu0 %v7684
  %7750 = vmatprep.subr.bf16.mxu0 %v7687
  %7751 = vmatpush1.bf16.msra.mxu0 %v7686
  %7752 = vmatprep.subr.bf16.mxu0 %v7689
  %7753 = vmatpush1.bf16.msra.mxu0 %v7688
  %7754 = vmatprep.subr.bf16.mxu0 %v7691
  %7755 = vmatpush1.bf16.msra.mxu0 %v7690
  %7756 = vmatprep.subr.bf16.mxu0 %v7693
  %7757 = vmatpush1.bf16.msra.mxu0 %v7692
  %7758 = vmatprep.subr.bf16.mxu0 %v7695
  %7759 = vmatpush1.bf16.msra.mxu0 %v7694
  %7760 = vmatprep.subr.bf16.mxu0 %v7697
  %7761 = vmatpush1.bf16.msra.mxu0 %v7696
  %7762 = vmatprep.subr.bf16.mxu0 %v7699
  %7763 = vmatpush1.bf16.msra.mxu0 %v7698
  %7764 = vmatprep.subr.bf16.mxu0 %v7701
  %7765 = vmatpush1.bf16.msra.mxu0 %v7700
  %7766 = vmatprep.mubr.bf16.mxu0 %v7538
  %7767 = vmatmul.mubr.bf16.gmra.mrb[0].mxu0 %v7537
  %v7768 = vpop.f32.mrb[0].mxu0
  %v7769 = vadd.f32 0.0, %v7768
  %v7770 = vpop.f32.mrb[0].mxu0
  %v7771 = vadd.f32 0.0, %v7770
  %v7772 = vpop.f32.mrb[0].mxu0
  %v7773 = vadd.f32 0.0, %v7772
  %v7774 = vpop.f32.mrb[0].mxu0
  %v7775 = vadd.f32 0.0, %v7774
  %7776 = vmatprep.mubr.bf16.mxu0 %v7540
  %7777 = vmatmul.mubr.bf16.gmra.mrb[0].mxu0 %v7539
  %v7778 = vpop.f32.mrb[0].mxu0
  %v7779 = vadd.f32 0.0, %v7778
  %v7780 = vpop.f32.mrb[0].mxu0
  %v7781 = vadd.f32 0.0, %v7780
  %v7782 = vpop.f32.mrb[0].mxu0
  %v7783 = vadd.f32 0.0, %v7782
  %v7784 = vpop.f32.mrb[0].mxu0
  %v7785 = vadd.f32 0.0, %v7784
  %7786 = vdwg.mxu0
  %v7787 = vadd.f32 %v7445, %v7769
  %v7788 = vadd.f32 %v7447, %v7771
  %v7789 = vadd.f32 %v7449, %v7773
  %v7790 = vadd.f32 %v7451, %v7775
  %v7791 = vadd.f32 %v7455, %v7779
  %v7792 = vadd.f32 %v7457, %v7781
  %v7793 = vadd.f32 %v7459, %v7783
  %v7794 = vadd.f32 %v7461, %v7785
  %s7795 = scalar_lea.vmem %s19, 48
  %v7796 = vld [vmem:[%s7795] sm:$0xf]
  %v7797 = vld [vmem:[%s7795 + $0x4] sm:$0xf]
  %v7798 = vld [vmem:[%s7795 + $0x8] sm:$0xf]
  %v7799 = vld [vmem:[%s7795 + $0xc] sm:$0xf]
  %v7804 = vunpack.c.l.b16 %v7796
  %v7805 = vunpack.c.l.b16 %v7797
  %v7806 = vunpack.c.l.b16 %v7798
  %v7807 = vunpack.c.l.b16 %v7799
  %v7808 = vpack.c.b16 %v7805, %v7804
  %v7809 = vpack.c.b16 %v7807, %v7806
  %v7811 = vsel %vm2155, %v7808, 0
  %v7814 = vsel %vm2155, %v7809, 0
  %7816 = vmatprep.subr.bf16.mxu0 %v6816
  %7817 = vmatpush1.bf16.msra.mxu0 %v6815
  %7818 = vmatprep.subr.bf16.mxu0 0
  %7819 = vmatpush1.bf16.msra.mxu0 0
  %7820 = vmatprep.subr.bf16.mxu0 0
  %7821 = vmatpush1.bf16.msra.mxu0 0
  %7822 = vmatprep.subr.bf16.mxu0 0
  %7823 = vmatpush1.bf16.msra.mxu0 0
  %7824 = vmatprep.subr.bf16.mxu0 0
  %7825 = vmatpush1.bf16.msra.mxu0 0
  %7826 = vmatprep.subr.bf16.mxu0 0
  %7827 = vmatpush1.bf16.msra.mxu0 0
  %7828 = vmatprep.subr.bf16.mxu0 0
  %7829 = vmatpush1.bf16.msra.mxu0 0
  %7830 = vmatprep.subr.bf16.mxu0 0
  %7831 = vmatpush1.bf16.msra.mxu0 0
  %7832 = vmatprep.subr.bf16.mxu0 0
  %7833 = vmatpush1.bf16.msra.mxu0 0
  %7834 = vmatprep.subr.bf16.mxu0 0
  %7835 = vmatpush1.bf16.msra.mxu0 0
  %7836 = vmatprep.subr.bf16.mxu0 0
  %7837 = vmatpush1.bf16.msra.mxu0 0
  %7838 = vmatprep.subr.bf16.mxu0 0
  %7839 = vmatpush1.bf16.msra.mxu0 0
  %7840 = vmatprep.subr.bf16.mxu0 0
  %7841 = vmatpush1.bf16.msra.mxu0 0
  %7842 = vmatprep.subr.bf16.mxu0 0
  %7843 = vmatpush1.bf16.msra.mxu0 0
  %7844 = vmatprep.subr.bf16.mxu0 0
  %7845 = vmatpush1.bf16.msra.mxu0 0
  %7846 = vmatprep.subr.bf16.mxu0 0
  %7847 = vmatpush1.bf16.msra.mxu0 0
  %7848 = vmatprep.mubr.bf16.mxu0 0
  %7849 = vmatmul.mubr.bf16.gmra.mrb[0].mxu0 %v7811
  %v7850 = vpop.f32.mrb[0].mxu0
  %v7851 = vadd.f32 0.0, %v7850
  %v7852 = vpop.f32.mrb[0].mxu0
  %v7853 = vadd.f32 0.0, %v7852
  %v7854 = vpop.f32.mrb[0].mxu0
  %v7855 = vadd.f32 0.0, %v7854
  %v7856 = vpop.f32.mrb[0].mxu0
  %v7857 = vadd.f32 0.0, %v7856
  %7858 = vmatprep.mubr.bf16.mxu0 0
  %7859 = vmatmul.mubr.bf16.gmra.mrb[0].mxu0 %v7814
  %v7860 = vpop.f32.mrb[0].mxu0
  %v7861 = vadd.f32 0.0, %v7860
  %v7862 = vpop.f32.mrb[0].mxu0
  %v7863 = vadd.f32 0.0, %v7862
  %v7864 = vpop.f32.mrb[0].mxu0
  %v7865 = vadd.f32 0.0, %v7864
  %v7866 = vpop.f32.mrb[0].mxu0
  %v7867 = vadd.f32 0.0, %v7866
  %7868 = vdwg.mxu0
  %v7869 = vpack.c.bf16 %v7855, %v7851
  %v7870 = vpack.c.bf16 %v7857, %v7853
  %v7871 = vpack.c.bf16 %v7865, %v7861
  %v7872 = vpack.c.bf16 %v7867, %v7863
  %s7873 = scalar_lea.vmem %s20, 768
  %v7874 = vld [vmem:[%s7873] sm:$0xff]
  %v7875 = vld [vmem:[%s7873 + $0x8] sm:$0xff]
  %v7876 = vld [vmem:[%s7873 + $0x10] sm:$0xff]
  %v7877 = vld [vmem:[%s7873 + $0x18] sm:$0xff]
  %v7878 = vld [vmem:[%s7873 + $0x20] sm:$0xff]
  %v7879 = vld [vmem:[%s7873 + $0x28] sm:$0xff]
  %v7880 = vld [vmem:[%s7873 + $0x30] sm:$0xff]
  %v7881 = vld [vmem:[%s7873 + $0x38] sm:$0xff]
  %v7882 = vld [vmem:[%s7873 + $0x40] sm:$0xff]
  %v7883 = vld [vmem:[%s7873 + $0x48] sm:$0xff]
  %v7884 = vld [vmem:[%s7873 + $0x50] sm:$0xff]
  %v7885 = vld [vmem:[%s7873 + $0x58] sm:$0xff]
  %v7886 = vld [vmem:[%s7873 + $0x60] sm:$0xff]
  %v7887 = vld [vmem:[%s7873 + $0x68] sm:$0xff]
  %v7888 = vld [vmem:[%s7873 + $0x70] sm:$0xff]
  %v7889 = vld [vmem:[%s7873 + $0x78] sm:$0xff]
  %v7890 = vld [vmem:[%s7873 + $0x80] sm:$0xff]
  %v7891 = vld [vmem:[%s7873 + $0x88] sm:$0xff]
  %v7892 = vld [vmem:[%s7873 + $0x90] sm:$0xff]
  %v7893 = vld [vmem:[%s7873 + $0x98] sm:$0xff]
  %v7894 = vld [vmem:[%s7873 + $0xa0] sm:$0xff]
  %v7895 = vld [vmem:[%s7873 + $0xa8] sm:$0xff]
  %v7896 = vld [vmem:[%s7873 + $0xb0] sm:$0xff]
  %v7897 = vld [vmem:[%s7873 + $0xb8] sm:$0xff]
  %v7898 = vld [vmem:[%s7873 + $0xc0] sm:$0xff]
  %v7899 = vld [vmem:[%s7873 + $0xc8] sm:$0xff]
  %v7900 = vld [vmem:[%s7873 + $0xd0] sm:$0xff]
  %v7901 = vld [vmem:[%s7873 + $0xd8] sm:$0xff]
  %v7902 = vld [vmem:[%s7873 + $0xe0] sm:$0xff]
  %v7903 = vld [vmem:[%s7873 + $0xe8] sm:$0xff]
  %v7904 = vld [vmem:[%s7873 + $0xf0] sm:$0xff]
  %v7905 = vld [vmem:[%s7873 + $0xf8] sm:$0xff]
  %v7938 = vunpack.c.l.b16 %v7874
  %v7939 = vunpack.c.h.b16 %v7874
  %v7940 = vunpack.c.l.b16 %v7875
  %v7941 = vunpack.c.h.b16 %v7875
  %v7942 = vunpack.c.l.b16 %v7876
  %v7943 = vunpack.c.h.b16 %v7876
  %v7944 = vunpack.c.l.b16 %v7877
  %v7945 = vunpack.c.h.b16 %v7877
  %v7946 = vunpack.c.l.b16 %v7878
  %v7947 = vunpack.c.h.b16 %v7878
  %v7948 = vunpack.c.l.b16 %v7879
  %v7949 = vunpack.c.h.b16 %v7879
  %v7950 = vunpack.c.l.b16 %v7880
  %v7951 = vunpack.c.h.b16 %v7880
  %v7952 = vunpack.c.l.b16 %v7881
  %v7953 = vunpack.c.h.b16 %v7881
  %v7954 = vunpack.c.l.b16 %v7882
  %v7955 = vunpack.c.h.b16 %v7882
  %v7956 = vunpack.c.l.b16 %v7883
  %v7957 = vunpack.c.h.b16 %v7883
  %v7958 = vunpack.c.l.b16 %v7884
  %v7959 = vunpack.c.h.b16 %v7884
  %v7960 = vunpack.c.l.b16 %v7885
  %v7961 = vunpack.c.h.b16 %v7885
  %v7962 = vunpack.c.l.b16 %v7886
  %v7963 = vunpack.c.h.b16 %v7886
  %v7964 = vunpack.c.l.b16 %v7887
  %v7965 = vunpack.c.h.b16 %v7887
  %v7966 = vunpack.c.l.b16 %v7888
  %v7967 = vunpack.c.h.b16 %v7888
  %v7968 = vunpack.c.l.b16 %v7889
  %v7969 = vunpack.c.h.b16 %v7889
  %v7970 = vunpack.c.l.b16 %v7890
  %v7971 = vunpack.c.h.b16 %v7890
  %v7972 = vunpack.c.l.b16 %v7891
  %v7973 = vunpack.c.h.b16 %v7891
  %v7974 = vunpack.c.l.b16 %v7892
  %v7975 = vunpack.c.h.b16 %v7892
  %v7976 = vunpack.c.l.b16 %v7893
  %v7977 = vunpack.c.h.b16 %v7893
  %v7978 = vunpack.c.l.b16 %v7894
  %v7979 = vunpack.c.h.b16 %v7894
  %v7980 = vunpack.c.l.b16 %v7895
  %v7981 = vunpack.c.h.b16 %v7895
  %v7982 = vunpack.c.l.b16 %v7896
  %v7983 = vunpack.c.h.b16 %v7896
  %v7984 = vunpack.c.l.b16 %v7897
  %v7985 = vunpack.c.h.b16 %v7897
  %v7986 = vunpack.c.l.b16 %v7898
  %v7987 = vunpack.c.h.b16 %v7898
  %v7988 = vunpack.c.l.b16 %v7899
  %v7989 = vunpack.c.h.b16 %v7899
  %v7990 = vunpack.c.l.b16 %v7900
  %v7991 = vunpack.c.h.b16 %v7900
  %v7992 = vunpack.c.l.b16 %v7901
  %v7993 = vunpack.c.h.b16 %v7901
  %v7994 = vunpack.c.l.b16 %v7902
  %v7995 = vunpack.c.h.b16 %v7902
  %v7996 = vunpack.c.l.b16 %v7903
  %v7997 = vunpack.c.h.b16 %v7903
  %v7998 = vunpack.c.l.b16 %v7904
  %v7999 = vunpack.c.h.b16 %v7904
  %v8000 = vunpack.c.l.b16 %v7905
  %v8001 = vunpack.c.h.b16 %v7905
  %v8002 = vpack.c.b16 %v7940, %v7938
  %v8003 = vpack.c.b16 %v7941, %v7939
  %v8004 = vpack.c.b16 %v7944, %v7942
  %v8005 = vpack.c.b16 %v7945, %v7943
  %v8006 = vpack.c.b16 %v7948, %v7946
  %v8007 = vpack.c.b16 %v7949, %v7947
  %v8008 = vpack.c.b16 %v7952, %v7950
  %v8009 = vpack.c.b16 %v7953, %v7951
  %v8010 = vpack.c.b16 %v7956, %v7954
  %v8011 = vpack.c.b16 %v7957, %v7955
  %v8012 = vpack.c.b16 %v7960, %v7958
  %v8013 = vpack.c.b16 %v7961, %v7959
  %v8014 = vpack.c.b16 %v7964, %v7962
  %v8015 = vpack.c.b16 %v7965, %v7963
  %v8016 = vpack.c.b16 %v7968, %v7966
  %v8017 = vpack.c.b16 %v7969, %v7967
  %v8018 = vpack.c.b16 %v7972, %v7970
  %v8019 = vpack.c.b16 %v7973, %v7971
  %v8020 = vpack.c.b16 %v7976, %v7974
  %v8021 = vpack.c.b16 %v7977, %v7975
  %v8022 = vpack.c.b16 %v7980, %v7978
  %v8023 = vpack.c.b16 %v7981, %v7979
  %v8024 = vpack.c.b16 %v7984, %v7982
  %v8025 = vpack.c.b16 %v7985, %v7983
  %v8026 = vpack.c.b16 %v7988, %v7986
  %v8027 = vpack.c.b16 %v7989, %v7987
  %v8028 = vpack.c.b16 %v7992, %v7990
  %v8029 = vpack.c.b16 %v7993, %v7991
  %v8030 = vpack.c.b16 %v7996, %v7994
  %v8031 = vpack.c.b16 %v7997, %v7995
  %v8032 = vpack.c.b16 %v8000, %v7998
  %v8033 = vpack.c.b16 %v8001, %v7999
  %8066 = vmatprep.subr.bf16.mxu0 %v8003
  %8067 = vmatpush1.bf16.msra.mxu0 %v8002
  %8068 = vmatprep.subr.bf16.mxu0 %v8005
  %8069 = vmatpush1.bf16.msra.mxu0 %v8004
  %8070 = vmatprep.subr.bf16.mxu0 %v8007
  %8071 = vmatpush1.bf16.msra.mxu0 %v8006
  %8072 = vmatprep.subr.bf16.mxu0 %v8009
  %8073 = vmatpush1.bf16.msra.mxu0 %v8008
  %8074 = vmatprep.subr.bf16.mxu0 %v8011
  %8075 = vmatpush1.bf16.msra.mxu0 %v8010
  %8076 = vmatprep.subr.bf16.mxu0 %v8013
  %8077 = vmatpush1.bf16.msra.mxu0 %v8012
  %8078 = vmatprep.subr.bf16.mxu0 %v8015
  %8079 = vmatpush1.bf16.msra.mxu0 %v8014
  %8080 = vmatprep.subr.bf16.mxu0 %v8017
  %8081 = vmatpush1.bf16.msra.mxu0 %v8016
  %8082 = vmatprep.subr.bf16.mxu0 %v8019
  %8083 = vmatpush1.bf16.msra.mxu0 %v8018
  %8084 = vmatprep.subr.bf16.mxu0 %v8021
  %8085 = vmatpush1.bf16.msra.mxu0 %v8020
  %8086 = vmatprep.subr.bf16.mxu0 %v8023
  %8087 = vmatpush1.bf16.msra.mxu0 %v8022
  %8088 = vmatprep.subr.bf16.mxu0 %v8025
  %8089 = vmatpush1.bf16.msra.mxu0 %v8024
  %8090 = vmatprep.subr.bf16.mxu0 %v8027
  %8091 = vmatpush1.bf16.msra.mxu0 %v8026
  %8092 = vmatprep.subr.bf16.mxu0 %v8029
  %8093 = vmatpush1.bf16.msra.mxu0 %v8028
  %8094 = vmatprep.subr.bf16.mxu0 %v8031
  %8095 = vmatpush1.bf16.msra.mxu0 %v8030
  %8096 = vmatprep.subr.bf16.mxu0 %v8033
  %8097 = vmatpush1.bf16.msra.mxu0 %v8032
  %8098 = vmatprep.mubr.bf16.mxu0 %v7870
  %8099 = vmatmul.mubr.bf16.gmra.mrb[0].mxu0 %v7869
  %v8100 = vpop.f32.mrb[0].mxu0
  %v8101 = vadd.f32 0.0, %v8100
  %v8102 = vpop.f32.mrb[0].mxu0
  %v8103 = vadd.f32 0.0, %v8102
  %v8104 = vpop.f32.mrb[0].mxu0
  %v8105 = vadd.f32 0.0, %v8104
  %v8106 = vpop.f32.mrb[0].mxu0
  %v8107 = vadd.f32 0.0, %v8106
  %8108 = vmatprep.mubr.bf16.mxu0 %v7872
  %8109 = vmatmul.mubr.bf16.gmra.mrb[0].mxu0 %v7871
  %v8110 = vpop.f32.mrb[0].mxu0
  %v8111 = vadd.f32 0.0, %v8110
  %v8112 = vpop.f32.mrb[0].mxu0
  %v8113 = vadd.f32 0.0, %v8112
  %v8114 = vpop.f32.mrb[0].mxu0
  %v8115 = vadd.f32 0.0, %v8114
  %v8116 = vpop.f32.mrb[0].mxu0
  %v8117 = vadd.f32 0.0, %v8116
  %8118 = vdwg.mxu0
  %v8119 = vadd.f32 %v7787, %v8101
  %v8120 = vadd.f32 %v7788, %v8103
  %v8121 = vadd.f32 %v7789, %v8105
  %v8122 = vadd.f32 %v7790, %v8107
  %v8123 = vadd.f32 %v7791, %v8111
  %v8124 = vadd.f32 %v7792, %v8113
  %v8125 = vadd.f32 %v7793, %v8115
  %v8126 = vadd.f32 %v7794, %v8117
  %v8127 = vld [vmem:[%s21] sm:$0x3]
  %v8129 = vlaneseq
  %v8130 = vshrl.u32 %v8129, 7
  %v8131 = vsub.s32 0, %v8130
  %v8132 = vrot.slane %v8127, %v8131
  %v8133 = vlaneseq
  %v8134 = vshrl.u32 %v8133, 7
  %v8135 = vsub.s32 1, %v8134
  %v8136 = vrot.slane %v8127, %v8135
  %v8139 = vadd.f32 %v8119, %v8132
  %v8140 = vadd.f32 %v8120, %v8136
  %v8141 = vadd.f32 %v8121, %v8132
  %v8142 = vadd.f32 %v8122, %v8136
  %v8143 = vadd.f32 %v8123, %v8132
  %v8144 = vadd.f32 %v8124, %v8136
  %v8145 = vadd.f32 %v8125, %v8132
  %v8146 = vadd.f32 %v8126, %v8136
  %v8147 = vmax.f32 %v8139, 0.0
  %v8148 = vmax.f32 %v8140, 0.0
  %v8149 = vmax.f32 %v8141, 0.0
  %v8150 = vmax.f32 %v8142, 0.0
  %v8151 = vmax.f32 %v8143, 0.0
  %v8152 = vmax.f32 %v8144, 0.0
  %v8153 = vmax.f32 %v8145, 0.0
  %v8154 = vmax.f32 %v8146, 0.0
  %v8155 = vpack.c.bf16 %v8149, %v8147
  %v8156 = vpack.c.bf16 %v8150, %v8148
  %v8157 = vpack.c.bf16 %v8153, %v8151
  %v8158 = vpack.c.bf16 %v8154, %v8152
  %v8159 = vld [vmem:[%s22] sm:$0xf]
  %v8160 = vld [vmem:[%s22 + $0x4] sm:$0xf]
  %v8161 = vld [vmem:[%s22 + $0x8] sm:$0xf]
  %v8162 = vld [vmem:[%s22 + $0xc] sm:$0xf]
  %v8163 = vld [vmem:[%s22 + $0x10] sm:$0xf]
  %v8164 = vld [vmem:[%s22 + $0x14] sm:$0xf]
  %v8165 = vld [vmem:[%s22 + $0x18] sm:$0xf]
  %v8166 = vld [vmem:[%s22 + $0x1c] sm:$0xf]
  %v8175 = vunpack.c.l.b16 %v8159
  %v8176 = vunpack.c.l.b16 %v8160
  %v8177 = vunpack.c.l.b16 %v8161
  %v8178 = vunpack.c.l.b16 %v8162
  %v8179 = vunpack.c.l.b16 %v8163
  %v8180 = vunpack.c.l.b16 %v8164
  %v8181 = vunpack.c.l.b16 %v8165
  %v8182 = vunpack.c.l.b16 %v8166
  %v8183 = vpack.c.b16 %v8176, %v8175
  %v8184 = vpack.c.b16 %v8178, %v8177
  %v8185 = vpack.c.b16 %v8180, %v8179
  %v8186 = vpack.c.b16 %v8182, %v8181
  %v8188 = vsel %vm964, %v8183, 0
  %v8191 = vsel %vm964, %v8184, 0
  %v8194 = vsel %vm964, %v8185, 0
  %v8197 = vsel %vm964, %v8186, 0
  %8199 = vmatprep.subr.bf16.mxu0 %v8156
  %8200 = vmatpush1.bf16.msra.mxu0 %v8155
  %8201 = vmatprep.subr.bf16.mxu0 %v8158
  %8202 = vmatpush1.bf16.msra.mxu0 %v8157
  %8203 = vmatprep.subr.bf16.mxu0 0
  %8204 = vmatpush1.bf16.msra.mxu0 0
  %8205 = vmatprep.subr.bf16.mxu0 0
  %8206 = vmatpush1.bf16.msra.mxu0 0
  %8207 = vmatprep.subr.bf16.mxu0 0
  %8208 = vmatpush1.bf16.msra.mxu0 0
  %8209 = vmatprep.subr.bf16.mxu0 0
  %8210 = vmatpush1.bf16.msra.mxu0 0
  %8211 = vmatprep.subr.bf16.mxu0 0
  %8212 = vmatpush1.bf16.msra.mxu0 0
  %8213 = vmatprep.subr.bf16.mxu0 0
  %8214 = vmatpush1.bf16.msra.mxu0 0
  %8215 = vmatprep.subr.bf16.mxu0 0
  %8216 = vmatpush1.bf16.msra.mxu0 0
  %8217 = vmatprep.subr.bf16.mxu0 0
  %8218 = vmatpush1.bf16.msra.mxu0 0
  %8219 = vmatprep.subr.bf16.mxu0 0
  %8220 = vmatpush1.bf16.msra.mxu0 0
  %8221 = vmatprep.subr.bf16.mxu0 0
  %8222 = vmatpush1.bf16.msra.mxu0 0
  %8223 = vmatprep.subr.bf16.mxu0 0
  %8224 = vmatpush1.bf16.msra.mxu0 0
  %8225 = vmatprep.subr.bf16.mxu0 0
  %8226 = vmatpush1.bf16.msra.mxu0 0
  %8227 = vmatprep.subr.bf16.mxu0 0
  %8228 = vmatpush1.bf16.msra.mxu0 0
  %8229 = vmatprep.subr.bf16.mxu0 0
  %8230 = vmatpush1.bf16.msra.mxu0 0
  %8231 = vmatprep.mubr.bf16.mxu0 0
  %8232 = vmatmul.mubr.bf16.gmra.mrb[0].mxu0 %v8188
  %v8233 = vpop.f32.mrb[0].mxu0
  %v8234 = vadd.f32 0.0, %v8233
  %v8235 = vpop.f32.mrb[0].mxu0
  %v8236 = vadd.f32 0.0, %v8235
  %v8237 = vpop.f32.mrb[0].mxu0
  %v8238 = vadd.f32 0.0, %v8237
  %v8239 = vpop.f32.mrb[0].mxu0
  %v8240 = vadd.f32 0.0, %v8239
  %8241 = vmatprep.mubr.bf16.mxu0 0
  %8242 = vmatmul.mubr.bf16.gmra.mrb[0].mxu0 %v8191
  %v8243 = vpop.f32.mrb[0].mxu0
  %v8244 = vadd.f32 0.0, %v8243
  %v8245 = vpop.f32.mrb[0].mxu0
  %v8246 = vadd.f32 0.0, %v8245
  %v8247 = vpop.f32.mrb[0].mxu0
  %v8248 = vadd.f32 0.0, %v8247
  %v8249 = vpop.f32.mrb[0].mxu0
  %v8250 = vadd.f32 0.0, %v8249
  %8251 = vmatprep.mubr.bf16.mxu0 0
  %8252 = vmatmul.mubr.bf16.gmra.mrb[0].mxu0 %v8194
  %v8253 = vpop.f32.mrb[0].mxu0
  %v8254 = vadd.f32 0.0, %v8253
  %v8255 = vpop.f32.mrb[0].mxu0
  %v8256 = vadd.f32 0.0, %v8255
  %v8257 = vpop.f32.mrb[0].mxu0
  %v8258 = vadd.f32 0.0, %v8257
  %v8259 = vpop.f32.mrb[0].mxu0
  %v8260 = vadd.f32 0.0, %v8259
  %8261 = vmatprep.mubr.bf16.mxu0 0
  %8262 = vmatmul.mubr.bf16.gmra.mrb[0].mxu0 %v8197
  %v8263 = vpop.f32.mrb[0].mxu0
  %v8264 = vadd.f32 0.0, %v8263
  %v8265 = vpop.f32.mrb[0].mxu0
  %v8266 = vadd.f32 0.0, %v8265
  %v8267 = vpop.f32.mrb[0].mxu0
  %v8268 = vadd.f32 0.0, %v8267
  %v8269 = vpop.f32.mrb[0].mxu0
  %v8270 = vadd.f32 0.0, %v8269
  %8271 = vdwg.mxu0
  %v8272 = vpack.c.bf16 %v8238, %v8234
  %v8273 = vpack.c.bf16 %v8240, %v8236
  %v8274 = vpack.c.bf16 %v8248, %v8244
  %v8275 = vpack.c.bf16 %v8250, %v8246
  %v8276 = vpack.c.bf16 %v8258, %v8254
  %v8277 = vpack.c.bf16 %v8260, %v8256
  %v8278 = vpack.c.bf16 %v8268, %v8264
  %v8279 = vpack.c.bf16 %v8270, %v8266
  %v8280 = vld [vmem:[%s23] sm:$0xf]
  %v8281 = vld [vmem:[%s23 + $0x4] sm:$0xf]
  %v8282 = vld [vmem:[%s23 + $0x8] sm:$0xf]
  %v8283 = vld [vmem:[%s23 + $0xc] sm:$0xf]
  %v8284 = vld [vmem:[%s23 + $0x10] sm:$0xf]
  %v8285 = vld [vmem:[%s23 + $0x14] sm:$0xf]
  %v8286 = vld [vmem:[%s23 + $0x18] sm:$0xf]
  %v8287 = vld [vmem:[%s23 + $0x1c] sm:$0xf]
  %v8288 = vld [vmem:[%s23 + $0x20] sm:$0xf]
  %v8289 = vld [vmem:[%s23 + $0x24] sm:$0xf]
  %v8290 = vld [vmem:[%s23 + $0x28] sm:$0xf]
  %v8291 = vld [vmem:[%s23 + $0x2c] sm:$0xf]
  %v8292 = vld [vmem:[%s23 + $0x30] sm:$0xf]
  %v8293 = vld [vmem:[%s23 + $0x34] sm:$0xf]
  %v8294 = vld [vmem:[%s23 + $0x38] sm:$0xf]
  %v8295 = vld [vmem:[%s23 + $0x3c] sm:$0xf]
  %v8296 = vld [vmem:[%s23 + $0x40] sm:$0xf]
  %v8297 = vld [vmem:[%s23 + $0x44] sm:$0xf]
  %v8298 = vld [vmem:[%s23 + $0x48] sm:$0xf]
  %v8299 = vld [vmem:[%s23 + $0x4c] sm:$0xf]
  %v8300 = vld [vmem:[%s23 + $0x50] sm:$0xf]
  %v8301 = vld [vmem:[%s23 + $0x54] sm:$0xf]
  %v8302 = vld [vmem:[%s23 + $0x58] sm:$0xf]
  %v8303 = vld [vmem:[%s23 + $0x5c] sm:$0xf]
  %v8304 = vld [vmem:[%s23 + $0x60] sm:$0xf]
  %v8305 = vld [vmem:[%s23 + $0x64] sm:$0xf]
  %v8306 = vld [vmem:[%s23 + $0x68] sm:$0xf]
  %v8307 = vld [vmem:[%s23 + $0x6c] sm:$0xf]
  %v8308 = vld [vmem:[%s23 + $0x70] sm:$0xf]
  %v8309 = vld [vmem:[%s23 + $0x74] sm:$0xf]
  %v8310 = vld [vmem:[%s23 + $0x78] sm:$0xf]
  %v8311 = vld [vmem:[%s23 + $0x7c] sm:$0xf]
  %s8312 = scalar_lea.vmem %s22, 32
  %v8313 = vld [vmem:[%s8312] sm:$0xf]
  %v8314 = vld [vmem:[%s8312 + $0x4] sm:$0xf]
  %v8315 = vld [vmem:[%s8312 + $0x8] sm:$0xf]
  %v8316 = vld [vmem:[%s8312 + $0xc] sm:$0xf]
  %v8317 = vld [vmem:[%s8312 + $0x10] sm:$0xf]
  %v8318 = vld [vmem:[%s8312 + $0x14] sm:$0xf]
  %v8319 = vld [vmem:[%s8312 + $0x18] sm:$0xf]
  %v8320 = vld [vmem:[%s8312 + $0x1c] sm:$0xf]
  %v8329 = vunpack.c.l.b16 %v8313
  %v8330 = vunpack.c.l.b16 %v8314
  %v8331 = vunpack.c.l.b16 %v8315
  %v8332 = vunpack.c.l.b16 %v8316
  %v8333 = vunpack.c.l.b16 %v8317
  %v8334 = vunpack.c.l.b16 %v8318
  %v8335 = vunpack.c.l.b16 %v8319
  %v8336 = vunpack.c.l.b16 %v8320
  %v8337 = vpack.c.b16 %v8330, %v8329
  %v8338 = vpack.c.b16 %v8332, %v8331
  %v8339 = vpack.c.b16 %v8334, %v8333
  %v8340 = vpack.c.b16 %v8336, %v8335
  %v8342 = vsel %vm964, %v8337, 0
  %v8345 = vsel %vm964, %v8338, 0
  %v8348 = vsel %vm964, %v8339, 0
  %v8351 = vsel %vm964, %v8340, 0
  %8353 = vmatprep.subr.bf16.mxu0 %v8156
  %8354 = vmatpush1.bf16.msra.mxu0 %v8155
  %8355 = vmatprep.subr.bf16.mxu0 %v8158
  %8356 = vmatpush1.bf16.msra.mxu0 %v8157
  %8357 = vmatprep.subr.bf16.mxu0 0
  %8358 = vmatpush1.bf16.msra.mxu0 0
  %8359 = vmatprep.subr.bf16.mxu0 0
  %8360 = vmatpush1.bf16.msra.mxu0 0
  %8361 = vmatprep.subr.bf16.mxu0 0
  %8362 = vmatpush1.bf16.msra.mxu0 0
  %8363 = vmatprep.subr.bf16.mxu0 0
  %8364 = vmatpush1.bf16.msra.mxu0 0
  %8365 = vmatprep.subr.bf16.mxu0 0
  %8366 = vmatpush1.bf16.msra.mxu0 0
  %8367 = vmatprep.subr.bf16.mxu0 0
  %8368 = vmatpush1.bf16.msra.mxu0 0
  %8369 = vmatprep.subr.bf16.mxu0 0
  %8370 = vmatpush1.bf16.msra.mxu0 0
  %8371 = vmatprep.subr.bf16.mxu0 0
  %8372 = vmatpush1.bf16.msra.mxu0 0
  %8373 = vmatprep.subr.bf16.mxu0 0
  %8374 = vmatpush1.bf16.msra.mxu0 0
  %8375 = vmatprep.subr.bf16.mxu0 0
  %8376 = vmatpush1.bf16.msra.mxu0 0
  %8377 = vmatprep.subr.bf16.mxu0 0
  %8378 = vmatpush1.bf16.msra.mxu0 0
  %8379 = vmatprep.subr.bf16.mxu0 0
  %8380 = vmatpush1.bf16.msra.mxu0 0
  %8381 = vmatprep.subr.bf16.mxu0 0
  %8382 = vmatpush1.bf16.msra.mxu0 0
  %8383 = vmatprep.subr.bf16.mxu0 0
  %8384 = vmatpush1.bf16.msra.mxu0 0
  %8385 = vmatprep.mubr.bf16.mxu0 0
  %8386 = vmatmul.mubr.bf16.gmra.mrb[0].mxu0 %v8342
  %v8387 = vpop.f32.mrb[0].mxu0
  %v8388 = vadd.f32 0.0, %v8387
  %v8389 = vpop.f32.mrb[0].mxu0
  %v8390 = vadd.f32 0.0, %v8389
  %v8391 = vpop.f32.mrb[0].mxu0
  %v8392 = vadd.f32 0.0, %v8391
  %v8393 = vpop.f32.mrb[0].mxu0
  %v8394 = vadd.f32 0.0, %v8393
  %8395 = vmatprep.mubr.bf16.mxu0 0
  %8396 = vmatmul.mubr.bf16.gmra.mrb[0].mxu0 %v8345
  %v8397 = vpop.f32.mrb[0].mxu0
  %v8398 = vadd.f32 0.0, %v8397
  %v8399 = vpop.f32.mrb[0].mxu0
  %v8400 = vadd.f32 0.0, %v8399
  %v8401 = vpop.f32.mrb[0].mxu0
  %v8402 = vadd.f32 0.0, %v8401
  %v8403 = vpop.f32.mrb[0].mxu0
  %v8404 = vadd.f32 0.0, %v8403
  %8405 = vmatprep.mubr.bf16.mxu0 0
  %8406 = vmatmul.mubr.bf16.gmra.mrb[0].mxu0 %v8348
  %v8407 = vpop.f32.mrb[0].mxu0
  %v8408 = vadd.f32 0.0, %v8407
  %v8409 = vpop.f32.mrb[0].mxu0
  %v8410 = vadd.f32 0.0, %v8409
  %v8411 = vpop.f32.mrb[0].mxu0
  %v8412 = vadd.f32 0.0, %v8411
  %v8413 = vpop.f32.mrb[0].mxu0
  %v8414 = vadd.f32 0.0, %v8413
  %8415 = vmatprep.mubr.bf16.mxu0 0
  %8416 = vmatmul.mubr.bf16.gmra.mrb[0].mxu0 %v8351
  %v8417 = vpop.f32.mrb[0].mxu0
  %v8418 = vadd.f32 0.0, %v8417
  %v8419 = vpop.f32.mrb[0].mxu0
  %v8420 = vadd.f32 0.0, %v8419
  %v8421 = vpop.f32.mrb[0].mxu0
  %v8422 = vadd.f32 0.0, %v8421
  %v8423 = vpop.f32.mrb[0].mxu0
  %v8424 = vadd.f32 0.0, %v8423
  %8425 = vdwg.mxu0
  %v8426 = vpack.c.bf16 %v8392, %v8388
  %v8427 = vpack.c.bf16 %v8394, %v8390
  %v8428 = vpack.c.bf16 %v8402, %v8398
  %v8429 = vpack.c.bf16 %v8404, %v8400
  %v8430 = vpack.c.bf16 %v8412, %v8408
  %v8431 = vpack.c.bf16 %v8414, %v8410
  %v8432 = vpack.c.bf16 %v8422, %v8418
  %v8433 = vpack.c.bf16 %v8424, %v8420
  %s8434 = scalar_lea.vmem %s23, 128
  %v8435 = vld [vmem:[%s8434] sm:$0xf]
  %v8436 = vld [vmem:[%s8434 + $0x4] sm:$0xf]
  %v8437 = vld [vmem:[%s8434 + $0x8] sm:$0xf]
  %v8438 = vld [vmem:[%s8434 + $0xc] sm:$0xf]
  %v8439 = vld [vmem:[%s8434 + $0x10] sm:$0xf]
  %v8440 = vld [vmem:[%s8434 + $0x14] sm:$0xf]
  %v8441 = vld [vmem:[%s8434 + $0x18] sm:$0xf]
  %v8442 = vld [vmem:[%s8434 + $0x1c] sm:$0xf]
  %v8443 = vld [vmem:[%s8434 + $0x20] sm:$0xf]
  %v8444 = vld [vmem:[%s8434 + $0x24] sm:$0xf]
  %v8445 = vld [vmem:[%s8434 + $0x28] sm:$0xf]
  %v8446 = vld [vmem:[%s8434 + $0x2c] sm:$0xf]
  %v8447 = vld [vmem:[%s8434 + $0x30] sm:$0xf]
  %v8448 = vld [vmem:[%s8434 + $0x34] sm:$0xf]
  %v8449 = vld [vmem:[%s8434 + $0x38] sm:$0xf]
  %v8450 = vld [vmem:[%s8434 + $0x3c] sm:$0xf]
  %v8451 = vld [vmem:[%s8434 + $0x40] sm:$0xf]
  %v8452 = vld [vmem:[%s8434 + $0x44] sm:$0xf]
  %v8453 = vld [vmem:[%s8434 + $0x48] sm:$0xf]
  %v8454 = vld [vmem:[%s8434 + $0x4c] sm:$0xf]
  %v8455 = vld [vmem:[%s8434 + $0x50] sm:$0xf]
  %v8456 = vld [vmem:[%s8434 + $0x54] sm:$0xf]
  %v8457 = vld [vmem:[%s8434 + $0x58] sm:$0xf]
  %v8458 = vld [vmem:[%s8434 + $0x5c] sm:$0xf]
  %v8459 = vld [vmem:[%s8434 + $0x60] sm:$0xf]
  %v8460 = vld [vmem:[%s8434 + $0x64] sm:$0xf]
  %v8461 = vld [vmem:[%s8434 + $0x68] sm:$0xf]
  %v8462 = vld [vmem:[%s8434 + $0x6c] sm:$0xf]
  %v8463 = vld [vmem:[%s8434 + $0x70] sm:$0xf]
  %v8464 = vld [vmem:[%s8434 + $0x74] sm:$0xf]
  %v8465 = vld [vmem:[%s8434 + $0x78] sm:$0xf]
  %v8466 = vld [vmem:[%s8434 + $0x7c] sm:$0xf]
  %v8499 = vunpack.c.l.b16 %v8435
  %v8500 = vunpack.c.l.b16 %v8436
  %v8501 = vunpack.c.l.b16 %v8437
  %v8502 = vunpack.c.l.b16 %v8438
  %v8503 = vunpack.c.l.b16 %v8439
  %v8504 = vunpack.c.l.b16 %v8440
  %v8505 = vunpack.c.l.b16 %v8441
  %v8506 = vunpack.c.l.b16 %v8442
  %v8507 = vunpack.c.l.b16 %v8443
  %v8508 = vunpack.c.l.b16 %v8444
  %v8509 = vunpack.c.l.b16 %v8445
  %v8510 = vunpack.c.l.b16 %v8446
  %v8511 = vunpack.c.l.b16 %v8447
  %v8512 = vunpack.c.l.b16 %v8448
  %v8513 = vunpack.c.l.b16 %v8449
  %v8514 = vunpack.c.l.b16 %v8450
  %v8515 = vunpack.c.l.b16 %v8451
  %v8516 = vunpack.c.l.b16 %v8452
  %v8517 = vunpack.c.l.b16 %v8453
  %v8518 = vunpack.c.l.b16 %v8454
  %v8519 = vunpack.c.l.b16 %v8455
  %v8520 = vunpack.c.l.b16 %v8456
  %v8521 = vunpack.c.l.b16 %v8457
  %v8522 = vunpack.c.l.b16 %v8458
  %v8523 = vunpack.c.l.b16 %v8459
  %v8524 = vunpack.c.l.b16 %v8460
  %v8525 = vunpack.c.l.b16 %v8461
  %v8526 = vunpack.c.l.b16 %v8462
  %v8527 = vunpack.c.l.b16 %v8463
  %v8528 = vunpack.c.l.b16 %v8464
  %v8529 = vunpack.c.l.b16 %v8465
  %v8530 = vunpack.c.l.b16 %v8466
  %v8531 = vpack.c.b16 %v8500, %v8499
  %v8532 = vpack.c.b16 %v8502, %v8501
  %v8533 = vpack.c.b16 %v8504, %v8503
  %v8534 = vpack.c.b16 %v8506, %v8505
  %v8535 = vpack.c.b16 %v8508, %v8507
  %v8536 = vpack.c.b16 %v8510, %v8509
  %v8537 = vpack.c.b16 %v8512, %v8511
  %v8538 = vpack.c.b16 %v8514, %v8513
  %v8539 = vpack.c.b16 %v8516, %v8515
  %v8540 = vpack.c.b16 %v8518, %v8517
  %v8541 = vpack.c.b16 %v8520, %v8519
  %v8542 = vpack.c.b16 %v8522, %v8521
  %v8543 = vpack.c.b16 %v8524, %v8523
  %v8544 = vpack.c.b16 %v8526, %v8525
  %v8545 = vpack.c.b16 %v8528, %v8527
  %v8546 = vpack.c.b16 %v8530, %v8529
  %8563 = vmatprep.subr.bf16.mxu0 0
  %8564 = vmatpush1.bf16.msra.mxu0 %v8531
  %8565 = vmatprep.subr.bf16.mxu0 0
  %8566 = vmatpush1.bf16.msra.mxu0 %v8532
  %8567 = vmatprep.subr.bf16.mxu0 0
  %8568 = vmatpush1.bf16.msra.mxu0 %v8533
  %8569 = vmatprep.subr.bf16.mxu0 0
  %8570 = vmatpush1.bf16.msra.mxu0 %v8534
  %8571 = vmatprep.subr.bf16.mxu0 0
  %8572 = vmatpush1.bf16.msra.mxu0 %v8535
  %8573 = vmatprep.subr.bf16.mxu0 0
  %8574 = vmatpush1.bf16.msra.mxu0 %v8536
  %8575 = vmatprep.subr.bf16.mxu0 0
  %8576 = vmatpush1.bf16.msra.mxu0 %v8537
  %8577 = vmatprep.subr.bf16.mxu0 0
  %8578 = vmatpush1.bf16.msra.mxu0 %v8538
  %8579 = vmatprep.subr.bf16.mxu0 0
  %8580 = vmatpush1.bf16.msra.mxu0 %v8539
  %8581 = vmatprep.subr.bf16.mxu0 0
  %8582 = vmatpush1.bf16.msra.mxu0 %v8540
  %8583 = vmatprep.subr.bf16.mxu0 0
  %8584 = vmatpush1.bf16.msra.mxu0 %v8541
  %8585 = vmatprep.subr.bf16.mxu0 0
  %8586 = vmatpush1.bf16.msra.mxu0 %v8542
  %8587 = vmatprep.subr.bf16.mxu0 0
  %8588 = vmatpush1.bf16.msra.mxu0 %v8543
  %8589 = vmatprep.subr.bf16.mxu0 0
  %8590 = vmatpush1.bf16.msra.mxu0 %v8544
  %8591 = vmatprep.subr.bf16.mxu0 0
  %8592 = vmatpush1.bf16.msra.mxu0 %v8545
  %8593 = vmatprep.subr.bf16.mxu0 0
  %8594 = vmatpush1.bf16.msra.mxu0 %v8546
  %8595 = vmatprep.mubr.bf16.mxu0 %v8427
  %8596 = vmatmul.mubr.bf16.gmra.mrb[0].mxu0 %v8426
  %v8597 = vpop.f32.mrb[0].mxu0
  %v8598 = vadd.f32 0.0, %v8597
  %v8599 = vpop.f32.mrb[0].mxu0
  %v8600 = vpop.f32.mrb[0].mxu0
  %v8601 = vadd.f32 0.0, %v8600
  %v8602 = vpop.f32.mrb[0].mxu0
  %8603 = vmatprep.mubr.bf16.mxu0 %v8429
  %8604 = vmatmul.mubr.bf16.gmra.mrb[0].mxu0 %v8428
  %v8605 = vpop.f32.mrb[0].mxu0
  %v8606 = vadd.f32 0.0, %v8605
  %v8607 = vpop.f32.mrb[0].mxu0
  %v8608 = vpop.f32.mrb[0].mxu0
  %v8609 = vadd.f32 0.0, %v8608
  %v8610 = vpop.f32.mrb[0].mxu0
  %8611 = vmatprep.mubr.bf16.mxu0 %v8431
  %8612 = vmatmul.mubr.bf16.gmra.mrb[0].mxu0 %v8430
  %v8613 = vpop.f32.mrb[0].mxu0
  %v8614 = vadd.f32 0.0, %v8613
  %v8615 = vpop.f32.mrb[0].mxu0
  %v8616 = vpop.f32.mrb[0].mxu0
  %v8617 = vadd.f32 0.0, %v8616
  %v8618 = vpop.f32.mrb[0].mxu0
  %8619 = vmatprep.mubr.bf16.mxu0 %v8433
  %8620 = vmatmul.mubr.bf16.gmra.mrb[0].mxu0 %v8432
  %v8621 = vpop.f32.mrb[0].mxu0
  %v8622 = vadd.f32 0.0, %v8621
  %v8623 = vpop.f32.mrb[0].mxu0
  %v8624 = vpop.f32.mrb[0].mxu0
  %v8625 = vadd.f32 0.0, %v8624
  %v8626 = vpop.f32.mrb[0].mxu0
  %8627 = vdwg.mxu0
  %v8660 = vunpack.c.l.b16 %v8280
  %v8661 = vunpack.c.l.b16 %v8281
  %v8662 = vunpack.c.l.b16 %v8282
  %v8663 = vunpack.c.l.b16 %v8283
  %v8664 = vunpack.c.l.b16 %v8284
  %v8665 = vunpack.c.l.b16 %v8285
  %v8666 = vunpack.c.l.b16 %v8286
  %v8667 = vunpack.c.l.b16 %v8287
  %v8668 = vunpack.c.l.b16 %v8288
  %v8669 = vunpack.c.l.b16 %v8289
  %v8670 = vunpack.c.l.b16 %v8290
  %v8671 = vunpack.c.l.b16 %v8291
  %v8672 = vunpack.c.l.b16 %v8292
  %v8673 = vunpack.c.l.b16 %v8293
  %v8674 = vunpack.c.l.b16 %v8294
  %v8675 = vunpack.c.l.b16 %v8295
  %v8676 = vunpack.c.l.b16 %v8296
  %v8677 = vunpack.c.l.b16 %v8297
  %v8678 = vunpack.c.l.b16 %v8298
  %v8679 = vunpack.c.l.b16 %v8299
  %v8680 = vunpack.c.l.b16 %v8300
  %v8681 = vunpack.c.l.b16 %v8301
  %v8682 = vunpack.c.l.b16 %v8302
  %v8683 = vunpack.c.l.b16 %v8303
  %v8684 = vunpack.c.l.b16 %v8304
  %v8685 = vunpack.c.l.b16 %v8305
  %v8686 = vunpack.c.l.b16 %v8306
  %v8687 = vunpack.c.l.b16 %v8307
  %v8688 = vunpack.c.l.b16 %v8308
  %v8689 = vunpack.c.l.b16 %v8309
  %v8690 = vunpack.c.l.b16 %v8310
  %v8691 = vunpack.c.l.b16 %v8311
  %v8692 = vpack.c.b16 %v8661, %v8660
  %v8693 = vpack.c.b16 %v8663, %v8662
  %v8694 = vpack.c.b16 %v8665, %v8664
  %v8695 = vpack.c.b16 %v8667, %v8666
  %v8696 = vpack.c.b16 %v8669, %v8668
  %v8697 = vpack.c.b16 %v8671, %v8670
  %v8698 = vpack.c.b16 %v8673, %v8672
  %v8699 = vpack.c.b16 %v8675, %v8674
  %v8700 = vpack.c.b16 %v8677, %v8676
  %v8701 = vpack.c.b16 %v8679, %v8678
  %v8702 = vpack.c.b16 %v8681, %v8680
  %v8703 = vpack.c.b16 %v8683, %v8682
  %v8704 = vpack.c.b16 %v8685, %v8684
  %v8705 = vpack.c.b16 %v8687, %v8686
  %v8706 = vpack.c.b16 %v8689, %v8688
  %v8707 = vpack.c.b16 %v8691, %v8690
  %8724 = vmatprep.subr.bf16.mxu0 0
  %8725 = vmatpush1.bf16.msra.mxu0 %v8692
  %8726 = vmatprep.subr.bf16.mxu0 0
  %8727 = vmatpush1.bf16.msra.mxu0 %v8693
  %8728 = vmatprep.subr.bf16.mxu0 0
  %8729 = vmatpush1.bf16.msra.mxu0 %v8694
  %8730 = vmatprep.subr.bf16.mxu0 0
  %8731 = vmatpush1.bf16.msra.mxu0 %v8695
  %8732 = vmatprep.subr.bf16.mxu0 0
  %8733 = vmatpush1.bf16.msra.mxu0 %v8696
  %8734 = vmatprep.subr.bf16.mxu0 0
  %8735 = vmatpush1.bf16.msra.mxu0 %v8697
  %8736 = vmatprep.subr.bf16.mxu0 0
  %8737 = vmatpush1.bf16.msra.mxu0 %v8698
  %8738 = vmatprep.subr.bf16.mxu0 0
  %8739 = vmatpush1.bf16.msra.mxu0 %v8699
  %8740 = vmatprep.subr.bf16.mxu0 0
  %8741 = vmatpush1.bf16.msra.mxu0 %v8700
  %8742 = vmatprep.subr.bf16.mxu0 0
  %8743 = vmatpush1.bf16.msra.mxu0 %v8701
  %8744 = vmatprep.subr.bf16.mxu0 0
  %8745 = vmatpush1.bf16.msra.mxu0 %v8702
  %8746 = vmatprep.subr.bf16.mxu0 0
  %8747 = vmatpush1.bf16.msra.mxu0 %v8703
  %8748 = vmatprep.subr.bf16.mxu0 0
  %8749 = vmatpush1.bf16.msra.mxu0 %v8704
  %8750 = vmatprep.subr.bf16.mxu0 0
  %8751 = vmatpush1.bf16.msra.mxu0 %v8705
  %8752 = vmatprep.subr.bf16.mxu0 0
  %8753 = vmatpush1.bf16.msra.mxu0 %v8706
  %8754 = vmatprep.subr.bf16.mxu0 0
  %8755 = vmatpush1.bf16.msra.mxu0 %v8707
  %8756 = vmatprep.mubr.bf16.mxu0 %v8273
  %8757 = vmatmul.mubr.bf16.gmra.mrb[0].mxu0 %v8272
  %v8758 = vpop.f32.mrb[0].mxu0
  %v8759 = vadd.f32 %v8598, %v8758
  %v8760 = vpop.f32.mrb[0].mxu0
  %v8761 = vpop.f32.mrb[0].mxu0
  %v8762 = vadd.f32 %v8601, %v8761
  %v8763 = vpop.f32.mrb[0].mxu0
  %8764 = vmatprep.mubr.bf16.mxu0 %v8275
  %8765 = vmatmul.mubr.bf16.gmra.mrb[0].mxu0 %v8274
  %v8766 = vpop.f32.mrb[0].mxu0
  %v8767 = vadd.f32 %v8606, %v8766
  %v8768 = vpop.f32.mrb[0].mxu0
  %v8769 = vpop.f32.mrb[0].mxu0
  %v8770 = vadd.f32 %v8609, %v8769
  %v8771 = vpop.f32.mrb[0].mxu0
  %8772 = vmatprep.mubr.bf16.mxu0 %v8277
  %8773 = vmatmul.mubr.bf16.gmra.mrb[0].mxu0 %v8276
  %v8774 = vpop.f32.mrb[0].mxu0
  %v8775 = vadd.f32 %v8614, %v8774
  %v8776 = vpop.f32.mrb[0].mxu0
  %v8777 = vpop.f32.mrb[0].mxu0
  %v8778 = vadd.f32 %v8617, %v8777
  %v8779 = vpop.f32.mrb[0].mxu0
  %8780 = vmatprep.mubr.bf16.mxu0 %v8279
  %8781 = vmatmul.mubr.bf16.gmra.mrb[0].mxu0 %v8278
  %v8782 = vpop.f32.mrb[0].mxu0
  %v8783 = vadd.f32 %v8622, %v8782
  %v8784 = vpop.f32.mrb[0].mxu0
  %v8785 = vpop.f32.mrb[0].mxu0
  %v8786 = vadd.f32 %v8625, %v8785
  %v8787 = vpop.f32.mrb[0].mxu0
  %8788 = vdwg.mxu0
  %s8789 = scalar_lea.vmem %s22, 64
  %v8790 = vld [vmem:[%s8789] sm:$0xf]
  %v8791 = vld [vmem:[%s8789 + $0x4] sm:$0xf]
  %v8792 = vld [vmem:[%s8789 + $0x8] sm:$0xf]
  %v8793 = vld [vmem:[%s8789 + $0xc] sm:$0xf]
  %v8794 = vld [vmem:[%s8789 + $0x10] sm:$0xf]
  %v8795 = vld [vmem:[%s8789 + $0x14] sm:$0xf]
  %v8796 = vld [vmem:[%s8789 + $0x18] sm:$0xf]
  %v8797 = vld [vmem:[%s8789 + $0x1c] sm:$0xf]
  %v8806 = vunpack.c.l.b16 %v8790
  %v8807 = vunpack.c.l.b16 %v8791
  %v8808 = vunpack.c.l.b16 %v8792
  %v8809 = vunpack.c.l.b16 %v8793
  %v8810 = vunpack.c.l.b16 %v8794
  %v8811 = vunpack.c.l.b16 %v8795
  %v8812 = vunpack.c.l.b16 %v8796
  %v8813 = vunpack.c.l.b16 %v8797
  %v8814 = vpack.c.b16 %v8807, %v8806
  %v8815 = vpack.c.b16 %v8809, %v8808
  %v8816 = vpack.c.b16 %v8811, %v8810
  %v8817 = vpack.c.b16 %v8813, %v8812
  %v8819 = vsel %vm964, %v8814, 0
  %v8822 = vsel %vm964, %v8815, 0
  %v8825 = vsel %vm964, %v8816, 0
  %v8828 = vsel %vm964, %v8817, 0
  %8830 = vmatprep.subr.bf16.mxu0 %v8156
  %8831 = vmatpush1.bf16.msra.mxu0 %v8155
  %8832 = vmatprep.subr.bf16.mxu0 %v8158
  %8833 = vmatpush1.bf16.msra.mxu0 %v8157
  %8834 = vmatprep.subr.bf16.mxu0 0
  %8835 = vmatpush1.bf16.msra.mxu0 0
  %8836 = vmatprep.subr.bf16.mxu0 0
  %8837 = vmatpush1.bf16.msra.mxu0 0
  %8838 = vmatprep.subr.bf16.mxu0 0
  %8839 = vmatpush1.bf16.msra.mxu0 0
  %8840 = vmatprep.subr.bf16.mxu0 0
  %8841 = vmatpush1.bf16.msra.mxu0 0
  %8842 = vmatprep.subr.bf16.mxu0 0
  %8843 = vmatpush1.bf16.msra.mxu0 0
  %8844 = vmatprep.subr.bf16.mxu0 0
  %8845 = vmatpush1.bf16.msra.mxu0 0
  %8846 = vmatprep.subr.bf16.mxu0 0
  %8847 = vmatpush1.bf16.msra.mxu0 0
  %8848 = vmatprep.subr.bf16.mxu0 0
  %8849 = vmatpush1.bf16.msra.mxu0 0
  %8850 = vmatprep.subr.bf16.mxu0 0
  %8851 = vmatpush1.bf16.msra.mxu0 0
  %8852 = vmatprep.subr.bf16.mxu0 0
  %8853 = vmatpush1.bf16.msra.mxu0 0
  %8854 = vmatprep.subr.bf16.mxu0 0
  %8855 = vmatpush1.bf16.msra.mxu0 0
  %8856 = vmatprep.subr.bf16.mxu0 0
  %8857 = vmatpush1.bf16.msra.mxu0 0
  %8858 = vmatprep.subr.bf16.mxu0 0
  %8859 = vmatpush1.bf16.msra.mxu0 0
  %8860 = vmatprep.subr.bf16.mxu0 0
  %8861 = vmatpush1.bf16.msra.mxu0 0
  %8862 = vmatprep.mubr.bf16.mxu0 0
  %8863 = vmatmul.mubr.bf16.gmra.mrb[0].mxu0 %v8819
  %v8864 = vpop.f32.mrb[0].mxu0
  %v8865 = vadd.f32 0.0, %v8864
  %v8866 = vpop.f32.mrb[0].mxu0
  %v8867 = vadd.f32 0.0, %v8866
  %v8868 = vpop.f32.mrb[0].mxu0
  %v8869 = vadd.f32 0.0, %v8868
  %v8870 = vpop.f32.mrb[0].mxu0
  %v8871 = vadd.f32 0.0, %v8870
  %8872 = vmatprep.mubr.bf16.mxu0 0
  %8873 = vmatmul.mubr.bf16.gmra.mrb[0].mxu0 %v8822
  %v8874 = vpop.f32.mrb[0].mxu0
  %v8875 = vadd.f32 0.0, %v8874
  %v8876 = vpop.f32.mrb[0].mxu0
  %v8877 = vadd.f32 0.0, %v8876
  %v8878 = vpop.f32.mrb[0].mxu0
  %v8879 = vadd.f32 0.0, %v8878
  %v8880 = vpop.f32.mrb[0].mxu0
  %v8881 = vadd.f32 0.0, %v8880
  %8882 = vmatprep.mubr.bf16.mxu0 0
  %8883 = vmatmul.mubr.bf16.gmra.mrb[0].mxu0 %v8825
  %v8884 = vpop.f32.mrb[0].mxu0
  %v8885 = vadd.f32 0.0, %v8884
  %v8886 = vpop.f32.mrb[0].mxu0
  %v8887 = vadd.f32 0.0, %v8886
  %v8888 = vpop.f32.mrb[0].mxu0
  %v8889 = vadd.f32 0.0, %v8888
  %v8890 = vpop.f32.mrb[0].mxu0
  %v8891 = vadd.f32 0.0, %v8890
  %8892 = vmatprep.mubr.bf16.mxu0 0
  %8893 = vmatmul.mubr.bf16.gmra.mrb[0].mxu0 %v8828
  %v8894 = vpop.f32.mrb[0].mxu0
  %v8895 = vadd.f32 0.0, %v8894
  %v8896 = vpop.f32.mrb[0].mxu0
  %v8897 = vadd.f32 0.0, %v8896
  %v8898 = vpop.f32.mrb[0].mxu0
  %v8899 = vadd.f32 0.0, %v8898
  %v8900 = vpop.f32.mrb[0].mxu0
  %v8901 = vadd.f32 0.0, %v8900
  %8902 = vdwg.mxu0
  %v8903 = vpack.c.bf16 %v8869, %v8865
  %v8904 = vpack.c.bf16 %v8871, %v8867
  %v8905 = vpack.c.bf16 %v8879, %v8875
  %v8906 = vpack.c.bf16 %v8881, %v8877
  %v8907 = vpack.c.bf16 %v8889, %v8885
  %v8908 = vpack.c.bf16 %v8891, %v8887
  %v8909 = vpack.c.bf16 %v8899, %v8895
  %v8910 = vpack.c.bf16 %v8901, %v8897
  %s8911 = scalar_lea.vmem %s23, 256
  %v8912 = vld [vmem:[%s8911] sm:$0xf]
  %v8913 = vld [vmem:[%s8911 + $0x4] sm:$0xf]
  %v8914 = vld [vmem:[%s8911 + $0x8] sm:$0xf]
  %v8915 = vld [vmem:[%s8911 + $0xc] sm:$0xf]
  %v8916 = vld [vmem:[%s8911 + $0x10] sm:$0xf]
  %v8917 = vld [vmem:[%s8911 + $0x14] sm:$0xf]
  %v8918 = vld [vmem:[%s8911 + $0x18] sm:$0xf]
  %v8919 = vld [vmem:[%s8911 + $0x1c] sm:$0xf]
  %v8920 = vld [vmem:[%s8911 + $0x20] sm:$0xf]
  %v8921 = vld [vmem:[%s8911 + $0x24] sm:$0xf]
  %v8922 = vld [vmem:[%s8911 + $0x28] sm:$0xf]
  %v8923 = vld [vmem:[%s8911 + $0x2c] sm:$0xf]
  %v8924 = vld [vmem:[%s8911 + $0x30] sm:$0xf]
  %v8925 = vld [vmem:[%s8911 + $0x34] sm:$0xf]
  %v8926 = vld [vmem:[%s8911 + $0x38] sm:$0xf]
  %v8927 = vld [vmem:[%s8911 + $0x3c] sm:$0xf]
  %v8928 = vld [vmem:[%s8911 + $0x40] sm:$0xf]
  %v8929 = vld [vmem:[%s8911 + $0x44] sm:$0xf]
  %v8930 = vld [vmem:[%s8911 + $0x48] sm:$0xf]
  %v8931 = vld [vmem:[%s8911 + $0x4c] sm:$0xf]
  %v8932 = vld [vmem:[%s8911 + $0x50] sm:$0xf]
  %v8933 = vld [vmem:[%s8911 + $0x54] sm:$0xf]
  %v8934 = vld [vmem:[%s8911 + $0x58] sm:$0xf]
  %v8935 = vld [vmem:[%s8911 + $0x5c] sm:$0xf]
  %v8936 = vld [vmem:[%s8911 + $0x60] sm:$0xf]
  %v8937 = vld [vmem:[%s8911 + $0x64] sm:$0xf]
  %v8938 = vld [vmem:[%s8911 + $0x68] sm:$0xf]
  %v8939 = vld [vmem:[%s8911 + $0x6c] sm:$0xf]
  %v8940 = vld [vmem:[%s8911 + $0x70] sm:$0xf]
  %v8941 = vld [vmem:[%s8911 + $0x74] sm:$0xf]
  %v8942 = vld [vmem:[%s8911 + $0x78] sm:$0xf]
  %v8943 = vld [vmem:[%s8911 + $0x7c] sm:$0xf]
  %v8976 = vunpack.c.l.b16 %v8912
  %v8977 = vunpack.c.l.b16 %v8913
  %v8978 = vunpack.c.l.b16 %v8914
  %v8979 = vunpack.c.l.b16 %v8915
  %v8980 = vunpack.c.l.b16 %v8916
  %v8981 = vunpack.c.l.b16 %v8917
  %v8982 = vunpack.c.l.b16 %v8918
  %v8983 = vunpack.c.l.b16 %v8919
  %v8984 = vunpack.c.l.b16 %v8920
  %v8985 = vunpack.c.l.b16 %v8921
  %v8986 = vunpack.c.l.b16 %v8922
  %v8987 = vunpack.c.l.b16 %v8923
  %v8988 = vunpack.c.l.b16 %v8924
  %v8989 = vunpack.c.l.b16 %v8925
  %v8990 = vunpack.c.l.b16 %v8926
  %v8991 = vunpack.c.l.b16 %v8927
  %v8992 = vunpack.c.l.b16 %v8928
  %v8993 = vunpack.c.l.b16 %v8929
  %v8994 = vunpack.c.l.b16 %v8930
  %v8995 = vunpack.c.l.b16 %v8931
  %v8996 = vunpack.c.l.b16 %v8932
  %v8997 = vunpack.c.l.b16 %v8933
  %v8998 = vunpack.c.l.b16 %v8934
  %v8999 = vunpack.c.l.b16 %v8935
  %v9000 = vunpack.c.l.b16 %v8936
  %v9001 = vunpack.c.l.b16 %v8937
  %v9002 = vunpack.c.l.b16 %v8938
  %v9003 = vunpack.c.l.b16 %v8939
  %v9004 = vunpack.c.l.b16 %v8940
  %v9005 = vunpack.c.l.b16 %v8941
  %v9006 = vunpack.c.l.b16 %v8942
  %v9007 = vunpack.c.l.b16 %v8943
  %v9008 = vpack.c.b16 %v8977, %v8976
  %v9009 = vpack.c.b16 %v8979, %v8978
  %v9010 = vpack.c.b16 %v8981, %v8980
  %v9011 = vpack.c.b16 %v8983, %v8982
  %v9012 = vpack.c.b16 %v8985, %v8984
  %v9013 = vpack.c.b16 %v8987, %v8986
  %v9014 = vpack.c.b16 %v8989, %v8988
  %v9015 = vpack.c.b16 %v8991, %v8990
  %v9016 = vpack.c.b16 %v8993, %v8992
  %v9017 = vpack.c.b16 %v8995, %v8994
  %v9018 = vpack.c.b16 %v8997, %v8996
  %v9019 = vpack.c.b16 %v8999, %v8998
  %v9020 = vpack.c.b16 %v9001, %v9000
  %v9021 = vpack.c.b16 %v9003, %v9002
  %v9022 = vpack.c.b16 %v9005, %v9004
  %v9023 = vpack.c.b16 %v9007, %v9006
  %9040 = vmatprep.subr.bf16.mxu0 0
  %9041 = vmatpush1.bf16.msra.mxu0 %v9008
  %9042 = vmatprep.subr.bf16.mxu0 0
  %9043 = vmatpush1.bf16.msra.mxu0 %v9009
  %9044 = vmatprep.subr.bf16.mxu0 0
  %9045 = vmatpush1.bf16.msra.mxu0 %v9010
  %9046 = vmatprep.subr.bf16.mxu0 0
  %9047 = vmatpush1.bf16.msra.mxu0 %v9011
  %9048 = vmatprep.subr.bf16.mxu0 0
  %9049 = vmatpush1.bf16.msra.mxu0 %v9012
  %9050 = vmatprep.subr.bf16.mxu0 0
  %9051 = vmatpush1.bf16.msra.mxu0 %v9013
  %9052 = vmatprep.subr.bf16.mxu0 0
  %9053 = vmatpush1.bf16.msra.mxu0 %v9014
  %9054 = vmatprep.subr.bf16.mxu0 0
  %9055 = vmatpush1.bf16.msra.mxu0 %v9015
  %9056 = vmatprep.subr.bf16.mxu0 0
  %9057 = vmatpush1.bf16.msra.mxu0 %v9016
  %9058 = vmatprep.subr.bf16.mxu0 0
  %9059 = vmatpush1.bf16.msra.mxu0 %v9017
  %9060 = vmatprep.subr.bf16.mxu0 0
  %9061 = vmatpush1.bf16.msra.mxu0 %v9018
  %9062 = vmatprep.subr.bf16.mxu0 0
  %9063 = vmatpush1.bf16.msra.mxu0 %v9019
  %9064 = vmatprep.subr.bf16.mxu0 0
  %9065 = vmatpush1.bf16.msra.mxu0 %v9020
  %9066 = vmatprep.subr.bf16.mxu0 0
  %9067 = vmatpush1.bf16.msra.mxu0 %v9021
  %9068 = vmatprep.subr.bf16.mxu0 0
  %9069 = vmatpush1.bf16.msra.mxu0 %v9022
  %9070 = vmatprep.subr.bf16.mxu0 0
  %9071 = vmatpush1.bf16.msra.mxu0 %v9023
  %9072 = vmatprep.mubr.bf16.mxu0 %v8904
  %9073 = vmatmul.mubr.bf16.gmra.mrb[0].mxu0 %v8903
  %v9074 = vpop.f32.mrb[0].mxu0
  %v9075 = vadd.f32 0.0, %v9074
  %v9076 = vpop.f32.mrb[0].mxu0
  %v9077 = vpop.f32.mrb[0].mxu0
  %v9078 = vadd.f32 0.0, %v9077
  %v9079 = vpop.f32.mrb[0].mxu0
  %9080 = vmatprep.mubr.bf16.mxu0 %v8906
  %9081 = vmatmul.mubr.bf16.gmra.mrb[0].mxu0 %v8905
  %v9082 = vpop.f32.mrb[0].mxu0
  %v9083 = vadd.f32 0.0, %v9082
  %v9084 = vpop.f32.mrb[0].mxu0
  %v9085 = vpop.f32.mrb[0].mxu0
  %v9086 = vadd.f32 0.0, %v9085
  %v9087 = vpop.f32.mrb[0].mxu0
  %9088 = vmatprep.mubr.bf16.mxu0 %v8908
  %9089 = vmatmul.mubr.bf16.gmra.mrb[0].mxu0 %v8907
  %v9090 = vpop.f32.mrb[0].mxu0
  %v9091 = vadd.f32 0.0, %v9090
  %v9092 = vpop.f32.mrb[0].mxu0
  %v9093 = vpop.f32.mrb[0].mxu0
  %v9094 = vadd.f32 0.0, %v9093
  %v9095 = vpop.f32.mrb[0].mxu0
  %9096 = vmatprep.mubr.bf16.mxu0 %v8910
  %9097 = vmatmul.mubr.bf16.gmra.mrb[0].mxu0 %v8909
  %v9098 = vpop.f32.mrb[0].mxu0
  %v9099 = vadd.f32 0.0, %v9098
  %v9100 = vpop.f32.mrb[0].mxu0
  %v9101 = vpop.f32.mrb[0].mxu0
  %v9102 = vadd.f32 0.0, %v9101
  %v9103 = vpop.f32.mrb[0].mxu0
  %9104 = vdwg.mxu0
  %v9105 = vadd.f32 %v8759, %v9075
  %v9106 = vadd.f32 %v8762, %v9078
  %v9107 = vadd.f32 %v8767, %v9083
  %v9108 = vadd.f32 %v8770, %v9086
  %v9109 = vadd.f32 %v8775, %v9091
  %v9110 = vadd.f32 %v8778, %v9094
  %v9111 = vadd.f32 %v8783, %v9099
  %v9112 = vadd.f32 %v8786, %v9102
  %s9113 = scalar_lea.vmem %s22, 96
  %v9114 = vld [vmem:[%s9113] sm:$0xf]
  %v9115 = vld [vmem:[%s9113 + $0x4] sm:$0xf]
  %v9116 = vld [vmem:[%s9113 + $0x8] sm:$0xf]
  %v9117 = vld [vmem:[%s9113 + $0xc] sm:$0xf]
  %v9118 = vld [vmem:[%s9113 + $0x10] sm:$0xf]
  %v9119 = vld [vmem:[%s9113 + $0x14] sm:$0xf]
  %v9120 = vld [vmem:[%s9113 + $0x18] sm:$0xf]
  %v9121 = vld [vmem:[%s9113 + $0x1c] sm:$0xf]
  %v9130 = vunpack.c.l.b16 %v9114
  %v9131 = vunpack.c.l.b16 %v9115
  %v9132 = vunpack.c.l.b16 %v9116
  %v9133 = vunpack.c.l.b16 %v9117
  %v9134 = vunpack.c.l.b16 %v9118
  %v9135 = vunpack.c.l.b16 %v9119
  %v9136 = vunpack.c.l.b16 %v9120
  %v9137 = vunpack.c.l.b16 %v9121
  %v9138 = vpack.c.b16 %v9131, %v9130
  %v9139 = vpack.c.b16 %v9133, %v9132
  %v9140 = vpack.c.b16 %v9135, %v9134
  %v9141 = vpack.c.b16 %v9137, %v9136
  %v9143 = vsel %vm964, %v9138, 0
  %v9146 = vsel %vm964, %v9139, 0
  %v9149 = vsel %vm964, %v9140, 0
  %v9152 = vsel %vm964, %v9141, 0
  %9154 = vmatprep.subr.bf16.mxu0 %v8156
  %9155 = vmatpush1.bf16.msra.mxu0 %v8155
  %9156 = vmatprep.subr.bf16.mxu0 %v8158
  %9157 = vmatpush1.bf16.msra.mxu0 %v8157
  %9158 = vmatprep.subr.bf16.mxu0 0
  %9159 = vmatpush1.bf16.msra.mxu0 0
  %9160 = vmatprep.subr.bf16.mxu0 0
  %9161 = vmatpush1.bf16.msra.mxu0 0
  %9162 = vmatprep.subr.bf16.mxu0 0
  %9163 = vmatpush1.bf16.msra.mxu0 0
  %9164 = vmatprep.subr.bf16.mxu0 0
  %9165 = vmatpush1.bf16.msra.mxu0 0
  %9166 = vmatprep.subr.bf16.mxu0 0
  %9167 = vmatpush1.bf16.msra.mxu0 0
  %9168 = vmatprep.subr.bf16.mxu0 0
  %9169 = vmatpush1.bf16.msra.mxu0 0
  %9170 = vmatprep.subr.bf16.mxu0 0
  %9171 = vmatpush1.bf16.msra.mxu0 0
  %9172 = vmatprep.subr.bf16.mxu0 0
  %9173 = vmatpush1.bf16.msra.mxu0 0
  %9174 = vmatprep.subr.bf16.mxu0 0
  %9175 = vmatpush1.bf16.msra.mxu0 0
  %9176 = vmatprep.subr.bf16.mxu0 0
  %9177 = vmatpush1.bf16.msra.mxu0 0
  %9178 = vmatprep.subr.bf16.mxu0 0
  %9179 = vmatpush1.bf16.msra.mxu0 0
  %9180 = vmatprep.subr.bf16.mxu0 0
  %9181 = vmatpush1.bf16.msra.mxu0 0
  %9182 = vmatprep.subr.bf16.mxu0 0
  %9183 = vmatpush1.bf16.msra.mxu0 0
  %9184 = vmatprep.subr.bf16.mxu0 0
  %9185 = vmatpush1.bf16.msra.mxu0 0
  %9186 = vmatprep.mubr.bf16.mxu0 0
  %9187 = vmatmul.mubr.bf16.gmra.mrb[0].mxu0 %v9143
  %v9188 = vpop.f32.mrb[0].mxu0
  %v9189 = vadd.f32 0.0, %v9188
  %v9190 = vpop.f32.mrb[0].mxu0
  %v9191 = vadd.f32 0.0, %v9190
  %v9192 = vpop.f32.mrb[0].mxu0
  %v9193 = vadd.f32 0.0, %v9192
  %v9194 = vpop.f32.mrb[0].mxu0
  %v9195 = vadd.f32 0.0, %v9194
  %9196 = vmatprep.mubr.bf16.mxu0 0
  %9197 = vmatmul.mubr.bf16.gmra.mrb[0].mxu0 %v9146
  %v9198 = vpop.f32.mrb[0].mxu0
  %v9199 = vadd.f32 0.0, %v9198
  %v9200 = vpop.f32.mrb[0].mxu0
  %v9201 = vadd.f32 0.0, %v9200
  %v9202 = vpop.f32.mrb[0].mxu0
  %v9203 = vadd.f32 0.0, %v9202
  %v9204 = vpop.f32.mrb[0].mxu0
  %v9205 = vadd.f32 0.0, %v9204
  %9206 = vmatprep.mubr.bf16.mxu0 0
  %9207 = vmatmul.mubr.bf16.gmra.mrb[0].mxu0 %v9149
  %v9208 = vpop.f32.mrb[0].mxu0
  %v9209 = vadd.f32 0.0, %v9208
  %v9210 = vpop.f32.mrb[0].mxu0
  %v9211 = vadd.f32 0.0, %v9210
  %v9212 = vpop.f32.mrb[0].mxu0
  %v9213 = vadd.f32 0.0, %v9212
  %v9214 = vpop.f32.mrb[0].mxu0
  %v9215 = vadd.f32 0.0, %v9214
  %9216 = vmatprep.mubr.bf16.mxu0 0
  %9217 = vmatmul.mubr.bf16.gmra.mrb[0].mxu0 %v9152
  %v9218 = vpop.f32.mrb[0].mxu0
  %v9219 = vadd.f32 0.0, %v9218
  %v9220 = vpop.f32.mrb[0].mxu0
  %v9221 = vadd.f32 0.0, %v9220
  %v9222 = vpop.f32.mrb[0].mxu0
  %v9223 = vadd.f32 0.0, %v9222
  %v9224 = vpop.f32.mrb[0].mxu0
  %v9225 = vadd.f32 0.0, %v9224
  %9226 = vdwg.mxu0
  %v9227 = vpack.c.bf16 %v9193, %v9189
  %v9228 = vpack.c.bf16 %v9195, %v9191
  %v9229 = vpack.c.bf16 %v9203, %v9199
  %v9230 = vpack.c.bf16 %v9205, %v9201
  %v9231 = vpack.c.bf16 %v9213, %v9209
  %v9232 = vpack.c.bf16 %v9215, %v9211
  %v9233 = vpack.c.bf16 %v9223, %v9219
  %v9234 = vpack.c.bf16 %v9225, %v9221
  %s9235 = scalar_lea.vmem %s23, 384
  %v9236 = vld [vmem:[%s9235] sm:$0xf]
  %v9237 = vld [vmem:[%s9235 + $0x4] sm:$0xf]
  %v9238 = vld [vmem:[%s9235 + $0x8] sm:$0xf]
  %v9239 = vld [vmem:[%s9235 + $0xc] sm:$0xf]
  %v9240 = vld [vmem:[%s9235 + $0x10] sm:$0xf]
  %v9241 = vld [vmem:[%s9235 + $0x14] sm:$0xf]
  %v9242 = vld [vmem:[%s9235 + $0x18] sm:$0xf]
  %v9243 = vld [vmem:[%s9235 + $0x1c] sm:$0xf]
  %v9244 = vld [vmem:[%s9235 + $0x20] sm:$0xf]
  %v9245 = vld [vmem:[%s9235 + $0x24] sm:$0xf]
  %v9246 = vld [vmem:[%s9235 + $0x28] sm:$0xf]
  %v9247 = vld [vmem:[%s9235 + $0x2c] sm:$0xf]
  %v9248 = vld [vmem:[%s9235 + $0x30] sm:$0xf]
  %v9249 = vld [vmem:[%s9235 + $0x34] sm:$0xf]
  %v9250 = vld [vmem:[%s9235 + $0x38] sm:$0xf]
  %v9251 = vld [vmem:[%s9235 + $0x3c] sm:$0xf]
  %v9252 = vld [vmem:[%s9235 + $0x40] sm:$0xf]
  %v9253 = vld [vmem:[%s9235 + $0x44] sm:$0xf]
  %v9254 = vld [vmem:[%s9235 + $0x48] sm:$0xf]
  %v9255 = vld [vmem:[%s9235 + $0x4c] sm:$0xf]
  %v9256 = vld [vmem:[%s9235 + $0x50] sm:$0xf]
  %v9257 = vld [vmem:[%s9235 + $0x54] sm:$0xf]
  %v9258 = vld [vmem:[%s9235 + $0x58] sm:$0xf]
  %v9259 = vld [vmem:[%s9235 + $0x5c] sm:$0xf]
  %v9260 = vld [vmem:[%s9235 + $0x60] sm:$0xf]
  %v9261 = vld [vmem:[%s9235 + $0x64] sm:$0xf]
  %v9262 = vld [vmem:[%s9235 + $0x68] sm:$0xf]
  %v9263 = vld [vmem:[%s9235 + $0x6c] sm:$0xf]
  %v9264 = vld [vmem:[%s9235 + $0x70] sm:$0xf]
  %v9265 = vld [vmem:[%s9235 + $0x74] sm:$0xf]
  %v9266 = vld [vmem:[%s9235 + $0x78] sm:$0xf]
  %v9267 = vld [vmem:[%s9235 + $0x7c] sm:$0xf]
  %v9300 = vunpack.c.l.b16 %v9236
  %v9301 = vunpack.c.l.b16 %v9237
  %v9302 = vunpack.c.l.b16 %v9238
  %v9303 = vunpack.c.l.b16 %v9239
  %v9304 = vunpack.c.l.b16 %v9240
  %v9305 = vunpack.c.l.b16 %v9241
  %v9306 = vunpack.c.l.b16 %v9242
  %v9307 = vunpack.c.l.b16 %v9243
  %v9308 = vunpack.c.l.b16 %v9244
  %v9309 = vunpack.c.l.b16 %v9245
  %v9310 = vunpack.c.l.b16 %v9246
  %v9311 = vunpack.c.l.b16 %v9247
  %v9312 = vunpack.c.l.b16 %v9248
  %v9313 = vunpack.c.l.b16 %v9249
  %v9314 = vunpack.c.l.b16 %v9250
  %v9315 = vunpack.c.l.b16 %v9251
  %v9316 = vunpack.c.l.b16 %v9252
  %v9317 = vunpack.c.l.b16 %v9253
  %v9318 = vunpack.c.l.b16 %v9254
  %v9319 = vunpack.c.l.b16 %v9255
  %v9320 = vunpack.c.l.b16 %v9256
  %v9321 = vunpack.c.l.b16 %v9257
  %v9322 = vunpack.c.l.b16 %v9258
  %v9323 = vunpack.c.l.b16 %v9259
  %v9324 = vunpack.c.l.b16 %v9260
  %v9325 = vunpack.c.l.b16 %v9261
  %v9326 = vunpack.c.l.b16 %v9262
  %v9327 = vunpack.c.l.b16 %v9263
  %v9328 = vunpack.c.l.b16 %v9264
  %v9329 = vunpack.c.l.b16 %v9265
  %v9330 = vunpack.c.l.b16 %v9266
  %v9331 = vunpack.c.l.b16 %v9267
  %v9332 = vpack.c.b16 %v9301, %v9300
  %v9333 = vpack.c.b16 %v9303, %v9302
  %v9334 = vpack.c.b16 %v9305, %v9304
  %v9335 = vpack.c.b16 %v9307, %v9306
  %v9336 = vpack.c.b16 %v9309, %v9308
  %v9337 = vpack.c.b16 %v9311, %v9310
  %v9338 = vpack.c.b16 %v9313, %v9312
  %v9339 = vpack.c.b16 %v9315, %v9314
  %v9340 = vpack.c.b16 %v9317, %v9316
  %v9341 = vpack.c.b16 %v9319, %v9318
  %v9342 = vpack.c.b16 %v9321, %v9320
  %v9343 = vpack.c.b16 %v9323, %v9322
  %v9344 = vpack.c.b16 %v9325, %v9324
  %v9345 = vpack.c.b16 %v9327, %v9326
  %v9346 = vpack.c.b16 %v9329, %v9328
  %v9347 = vpack.c.b16 %v9331, %v9330
  %9364 = vmatprep.subr.bf16.mxu0 0
  %9365 = vmatpush1.bf16.msra.mxu0 %v9332
  %9366 = vmatprep.subr.bf16.mxu0 0
  %9367 = vmatpush1.bf16.msra.mxu0 %v9333
  %9368 = vmatprep.subr.bf16.mxu0 0
  %9369 = vmatpush1.bf16.msra.mxu0 %v9334
  %9370 = vmatprep.subr.bf16.mxu0 0
  %9371 = vmatpush1.bf16.msra.mxu0 %v9335
  %9372 = vmatprep.subr.bf16.mxu0 0
  %9373 = vmatpush1.bf16.msra.mxu0 %v9336
  %9374 = vmatprep.subr.bf16.mxu0 0
  %9375 = vmatpush1.bf16.msra.mxu0 %v9337
  %9376 = vmatprep.subr.bf16.mxu0 0
  %9377 = vmatpush1.bf16.msra.mxu0 %v9338
  %9378 = vmatprep.subr.bf16.mxu0 0
  %9379 = vmatpush1.bf16.msra.mxu0 %v9339
  %9380 = vmatprep.subr.bf16.mxu0 0
  %9381 = vmatpush1.bf16.msra.mxu0 %v9340
  %9382 = vmatprep.subr.bf16.mxu0 0
  %9383 = vmatpush1.bf16.msra.mxu0 %v9341
  %9384 = vmatprep.subr.bf16.mxu0 0
  %9385 = vmatpush1.bf16.msra.mxu0 %v9342
  %9386 = vmatprep.subr.bf16.mxu0 0
  %9387 = vmatpush1.bf16.msra.mxu0 %v9343
  %9388 = vmatprep.subr.bf16.mxu0 0
  %9389 = vmatpush1.bf16.msra.mxu0 %v9344
  %9390 = vmatprep.subr.bf16.mxu0 0
  %9391 = vmatpush1.bf16.msra.mxu0 %v9345
  %9392 = vmatprep.subr.bf16.mxu0 0
  %9393 = vmatpush1.bf16.msra.mxu0 %v9346
  %9394 = vmatprep.subr.bf16.mxu0 0
  %9395 = vmatpush1.bf16.msra.mxu0 %v9347
  %9396 = vmatprep.mubr.bf16.mxu0 %v9228
  %9397 = vmatmul.mubr.bf16.gmra.mrb[0].mxu0 %v9227
  %v9398 = vpop.f32.mrb[0].mxu0
  %v9399 = vadd.f32 0.0, %v9398
  %v9400 = vpop.f32.mrb[0].mxu0
  %v9401 = vpop.f32.mrb[0].mxu0
  %v9402 = vadd.f32 0.0, %v9401
  %v9403 = vpop.f32.mrb[0].mxu0
  %9404 = vmatprep.mubr.bf16.mxu0 %v9230
  %9405 = vmatmul.mubr.bf16.gmra.mrb[0].mxu0 %v9229
  %v9406 = vpop.f32.mrb[0].mxu0
  %v9407 = vadd.f32 0.0, %v9406
  %v9408 = vpop.f32.mrb[0].mxu0
  %v9409 = vpop.f32.mrb[0].mxu0
  %v9410 = vadd.f32 0.0, %v9409
  %v9411 = vpop.f32.mrb[0].mxu0
  %9412 = vmatprep.mubr.bf16.mxu0 %v9232
  %9413 = vmatmul.mubr.bf16.gmra.mrb[0].mxu0 %v9231
  %v9414 = vpop.f32.mrb[0].mxu0
  %v9415 = vadd.f32 0.0, %v9414
  %v9416 = vpop.f32.mrb[0].mxu0
  %v9417 = vpop.f32.mrb[0].mxu0
  %v9418 = vadd.f32 0.0, %v9417
  %v9419 = vpop.f32.mrb[0].mxu0
  %9420 = vmatprep.mubr.bf16.mxu0 %v9234
  %9421 = vmatmul.mubr.bf16.gmra.mrb[0].mxu0 %v9233
  %v9422 = vpop.f32.mrb[0].mxu0
  %v9423 = vadd.f32 0.0, %v9422
  %v9424 = vpop.f32.mrb[0].mxu0
  %v9425 = vpop.f32.mrb[0].mxu0
  %v9426 = vadd.f32 0.0, %v9425
  %v9427 = vpop.f32.mrb[0].mxu0
  %9428 = vdwg.mxu0
  %v9429 = vadd.f32 %v9105, %v9399
  %v9430 = vadd.f32 %v9106, %v9402
  %v9431 = vadd.f32 %v9107, %v9407
  %v9432 = vadd.f32 %v9108, %v9410
  %v9433 = vadd.f32 %v9109, %v9415
  %v9434 = vadd.f32 %v9110, %v9418
  %v9435 = vadd.f32 %v9111, %v9423
  %v9436 = vadd.f32 %v9112, %v9426
  %v9437 = vld [vmem:[%s24] sm:$0x1]
  %v9439 = vlaneseq
  %v9440 = vshrl.u32 %v9439, 7
  %v9441 = vsub.s32 0, %v9440
  %v9442 = vrot.slane %v9437, %v9441
  %v9444 = vadd.f32 %v9429, %v9442
  %v9445 = vadd.f32 %v9430, %v9442
  %v9446 = vadd.f32 %v9431, %v9442
  %v9447 = vadd.f32 %v9432, %v9442
  %v9448 = vadd.f32 %v9433, %v9442
  %v9449 = vadd.f32 %v9434, %v9442
  %v9450 = vadd.f32 %v9435, %v9442
  %v9451 = vadd.f32 %v9436, %v9442
  %v9452 = vxor.u32 %v9444, 2147483648
  %v9453 = vxor.u32 %v9445, 2147483648
  %v9454 = vxor.u32 %v9446, 2147483648
  %v9455 = vxor.u32 %v9447, 2147483648
  %v9456 = vxor.u32 %v9448, 2147483648
  %v9457 = vxor.u32 %v9449, 2147483648
  %v9458 = vxor.u32 %v9450, 2147483648
  %v9459 = vxor.u32 %v9451, 2147483648
  %v9460 = vmul.f32 %v9452, 1.442695
  %v9461 = vpow.pop %v9460
  %v9462 = vmul.f32 %v9453, 1.442695
  %v9463 = vpow.pop %v9462
  %v9464 = vmul.f32 %v9454, 1.442695
  %v9465 = vpow.pop %v9464
  %v9466 = vmul.f32 %v9455, 1.442695
  %v9467 = vpow.pop %v9466
  %v9468 = vmul.f32 %v9456, 1.442695
  %v9469 = vpow.pop %v9468
  %v9470 = vmul.f32 %v9457, 1.442695
  %v9471 = vpow.pop %v9470
  %v9472 = vmul.f32 %v9458, 1.442695
  %v9473 = vpow.pop %v9472
  %v9474 = vmul.f32 %v9459, 1.442695
  %v9475 = vpow.pop %v9474
  %v9476 = vadd.f32 %v9461, 1.0
  %v9477 = vadd.f32 %v9463, 1.0
  %v9478 = vadd.f32 %v9465, 1.0
  %v9479 = vadd.f32 %v9467, 1.0
  %v9480 = vadd.f32 %v9469, 1.0
  %v9481 = vadd.f32 %v9471, 1.0
  %v9482 = vadd.f32 %v9473, 1.0
  %v9483 = vadd.f32 %v9475, 1.0
  %v9484 = vrcp.pop %v9476
  %v9485 = vmul.f32 1.0, %v9484
  %v9486 = vrcp.pop %v9477
  %v9487 = vmul.f32 1.0, %v9486
  %v9488 = vrcp.pop %v9478
  %v9489 = vmul.f32 1.0, %v9488
  %v9490 = vrcp.pop %v9479
  %v9491 = vmul.f32 1.0, %v9490
  %v9492 = vrcp.pop %v9480
  %v9493 = vmul.f32 1.0, %v9492
  %v9494 = vrcp.pop %v9481
  %v9495 = vmul.f32 1.0, %v9494
  %v9496 = vrcp.pop %v9482
  %v9497 = vmul.f32 1.0, %v9496
  %v9498 = vrcp.pop %v9483
  %v9499 = vmul.f32 1.0, %v9498
  %9500 = vst.msk [vmem:[%s25] sm:$0xff] %vm322, %v9485
  %9501 = vst.msk [vmem:[%s25 + $0x8] sm:$0xff] %vm322, %v9487
  %9502 = vst.msk [vmem:[%s25 + $0x10] sm:$0xff] %vm322, %v9489
  %9503 = vst.msk [vmem:[%s25 + $0x18] sm:$0xff] %vm322, %v9491
  %9504 = vst.msk [vmem:[%s25 + $0x20] sm:$0xff] %vm322, %v9493
  %9505 = vst.msk [vmem:[%s25 + $0x28] sm:$0xff] %vm322, %v9495
  %9506 = vst.msk [vmem:[%s25 + $0x30] sm:$0xff] %vm322, %v9497
  %9507 = vst.msk [vmem:[%s25 + $0x38] sm:$0xff] %vm322, %v9499
  // Predicated region
  $region102: #{autoencoder_forward.1} parent=0 // pred_check
    _
  $region103: #{autoencoder_forward.1} parent=0 // pred_check_branch
    %9509 = sbr.rel (0) target = $region105
  $region104: #{autoencoder_forward.1} parent=0 // pred_region
    _
  $region105: #{autoencoder_forward.1} parent=0 // pred_fallthru
    _
  // Predicated region
  $region106: #{autoencoder_forward.1} parent=0 // pred_check
    _
  $region107: #{autoencoder_forward.1} parent=0 // pred_check_branch
    %9511 = sbr.rel (0) target = $region109
  $region108: #{autoencoder_forward.1} parent=0 // pred_region
    _
  $region109: #{autoencoder_forward.1} parent=0 // pred_fallthru
    _

</llo_original>
